<compile_context>
chip_gen: v6e
topology: v6e:2x2x1
jax: 0.10.0
libtpu: 0.0.40
codegen_flags: <defaults>
</compile_context>

<pallas_src>
import functools

import numpy as np
import jax
import jax.numpy as jnp
from jax import lax
from jax.experimental import pallas as pl
from jax.experimental.pallas import tpu as pltpu


def _conv3d_tap_kernel(*refs, KH, KW, dh, dw, Hout, Wout, Cin, Cout,
                       has_bias, apply_gelu):
    """One (batch, output-depth, depth-tap) grid step of an implicit-GEMM dilated conv.

    refs = (x_ref, w_ref, [b_ref], o_ref, acc_ref)
      x_ref  : (1, 1, Hp, Wp, Cin)       padded input plane at depth do + kd*dd (bf16)
      w_ref  : (1, KH, KW, Cin, Cout)    weight slab for this depth tap (bf16)
      b_ref  : (1, 1, Cout)              bias (f32), present only if has_bias
      o_ref  : (1, 1, Hout, Wout, Cout)  output block (revisited across the kd axis)
      acc_ref: (Hout, Wout, Cout)        f32 VMEM accumulator, persists across kd steps
    """
    if has_bias:
        x_ref, w_ref, b_ref, o_ref, acc_ref = refs
    else:
        x_ref, w_ref, o_ref, acc_ref = refs
        b_ref = None

    kd = pl.program_id(2)

    @pl.when(kd == 0)
    def _init():
        acc_ref[...] = jnp.zeros_like(acc_ref)

    acc = acc_ref[...]
    for kh in range(KH):
        for kw in range(KW):
            patch = x_ref[0, 0,
                          kh * dh:kh * dh + Hout,
                          kw * dw:kw * dw + Wout, :]          # (Hout, Wout, Cin) bf16
            w_tap = w_ref[0, kh, kw]                          # (Cin, Cout) bf16
            if Cin == 1:
                # Degenerate contraction (K=1): VPU outer product, skip the MXU.
                contrib = patch.astype(jnp.float32) * w_tap.astype(jnp.float32)[None]
            else:
                # Row-batched MXU matmul: (Wout, Cin) @ (Cin, Cout) for each output row.
                w_b = jnp.broadcast_to(w_tap[None], (Hout, Cin, Cout))
                contrib = jnp.einsum("hwc,hco->hwo", patch, w_b,
                                     preferred_element_type=jnp.float32)
            acc = acc + contrib
    acc_ref[...] = acc

    @pl.when(kd == pl.num_programs(2) - 1)
    def _finalize():
        r = acc_ref[...]
        if has_bias:
            r = r + b_ref[...]
        if apply_gelu:
            v3 = r * 0.5
            v6 = (r * r * r) * 0.044715
            v8 = (r + v6) * 0.7978845608028654
            r = v3 * (jnp.tanh(v8) + 1.0)
        o_ref[0, 0] = r.astype(o_ref.dtype)


def conv3d_pallas(x, w, b=None, *, padding, dilation, apply_gelu=False, out_dtype=None):
    """Stride-1 dilated 3-D convolution, NDHWC activations, implicit GEMM in Pallas.

    x: (N, D, H, W, Cin); w: (KD, KH, KW, Cin, Cout); b: (Cout,) or None.
    """
    N, D, H, W, Cin = x.shape
    KD, KH, KW, _, Cout = w.shape
    pd, ph, pw = padding
    dd, dh, dw = dilation
    Dout = D + 2 * pd - dd * (KD - 1)
    Hout = H + 2 * ph - dh * (KH - 1)
    Wout = W + 2 * pw - dw * (KW - 1)
    if out_dtype is None:
        out_dtype = x.dtype

    # bf16 operands (f32 accumulation in-kernel) halve HBM traffic and use the fast MXU path.
    x = x.astype(jnp.bfloat16)
    w = w.astype(jnp.bfloat16)

    # One activation-sized zero-pad copy in HBM (no im2col blow-up, no M-padding copies).
    xp = jnp.pad(x, ((0, 0), (pd, pd), (ph, ph), (pw, pw), (0, 0)))
    Hp, Wp = H + 2 * ph, W + 2 * pw

    kernel = functools.partial(
        _conv3d_tap_kernel, KH=KH, KW=KW, dh=dh, dw=dw,
        Hout=Hout, Wout=Wout, Cin=Cin, Cout=Cout,
        has_bias=b is not None, apply_gelu=apply_gelu)

    in_specs = [
        # One padded H/W plane at depth (do + kd*dd); depth block size 1 makes the block
        # index an element index, so overlapping-halo machinery is not needed.
        pl.BlockSpec((1, 1, Hp, Wp, Cin),
                     lambda n, do, kd: (n, do + kd * dd, 0, 0, 0)),
        # Weight slab for depth tap kd.
        pl.BlockSpec((1, KH, KW, Cin, Cout),
                     lambda n, do, kd: (kd, 0, 0, 0, 0)),
    ]
    inputs = [xp, w]
    if b is not None:
        in_specs.append(pl.BlockSpec((1, 1, Cout), lambda n, do, kd: (0, 0, 0)))
        inputs.append(b.astype(jnp.float32).reshape(1, 1, Cout))

    out = pl.pallas_call(
        kernel,
        out_shape=jax.ShapeDtypeStruct((N, Dout, Hout, Wout, Cout), out_dtype),
        grid_spec=pltpu.PrefetchScalarGridSpec(
            num_scalar_prefetch=0,
            grid=(N, Dout, KD),
            in_specs=in_specs,
            out_specs=pl.BlockSpec((1, 1, Hout, Wout, Cout),
                                   lambda n, do, kd: (n, do, 0, 0, 0)),
            scratch_shapes=[pltpu.VMEM((Hout, Wout, Cout), jnp.float32)],
        ),
        compiler_params=pltpu.CompilerParams(
            dimension_semantics=("parallel", "parallel", "arbitrary"),
            vmem_limit_bytes=48 * 1024 * 1024,
        ),
    )(*inputs)
    return out


def model_forward(x_ncdhw, params):
    # NCDHW -> NDHWC
    x = jnp.transpose(x_ncdhw, (0, 2, 3, 4, 1))
    v1 = conv3d_pallas(x, params["w1"], None,
                       padding=(2, 2, 2), dilation=(1, 1, 1),
                       apply_gelu=False, out_dtype=jnp.bfloat16)
    y = conv3d_pallas(v1, params["w2"], params["b2"],
                      padding=(1, 1, 1), dilation=(2, 2, 2),
                      apply_gelu=True, out_dtype=jnp.float32)
    # back to NCDHW to match PyTorch
    return jnp.transpose(y, (0, 4, 1, 2, 3))


def init_params(key):
    # PyTorch shapes: conv1.weight (32,1,5,5,5); conv2.weight (64,32,3,3,3); conv2.bias (64,)
    k1, k2, k3 = jax.random.split(key, 3)
    fan1 = 1 * 5 * 5 * 5
    fan2 = 32 * 3 * 3 * 3
    w1 = jax.random.uniform(k1, (32, 1, 5, 5, 5), jnp.float32, -1.0, 1.0) / np.sqrt(fan1)
    w2 = jax.random.uniform(k2, (64, 32, 3, 3, 3), jnp.float32, -1.0, 1.0) / np.sqrt(fan2)
    b2 = jax.random.uniform(k3, (64,), jnp.float32, -1.0, 1.0) / np.sqrt(fan2)
    # OIDHW -> (KD, KH, KW, Cin, Cout)
    return {
        "w1": jnp.transpose(w1, (2, 3, 4, 1, 0)),
        "w2": jnp.transpose(w2, (2, 3, 4, 1, 0)),
        "b2": b2,
    }


def reference_forward(x_ncdhw, params):
    # Pure-JAX f32 reference (lax conv) for correctness checking.
    w1 = jnp.transpose(params["w1"], (4, 3, 0, 1, 2))  # OIDHW
    w2 = jnp.transpose(params["w2"], (4, 3, 0, 1, 2))
    dn1 = lax.conv_dimension_numbers(x_ncdhw.shape, w1.shape, ("NCDHW", "OIDHW", "NCDHW"))
    v1 = lax.conv_general_dilated(x_ncdhw, w1, (1, 1, 1), [(2, 2), (2, 2), (2, 2)],
                                  rhs_dilation=(1, 1, 1), dimension_numbers=dn1,
                                  precision=lax.Precision.HIGHEST)
    dn2 = lax.conv_dimension_numbers(v1.shape, w2.shape, ("NCDHW", "OIDHW", "NCDHW"))
    v2 = lax.conv_general_dilated(v1, w2, (1, 1, 1), [(1, 1), (1, 1), (1, 1)],
                                  rhs_dilation=(2, 2, 2), dimension_numbers=dn2,
                                  precision=lax.Precision.HIGHEST)
    v2 = v2 + params["b2"].reshape(1, -1, 1, 1, 1)
    v3 = v2 * 0.5
    v6 = (v2 * v2 * v2) * 0.044715
    v8 = (v2 + v6) * 0.7978845608028654
    return v3 * (jnp.tanh(v8) + 1.0)


if __name__ == "__main__":
    key = jax.random.PRNGKey(0)
    pkey, xkey = jax.random.split(key)
    params = init_params(pkey)

    # Small-shape analogue of torch.randn(12, 1, 40, 115, 136): (N=2, C=1, D=H=W=8), NCDHW.
    x = jax.random.normal(xkey, (2, 1, 8, 8, 8), jnp.float32)

    out = jax.block_until_ready(jax.jit(model_forward)(x, params))

    assert out.shape == (2, 64, 6, 6, 6), out.shape
    ref = reference_forward(x, params)
    # bf16 operands / f32 accumulation vs the f32 HIGHEST-precision reference.
    np.testing.assert_allclose(np.asarray(out, dtype=np.float32), np.asarray(ref),
                               rtol=2e-2, atol=2e-2)

    print("KERNEL_OK")
</pallas_src>

<mosaic_0001>
module attributes {stable_mosaic.version = 11 : i64} {
  func.func @_conv3d_tap_kernel(%arg0: i32, %arg1: i32, %arg2: i32, %arg3: memref<1x1x12x12x1xbf16, #tpu.memory_space<vmem>>, %arg4: memref<1x5x5x1x32xbf16, #tpu.memory_space<vmem>>, %arg5: memref<1x1x8x8x32xbf16, #tpu.memory_space<vmem>>, %arg6: memref<8x8x32xf32, #tpu.memory_space<vmem>>) attributes {dimension_semantics = [#tpu.dimension_semantics<parallel>, #tpu.dimension_semantics<parallel>, #tpu.dimension_semantics<arbitrary>], iteration_bounds = array<i64: 2, 8, 5>, scalar_prefetch = 0 : i64, scratch_operands = 1 : i64, tpu.core_type = #tpu.core_type<tc>, window_params = [{transform_indices = @transform_0, window_bounds = array<i64: 1, 1, 12, 12, 1>}, {transform_indices = @transform_1, window_bounds = array<i64: 1, 5, 5, 1, 32>}, {transform_indices = @transform_2, window_bounds = array<i64: 1, 1, 8, 8, 32>}]} {
    %c0_i32 = arith.constant 0 : i32
    %0 = arith.cmpi eq, %arg2, %c0_i32 : i32
    %1 = arith.extui %0 : i1 to i32
    %c0_i32_0 = arith.constant 0 : i32
    %2 = arith.cmpi ne, %1, %c0_i32_0 : i32
    scf.if %2 {
      %cst = arith.constant 0.000000e+00 : f32
      %283 = vector.broadcast %cst : f32 to vector<8x8x32xf32>
      %c0_253 = arith.constant 0 : index
      %c0_254 = arith.constant 0 : index
      %c0_255 = arith.constant 0 : index
      %284 = vector.load %arg6[%c0_253, %c0_254, %c0_255] : memref<8x8x32xf32, #tpu.memory_space<vmem>>, vector<8x8x32xf32>
      tpu.vector_store %arg6[%c0_253, %c0_254, %c0_255], %283 {strides = array<i32>} : memref<8x8x32xf32, #tpu.memory_space<vmem>>, vector<8x8x32xf32>,
    } else {
    }
    %c0 = arith.constant 0 : index
    %c0_1 = arith.constant 0 : index
    %c0_2 = arith.constant 0 : index
    %3 = vector.load %arg6[%c0, %c0_1, %c0_2] : memref<8x8x32xf32, #tpu.memory_space<vmem>>, vector<8x8x32xf32>
    %c0_3 = arith.constant 0 : index
    %c0_4 = arith.constant 0 : index
    %c0_5 = arith.constant 0 : index
    %c0_6 = arith.constant 0 : index
    %c0_7 = arith.constant 0 : index
    %4 = vector.load %arg3[%c0_3, %c0_4, %c0_5, %c0_6, %c0_7] : memref<1x1x12x12x1xbf16, #tpu.memory_space<vmem>>, vector<1x1x8x8x1xbf16>
    %5 = vector.shape_cast %4 : vector<1x1x8x8x1xbf16> to vector<8x8x1xbf16>
    %c0_8 = arith.constant 0 : index
    %c0_9 = arith.constant 0 : index
    %c0_10 = arith.constant 0 : index
    %c0_11 = arith.constant 0 : index
    %c0_12 = arith.constant 0 : index
    %6 = vector.load %arg4[%c0_8, %c0_9, %c0_10, %c0_11, %c0_12] : memref<1x5x5x1x32xbf16, #tpu.memory_space<vmem>>, vector<1x1x1x1x32xbf16>
    %7 = vector.shape_cast %6 : vector<1x1x1x1x32xbf16> to vector<1x32xbf16>
    %8 = arith.extf %5 : vector<8x8x1xbf16> to vector<8x8x1xf32>
    %9 = arith.extf %7 : vector<1x32xbf16> to vector<1x32xf32>
    %10 = vector.shape_cast %9 : vector<1x32xf32> to vector<1x1x32xf32>
    %11 = vector.broadcast %8 : vector<8x8x1xf32> to vector<8x8x32xf32>
    %12 = vector.broadcast %10 : vector<1x1x32xf32> to vector<8x8x32xf32>
    %13 = arith.mulf %11, %12 : vector<8x8x32xf32>
    %14 = arith.addf %3, %13 : vector<8x8x32xf32>
    %c0_13 = arith.constant 0 : index
    %c0_14 = arith.constant 0 : index
    %c0_15 = arith.constant 0 : index
    %c1 = arith.constant 1 : index
    %c0_16 = arith.constant 0 : index
    %15 = vector.load %arg3[%c0_13, %c0_14, %c0_15, %c1, %c0_16] : memref<1x1x12x12x1xbf16, #tpu.memory_space<vmem>>, vector<1x1x8x8x1xbf16>
    %16 = vector.shape_cast %15 : vector<1x1x8x8x1xbf16> to vector<8x8x1xbf16>
    %c0_17 = arith.constant 0 : index
    %c0_18 = arith.constant 0 : index
    %c1_19 = arith.constant 1 : index
    %c0_20 = arith.constant 0 : index
    %c0_21 = arith.constant 0 : index
    %17 = vector.load %arg4[%c0_17, %c0_18, %c1_19, %c0_20, %c0_21] : memref<1x5x5x1x32xbf16, #tpu.memory_space<vmem>>, vector<1x1x1x1x32xbf16>
    %18 = vector.shape_cast %17 : vector<1x1x1x1x32xbf16> to vector<1x32xbf16>
    %19 = arith.extf %16 : vector<8x8x1xbf16> to vector<8x8x1xf32>
    %20 = arith.extf %18 : vector<1x32xbf16> to vector<1x32xf32>
    %21 = vector.shape_cast %20 : vector<1x32xf32> to vector<1x1x32xf32>
    %22 = vector.broadcast %19 : vector<8x8x1xf32> to vector<8x8x32xf32>
    %23 = vector.broadcast %21 : vector<1x1x32xf32> to vector<8x8x32xf32>
    %24 = arith.mulf %22, %23 : vector<8x8x32xf32>
    %25 = arith.addf %14, %24 : vector<8x8x32xf32>
    %c0_22 = arith.constant 0 : index
    %c0_23 = arith.constant 0 : index
    %c0_24 = arith.constant 0 : index
    %c2 = arith.constant 2 : index
    %c0_25 = arith.constant 0 : index
    %26 = vector.load %arg3[%c0_22, %c0_23, %c0_24, %c2, %c0_25] : memref<1x1x12x12x1xbf16, #tpu.memory_space<vmem>>, vector<1x1x8x8x1xbf16>
    %27 = vector.shape_cast %26 : vector<1x1x8x8x1xbf16> to vector<8x8x1xbf16>
    %c0_26 = arith.constant 0 : index
    %c0_27 = arith.constant 0 : index
    %c2_28 = arith.constant 2 : index
    %c0_29 = arith.constant 0 : index
    %c0_30 = arith.constant 0 : index
    %28 = vector.load %arg4[%c0_26, %c0_27, %c2_28, %c0_29, %c0_30] : memref<1x5x5x1x32xbf16, #tpu.memory_space<vmem>>, vector<1x1x1x1x32xbf16>
    %29 = vector.shape_cast %28 : vector<1x1x1x1x32xbf16> to vector<1x32xbf16>
    %30 = arith.extf %27 : vector<8x8x1xbf16> to vector<8x8x1xf32>
    %31 = arith.extf %29 : vector<1x32xbf16> to vector<1x32xf32>
    %32 = vector.shape_cast %31 : vector<1x32xf32> to vector<1x1x32xf32>
    %33 = vector.broadcast %30 : vector<8x8x1xf32> to vector<8x8x32xf32>
    %34 = vector.broadcast %32 : vector<1x1x32xf32> to vector<8x8x32xf32>
    %35 = arith.mulf %33, %34 : vector<8x8x32xf32>
    %36 = arith.addf %25, %35 : vector<8x8x32xf32>
    %c0_31 = arith.constant 0 : index
    %c0_32 = arith.constant 0 : index
    %c0_33 = arith.constant 0 : index
    %c3 = arith.constant 3 : index
    %c0_34 = arith.constant 0 : index
    %37 = vector.load %arg3[%c0_31, %c0_32, %c0_33, %c3, %c0_34] : memref<1x1x12x12x1xbf16, #tpu.memory_space<vmem>>, vector<1x1x8x8x1xbf16>
    %38 = vector.shape_cast %37 : vector<1x1x8x8x1xbf16> to vector<8x8x1xbf16>
    %c0_35 = arith.constant 0 : index
    %c0_36 = arith.constant 0 : index
    %c3_37 = arith.constant 3 : index
    %c0_38 = arith.constant 0 : index
    %c0_39 = arith.constant 0 : index
    %39 = vector.load %arg4[%c0_35, %c0_36, %c3_37, %c0_38, %c0_39] : memref<1x5x5x1x32xbf16, #tpu.memory_space<vmem>>, vector<1x1x1x1x32xbf16>
    %40 = vector.shape_cast %39 : vector<1x1x1x1x32xbf16> to vector<1x32xbf16>
    %41 = arith.extf %38 : vector<8x8x1xbf16> to vector<8x8x1xf32>
    %42 = arith.extf %40 : vector<1x32xbf16> to vector<1x32xf32>
    %43 = vector.shape_cast %42 : vector<1x32xf32> to vector<1x1x32xf32>
    %44 = vector.broadcast %41 : vector<8x8x1xf32> to vector<8x8x32xf32>
    %45 = vector.broadcast %43 : vector<1x1x32xf32> to vector<8x8x32xf32>
    %46 = arith.mulf %44, %45 : vector<8x8x32xf32>
    %47 = arith.addf %36, %46 : vector<8x8x32xf32>
    %c0_40 = arith.constant 0 : index
    %c0_41 = arith.constant 0 : index
    %c0_42 = arith.constant 0 : index
    %c4 = arith.constant 4 : index
    %c0_43 = arith.constant 0 : index
    %48 = vector.load %arg3[%c0_40, %c0_41, %c0_42, %c4, %c0_43] : memref<1x1x12x12x1xbf16, #tpu.memory_space<vmem>>, vector<1x1x8x8x1xbf16>
    %49 = vector.shape_cast %48 : vector<1x1x8x8x1xbf16> to vector<8x8x1xbf16>
    %c0_44 = arith.constant 0 : index
    %c0_45 = arith.constant 0 : index
    %c4_46 = arith.constant 4 : index
    %c0_47 = arith.constant 0 : index
    %c0_48 = arith.constant 0 : index
    %50 = vector.load %arg4[%c0_44, %c0_45, %c4_46, %c0_47, %c0_48] : memref<1x5x5x1x32xbf16, #tpu.memory_space<vmem>>, vector<1x1x1x1x32xbf16>
    %51 = vector.shape_cast %50 : vector<1x1x1x1x32xbf16> to vector<1x32xbf16>
    %52 = arith.extf %49 : vector<8x8x1xbf16> to vector<8x8x1xf32>
    %53 = arith.extf %51 : vector<1x32xbf16> to vector<1x32xf32>
    %54 = vector.shape_cast %53 : vector<1x32xf32> to vector<1x1x32xf32>
    %55 = vector.broadcast %52 : vector<8x8x1xf32> to vector<8x8x32xf32>
    %56 = vector.broadcast %54 : vector<1x1x32xf32> to vector<8x8x32xf32>
    %57 = arith.mulf %55, %56 : vector<8x8x32xf32>
    %58 = arith.addf %47, %57 : vector<8x8x32xf32>
    %c0_49 = arith.constant 0 : index
    %c0_50 = arith.constant 0 : index
    %c1_51 = arith.constant 1 : index
    %c0_52 = arith.constant 0 : index
    %c0_53 = arith.constant 0 : index
    %59 = vector.load %arg3[%c0_49, %c0_50, %c1_51, %c0_52, %c0_53] : memref<1x1x12x12x1xbf16, #tpu.memory_space<vmem>>, vector<1x1x8x8x1xbf16>
    %60 = vector.shape_cast %59 : vector<1x1x8x8x1xbf16> to vector<8x8x1xbf16>
    %c0_54 = arith.constant 0 : index
    %c1_55 = arith.constant 1 : index
    %c0_56 = arith.constant 0 : index
    %c0_57 = arith.constant 0 : index
    %c0_58 = arith.constant 0 : index
    %61 = vector.load %arg4[%c0_54, %c1_55, %c0_56, %c0_57, %c0_58] : memref<1x5x5x1x32xbf16, #tpu.memory_space<vmem>>, vector<1x1x1x1x32xbf16>
    %62 = vector.shape_cast %61 : vector<1x1x1x1x32xbf16> to vector<1x32xbf16>
    %63 = arith.extf %60 : vector<8x8x1xbf16> to vector<8x8x1xf32>
    %64 = arith.extf %62 : vector<1x32xbf16> to vector<1x32xf32>
    %65 = vector.shape_cast %64 : vector<1x32xf32> to vector<1x1x32xf32>
    %66 = vector.broadcast %63 : vector<8x8x1xf32> to vector<8x8x32xf32>
    %67 = vector.broadcast %65 : vector<1x1x32xf32> to vector<8x8x32xf32>
    %68 = arith.mulf %66, %67 : vector<8x8x32xf32>
    %69 = arith.addf %58, %68 : vector<8x8x32xf32>
    %c0_59 = arith.constant 0 : index
    %c0_60 = arith.constant 0 : index
    %c1_61 = arith.constant 1 : index
    %c1_62 = arith.constant 1 : index
    %c0_63 = arith.constant 0 : index
    %70 = vector.load %arg3[%c0_59, %c0_60, %c1_61, %c1_62, %c0_63] : memref<1x1x12x12x1xbf16, #tpu.memory_space<vmem>>, vector<1x1x8x8x1xbf16>
    %71 = vector.shape_cast %70 : vector<1x1x8x8x1xbf16> to vector<8x8x1xbf16>
    %c0_64 = arith.constant 0 : index
    %c1_65 = arith.constant 1 : index
    %c1_66 = arith.constant 1 : index
    %c0_67 = arith.constant 0 : index
    %c0_68 = arith.constant 0 : index
    %72 = vector.load %arg4[%c0_64, %c1_65, %c1_66, %c0_67, %c0_68] : memref<1x5x5x1x32xbf16, #tpu.memory_space<vmem>>, vector<1x1x1x1x32xbf16>
    %73 = vector.shape_cast %72 : vector<1x1x1x1x32xbf16> to vector<1x32xbf16>
    %74 = arith.extf %71 : vector<8x8x1xbf16> to vector<8x8x1xf32>
    %75 = arith.extf %73 : vector<1x32xbf16> to vector<1x32xf32>
    %76 = vector.shape_cast %75 : vector<1x32xf32> to vector<1x1x32xf32>
    %77 = vector.broadcast %74 : vector<8x8x1xf32> to vector<8x8x32xf32>
    %78 = vector.broadcast %76 : vector<1x1x32xf32> to vector<8x8x32xf32>
    %79 = arith.mulf %77, %78 : vector<8x8x32xf32>
    %80 = arith.addf %69, %79 : vector<8x8x32xf32>
    %c0_69 = arith.constant 0 : index
    %c0_70 = arith.constant 0 : index
    %c1_71 = arith.constant 1 : index
    %c2_72 = arith.constant 2 : index
    %c0_73 = arith.constant 0 : index
    %81 = vector.load %arg3[%c0_69, %c0_70, %c1_71, %c2_72, %c0_73] : memref<1x1x12x12x1xbf16, #tpu.memory_space<vmem>>, vector<1x1x8x8x1xbf16>
    %82 = vector.shape_cast %81 : vector<1x1x8x8x1xbf16> to vector<8x8x1xbf16>
    %c0_74 = arith.constant 0 : index
    %c1_75 = arith.constant 1 : index
    %c2_76 = arith.constant 2 : index
    %c0_77 = arith.constant 0 : index
    %c0_78 = arith.constant 0 : index
    %83 = vector.load %arg4[%c0_74, %c1_75, %c2_76, %c0_77, %c0_78] : memref<1x5x5x1x32xbf16, #tpu.memory_space<vmem>>, vector<1x1x1x1x32xbf16>
    %84 = vector.shape_cast %83 : vector<1x1x1x1x32xbf16> to vector<1x32xbf16>
    %85 = arith.extf %82 : vector<8x8x1xbf16> to vector<8x8x1xf32>
    %86 = arith.extf %84 : vector<1x32xbf16> to vector<1x32xf32>
    %87 = vector.shape_cast %86 : vector<1x32xf32> to vector<1x1x32xf32>
    %88 = vector.broadcast %85 : vector<8x8x1xf32> to vector<8x8x32xf32>
    %89 = vector.broadcast %87 : vector<1x1x32xf32> to vector<8x8x32xf32>
    %90 = arith.mulf %88, %89 : vector<8x8x32xf32>
    %91 = arith.addf %80, %90 : vector<8x8x32xf32>
    %c0_79 = arith.constant 0 : index
    %c0_80 = arith.constant 0 : index
    %c1_81 = arith.constant 1 : index
    %c3_82 = arith.constant 3 : index
    %c0_83 = arith.constant 0 : index
    %92 = vector.load %arg3[%c0_79, %c0_80, %c1_81, %c3_82, %c0_83] : memref<1x1x12x12x1xbf16, #tpu.memory_space<vmem>>, vector<1x1x8x8x1xbf16>
    %93 = vector.shape_cast %92 : vector<1x1x8x8x1xbf16> to vector<8x8x1xbf16>
    %c0_84 = arith.constant 0 : index
    %c1_85 = arith.constant 1 : index
    %c3_86 = arith.constant 3 : index
    %c0_87 = arith.constant 0 : index
    %c0_88 = arith.constant 0 : index
    %94 = vector.load %arg4[%c0_84, %c1_85, %c3_86, %c0_87, %c0_88] : memref<1x5x5x1x32xbf16, #tpu.memory_space<vmem>>, vector<1x1x1x1x32xbf16>
    %95 = vector.shape_cast %94 : vector<1x1x1x1x32xbf16> to vector<1x32xbf16>
    %96 = arith.extf %93 : vector<8x8x1xbf16> to vector<8x8x1xf32>
    %97 = arith.extf %95 : vector<1x32xbf16> to vector<1x32xf32>
    %98 = vector.shape_cast %97 : vector<1x32xf32> to vector<1x1x32xf32>
    %99 = vector.broadcast %96 : vector<8x8x1xf32> to vector<8x8x32xf32>
    %100 = vector.broadcast %98 : vector<1x1x32xf32> to vector<8x8x32xf32>
    %101 = arith.mulf %99, %100 : vector<8x8x32xf32>
    %102 = arith.addf %91, %101 : vector<8x8x32xf32>
    %c0_89 = arith.constant 0 : index
    %c0_90 = arith.constant 0 : index
    %c1_91 = arith.constant 1 : index
    %c4_92 = arith.constant 4 : index
    %c0_93 = arith.constant 0 : index
    %103 = vector.load %arg3[%c0_89, %c0_90, %c1_91, %c4_92, %c0_93] : memref<1x1x12x12x1xbf16, #tpu.memory_space<vmem>>, vector<1x1x8x8x1xbf16>
    %104 = vector.shape_cast %103 : vector<1x1x8x8x1xbf16> to vector<8x8x1xbf16>
    %c0_94 = arith.constant 0 : index
    %c1_95 = arith.constant 1 : index
    %c4_96 = arith.constant 4 : index
    %c0_97 = arith.constant 0 : index
    %c0_98 = arith.constant 0 : index
    %105 = vector.load %arg4[%c0_94, %c1_95, %c4_96, %c0_97, %c0_98] : memref<1x5x5x1x32xbf16, #tpu.memory_space<vmem>>, vector<1x1x1x1x32xbf16>
    %106 = vector.shape_cast %105 : vector<1x1x1x1x32xbf16> to vector<1x32xbf16>
    %107 = arith.extf %104 : vector<8x8x1xbf16> to vector<8x8x1xf32>
    %108 = arith.extf %106 : vector<1x32xbf16> to vector<1x32xf32>
    %109 = vector.shape_cast %108 : vector<1x32xf32> to vector<1x1x32xf32>
    %110 = vector.broadcast %107 : vector<8x8x1xf32> to vector<8x8x32xf32>
    %111 = vector.broadcast %109 : vector<1x1x32xf32> to vector<8x8x32xf32>
    %112 = arith.mulf %110, %111 : vector<8x8x32xf32>
    %113 = arith.addf %102, %112 : vector<8x8x32xf32>
    %c0_99 = arith.constant 0 : index
    %c0_100 = arith.constant 0 : index
    %c2_101 = arith.constant 2 : index
    %c0_102 = arith.constant 0 : index
    %c0_103 = arith.constant 0 : index
    %114 = vector.load %arg3[%c0_99, %c0_100, %c2_101, %c0_102, %c0_103] : memref<1x1x12x12x1xbf16, #tpu.memory_space<vmem>>, vector<1x1x8x8x1xbf16>
    %115 = vector.shape_cast %114 : vector<1x1x8x8x1xbf16> to vector<8x8x1xbf16>
    %c0_104 = arith.constant 0 : index
    %c2_105 = arith.constant 2 : index
    %c0_106 = arith.constant 0 : index
    %c0_107 = arith.constant 0 : index
    %c0_108 = arith.constant 0 : index
    %116 = vector.load %arg4[%c0_104, %c2_105, %c0_106, %c0_107, %c0_108] : memref<1x5x5x1x32xbf16, #tpu.memory_space<vmem>>, vector<1x1x1x1x32xbf16>
    %117 = vector.shape_cast %116 : vector<1x1x1x1x32xbf16> to vector<1x32xbf16>
    %118 = arith.extf %115 : vector<8x8x1xbf16> to vector<8x8x1xf32>
    %119 = arith.extf %117 : vector<1x32xbf16> to vector<1x32xf32>
    %120 = vector.shape_cast %119 : vector<1x32xf32> to vector<1x1x32xf32>
    %121 = vector.broadcast %118 : vector<8x8x1xf32> to vector<8x8x32xf32>
    %122 = vector.broadcast %120 : vector<1x1x32xf32> to vector<8x8x32xf32>
    %123 = arith.mulf %121, %122 : vector<8x8x32xf32>
    %124 = arith.addf %113, %123 : vector<8x8x32xf32>
    %c0_109 = arith.constant 0 : index
    %c0_110 = arith.constant 0 : index
    %c2_111 = arith.constant 2 : index
    %c1_112 = arith.constant 1 : index
    %c0_113 = arith.constant 0 : index
    %125 = vector.load %arg3[%c0_109, %c0_110, %c2_111, %c1_112, %c0_113] : memref<1x1x12x12x1xbf16, #tpu.memory_space<vmem>>, vector<1x1x8x8x1xbf16>
    %126 = vector.shape_cast %125 : vector<1x1x8x8x1xbf16> to vector<8x8x1xbf16>
    %c0_114 = arith.constant 0 : index
    %c2_115 = arith.constant 2 : index
    %c1_116 = arith.constant 1 : index
    %c0_117 = arith.constant 0 : index
    %c0_118 = arith.constant 0 : index
    %127 = vector.load %arg4[%c0_114, %c2_115, %c1_116, %c0_117, %c0_118] : memref<1x5x5x1x32xbf16, #tpu.memory_space<vmem>>, vector<1x1x1x1x32xbf16>
    %128 = vector.shape_cast %127 : vector<1x1x1x1x32xbf16> to vector<1x32xbf16>
    %129 = arith.extf %126 : vector<8x8x1xbf16> to vector<8x8x1xf32>
    %130 = arith.extf %128 : vector<1x32xbf16> to vector<1x32xf32>
    %131 = vector.shape_cast %130 : vector<1x32xf32> to vector<1x1x32xf32>
    %132 = vector.broadcast %129 : vector<8x8x1xf32> to vector<8x8x32xf32>
    %133 = vector.broadcast %131 : vector<1x1x32xf32> to vector<8x8x32xf32>
    %134 = arith.mulf %132, %133 : vector<8x8x32xf32>
    %135 = arith.addf %124, %134 : vector<8x8x32xf32>
    %c0_119 = arith.constant 0 : index
    %c0_120 = arith.constant 0 : index
    %c2_121 = arith.constant 2 : index
    %c2_122 = arith.constant 2 : index
    %c0_123 = arith.constant 0 : index
    %136 = vector.load %arg3[%c0_119, %c0_120, %c2_121, %c2_122, %c0_123] : memref<1x1x12x12x1xbf16, #tpu.memory_space<vmem>>, vector<1x1x8x8x1xbf16>
    %137 = vector.shape_cast %136 : vector<1x1x8x8x1xbf16> to vector<8x8x1xbf16>
    %c0_124 = arith.constant 0 : index
    %c2_125 = arith.constant 2 : index
    %c2_126 = arith.constant 2 : index
    %c0_127 = arith.constant 0 : index
    %c0_128 = arith.constant 0 : index
    %138 = vector.load %arg4[%c0_124, %c2_125, %c2_126, %c0_127, %c0_128] : memref<1x5x5x1x32xbf16, #tpu.memory_space<vmem>>, vector<1x1x1x1x32xbf16>
    %139 = vector.shape_cast %138 : vector<1x1x1x1x32xbf16> to vector<1x32xbf16>
    %140 = arith.extf %137 : vector<8x8x1xbf16> to vector<8x8x1xf32>
    %141 = arith.extf %139 : vector<1x32xbf16> to vector<1x32xf32>
    %142 = vector.shape_cast %141 : vector<1x32xf32> to vector<1x1x32xf32>
    %143 = vector.broadcast %140 : vector<8x8x1xf32> to vector<8x8x32xf32>
    %144 = vector.broadcast %142 : vector<1x1x32xf32> to vector<8x8x32xf32>
    %145 = arith.mulf %143, %144 : vector<8x8x32xf32>
    %146 = arith.addf %135, %145 : vector<8x8x32xf32>
    %c0_129 = arith.constant 0 : index
    %c0_130 = arith.constant 0 : index
    %c2_131 = arith.constant 2 : index
    %c3_132 = arith.constant 3 : index
    %c0_133 = arith.constant 0 : index
    %147 = vector.load %arg3[%c0_129, %c0_130, %c2_131, %c3_132, %c0_133] : memref<1x1x12x12x1xbf16, #tpu.memory_space<vmem>>, vector<1x1x8x8x1xbf16>
    %148 = vector.shape_cast %147 : vector<1x1x8x8x1xbf16> to vector<8x8x1xbf16>
    %c0_134 = arith.constant 0 : index
    %c2_135 = arith.constant 2 : index
    %c3_136 = arith.constant 3 : index
    %c0_137 = arith.constant 0 : index
    %c0_138 = arith.constant 0 : index
    %149 = vector.load %arg4[%c0_134, %c2_135, %c3_136, %c0_137, %c0_138] : memref<1x5x5x1x32xbf16, #tpu.memory_space<vmem>>, vector<1x1x1x1x32xbf16>
    %150 = vector.shape_cast %149 : vector<1x1x1x1x32xbf16> to vector<1x32xbf16>
    %151 = arith.extf %148 : vector<8x8x1xbf16> to vector<8x8x1xf32>
    %152 = arith.extf %150 : vector<1x32xbf16> to vector<1x32xf32>
    %153 = vector.shape_cast %152 : vector<1x32xf32> to vector<1x1x32xf32>
    %154 = vector.broadcast %151 : vector<8x8x1xf32> to vector<8x8x32xf32>
    %155 = vector.broadcast %153 : vector<1x1x32xf32> to vector<8x8x32xf32>
    %156 = arith.mulf %154, %155 : vector<8x8x32xf32>
    %157 = arith.addf %146, %156 : vector<8x8x32xf32>
    %c0_139 = arith.constant 0 : index
    %c0_140 = arith.constant 0 : index
    %c2_141 = arith.constant 2 : index
    %c4_142 = arith.constant 4 : index
    %c0_143 = arith.constant 0 : index
    %158 = vector.load %arg3[%c0_139, %c0_140, %c2_141, %c4_142, %c0_143] : memref<1x1x12x12x1xbf16, #tpu.memory_space<vmem>>, vector<1x1x8x8x1xbf16>
    %159 = vector.shape_cast %158 : vector<1x1x8x8x1xbf16> to vector<8x8x1xbf16>
    %c0_144 = arith.constant 0 : index
    %c2_145 = arith.constant 2 : index
    %c4_146 = arith.constant 4 : index
    %c0_147 = arith.constant 0 : index
    %c0_148 = arith.constant 0 : index
    %160 = vector.load %arg4[%c0_144, %c2_145, %c4_146, %c0_147, %c0_148] : memref<1x5x5x1x32xbf16, #tpu.memory_space<vmem>>, vector<1x1x1x1x32xbf16>
    %161 = vector.shape_cast %160 : vector<1x1x1x1x32xbf16> to vector<1x32xbf16>
    %162 = arith.extf %159 : vector<8x8x1xbf16> to vector<8x8x1xf32>
    %163 = arith.extf %161 : vector<1x32xbf16> to vector<1x32xf32>
    %164 = vector.shape_cast %163 : vector<1x32xf32> to vector<1x1x32xf32>
    %165 = vector.broadcast %162 : vector<8x8x1xf32> to vector<8x8x32xf32>
    %166 = vector.broadcast %164 : vector<1x1x32xf32> to vector<8x8x32xf32>
    %167 = arith.mulf %165, %166 : vector<8x8x32xf32>
    %168 = arith.addf %157, %167 : vector<8x8x32xf32>
    %c0_149 = arith.constant 0 : index
    %c0_150 = arith.constant 0 : index
    %c3_151 = arith.constant 3 : index
    %c0_152 = arith.constant 0 : index
    %c0_153 = arith.constant 0 : index
    %169 = vector.load %arg3[%c0_149, %c0_150, %c3_151, %c0_152, %c0_153] : memref<1x1x12x12x1xbf16, #tpu.memory_space<vmem>>, vector<1x1x8x8x1xbf16>
    %170 = vector.shape_cast %169 : vector<1x1x8x8x1xbf16> to vector<8x8x1xbf16>
    %c0_154 = arith.constant 0 : index
    %c3_155 = arith.constant 3 : index
    %c0_156 = arith.constant 0 : index
    %c0_157 = arith.constant 0 : index
    %c0_158 = arith.constant 0 : index
    %171 = vector.load %arg4[%c0_154, %c3_155, %c0_156, %c0_157, %c0_158] : memref<1x5x5x1x32xbf16, #tpu.memory_space<vmem>>, vector<1x1x1x1x32xbf16>
    %172 = vector.shape_cast %171 : vector<1x1x1x1x32xbf16> to vector<1x32xbf16>
    %173 = arith.extf %170 : vector<8x8x1xbf16> to vector<8x8x1xf32>
    %174 = arith.extf %172 : vector<1x32xbf16> to vector<1x32xf32>
    %175 = vector.shape_cast %174 : vector<1x32xf32> to vector<1x1x32xf32>
    %176 = vector.broadcast %173 : vector<8x8x1xf32> to vector<8x8x32xf32>
    %177 = vector.broadcast %175 : vector<1x1x32xf32> to vector<8x8x32xf32>
    %178 = arith.mulf %176, %177 : vector<8x8x32xf32>
    %179 = arith.addf %168, %178 : vector<8x8x32xf32>
    %c0_159 = arith.constant 0 : index
    %c0_160 = arith.constant 0 : index
    %c3_161 = arith.constant 3 : index
    %c1_162 = arith.constant 1 : index
    %c0_163 = arith.constant 0 : index
    %180 = vector.load %arg3[%c0_159, %c0_160, %c3_161, %c1_162, %c0_163] : memref<1x1x12x12x1xbf16, #tpu.memory_space<vmem>>, vector<1x1x8x8x1xbf16>
    %181 = vector.shape_cast %180 : vector<1x1x8x8x1xbf16> to vector<8x8x1xbf16>
    %c0_164 = arith.constant 0 : index
    %c3_165 = arith.constant 3 : index
    %c1_166 = arith.constant 1 : index
    %c0_167 = arith.constant 0 : index
    %c0_168 = arith.constant 0 : index
    %182 = vector.load %arg4[%c0_164, %c3_165, %c1_166, %c0_167, %c0_168] : memref<1x5x5x1x32xbf16, #tpu.memory_space<vmem>>, vector<1x1x1x1x32xbf16>
    %183 = vector.shape_cast %182 : vector<1x1x1x1x32xbf16> to vector<1x32xbf16>
    %184 = arith.extf %181 : vector<8x8x1xbf16> to vector<8x8x1xf32>
    %185 = arith.extf %183 : vector<1x32xbf16> to vector<1x32xf32>
    %186 = vector.shape_cast %185 : vector<1x32xf32> to vector<1x1x32xf32>
    %187 = vector.broadcast %184 : vector<8x8x1xf32> to vector<8x8x32xf32>
    %188 = vector.broadcast %186 : vector<1x1x32xf32> to vector<8x8x32xf32>
    %189 = arith.mulf %187, %188 : vector<8x8x32xf32>
    %190 = arith.addf %179, %189 : vector<8x8x32xf32>
    %c0_169 = arith.constant 0 : index
    %c0_170 = arith.constant 0 : index
    %c3_171 = arith.constant 3 : index
    %c2_172 = arith.constant 2 : index
    %c0_173 = arith.constant 0 : index
    %191 = vector.load %arg3[%c0_169, %c0_170, %c3_171, %c2_172, %c0_173] : memref<1x1x12x12x1xbf16, #tpu.memory_space<vmem>>, vector<1x1x8x8x1xbf16>
    %192 = vector.shape_cast %191 : vector<1x1x8x8x1xbf16> to vector<8x8x1xbf16>
    %c0_174 = arith.constant 0 : index
    %c3_175 = arith.constant 3 : index
    %c2_176 = arith.constant 2 : index
    %c0_177 = arith.constant 0 : index
    %c0_178 = arith.constant 0 : index
    %193 = vector.load %arg4[%c0_174, %c3_175, %c2_176, %c0_177, %c0_178] : memref<1x5x5x1x32xbf16, #tpu.memory_space<vmem>>, vector<1x1x1x1x32xbf16>
    %194 = vector.shape_cast %193 : vector<1x1x1x1x32xbf16> to vector<1x32xbf16>
    %195 = arith.extf %192 : vector<8x8x1xbf16> to vector<8x8x1xf32>
    %196 = arith.extf %194 : vector<1x32xbf16> to vector<1x32xf32>
    %197 = vector.shape_cast %196 : vector<1x32xf32> to vector<1x1x32xf32>
    %198 = vector.broadcast %195 : vector<8x8x1xf32> to vector<8x8x32xf32>
    %199 = vector.broadcast %197 : vector<1x1x32xf32> to vector<8x8x32xf32>
    %200 = arith.mulf %198, %199 : vector<8x8x32xf32>
    %201 = arith.addf %190, %200 : vector<8x8x32xf32>
    %c0_179 = arith.constant 0 : index
    %c0_180 = arith.constant 0 : index
    %c3_181 = arith.constant 3 : index
    %c3_182 = arith.constant 3 : index
    %c0_183 = arith.constant 0 : index
    %202 = vector.load %arg3[%c0_179, %c0_180, %c3_181, %c3_182, %c0_183] : memref<1x1x12x12x1xbf16, #tpu.memory_space<vmem>>, vector<1x1x8x8x1xbf16>
    %203 = vector.shape_cast %202 : vector<1x1x8x8x1xbf16> to vector<8x8x1xbf16>
    %c0_184 = arith.constant 0 : index
    %c3_185 = arith.constant 3 : index
    %c3_186 = arith.constant 3 : index
    %c0_187 = arith.constant 0 : index
    %c0_188 = arith.constant 0 : index
    %204 = vector.load %arg4[%c0_184, %c3_185, %c3_186, %c0_187, %c0_188] : memref<1x5x5x1x32xbf16, #tpu.memory_space<vmem>>, vector<1x1x1x1x32xbf16>
    %205 = vector.shape_cast %204 : vector<1x1x1x1x32xbf16> to vector<1x32xbf16>
    %206 = arith.extf %203 : vector<8x8x1xbf16> to vector<8x8x1xf32>
    %207 = arith.extf %205 : vector<1x32xbf16> to vector<1x32xf32>
    %208 = vector.shape_cast %207 : vector<1x32xf32> to vector<1x1x32xf32>
    %209 = vector.broadcast %206 : vector<8x8x1xf32> to vector<8x8x32xf32>
    %210 = vector.broadcast %208 : vector<1x1x32xf32> to vector<8x8x32xf32>
    %211 = arith.mulf %209, %210 : vector<8x8x32xf32>
    %212 = arith.addf %201, %211 : vector<8x8x32xf32>
    %c0_189 = arith.constant 0 : index
    %c0_190 = arith.constant 0 : index
    %c3_191 = arith.constant 3 : index
    %c4_192 = arith.constant 4 : index
    %c0_193 = arith.constant 0 : index
    %213 = vector.load %arg3[%c0_189, %c0_190, %c3_191, %c4_192, %c0_193] : memref<1x1x12x12x1xbf16, #tpu.memory_space<vmem>>, vector<1x1x8x8x1xbf16>
    %214 = vector.shape_cast %213 : vector<1x1x8x8x1xbf16> to vector<8x8x1xbf16>
    %c0_194 = arith.constant 0 : index
    %c3_195 = arith.constant 3 : index
    %c4_196 = arith.constant 4 : index
    %c0_197 = arith.constant 0 : index
    %c0_198 = arith.constant 0 : index
    %215 = vector.load %arg4[%c0_194, %c3_195, %c4_196, %c0_197, %c0_198] : memref<1x5x5x1x32xbf16, #tpu.memory_space<vmem>>, vector<1x1x1x1x32xbf16>
    %216 = vector.shape_cast %215 : vector<1x1x1x1x32xbf16> to vector<1x32xbf16>
    %217 = arith.extf %214 : vector<8x8x1xbf16> to vector<8x8x1xf32>
    %218 = arith.extf %216 : vector<1x32xbf16> to vector<1x32xf32>
    %219 = vector.shape_cast %218 : vector<1x32xf32> to vector<1x1x32xf32>
    %220 = vector.broadcast %217 : vector<8x8x1xf32> to vector<8x8x32xf32>
    %221 = vector.broadcast %219 : vector<1x1x32xf32> to vector<8x8x32xf32>
    %222 = arith.mulf %220, %221 : vector<8x8x32xf32>
    %223 = arith.addf %212, %222 : vector<8x8x32xf32>
    %c0_199 = arith.constant 0 : index
    %c0_200 = arith.constant 0 : index
    %c4_201 = arith.constant 4 : index
    %c0_202 = arith.constant 0 : index
    %c0_203 = arith.constant 0 : index
    %224 = vector.load %arg3[%c0_199, %c0_200, %c4_201, %c0_202, %c0_203] : memref<1x1x12x12x1xbf16, #tpu.memory_space<vmem>>, vector<1x1x8x8x1xbf16>
    %225 = vector.shape_cast %224 : vector<1x1x8x8x1xbf16> to vector<8x8x1xbf16>
    %c0_204 = arith.constant 0 : index
    %c4_205 = arith.constant 4 : index
    %c0_206 = arith.constant 0 : index
    %c0_207 = arith.constant 0 : index
    %c0_208 = arith.constant 0 : index
    %226 = vector.load %arg4[%c0_204, %c4_205, %c0_206, %c0_207, %c0_208] : memref<1x5x5x1x32xbf16, #tpu.memory_space<vmem>>, vector<1x1x1x1x32xbf16>
    %227 = vector.shape_cast %226 : vector<1x1x1x1x32xbf16> to vector<1x32xbf16>
    %228 = arith.extf %225 : vector<8x8x1xbf16> to vector<8x8x1xf32>
    %229 = arith.extf %227 : vector<1x32xbf16> to vector<1x32xf32>
    %230 = vector.shape_cast %229 : vector<1x32xf32> to vector<1x1x32xf32>
    %231 = vector.broadcast %228 : vector<8x8x1xf32> to vector<8x8x32xf32>
    %232 = vector.broadcast %230 : vector<1x1x32xf32> to vector<8x8x32xf32>
    %233 = arith.mulf %231, %232 : vector<8x8x32xf32>
    %234 = arith.addf %223, %233 : vector<8x8x32xf32>
    %c0_209 = arith.constant 0 : index
    %c0_210 = arith.constant 0 : index
    %c4_211 = arith.constant 4 : index
    %c1_212 = arith.constant 1 : index
    %c0_213 = arith.constant 0 : index
    %235 = vector.load %arg3[%c0_209, %c0_210, %c4_211, %c1_212, %c0_213] : memref<1x1x12x12x1xbf16, #tpu.memory_space<vmem>>, vector<1x1x8x8x1xbf16>
    %236 = vector.shape_cast %235 : vector<1x1x8x8x1xbf16> to vector<8x8x1xbf16>
    %c0_214 = arith.constant 0 : index
    %c4_215 = arith.constant 4 : index
    %c1_216 = arith.constant 1 : index
    %c0_217 = arith.constant 0 : index
    %c0_218 = arith.constant 0 : index
    %237 = vector.load %arg4[%c0_214, %c4_215, %c1_216, %c0_217, %c0_218] : memref<1x5x5x1x32xbf16, #tpu.memory_space<vmem>>, vector<1x1x1x1x32xbf16>
    %238 = vector.shape_cast %237 : vector<1x1x1x1x32xbf16> to vector<1x32xbf16>
    %239 = arith.extf %236 : vector<8x8x1xbf16> to vector<8x8x1xf32>
    %240 = arith.extf %238 : vector<1x32xbf16> to vector<1x32xf32>
    %241 = vector.shape_cast %240 : vector<1x32xf32> to vector<1x1x32xf32>
    %242 = vector.broadcast %239 : vector<8x8x1xf32> to vector<8x8x32xf32>
    %243 = vector.broadcast %241 : vector<1x1x32xf32> to vector<8x8x32xf32>
    %244 = arith.mulf %242, %243 : vector<8x8x32xf32>
    %245 = arith.addf %234, %244 : vector<8x8x32xf32>
    %c0_219 = arith.constant 0 : index
    %c0_220 = arith.constant 0 : index
    %c4_221 = arith.constant 4 : index
    %c2_222 = arith.constant 2 : index
    %c0_223 = arith.constant 0 : index
    %246 = vector.load %arg3[%c0_219, %c0_220, %c4_221, %c2_222, %c0_223] : memref<1x1x12x12x1xbf16, #tpu.memory_space<vmem>>, vector<1x1x8x8x1xbf16>
    %247 = vector.shape_cast %246 : vector<1x1x8x8x1xbf16> to vector<8x8x1xbf16>
    %c0_224 = arith.constant 0 : index
    %c4_225 = arith.constant 4 : index
    %c2_226 = arith.constant 2 : index
    %c0_227 = arith.constant 0 : index
    %c0_228 = arith.constant 0 : index
    %248 = vector.load %arg4[%c0_224, %c4_225, %c2_226, %c0_227, %c0_228] : memref<1x5x5x1x32xbf16, #tpu.memory_space<vmem>>, vector<1x1x1x1x32xbf16>
    %249 = vector.shape_cast %248 : vector<1x1x1x1x32xbf16> to vector<1x32xbf16>
    %250 = arith.extf %247 : vector<8x8x1xbf16> to vector<8x8x1xf32>
    %251 = arith.extf %249 : vector<1x32xbf16> to vector<1x32xf32>
    %252 = vector.shape_cast %251 : vector<1x32xf32> to vector<1x1x32xf32>
    %253 = vector.broadcast %250 : vector<8x8x1xf32> to vector<8x8x32xf32>
    %254 = vector.broadcast %252 : vector<1x1x32xf32> to vector<8x8x32xf32>
    %255 = arith.mulf %253, %254 : vector<8x8x32xf32>
    %256 = arith.addf %245, %255 : vector<8x8x32xf32>
    %c0_229 = arith.constant 0 : index
    %c0_230 = arith.constant 0 : index
    %c4_231 = arith.constant 4 : index
    %c3_232 = arith.constant 3 : index
    %c0_233 = arith.constant 0 : index
    %257 = vector.load %arg3[%c0_229, %c0_230, %c4_231, %c3_232, %c0_233] : memref<1x1x12x12x1xbf16, #tpu.memory_space<vmem>>, vector<1x1x8x8x1xbf16>
    %258 = vector.shape_cast %257 : vector<1x1x8x8x1xbf16> to vector<8x8x1xbf16>
    %c0_234 = arith.constant 0 : index
    %c4_235 = arith.constant 4 : index
    %c3_236 = arith.constant 3 : index
    %c0_237 = arith.constant 0 : index
    %c0_238 = arith.constant 0 : index
    %259 = vector.load %arg4[%c0_234, %c4_235, %c3_236, %c0_237, %c0_238] : memref<1x5x5x1x32xbf16, #tpu.memory_space<vmem>>, vector<1x1x1x1x32xbf16>
    %260 = vector.shape_cast %259 : vector<1x1x1x1x32xbf16> to vector<1x32xbf16>
    %261 = arith.extf %258 : vector<8x8x1xbf16> to vector<8x8x1xf32>
    %262 = arith.extf %260 : vector<1x32xbf16> to vector<1x32xf32>
    %263 = vector.shape_cast %262 : vector<1x32xf32> to vector<1x1x32xf32>
    %264 = vector.broadcast %261 : vector<8x8x1xf32> to vector<8x8x32xf32>
    %265 = vector.broadcast %263 : vector<1x1x32xf32> to vector<8x8x32xf32>
    %266 = arith.mulf %264, %265 : vector<8x8x32xf32>
    %267 = arith.addf %256, %266 : vector<8x8x32xf32>
    %c0_239 = arith.constant 0 : index
    %c0_240 = arith.constant 0 : index
    %c4_241 = arith.constant 4 : index
    %c4_242 = arith.constant 4 : index
    %c0_243 = arith.constant 0 : index
    %268 = vector.load %arg3[%c0_239, %c0_240, %c4_241, %c4_242, %c0_243] : memref<1x1x12x12x1xbf16, #tpu.memory_space<vmem>>, vector<1x1x8x8x1xbf16>
    %269 = vector.shape_cast %268 : vector<1x1x8x8x1xbf16> to vector<8x8x1xbf16>
    %c0_244 = arith.constant 0 : index
    %c4_245 = arith.constant 4 : index
    %c4_246 = arith.constant 4 : index
    %c0_247 = arith.constant 0 : index
    %c0_248 = arith.constant 0 : index
    %270 = vector.load %arg4[%c0_244, %c4_245, %c4_246, %c0_247, %c0_248] : memref<1x5x5x1x32xbf16, #tpu.memory_space<vmem>>, vector<1x1x1x1x32xbf16>
    %271 = vector.shape_cast %270 : vector<1x1x1x1x32xbf16> to vector<1x32xbf16>
    %272 = arith.extf %269 : vector<8x8x1xbf16> to vector<8x8x1xf32>
    %273 = arith.extf %271 : vector<1x32xbf16> to vector<1x32xf32>
    %274 = vector.shape_cast %273 : vector<1x32xf32> to vector<1x1x32xf32>
    %275 = vector.broadcast %272 : vector<8x8x1xf32> to vector<8x8x32xf32>
    %276 = vector.broadcast %274 : vector<1x1x32xf32> to vector<8x8x32xf32>
    %277 = arith.mulf %275, %276 : vector<8x8x32xf32>
    %278 = arith.addf %267, %277 : vector<8x8x32xf32>
    %c0_249 = arith.constant 0 : index
    %c0_250 = arith.constant 0 : index
    %c0_251 = arith.constant 0 : index
    %279 = vector.load %arg6[%c0_249, %c0_250, %c0_251] : memref<8x8x32xf32, #tpu.memory_space<vmem>>, vector<8x8x32xf32>
    tpu.vector_store %arg6[%c0_249, %c0_250, %c0_251], %278 {strides = array<i32>} : memref<8x8x32xf32, #tpu.memory_space<vmem>>, vector<8x8x32xf32>,
    %c4_i32 = arith.constant 4 : i32
    %280 = arith.cmpi eq, %arg2, %c4_i32 : i32
    %281 = arith.extui %280 : i1 to i32
    %c0_i32_252 = arith.constant 0 : i32
    %282 = arith.cmpi ne, %281, %c0_i32_252 : i32
    scf.if %282 {
      %c0_253 = arith.constant 0 : index
      %c0_254 = arith.constant 0 : index
      %c0_255 = arith.constant 0 : index
      %283 = vector.load %arg6[%c0_253, %c0_254, %c0_255] : memref<8x8x32xf32, #tpu.memory_space<vmem>>, vector<8x8x32xf32>
      %284 = arith.truncf %283 : vector<8x8x32xf32> to vector<8x8x32xbf16>
      %c0_256 = arith.constant 0 : index
      %c0_257 = arith.constant 0 : index
      %c0_258 = arith.constant 0 : index
      %c0_259 = arith.constant 0 : index
      %c0_260 = arith.constant 0 : index
      %285 = vector.load %arg5[%c0_256, %c0_257, %c0_258, %c0_259, %c0_260] : memref<1x1x8x8x32xbf16, #tpu.memory_space<vmem>>, vector<1x1x8x8x32xbf16>
      %286 = vector.shape_cast %285 : vector<1x1x8x8x32xbf16> to vector<8x8x32xbf16>
      %287 = vector.shape_cast %284 : vector<8x8x32xbf16> to vector<1x1x8x8x32xbf16>
      tpu.vector_store %arg5[%c0_256, %c0_257, %c0_258, %c0_259, %c0_260], %287 {strides = array<i32>} : memref<1x1x8x8x32xbf16, #tpu.memory_space<vmem>>, vector<1x1x8x8x32xbf16>,
    } else {
    }
    return
  }
  func.func @transform_0(%arg0: i32, %arg1: i32, %arg2: i32) -> (i32, i32, i32, i32, i32) {
    %c1_i32 = arith.constant 1 : i32
    %0 = arith.muli %arg2, %c1_i32 : i32
    %1 = arith.addi %arg1, %0 : i32
    %c0_i32 = arith.constant 0 : i32
    %c0_i32_0 = arith.constant 0 : i32
    %c0_i32_1 = arith.constant 0 : i32
    %c0_i32_2 = arith.constant 0 : i32
    return %arg0, %1, %c0_i32, %c0_i32_0, %c0_i32_1 : i32, i32, i32, i32, i32
  }
  func.func @transform_1(%arg0: i32, %arg1: i32, %arg2: i32) -> (i32, i32, i32, i32, i32) {
    %c0_i32 = arith.constant 0 : i32
    %c0_i32_0 = arith.constant 0 : i32
    %c0_i32_1 = arith.constant 0 : i32
    %c0_i32_2 = arith.constant 0 : i32
    %c0_i32_3 = arith.constant 0 : i32
    return %arg2, %c0_i32, %c0_i32_0, %c0_i32_1, %c0_i32_2 : i32, i32, i32, i32, i32
  }
  func.func @transform_2(%arg0: i32, %arg1: i32, %arg2: i32) -> (i32, i32, i32, i32, i32) {
    %c0_i32 = arith.constant 0 : i32
    %c0_i32_0 = arith.constant 0 : i32
    %c0_i32_1 = arith.constant 0 : i32
    %c0_i32_2 = arith.constant 0 : i32
    return %arg0, %arg1, %c0_i32, %c0_i32_0, %c0_i32_1 : i32, i32, i32, i32, i32
  }
}

module attributes {stable_mosaic.version = 11 : i64} {
  func.func @_conv3d_tap_kernel(%arg0: i32, %arg1: i32, %arg2: i32, %arg3: memref<1x1x10x10x32xbf16, #tpu.memory_space<vmem>>, %arg4: memref<1x3x3x32x64xbf16, #tpu.memory_space<vmem>>, %arg5: memref<1x1x64xf32, #tpu.memory_space<vmem>>, %arg6: memref<1x1x6x6x64xf32, #tpu.memory_space<vmem>>, %arg7: memref<6x6x64xf32, #tpu.memory_space<vmem>>) attributes {dimension_semantics = [#tpu.dimension_semantics<parallel>, #tpu.dimension_semantics<parallel>, #tpu.dimension_semantics<arbitrary>], iteration_bounds = array<i64: 2, 6, 3>, scalar_prefetch = 0 : i64, scratch_operands = 1 : i64, tpu.core_type = #tpu.core_type<tc>, window_params = [{transform_indices = @transform_0, window_bounds = array<i64: 1, 1, 10, 10, 32>}, {transform_indices = @transform_1, window_bounds = array<i64: 1, 3, 3, 32, 64>}, {pipeline_mode = #tpu.pipeline_mode<synchronous>, transform_indices = @transform_2, window_bounds = array<i64: 1, 1, 64>}, {transform_indices = @transform_3, window_bounds = array<i64: 1, 1, 6, 6, 64>}]} {
    %c0_i32 = arith.constant 0 : i32
    %0 = arith.cmpi eq, %arg2, %c0_i32 : i32
    %1 = arith.extui %0 : i1 to i32
    %c0_i32_0 = arith.constant 0 : i32
    %2 = arith.cmpi ne, %1, %c0_i32_0 : i32
    scf.if %2 {
      %cst_102 = arith.constant 0.000000e+00 : f32
      %89 = vector.broadcast %cst_102 : f32 to vector<6x6x64xf32>
      %c0_103 = arith.constant 0 : index
      %c0_104 = arith.constant 0 : index
      %c0_105 = arith.constant 0 : index
      %90 = vector.load %arg7[%c0_103, %c0_104, %c0_105] : memref<6x6x64xf32, #tpu.memory_space<vmem>>, vector<6x6x64xf32>
      tpu.vector_store %arg7[%c0_103, %c0_104, %c0_105], %89 {strides = array<i32>} : memref<6x6x64xf32, #tpu.memory_space<vmem>>, vector<6x6x64xf32>,
    } else {
    }
    %c0 = arith.constant 0 : index
    %c0_1 = arith.constant 0 : index
    %c0_2 = arith.constant 0 : index
    %3 = vector.load %arg7[%c0, %c0_1, %c0_2] : memref<6x6x64xf32, #tpu.memory_space<vmem>>, vector<6x6x64xf32>
    %c0_3 = arith.constant 0 : index
    %c0_4 = arith.constant 0 : index
    %c0_5 = arith.constant 0 : index
    %c0_6 = arith.constant 0 : index
    %c0_7 = arith.constant 0 : index
    %4 = vector.load %arg3[%c0_3, %c0_4, %c0_5, %c0_6, %c0_7] : memref<1x1x10x10x32xbf16, #tpu.memory_space<vmem>>, vector<1x1x6x6x32xbf16>
    %5 = vector.shape_cast %4 : vector<1x1x6x6x32xbf16> to vector<6x6x32xbf16>
    %c0_8 = arith.constant 0 : index
    %c0_9 = arith.constant 0 : index
    %c0_10 = arith.constant 0 : index
    %c0_11 = arith.constant 0 : index
    %c0_12 = arith.constant 0 : index
    %6 = vector.load %arg4[%c0_8, %c0_9, %c0_10, %c0_11, %c0_12] : memref<1x3x3x32x64xbf16, #tpu.memory_space<vmem>>, vector<1x1x1x32x64xbf16>
    %7 = vector.shape_cast %6 : vector<1x1x1x32x64xbf16> to vector<32x64xbf16>
    %8 = vector.shape_cast %7 : vector<32x64xbf16> to vector<1x32x64xbf16>
    %9 = vector.shape_cast %8 : vector<1x32x64xbf16> to vector<1x32x64xbf16>
    %10 = vector.broadcast %9 : vector<1x32x64xbf16> to vector<6x32x64xbf16>
    "tpu.trace_start"() <{level = 10 : i32, message = "hwc,hco->hwo"}> : () -> ()
    %cst = arith.constant dense<0.000000e+00> : vector<6x6x64xf32>
    %11 = tpu.matmul %5, %10, %cst {dimension_numbers = #tpu.dot_dimension_numbers<[2], [1], [1], [2], [0, 0, 0, 1, 1, 2], [0], [0]>} : vector<6x6x32xbf16>, vector<6x32x64xbf16>, vector<6x6x64xf32> -> vector<6x6x64xf32>
    "tpu.trace_stop"() : () -> ()
    %12 = arith.addf %3, %11 : vector<6x6x64xf32>
    %c0_13 = arith.constant 0 : index
    %c0_14 = arith.constant 0 : index
    %c0_15 = arith.constant 0 : index
    %c2 = arith.constant 2 : index
    %c0_16 = arith.constant 0 : index
    %13 = vector.load %arg3[%c0_13, %c0_14, %c0_15, %c2, %c0_16] : memref<1x1x10x10x32xbf16, #tpu.memory_space<vmem>>, vector<1x1x6x6x32xbf16>
    %14 = vector.shape_cast %13 : vector<1x1x6x6x32xbf16> to vector<6x6x32xbf16>
    %c0_17 = arith.constant 0 : index
    %c0_18 = arith.constant 0 : index
    %c1 = arith.constant 1 : index
    %c0_19 = arith.constant 0 : index
    %c0_20 = arith.constant 0 : index
    %15 = vector.load %arg4[%c0_17, %c0_18, %c1, %c0_19, %c0_20] : memref<1x3x3x32x64xbf16, #tpu.memory_space<vmem>>, vector<1x1x1x32x64xbf16>
    %16 = vector.shape_cast %15 : vector<1x1x1x32x64xbf16> to vector<32x64xbf16>
    %17 = vector.shape_cast %16 : vector<32x64xbf16> to vector<1x32x64xbf16>
    %18 = vector.shape_cast %17 : vector<1x32x64xbf16> to vector<1x32x64xbf16>
    %19 = vector.broadcast %18 : vector<1x32x64xbf16> to vector<6x32x64xbf16>
    "tpu.trace_start"() <{level = 10 : i32, message = "hwc,hco->hwo"}> : () -> ()
    %cst_21 = arith.constant dense<0.000000e+00> : vector<6x6x64xf32>
    %20 = tpu.matmul %14, %19, %cst_21 {dimension_numbers = #tpu.dot_dimension_numbers<[2], [1], [1], [2], [0, 0, 0, 1, 1, 2], [0], [0]>} : vector<6x6x32xbf16>, vector<6x32x64xbf16>, vector<6x6x64xf32> -> vector<6x6x64xf32>
    "tpu.trace_stop"() : () -> ()
    %21 = arith.addf %12, %20 : vector<6x6x64xf32>
    %c0_22 = arith.constant 0 : index
    %c0_23 = arith.constant 0 : index
    %c0_24 = arith.constant 0 : index
    %c4 = arith.constant 4 : index
    %c0_25 = arith.constant 0 : index
    %22 = vector.load %arg3[%c0_22, %c0_23, %c0_24, %c4, %c0_25] : memref<1x1x10x10x32xbf16, #tpu.memory_space<vmem>>, vector<1x1x6x6x32xbf16>
    %23 = vector.shape_cast %22 : vector<1x1x6x6x32xbf16> to vector<6x6x32xbf16>
    %c0_26 = arith.constant 0 : index
    %c0_27 = arith.constant 0 : index
    %c2_28 = arith.constant 2 : index
    %c0_29 = arith.constant 0 : index
    %c0_30 = arith.constant 0 : index
    %24 = vector.load %arg4[%c0_26, %c0_27, %c2_28, %c0_29, %c0_30] : memref<1x3x3x32x64xbf16, #tpu.memory_space<vmem>>, vector<1x1x1x32x64xbf16>
    %25 = vector.shape_cast %24 : vector<1x1x1x32x64xbf16> to vector<32x64xbf16>
    %26 = vector.shape_cast %25 : vector<32x64xbf16> to vector<1x32x64xbf16>
    %27 = vector.shape_cast %26 : vector<1x32x64xbf16> to vector<1x32x64xbf16>
    %28 = vector.broadcast %27 : vector<1x32x64xbf16> to vector<6x32x64xbf16>
    "tpu.trace_start"() <{level = 10 : i32, message = "hwc,hco->hwo"}> : () -> ()
    %cst_31 = arith.constant dense<0.000000e+00> : vector<6x6x64xf32>
    %29 = tpu.matmul %23, %28, %cst_31 {dimension_numbers = #tpu.dot_dimension_numbers<[2], [1], [1], [2], [0, 0, 0, 1, 1, 2], [0], [0]>} : vector<6x6x32xbf16>, vector<6x32x64xbf16>, vector<6x6x64xf32> -> vector<6x6x64xf32>
    "tpu.trace_stop"() : () -> ()
    %30 = arith.addf %21, %29 : vector<6x6x64xf32>
    %c0_32 = arith.constant 0 : index
    %c0_33 = arith.constant 0 : index
    %c2_34 = arith.constant 2 : index
    %c0_35 = arith.constant 0 : index
    %c0_36 = arith.constant 0 : index
    %31 = vector.load %arg3[%c0_32, %c0_33, %c2_34, %c0_35, %c0_36] : memref<1x1x10x10x32xbf16, #tpu.memory_space<vmem>>, vector<1x1x6x6x32xbf16>
    %32 = vector.shape_cast %31 : vector<1x1x6x6x32xbf16> to vector<6x6x32xbf16>
    %c0_37 = arith.constant 0 : index
    %c1_38 = arith.constant 1 : index
    %c0_39 = arith.constant 0 : index
    %c0_40 = arith.constant 0 : index
    %c0_41 = arith.constant 0 : index
    %33 = vector.load %arg4[%c0_37, %c1_38, %c0_39, %c0_40, %c0_41] : memref<1x3x3x32x64xbf16, #tpu.memory_space<vmem>>, vector<1x1x1x32x64xbf16>
    %34 = vector.shape_cast %33 : vector<1x1x1x32x64xbf16> to vector<32x64xbf16>
    %35 = vector.shape_cast %34 : vector<32x64xbf16> to vector<1x32x64xbf16>
    %36 = vector.shape_cast %35 : vector<1x32x64xbf16> to vector<1x32x64xbf16>
    %37 = vector.broadcast %36 : vector<1x32x64xbf16> to vector<6x32x64xbf16>
    "tpu.trace_start"() <{level = 10 : i32, message = "hwc,hco->hwo"}> : () -> ()
    %cst_42 = arith.constant dense<0.000000e+00> : vector<6x6x64xf32>
    %38 = tpu.matmul %32, %37, %cst_42 {dimension_numbers = #tpu.dot_dimension_numbers<[2], [1], [1], [2], [0, 0, 0, 1, 1, 2], [0], [0]>} : vector<6x6x32xbf16>, vector<6x32x64xbf16>, vector<6x6x64xf32> -> vector<6x6x64xf32>
    "tpu.trace_stop"() : () -> ()
    %39 = arith.addf %30, %38 : vector<6x6x64xf32>
    %c0_43 = arith.constant 0 : index
    %c0_44 = arith.constant 0 : index
    %c2_45 = arith.constant 2 : index
    %c2_46 = arith.constant 2 : index
    %c0_47 = arith.constant 0 : index
    %40 = vector.load %arg3[%c0_43, %c0_44, %c2_45, %c2_46, %c0_47] : memref<1x1x10x10x32xbf16, #tpu.memory_space<vmem>>, vector<1x1x6x6x32xbf16>
    %41 = vector.shape_cast %40 : vector<1x1x6x6x32xbf16> to vector<6x6x32xbf16>
    %c0_48 = arith.constant 0 : index
    %c1_49 = arith.constant 1 : index
    %c1_50 = arith.constant 1 : index
    %c0_51 = arith.constant 0 : index
    %c0_52 = arith.constant 0 : index
    %42 = vector.load %arg4[%c0_48, %c1_49, %c1_50, %c0_51, %c0_52] : memref<1x3x3x32x64xbf16, #tpu.memory_space<vmem>>, vector<1x1x1x32x64xbf16>
    %43 = vector.shape_cast %42 : vector<1x1x1x32x64xbf16> to vector<32x64xbf16>
    %44 = vector.shape_cast %43 : vector<32x64xbf16> to vector<1x32x64xbf16>
    %45 = vector.shape_cast %44 : vector<1x32x64xbf16> to vector<1x32x64xbf16>
    %46 = vector.broadcast %45 : vector<1x32x64xbf16> to vector<6x32x64xbf16>
    "tpu.trace_start"() <{level = 10 : i32, message = "hwc,hco->hwo"}> : () -> ()
    %cst_53 = arith.constant dense<0.000000e+00> : vector<6x6x64xf32>
    %47 = tpu.matmul %41, %46, %cst_53 {dimension_numbers = #tpu.dot_dimension_numbers<[2], [1], [1], [2], [0, 0, 0, 1, 1, 2], [0], [0]>} : vector<6x6x32xbf16>, vector<6x32x64xbf16>, vector<6x6x64xf32> -> vector<6x6x64xf32>
    "tpu.trace_stop"() : () -> ()
    %48 = arith.addf %39, %47 : vector<6x6x64xf32>
    %c0_54 = arith.constant 0 : index
    %c0_55 = arith.constant 0 : index
    %c2_56 = arith.constant 2 : index
    %c4_57 = arith.constant 4 : index
    %c0_58 = arith.constant 0 : index
    %49 = vector.load %arg3[%c0_54, %c0_55, %c2_56, %c4_57, %c0_58] : memref<1x1x10x10x32xbf16, #tpu.memory_space<vmem>>, vector<1x1x6x6x32xbf16>
    %50 = vector.shape_cast %49 : vector<1x1x6x6x32xbf16> to vector<6x6x32xbf16>
    %c0_59 = arith.constant 0 : index
    %c1_60 = arith.constant 1 : index
    %c2_61 = arith.constant 2 : index
    %c0_62 = arith.constant 0 : index
    %c0_63 = arith.constant 0 : index
    %51 = vector.load %arg4[%c0_59, %c1_60, %c2_61, %c0_62, %c0_63] : memref<1x3x3x32x64xbf16, #tpu.memory_space<vmem>>, vector<1x1x1x32x64xbf16>
    %52 = vector.shape_cast %51 : vector<1x1x1x32x64xbf16> to vector<32x64xbf16>
    %53 = vector.shape_cast %52 : vector<32x64xbf16> to vector<1x32x64xbf16>
    %54 = vector.shape_cast %53 : vector<1x32x64xbf16> to vector<1x32x64xbf16>
    %55 = vector.broadcast %54 : vector<1x32x64xbf16> to vector<6x32x64xbf16>
    "tpu.trace_start"() <{level = 10 : i32, message = "hwc,hco->hwo"}> : () -> ()
    %cst_64 = arith.constant dense<0.000000e+00> : vector<6x6x64xf32>
    %56 = tpu.matmul %50, %55, %cst_64 {dimension_numbers = #tpu.dot_dimension_numbers<[2], [1], [1], [2], [0, 0, 0, 1, 1, 2], [0], [0]>} : vector<6x6x32xbf16>, vector<6x32x64xbf16>, vector<6x6x64xf32> -> vector<6x6x64xf32>
    "tpu.trace_stop"() : () -> ()
    %57 = arith.addf %48, %56 : vector<6x6x64xf32>
    %c0_65 = arith.constant 0 : index
    %c0_66 = arith.constant 0 : index
    %c4_67 = arith.constant 4 : index
    %c0_68 = arith.constant 0 : index
    %c0_69 = arith.constant 0 : index
    %58 = vector.load %arg3[%c0_65, %c0_66, %c4_67, %c0_68, %c0_69] : memref<1x1x10x10x32xbf16, #tpu.memory_space<vmem>>, vector<1x1x6x6x32xbf16>
    %59 = vector.shape_cast %58 : vector<1x1x6x6x32xbf16> to vector<6x6x32xbf16>
    %c0_70 = arith.constant 0 : index
    %c2_71 = arith.constant 2 : index
    %c0_72 = arith.constant 0 : index
    %c0_73 = arith.constant 0 : index
    %c0_74 = arith.constant 0 : index
    %60 = vector.load %arg4[%c0_70, %c2_71, %c0_72, %c0_73, %c0_74] : memref<1x3x3x32x64xbf16, #tpu.memory_space<vmem>>, vector<1x1x1x32x64xbf16>
    %61 = vector.shape_cast %60 : vector<1x1x1x32x64xbf16> to vector<32x64xbf16>
    %62 = vector.shape_cast %61 : vector<32x64xbf16> to vector<1x32x64xbf16>
    %63 = vector.shape_cast %62 : vector<1x32x64xbf16> to vector<1x32x64xbf16>
    %64 = vector.broadcast %63 : vector<1x32x64xbf16> to vector<6x32x64xbf16>
    "tpu.trace_start"() <{level = 10 : i32, message = "hwc,hco->hwo"}> : () -> ()
    %cst_75 = arith.constant dense<0.000000e+00> : vector<6x6x64xf32>
    %65 = tpu.matmul %59, %64, %cst_75 {dimension_numbers = #tpu.dot_dimension_numbers<[2], [1], [1], [2], [0, 0, 0, 1, 1, 2], [0], [0]>} : vector<6x6x32xbf16>, vector<6x32x64xbf16>, vector<6x6x64xf32> -> vector<6x6x64xf32>
    "tpu.trace_stop"() : () -> ()
    %66 = arith.addf %57, %65 : vector<6x6x64xf32>
    %c0_76 = arith.constant 0 : index
    %c0_77 = arith.constant 0 : index
    %c4_78 = arith.constant 4 : index
    %c2_79 = arith.constant 2 : index
    %c0_80 = arith.constant 0 : index
    %67 = vector.load %arg3[%c0_76, %c0_77, %c4_78, %c2_79, %c0_80] : memref<1x1x10x10x32xbf16, #tpu.memory_space<vmem>>, vector<1x1x6x6x32xbf16>
    %68 = vector.shape_cast %67 : vector<1x1x6x6x32xbf16> to vector<6x6x32xbf16>
    %c0_81 = arith.constant 0 : index
    %c2_82 = arith.constant 2 : index
    %c1_83 = arith.constant 1 : index
    %c0_84 = arith.constant 0 : index
    %c0_85 = arith.constant 0 : index
    %69 = vector.load %arg4[%c0_81, %c2_82, %c1_83, %c0_84, %c0_85] : memref<1x3x3x32x64xbf16, #tpu.memory_space<vmem>>, vector<1x1x1x32x64xbf16>
    %70 = vector.shape_cast %69 : vector<1x1x1x32x64xbf16> to vector<32x64xbf16>
    %71 = vector.shape_cast %70 : vector<32x64xbf16> to vector<1x32x64xbf16>
    %72 = vector.shape_cast %71 : vector<1x32x64xbf16> to vector<1x32x64xbf16>
    %73 = vector.broadcast %72 : vector<1x32x64xbf16> to vector<6x32x64xbf16>
    "tpu.trace_start"() <{level = 10 : i32, message = "hwc,hco->hwo"}> : () -> ()
    %cst_86 = arith.constant dense<0.000000e+00> : vector<6x6x64xf32>
    %74 = tpu.matmul %68, %73, %cst_86 {dimension_numbers = #tpu.dot_dimension_numbers<[2], [1], [1], [2], [0, 0, 0, 1, 1, 2], [0], [0]>} : vector<6x6x32xbf16>, vector<6x32x64xbf16>, vector<6x6x64xf32> -> vector<6x6x64xf32>
    "tpu.trace_stop"() : () -> ()
    %75 = arith.addf %66, %74 : vector<6x6x64xf32>
    %c0_87 = arith.constant 0 : index
    %c0_88 = arith.constant 0 : index
    %c4_89 = arith.constant 4 : index
    %c4_90 = arith.constant 4 : index
    %c0_91 = arith.constant 0 : index
    %76 = vector.load %arg3[%c0_87, %c0_88, %c4_89, %c4_90, %c0_91] : memref<1x1x10x10x32xbf16, #tpu.memory_space<vmem>>, vector<1x1x6x6x32xbf16>
    %77 = vector.shape_cast %76 : vector<1x1x6x6x32xbf16> to vector<6x6x32xbf16>
    %c0_92 = arith.constant 0 : index
    %c2_93 = arith.constant 2 : index
    %c2_94 = arith.constant 2 : index
    %c0_95 = arith.constant 0 : index
    %c0_96 = arith.constant 0 : index
    %78 = vector.load %arg4[%c0_92, %c2_93, %c2_94, %c0_95, %c0_96] : memref<1x3x3x32x64xbf16, #tpu.memory_space<vmem>>, vector<1x1x1x32x64xbf16>
    %79 = vector.shape_cast %78 : vector<1x1x1x32x64xbf16> to vector<32x64xbf16>
    %80 = vector.shape_cast %79 : vector<32x64xbf16> to vector<1x32x64xbf16>
    %81 = vector.shape_cast %80 : vector<1x32x64xbf16> to vector<1x32x64xbf16>
    %82 = vector.broadcast %81 : vector<1x32x64xbf16> to vector<6x32x64xbf16>
    "tpu.trace_start"() <{level = 10 : i32, message = "hwc,hco->hwo"}> : () -> ()
    %cst_97 = arith.constant dense<0.000000e+00> : vector<6x6x64xf32>
    %83 = tpu.matmul %77, %82, %cst_97 {dimension_numbers = #tpu.dot_dimension_numbers<[2], [1], [1], [2], [0, 0, 0, 1, 1, 2], [0], [0]>} : vector<6x6x32xbf16>, vector<6x32x64xbf16>, vector<6x6x64xf32> -> vector<6x6x64xf32>
    "tpu.trace_stop"() : () -> ()
    %84 = arith.addf %75, %83 : vector<6x6x64xf32>
    %c0_98 = arith.constant 0 : index
    %c0_99 = arith.constant 0 : index
    %c0_100 = arith.constant 0 : index
    %85 = vector.load %arg7[%c0_98, %c0_99, %c0_100] : memref<6x6x64xf32, #tpu.memory_space<vmem>>, vector<6x6x64xf32>
    tpu.vector_store %arg7[%c0_98, %c0_99, %c0_100], %84 {strides = array<i32>} : memref<6x6x64xf32, #tpu.memory_space<vmem>>, vector<6x6x64xf32>,
    %c2_i32 = arith.constant 2 : i32
    %86 = arith.cmpi eq, %arg2, %c2_i32 : i32
    %87 = arith.extui %86 : i1 to i32
    %c0_i32_101 = arith.constant 0 : i32
    %88 = arith.cmpi ne, %87, %c0_i32_101 : i32
    scf.if %88 {
      %c0_102 = arith.constant 0 : index
      %c0_103 = arith.constant 0 : index
      %c0_104 = arith.constant 0 : index
      %89 = vector.load %arg7[%c0_102, %c0_103, %c0_104] : memref<6x6x64xf32, #tpu.memory_space<vmem>>, vector<6x6x64xf32>
      %c0_105 = arith.constant 0 : index
      %c0_106 = arith.constant 0 : index
      %c0_107 = arith.constant 0 : index
      %90 = vector.load %arg5[%c0_105, %c0_106, %c0_107] : memref<1x1x64xf32, #tpu.memory_space<vmem>>, vector<1x1x64xf32>
      %91 = vector.broadcast %90 : vector<1x1x64xf32> to vector<6x6x64xf32>
      %92 = arith.addf %89, %91 : vector<6x6x64xf32>
      %cst_108 = arith.constant 5.000000e-01 : f32
      %93 = vector.broadcast %cst_108 : f32 to vector<6x6x64xf32>
      %94 = arith.mulf %92, %93 : vector<6x6x64xf32>
      %95 = arith.mulf %92, %92 : vector<6x6x64xf32>
      %96 = arith.mulf %95, %92 : vector<6x6x64xf32>
      %cst_109 = arith.constant 4.471500e-02 : f32
      %97 = vector.broadcast %cst_109 : f32 to vector<6x6x64xf32>
      %98 = arith.mulf %96, %97 : vector<6x6x64xf32>
      %99 = arith.addf %92, %98 : vector<6x6x64xf32>
      %cst_110 = arith.constant 0.797884583 : f32
      %100 = vector.broadcast %cst_110 : f32 to vector<6x6x64xf32>
      %101 = arith.mulf %99, %100 : vector<6x6x64xf32>
      %102 = math.tanh %101 : vector<6x6x64xf32>
      %cst_111 = arith.constant 1.000000e+00 : f32
      %103 = vector.broadcast %cst_111 : f32 to vector<6x6x64xf32>
      %104 = arith.addf %102, %103 : vector<6x6x64xf32>
      %105 = arith.mulf %94, %104 : vector<6x6x64xf32>
      %c0_112 = arith.constant 0 : index
      %c0_113 = arith.constant 0 : index
      %c0_114 = arith.constant 0 : index
      %c0_115 = arith.constant 0 : index
      %c0_116 = arith.constant 0 : index
      %106 = vector.load %arg6[%c0_112, %c0_113, %c0_114, %c0_115, %c0_116] : memref<1x1x6x6x64xf32, #tpu.memory_space<vmem>>, vector<1x1x6x6x64xf32>
      %107 = vector.shape_cast %106 : vector<1x1x6x6x64xf32> to vector<6x6x64xf32>
      %108 = vector.shape_cast %105 : vector<6x6x64xf32> to vector<1x1x6x6x64xf32>
      tpu.vector_store %arg6[%c0_112, %c0_113, %c0_114, %c0_115, %c0_116], %108 {strides = array<i32>} : memref<1x1x6x6x64xf32, #tpu.memory_space<vmem>>, vector<1x1x6x6x64xf32>,
    } else {
    }
    return
  }
  func.func @transform_0(%arg0: i32, %arg1: i32, %arg2: i32) -> (i32, i32, i32, i32, i32) {
    %c2_i32 = arith.constant 2 : i32
    %0 = arith.muli %arg2, %c2_i32 : i32
    %1 = arith.addi %arg1, %0 : i32
    %c0_i32 = arith.constant 0 : i32
    %c0_i32_0 = arith.constant 0 : i32
    %c0_i32_1 = arith.constant 0 : i32
    %c0_i32_2 = arith.constant 0 : i32
    return %arg0, %1, %c0_i32, %c0_i32_0, %c0_i32_1 : i32, i32, i32, i32, i32
  }
  func.func @transform_1(%arg0: i32, %arg1: i32, %arg2: i32) -> (i32, i32, i32, i32, i32) {
    %c0_i32 = arith.constant 0 : i32
    %c0_i32_0 = arith.constant 0 : i32
    %c0_i32_1 = arith.constant 0 : i32
    %c0_i32_2 = arith.constant 0 : i32
    %c0_i32_3 = arith.constant 0 : i32
    return %arg2, %c0_i32, %c0_i32_0, %c0_i32_1, %c0_i32_2 : i32, i32, i32, i32, i32
  }
  func.func @transform_2(%arg0: i32, %arg1: i32, %arg2: i32) -> (i32, i32, i32) {
    %c0_i32 = arith.constant 0 : i32
    %c0_i32_0 = arith.constant 0 : i32
    %c0_i32_1 = arith.constant 0 : i32
    %c0_i32_2 = arith.constant 0 : i32
    return %c0_i32, %c0_i32_0, %c0_i32_1 : i32, i32, i32
  }
  func.func @transform_3(%arg0: i32, %arg1: i32, %arg2: i32) -> (i32, i32, i32, i32, i32) {
    %c0_i32 = arith.constant 0 : i32
    %c0_i32_0 = arith.constant 0 : i32
    %c0_i32_1 = arith.constant 0 : i32
    %c0_i32_2 = arith.constant 0 : i32
    return %arg0, %arg1, %c0_i32, %c0_i32_0, %c0_i32_1 : i32, i32, i32, i32, i32
  }
}

</mosaic_0001>

<llo_original>
// kernel: model_forward.2
$region0: #{model_forward.2}
  #allocation0 [shape = 'u32[]', space=smem, size = 0x4, offset = 0x4, fixed_abs, tag = 'smem constant byte address 0x4 - core index']
  #allocation1 [shape = 'u32[144,128]{1,0:T(1,128)}', space=vmem, size = 0x12000, scoped, tag = 'internal scratch']
  #allocation2 [shape = 'f32[8,8,32]{2,1,0:T(8,128)}', space=vmem, size = 0x8000, scoped, tag = 'scratch operand']
  %s0 = inlined_call_operand.vmem [shape: bf16[2,12,12,12,1], index: 0, kind: input, shape index: {}]
  %s1 = inlined_call_operand.vmem [shape: bf16[5,5,5,1,32], index: 1, kind: input, shape index: {}]
  %s2 = inlined_call_operand.vmem [shape: bf16[2,8,8,8,32], index: 2, kind: output, shape index: {}]
  %s3 = sld [smem:[#allocation0]]
  $region49: #{model_forward.2} parent=0
    _
  %s5 = ssub.s32 1, %s3
  %s6 = scalar_select 0, %s5, %s3
  loop: start=0, step=1, limit=82
  $region2: #{model_forward.2} parent=0 // loop_pre_header
    _
  $region3: #{model_forward.2} parent=0 // loop_header
    %s8 = sphi 0, %s12
    %p9 = scmp.ge.s32.totalorder %s8, 82
    %s15 = sphi 0, %s34
    %s16 = sphi 0, %s30
    %s17 = sphi 0, %s26
    %s18 = sphi 0, %s15
    %s19 = sphi 0, %s16
    %s20 = sphi 0, %s17
    %s21 = sphi 0, %s18
    %s22 = sphi 0, %s19
    %s23 = sphi 0, %s20
    %s41 = sphi 0, %s43
    %s44 = sphi 0, %s41
    %s45 = sphi 0, %s44
    %s61 = sphi 0, %s45
    %s67 = sphi 0, %s69
    %s70 = sphi 0, %s67
    %s71 = sphi 0, %s70
    %s87 = sphi 0, %s71
    %s95 = sphi 0, %s97
    %s98 = sphi 0, %s95
    %s99 = sphi 0, %s98
    %s115 = sphi 0, %s99
  $region4: #{model_forward.2} parent=0 // loop_header_branch
    %11 = sbr.rel (%p9) target = $region8
  $region5: #{model_forward.2} parent=0 // loop_body
    %s13 = ssub.s32 %s8, 1
    %s14 = ssub.s32 %s8, 2
    %s24 = sadd.s32 1, %s17
    %p25 = scmp.ge.s32.totalorder %s24, 5
    %s26 = scalar_select %p25, 0, %s24
    %s27 = sadd.s32 1, %s16
    %s28 = scalar_select %p25, %s27, %s16
    %p29 = scmp.ge.s32.totalorder %s28, 8
    %s30 = scalar_select %p29, 0, %s28
    %s31 = sadd.s32 1, %s15
    %s32 = scalar_select %p29, %s31, %s15
    %p33 = scmp.ge.s32.totalorder %s32, 2
    %s34 = scalar_select %p33, 0, %s32
    %s35 = sadd.s32 %s16, %s17
    %s36 = sadd.s32 %s30, %s26
    %s37 = ssub.s32 %s15, %s34
    %s38 = ssub.s32 %s35, %s36
    %s39 = sor.u32 %s37, %s38
    %p40 = scmp.eq.s32.totalorder %s39, 0
    %s42 = sadd.s32 %s41, 1
    %s43 = scalar_select %p40, %s41, %s42
    %p46 = pneg %p40
    %p47 = scmp.eq.s32.totalorder %s8, 79
    %p48 = por %p46, %p47
    %p49 = scmp.ne.s32.totalorder %s41, %s44
    %p50 = scmp.eq.s32.totalorder %s8, 0
    %p51 = por %p49, %p50
    %p52 = scmp.ne.s32.totalorder %s41, %s44
    %p53 = scmp.eq.s32.totalorder %s13, 79
    %p54 = por %p52, %p53
    %p55 = scmp.ne.s32.totalorder %s44, %s45
    %p56 = scmp.eq.s32.totalorder %s13, 0
    %p57 = por %p55, %p56
    %p58 = scmp.ne.s32.totalorder %s44, %s45
    %p59 = scmp.eq.s32.totalorder %s14, 79
    %p60 = por %p58, %p59
    %p62 = scmp.ne.s32.totalorder %s45, %s61
    %p63 = scmp.eq.s32.totalorder %s14, 0
    %p64 = por %p62, %p63
    %s65 = ssub.s32 %s17, %s26
    %p66 = scmp.eq.s32.totalorder %s65, 0
    %s68 = sadd.s32 %s67, 1
    %s69 = scalar_select %p66, %s67, %s68
    %p72 = pneg %p66
    %p73 = scmp.eq.s32.totalorder %s8, 79
    %p74 = por %p72, %p73
    %p75 = scmp.ne.s32.totalorder %s67, %s70
    %p76 = scmp.eq.s32.totalorder %s8, 0
    %p77 = por %p75, %p76
    %p78 = scmp.ne.s32.totalorder %s67, %s70
    %p79 = scmp.eq.s32.totalorder %s13, 79
    %p80 = por %p78, %p79
    %p81 = scmp.ne.s32.totalorder %s70, %s71
    %p82 = scmp.eq.s32.totalorder %s13, 0
    %p83 = por %p81, %p82
    %p84 = scmp.ne.s32.totalorder %s70, %s71
    %p85 = scmp.eq.s32.totalorder %s14, 79
    %p86 = por %p84, %p85
    %p88 = scmp.ne.s32.totalorder %s71, %s87
    %p89 = scmp.eq.s32.totalorder %s14, 0
    %p90 = por %p88, %p89
    %s91 = ssub.s32 %s15, %s34
    %s92 = ssub.s32 %s16, %s30
    %s93 = sor.u32 %s91, %s92
    %p94 = scmp.eq.s32.totalorder %s93, 0
    %s96 = sadd.s32 %s95, 1
    %s97 = scalar_select %p94, %s95, %s96
    %p100 = pneg %p94
    %p101 = scmp.eq.s32.totalorder %s8, 79
    %p102 = por %p100, %p101
    %p103 = scmp.ne.s32.totalorder %s95, %s98
    %p104 = scmp.eq.s32.totalorder %s8, 0
    %p105 = por %p103, %p104
    %p106 = scmp.ne.s32.totalorder %s95, %s98
    %p107 = scmp.eq.s32.totalorder %s13, 79
    %p108 = por %p106, %p107
    %p109 = scmp.ne.s32.totalorder %s98, %s99
    %p110 = scmp.eq.s32.totalorder %s13, 0
    %p111 = por %p109, %p110
    %p112 = scmp.ne.s32.totalorder %s98, %s99
    %p113 = scmp.eq.s32.totalorder %s14, 79
    %p114 = por %p112, %p113
    %p116 = scmp.ne.s32.totalorder %s99, %s115
    %p117 = scmp.eq.s32.totalorder %s14, 0
    %p118 = por %p116, %p117
    %p119 = scmp.le.s32.totalorder 1, %s8
    %p120 = scmp.lt.s32.totalorder %s8, 81
    %p121 = pnand %p119, %p120
    %p122 = pneg %p121
    // Predicated region
    $region9: #{model_forward.2} parent=5 // pred_check
      _
    $region10: #{model_forward.2} parent=5 // pred_check_branch
      %124 = sbr.rel (%p121) target = $region12
    $region11: #{model_forward.2} parent=5 // pred_region
      %s125 = ssub.s32 %s8, 1
    $region12: #{model_forward.2} parent=5 // pred_fallthru
      _
    %p126 = scmp.lt.s32.totalorder %s8, 80
    // Predicated region
    $region13: #{model_forward.2} parent=5 // pred_check
      %p127 = pneg %p126
    $region14: #{model_forward.2} parent=5 // pred_check_branch
      %129 = sbr.rel (%p127) target = $region16
    $region15: #{model_forward.2} parent=5 // pred_region
      // Predicated region
      $region17: #{model_forward.2} parent=15 // pred_check
        %p130 = pneg %p51
      $region18: #{model_forward.2} parent=15 // pred_check_branch
        %132 = sbr.rel (%p130) target = $region20
      $region19: #{model_forward.2} parent=15 // pred_region
        %s133 = sadd.s32 %s16, %s17
        %p134 = scmp.lt.s32.totalorder %s15, 1
        %s135 = scalar_select %p134, %s15, 1
        %p136 = scmp.lt.s32.totalorder %s133, 11
        %s137 = scalar_select %p136, %s133, 11
        %s138 = smul.addr %s137, 24
        %s139 = smul.addr %s135, 288
        %s140 = sadd.s32 %s138, %s139
        %s141 = smul.addr %s140, 4
        %s142 = scalar_lea.vmem %s0, %s141
        %s143 = sadd.s32 %s16, %s17
      $region20: #{model_forward.2} parent=15 // pred_fallthru
        _
      // Predicated region
      $region21: #{model_forward.2} parent=15 // pred_check
        %p144 = pneg %p77
      $region22: #{model_forward.2} parent=15 // pred_check_branch
        %146 = sbr.rel (%p144) target = $region24
      $region23: #{model_forward.2} parent=15 // pred_region
        %p147 = scmp.lt.s32.totalorder %s17, 4
        %s148 = scalar_select %p147, %s17, 4
        %s149 = smul.addr %s148, 25
        %s150 = scalar_lea.vmem %s1, %s149
      $region24: #{model_forward.2} parent=15 // pred_fallthru
        _
    $region16: #{model_forward.2} parent=5 // pred_fallthru
      _
    %p151 = scmp.le.s32.totalorder 1, %s8
    %p152 = scmp.lt.s32.totalorder %s8, 81
    %p153 = pnand %p151, %p152
    %p154 = pneg %p153
    // Predicated region
    $region25: #{model_forward.2} parent=5 // pred_check
      _
    $region26: #{model_forward.2} parent=5 // pred_check_branch
      %156 = sbr.rel (%p153) target = $region28
    $region27: #{model_forward.2} parent=5 // pred_region
      %s157 = ssub.s32 %s8, 1
      %s158 = sadd.s32 %s19, %s20
      %p159 = scmp.lt.s32.totalorder %s18, 1
      %s160 = scalar_select %p159, %s18, 1
      %p161 = scmp.lt.s32.totalorder %s158, 11
      %s162 = scalar_select %p161, %s158, 11
      %s163 = smul.addr %s162, 24
      %s164 = smul.addr %s160, 288
      %s165 = sadd.s32 %s163, %s164
      %s166 = smul.addr %s165, 4
      %s167 = scalar_lea.vmem %s0, %s166
      %p168 = pneg %p57
      %p169 = pneg %p54
      %p170 = scmp.lt.s32.totalorder %s20, 4
      %s171 = scalar_select %p170, %s20, 4
      %s172 = smul.addr %s171, 25
      %s173 = scalar_lea.vmem %s1, %s172
      %p174 = pneg %p83
      %p175 = pneg %p80
      %p176 = pneg %p111
      %p177 = pneg %p108
      %p178 = scmp.lt.s32.totalorder %s18, 1
      %s179 = scalar_select %p178, %s18, 1
      %p180 = scmp.lt.s32.totalorder %s19, 7
      %s181 = scalar_select %p180, %s19, 7
      %s182 = smul.addr %s181, 8
      %s183 = smul.addr %s179, 64
      %s184 = sadd.s32 %s182, %s183
      %s185 = smul.addr %s184, 4
      %s186 = scalar_lea.vmem %s2, %s185
      %s187 = sadd.s32 %s19, %s20
      %p188 = scmp.lt.s32.totalorder %s18, 1
      %s189 = scalar_select %p188, %s18, 1
      %p190 = scmp.lt.s32.totalorder %s187, 11
      %s191 = scalar_select %p190, %s187, 11
      %s192 = smul.addr %s191, 24
      %s193 = smul.addr %s189, 288
      %s194 = sadd.s32 %s192, %s193
      %s195 = smul.addr %s194, 4
      %s196 = scalar_lea.vmem %s0, %s195
      %s197 = sadd.s32 %s19, %s20
      %p198 = scmp.lt.s32.totalorder %s20, 4
      %s199 = scalar_select %p198, %s20, 4
      %s200 = smul.addr %s199, 25
      %s201 = scalar_lea.vmem %s1, %s200
      %p202 = scmp.lt.s32.totalorder %s18, 1
      %s203 = scalar_select %p202, %s18, 1
      %p204 = scmp.lt.s32.totalorder %s19, 7
      %s205 = scalar_select %p204, %s19, 7
      %s206 = smul.addr %s205, 8
      %s207 = smul.addr %s203, 64
      %s208 = sadd.s32 %s206, %s207
      %s209 = smul.addr %s208, 4
      %s210 = scalar_lea.vmem %s2, %s209
      %p211 = scmp.eq.s32.totalorder %s20, 0
      // Predicated region
      $region29: #{model_forward.2} parent=27 // pred_check
        %p212 = pneg %p211
      $region30: #{model_forward.2} parent=27 // pred_check_branch
        %214 = sbr.rel (%p212) target = $region32
      $region31: #{model_forward.2} parent=27 // pred_region
        %vm215 = vcmask 261120
        %216 = vst.msk [vmem:[#allocation2] sm:$0xff] %vm215, 0.0
        %217 = vst.msk [vmem:[#allocation2 + $0x8] sm:$0xff] %vm215, 0.0
        %218 = vst.msk [vmem:[#allocation2 + $0x10] sm:$0xff] %vm215, 0.0
        %219 = vst.msk [vmem:[#allocation2 + $0x18] sm:$0xff] %vm215, 0.0
        %220 = vst.msk [vmem:[#allocation2 + $0x20] sm:$0xff] %vm215, 0.0
        %221 = vst.msk [vmem:[#allocation2 + $0x28] sm:$0xff] %vm215, 0.0
        %222 = vst.msk [vmem:[#allocation2 + $0x30] sm:$0xff] %vm215, 0.0
        %223 = vst.msk [vmem:[#allocation2 + $0x38] sm:$0xff] %vm215, 0.0
      $region32: #{model_forward.2} parent=27 // pred_fallthru
        _
      %v224 = vld [vmem:[#allocation2] sm:$0xff]
      %v225 = vld [vmem:[#allocation2 + $0x8] sm:$0xff]
      %v226 = vld [vmem:[#allocation2 + $0x10] sm:$0xff]
      %v227 = vld [vmem:[#allocation2 + $0x18] sm:$0xff]
      %v228 = vld [vmem:[#allocation2 + $0x20] sm:$0xff]
      %v229 = vld [vmem:[#allocation2 + $0x28] sm:$0xff]
      %v230 = vld [vmem:[#allocation2 + $0x30] sm:$0xff]
      %v231 = vld [vmem:[#allocation2 + $0x38] sm:$0xff]
      %v232 = vld [vmem:[%s196] sm:$0xf]
      %v233 = vld [vmem:[%s196 + $0x8] sm:$0xf]
      %v234 = vld [vmem:[%s196 + $0x10] sm:$0xf]
      %v235 = vld [vmem:[%s196 + $0x18] sm:$0xf]
      %v236 = vld [vmem:[%s196 + $0x20] sm:$0xf]
      %v237 = vld [vmem:[%s196 + $0x28] sm:$0xf]
      %v238 = vld [vmem:[%s196 + $0x30] sm:$0xf]
      %v239 = vld [vmem:[%s196 + $0x38] sm:$0xf]
      %v240 = vld [vmem:[%s201] sm:$0x1]
      %v241 = vunpack.c.l.bf16 %v232
      %v242 = vunpack.c.l.bf16 %v233
      %v243 = vunpack.c.l.bf16 %v234
      %v244 = vunpack.c.l.bf16 %v235
      %v245 = vunpack.c.l.bf16 %v236
      %v246 = vunpack.c.l.bf16 %v237
      %v247 = vunpack.c.l.bf16 %v238
      %v248 = vunpack.c.l.bf16 %v239
      %v249 = vunpack.c.l.bf16 %v240
      %251 = vset.pattern.permute.xlu0 0
      %252 = vperm.xlu0 %251, %v241
      %v253 = vpop.permute.xlu0 %252
      %256 = vset.pattern.permute.xlu0 0
      %257 = vperm.xlu0 %256, %v242
      %v258 = vpop.permute.xlu0 %257
      %261 = vset.pattern.permute.xlu0 0
      %262 = vperm.xlu0 %261, %v243
      %v263 = vpop.permute.xlu0 %262
      %266 = vset.pattern.permute.xlu0 0
      %267 = vperm.xlu0 %266, %v244
      %v268 = vpop.permute.xlu0 %267
      %271 = vset.pattern.permute.xlu0 0
      %272 = vperm.xlu0 %271, %v245
      %v273 = vpop.permute.xlu0 %272
      %276 = vset.pattern.permute.xlu0 0
      %277 = vperm.xlu0 %276, %v246
      %v278 = vpop.permute.xlu0 %277
      %281 = vset.pattern.permute.xlu0 0
      %282 = vperm.xlu0 %281, %v247
      %v283 = vpop.permute.xlu0 %282
      %286 = vset.pattern.permute.xlu0 0
      %287 = vperm.xlu0 %286, %v248
      %v288 = vpop.permute.xlu0 %287
      %v290 = vlaneseq
      %v291 = vshrl.u32 %v290, 7
      %v292 = vsub.s32 0, %v291
      %v293 = vrot.slane %v249, %v292
      %v294 = vmul.f32 %v253, %v293
      %v295 = vmul.f32 %v258, %v293
      %v296 = vmul.f32 %v263, %v293
      %v297 = vmul.f32 %v268, %v293
      %v298 = vmul.f32 %v273, %v293
      %v299 = vmul.f32 %v278, %v293
      %v300 = vmul.f32 %v283, %v293
      %v301 = vmul.f32 %v288, %v293
      %v302 = vadd.f32 %v224, %v294
      %v303 = vadd.f32 %v225, %v295
      %v304 = vadd.f32 %v226, %v296
      %v305 = vadd.f32 %v227, %v297
      %v306 = vadd.f32 %v228, %v298
      %v307 = vadd.f32 %v229, %v299
      %v308 = vadd.f32 %v230, %v300
      %v309 = vadd.f32 %v231, %v301
      %v310 = vld [vmem:[%s196] sm:$0xf]
      %v311 = vld [vmem:[%s196 + $0x4] sm:$0x1]
      %v312 = vld [vmem:[%s196 + $0x8] sm:$0xf]
      %v313 = vld [vmem:[%s196 + $0xc] sm:$0x1]
      %v314 = vld [vmem:[%s196 + $0x10] sm:$0xf]
      %v315 = vld [vmem:[%s196 + $0x14] sm:$0x1]
      %v316 = vld [vmem:[%s196 + $0x18] sm:$0xf]
      %v317 = vld [vmem:[%s196 + $0x1c] sm:$0x1]
      %v318 = vld [vmem:[%s196 + $0x20] sm:$0xf]
      %v319 = vld [vmem:[%s196 + $0x24] sm:$0x1]
      %v320 = vld [vmem:[%s196 + $0x28] sm:$0xf]
      %v321 = vld [vmem:[%s196 + $0x2c] sm:$0x1]
      %v322 = vld [vmem:[%s196 + $0x30] sm:$0xf]
      %v323 = vld [vmem:[%s196 + $0x34] sm:$0x1]
      %v324 = vld [vmem:[%s196 + $0x38] sm:$0xf]
      %v325 = vld [vmem:[%s196 + $0x3c] sm:$0x1]
      %s326 = scalar_lea.vmem %s201, 1
      %v327 = vld [vmem:[%s326] sm:$0x1]
      %v328 = vunpack.c.l.bf16 %v310
      %v329 = vunpack.c.l.bf16 %v311
      %v330 = vunpack.c.l.bf16 %v312
      %v331 = vunpack.c.l.bf16 %v313
      %v332 = vunpack.c.l.bf16 %v314
      %v333 = vunpack.c.l.bf16 %v315
      %v334 = vunpack.c.l.bf16 %v316
      %v335 = vunpack.c.l.bf16 %v317
      %v336 = vunpack.c.l.bf16 %v318
      %v337 = vunpack.c.l.bf16 %v319
      %v338 = vunpack.c.l.bf16 %v320
      %v339 = vunpack.c.l.bf16 %v321
      %v340 = vunpack.c.l.bf16 %v322
      %v341 = vunpack.c.l.bf16 %v323
      %v342 = vunpack.c.l.bf16 %v324
      %v343 = vunpack.c.l.bf16 %v325
      %v344 = vunpack.c.l.bf16 %v327
      %346 = vset.pattern.permute.xlu0 0
      %347 = vperm.xlu0 %346, %v328
      %v348 = vpop.permute.xlu0 %347
      %351 = vset.pattern.permute.xlu0 0
      %352 = vperm.xlu0 %351, %v329
      %v353 = vpop.permute.xlu0 %352
      %356 = vset.pattern.permute.xlu0 0
      %357 = vperm.xlu0 %356, %v330
      %v358 = vpop.permute.xlu0 %357
      %361 = vset.pattern.permute.xlu0 0
      %362 = vperm.xlu0 %361, %v331
      %v363 = vpop.permute.xlu0 %362
      %366 = vset.pattern.permute.xlu0 0
      %367 = vperm.xlu0 %366, %v332
      %v368 = vpop.permute.xlu0 %367
      %371 = vset.pattern.permute.xlu0 0
      %372 = vperm.xlu0 %371, %v333
      %v373 = vpop.permute.xlu0 %372
      %376 = vset.pattern.permute.xlu0 0
      %377 = vperm.xlu0 %376, %v334
      %v378 = vpop.permute.xlu0 %377
      %381 = vset.pattern.permute.xlu0 0
      %382 = vperm.xlu0 %381, %v335
      %v383 = vpop.permute.xlu0 %382
      %386 = vset.pattern.permute.xlu0 0
      %387 = vperm.xlu0 %386, %v336
      %v388 = vpop.permute.xlu0 %387
      %391 = vset.pattern.permute.xlu0 0
      %392 = vperm.xlu0 %391, %v337
      %v393 = vpop.permute.xlu0 %392
      %396 = vset.pattern.permute.xlu0 0
      %397 = vperm.xlu0 %396, %v338
      %v398 = vpop.permute.xlu0 %397
      %401 = vset.pattern.permute.xlu0 0
      %402 = vperm.xlu0 %401, %v339
      %v403 = vpop.permute.xlu0 %402
      %406 = vset.pattern.permute.xlu0 0
      %407 = vperm.xlu0 %406, %v340
      %v408 = vpop.permute.xlu0 %407
      %411 = vset.pattern.permute.xlu0 0
      %412 = vperm.xlu0 %411, %v341
      %v413 = vpop.permute.xlu0 %412
      %416 = vset.pattern.permute.xlu0 0
      %417 = vperm.xlu0 %416, %v342
      %v418 = vpop.permute.xlu0 %417
      %421 = vset.pattern.permute.xlu0 0
      %422 = vperm.xlu0 %421, %v343
      %v423 = vpop.permute.xlu0 %422
      %v425 = vlaneseq
      %v426 = vshrl.u32 %v425, 7
      %v427 = vsub.s32 0, %v426
      %v428 = vrot.slane %v344, %v427
      %v429 = vmul.f32 %v348, %v428
      %v430 = vmul.f32 %v353, %v428
      %v431 = vmul.f32 %v358, %v428
      %v432 = vmul.f32 %v363, %v428
      %v433 = vmul.f32 %v368, %v428
      %v434 = vmul.f32 %v373, %v428
      %v435 = vmul.f32 %v378, %v428
      %v436 = vmul.f32 %v383, %v428
      %v437 = vmul.f32 %v388, %v428
      %v438 = vmul.f32 %v393, %v428
      %v439 = vmul.f32 %v398, %v428
      %v440 = vmul.f32 %v403, %v428
      %v441 = vmul.f32 %v408, %v428
      %v442 = vmul.f32 %v413, %v428
      %v443 = vmul.f32 %v418, %v428
      %v444 = vmul.f32 %v423, %v428
      %vm461 = vcmask 1046528
      %v462 = vrot.slane %v429, 1
      %v463 = vrot.slane %v430, 1
      %v464 = vsel %vm461, %v462, %v463
      %v465 = vrot.slane %v431, 1
      %v466 = vrot.slane %v432, 1
      %v467 = vsel %vm461, %v465, %v466
      %v468 = vrot.slane %v433, 1
      %v469 = vrot.slane %v434, 1
      %v470 = vsel %vm461, %v468, %v469
      %v471 = vrot.slane %v435, 1
      %v472 = vrot.slane %v436, 1
      %v473 = vsel %vm461, %v471, %v472
      %v474 = vrot.slane %v437, 1
      %v475 = vrot.slane %v438, 1
      %v476 = vsel %vm461, %v474, %v475
      %v477 = vrot.slane %v439, 1
      %v478 = vrot.slane %v440, 1
      %v479 = vsel %vm461, %v477, %v478
      %v480 = vrot.slane %v441, 1
      %v481 = vrot.slane %v442, 1
      %v482 = vsel %vm461, %v480, %v481
      %v483 = vrot.slane %v443, 1
      %v484 = vrot.slane %v444, 1
      %v485 = vsel %vm461, %v483, %v484
      %v494 = vadd.f32 %v302, %v464
      %v495 = vadd.f32 %v303, %v467
      %v496 = vadd.f32 %v304, %v470
      %v497 = vadd.f32 %v305, %v473
      %v498 = vadd.f32 %v306, %v476
      %v499 = vadd.f32 %v307, %v479
      %v500 = vadd.f32 %v308, %v482
      %v501 = vadd.f32 %v309, %v485
      %v502 = vld [vmem:[%s196] sm:$0xe]
      %v503 = vld [vmem:[%s196 + $0x8] sm:$0xe]
      %v504 = vld [vmem:[%s196 + $0x10] sm:$0xe]
      %v505 = vld [vmem:[%s196 + $0x18] sm:$0xe]
      %v506 = vld [vmem:[%s196 + $0x20] sm:$0xe]
      %v507 = vld [vmem:[%s196 + $0x28] sm:$0xe]
      %v508 = vld [vmem:[%s196 + $0x30] sm:$0xe]
      %v509 = vld [vmem:[%s196 + $0x38] sm:$0xe]
      %s510 = scalar_lea.vmem %s201, 2
      %v511 = vld [vmem:[%s510] sm:$0x1]
      %v512 = vunpack.c.l.bf16 %v502
      %v513 = vunpack.c.l.bf16 %v503
      %v514 = vunpack.c.l.bf16 %v504
      %v515 = vunpack.c.l.bf16 %v505
      %v516 = vunpack.c.l.bf16 %v506
      %v517 = vunpack.c.l.bf16 %v507
      %v518 = vunpack.c.l.bf16 %v508
      %v519 = vunpack.c.l.bf16 %v509
      %v520 = vunpack.c.l.bf16 %v511
      %522 = vset.pattern.permute.xlu0 0
      %523 = vperm.xlu0 %522, %v512
      %v524 = vpop.permute.xlu0 %523
      %527 = vset.pattern.permute.xlu0 0
      %528 = vperm.xlu0 %527, %v513
      %v529 = vpop.permute.xlu0 %528
      %532 = vset.pattern.permute.xlu0 0
      %533 = vperm.xlu0 %532, %v514
      %v534 = vpop.permute.xlu0 %533
      %537 = vset.pattern.permute.xlu0 0
      %538 = vperm.xlu0 %537, %v515
      %v539 = vpop.permute.xlu0 %538
      %542 = vset.pattern.permute.xlu0 0
      %543 = vperm.xlu0 %542, %v516
      %v544 = vpop.permute.xlu0 %543
      %547 = vset.pattern.permute.xlu0 0
      %548 = vperm.xlu0 %547, %v517
      %v549 = vpop.permute.xlu0 %548
      %552 = vset.pattern.permute.xlu0 0
      %553 = vperm.xlu0 %552, %v518
      %v554 = vpop.permute.xlu0 %553
      %557 = vset.pattern.permute.xlu0 0
      %558 = vperm.xlu0 %557, %v519
      %v559 = vpop.permute.xlu0 %558
      %v561 = vlaneseq
      %v562 = vshrl.u32 %v561, 7
      %v563 = vsub.s32 0, %v562
      %v564 = vrot.slane %v520, %v563
      %v565 = vmul.f32 %v524, %v564
      %v566 = vmul.f32 %v353, %v564
      %v567 = vmul.f32 %v529, %v564
      %v568 = vmul.f32 %v363, %v564
      %v569 = vmul.f32 %v534, %v564
      %v570 = vmul.f32 %v373, %v564
      %v571 = vmul.f32 %v539, %v564
      %v572 = vmul.f32 %v383, %v564
      %v573 = vmul.f32 %v544, %v564
      %v574 = vmul.f32 %v393, %v564
      %v575 = vmul.f32 %v549, %v564
      %v576 = vmul.f32 %v403, %v564
      %v577 = vmul.f32 %v554, %v564
      %v578 = vmul.f32 %v413, %v564
      %v579 = vmul.f32 %v559, %v564
      %v580 = vmul.f32 %v423, %v564
      %vm597 = vcmask 1045504
      %v598 = vrot.slane %v565, 2
      %v599 = vrot.slane %v566, 2
      %v600 = vsel %vm597, %v598, %v599
      %v601 = vrot.slane %v567, 2
      %v602 = vrot.slane %v568, 2
      %v603 = vsel %vm597, %v601, %v602
      %v604 = vrot.slane %v569, 2
      %v605 = vrot.slane %v570, 2
      %v606 = vsel %vm597, %v604, %v605
      %v607 = vrot.slane %v571, 2
      %v608 = vrot.slane %v572, 2
      %v609 = vsel %vm597, %v607, %v608
      %v610 = vrot.slane %v573, 2
      %v611 = vrot.slane %v574, 2
      %v612 = vsel %vm597, %v610, %v611
      %v613 = vrot.slane %v575, 2
      %v614 = vrot.slane %v576, 2
      %v615 = vsel %vm597, %v613, %v614
      %v616 = vrot.slane %v577, 2
      %v617 = vrot.slane %v578, 2
      %v618 = vsel %vm597, %v616, %v617
      %v619 = vrot.slane %v579, 2
      %v620 = vrot.slane %v580, 2
      %v621 = vsel %vm597, %v619, %v620
      %v630 = vadd.f32 %v494, %v600
      %v631 = vadd.f32 %v495, %v603
      %v632 = vadd.f32 %v496, %v606
      %v633 = vadd.f32 %v497, %v609
      %v634 = vadd.f32 %v498, %v612
      %v635 = vadd.f32 %v499, %v615
      %v636 = vadd.f32 %v500, %v618
      %v637 = vadd.f32 %v501, %v621
      %v638 = vld [vmem:[%s196 + $0x4] sm:$0x3]
      %v639 = vld [vmem:[%s196 + $0xc] sm:$0x3]
      %v640 = vld [vmem:[%s196 + $0x14] sm:$0x3]
      %v641 = vld [vmem:[%s196 + $0x1c] sm:$0x3]
      %v642 = vld [vmem:[%s196 + $0x24] sm:$0x3]
      %v643 = vld [vmem:[%s196 + $0x2c] sm:$0x3]
      %v644 = vld [vmem:[%s196 + $0x34] sm:$0x3]
      %v645 = vld [vmem:[%s196 + $0x3c] sm:$0x3]
      %s646 = scalar_lea.vmem %s201, 3
      %v647 = vld [vmem:[%s646] sm:$0x1]
      %v648 = vunpack.c.l.bf16 %v638
      %v649 = vunpack.c.l.bf16 %v639
      %v650 = vunpack.c.l.bf16 %v640
      %v651 = vunpack.c.l.bf16 %v641
      %v652 = vunpack.c.l.bf16 %v642
      %v653 = vunpack.c.l.bf16 %v643
      %v654 = vunpack.c.l.bf16 %v644
      %v655 = vunpack.c.l.bf16 %v645
      %v656 = vunpack.c.l.bf16 %v647
      %658 = vset.pattern.permute.xlu0 0
      %659 = vperm.xlu0 %658, %v648
      %v660 = vpop.permute.xlu0 %659
      %663 = vset.pattern.permute.xlu0 0
      %664 = vperm.xlu0 %663, %v649
      %v665 = vpop.permute.xlu0 %664
      %668 = vset.pattern.permute.xlu0 0
      %669 = vperm.xlu0 %668, %v650
      %v670 = vpop.permute.xlu0 %669
      %673 = vset.pattern.permute.xlu0 0
      %674 = vperm.xlu0 %673, %v651
      %v675 = vpop.permute.xlu0 %674
      %678 = vset.pattern.permute.xlu0 0
      %679 = vperm.xlu0 %678, %v652
      %v680 = vpop.permute.xlu0 %679
      %683 = vset.pattern.permute.xlu0 0
      %684 = vperm.xlu0 %683, %v653
      %v685 = vpop.permute.xlu0 %684
      %688 = vset.pattern.permute.xlu0 0
      %689 = vperm.xlu0 %688, %v654
      %v690 = vpop.permute.xlu0 %689
      %693 = vset.pattern.permute.xlu0 0
      %694 = vperm.xlu0 %693, %v655
      %v695 = vpop.permute.xlu0 %694
      %v697 = vlaneseq
      %v698 = vshrl.u32 %v697, 7
      %v699 = vsub.s32 0, %v698
      %v700 = vrot.slane %v656, %v699
      %v701 = vmul.f32 %v524, %v700
      %v702 = vmul.f32 %v660, %v700
      %v703 = vmul.f32 %v529, %v700
      %v704 = vmul.f32 %v665, %v700
      %v705 = vmul.f32 %v534, %v700
      %v706 = vmul.f32 %v670, %v700
      %v707 = vmul.f32 %v539, %v700
      %v708 = vmul.f32 %v675, %v700
      %v709 = vmul.f32 %v544, %v700
      %v710 = vmul.f32 %v680, %v700
      %v711 = vmul.f32 %v549, %v700
      %v712 = vmul.f32 %v685, %v700
      %v713 = vmul.f32 %v554, %v700
      %v714 = vmul.f32 %v690, %v700
      %v715 = vmul.f32 %v559, %v700
      %v716 = vmul.f32 %v695, %v700
      %vm733 = vcmask 1044480
      %v734 = vrot.slane %v701, 3
      %v735 = vrot.slane %v702, 3
      %v736 = vsel %vm733, %v734, %v735
      %v737 = vrot.slane %v703, 3
      %v738 = vrot.slane %v704, 3
      %v739 = vsel %vm733, %v737, %v738
      %v740 = vrot.slane %v705, 3
      %v741 = vrot.slane %v706, 3
      %v742 = vsel %vm733, %v740, %v741
      %v743 = vrot.slane %v707, 3
      %v744 = vrot.slane %v708, 3
      %v745 = vsel %vm733, %v743, %v744
      %v746 = vrot.slane %v709, 3
      %v747 = vrot.slane %v710, 3
      %v748 = vsel %vm733, %v746, %v747
      %v749 = vrot.slane %v711, 3
      %v750 = vrot.slane %v712, 3
      %v751 = vsel %vm733, %v749, %v750
      %v752 = vrot.slane %v713, 3
      %v753 = vrot.slane %v714, 3
      %v754 = vsel %vm733, %v752, %v753
      %v755 = vrot.slane %v715, 3
      %v756 = vrot.slane %v716, 3
      %v757 = vsel %vm733, %v755, %v756
      %v766 = vadd.f32 %v630, %v736
      %v767 = vadd.f32 %v631, %v739
      %v768 = vadd.f32 %v632, %v742
      %v769 = vadd.f32 %v633, %v745
      %v770 = vadd.f32 %v634, %v748
      %v771 = vadd.f32 %v635, %v751
      %v772 = vadd.f32 %v636, %v754
      %v773 = vadd.f32 %v637, %v757
      %v774 = vld [vmem:[%s196] sm:$0xc]
      %v775 = vld [vmem:[%s196 + $0x8] sm:$0xc]
      %v776 = vld [vmem:[%s196 + $0x10] sm:$0xc]
      %v777 = vld [vmem:[%s196 + $0x18] sm:$0xc]
      %v778 = vld [vmem:[%s196 + $0x20] sm:$0xc]
      %v779 = vld [vmem:[%s196 + $0x28] sm:$0xc]
      %v780 = vld [vmem:[%s196 + $0x30] sm:$0xc]
      %v781 = vld [vmem:[%s196 + $0x38] sm:$0xc]
      %s782 = scalar_lea.vmem %s201, 4
      %v783 = vld [vmem:[%s782] sm:$0x1]
      %v784 = vunpack.c.l.bf16 %v774
      %v785 = vunpack.c.l.bf16 %v775
      %v786 = vunpack.c.l.bf16 %v776
      %v787 = vunpack.c.l.bf16 %v777
      %v788 = vunpack.c.l.bf16 %v778
      %v789 = vunpack.c.l.bf16 %v779
      %v790 = vunpack.c.l.bf16 %v780
      %v791 = vunpack.c.l.bf16 %v781
      %v792 = vunpack.c.l.bf16 %v783
      %794 = vset.pattern.permute.xlu0 0
      %795 = vperm.xlu0 %794, %v784
      %v796 = vpop.permute.xlu0 %795
      %799 = vset.pattern.permute.xlu0 0
      %800 = vperm.xlu0 %799, %v785
      %v801 = vpop.permute.xlu0 %800
      %804 = vset.pattern.permute.xlu0 0
      %805 = vperm.xlu0 %804, %v786
      %v806 = vpop.permute.xlu0 %805
      %809 = vset.pattern.permute.xlu0 0
      %810 = vperm.xlu0 %809, %v787
      %v811 = vpop.permute.xlu0 %810
      %814 = vset.pattern.permute.xlu0 0
      %815 = vperm.xlu0 %814, %v788
      %v816 = vpop.permute.xlu0 %815
      %819 = vset.pattern.permute.xlu0 0
      %820 = vperm.xlu0 %819, %v789
      %v821 = vpop.permute.xlu0 %820
      %824 = vset.pattern.permute.xlu0 0
      %825 = vperm.xlu0 %824, %v790
      %v826 = vpop.permute.xlu0 %825
      %829 = vset.pattern.permute.xlu0 0
      %830 = vperm.xlu0 %829, %v791
      %v831 = vpop.permute.xlu0 %830
      %v833 = vlaneseq
      %v834 = vshrl.u32 %v833, 7
      %v835 = vsub.s32 0, %v834
      %v836 = vrot.slane %v792, %v835
      %v837 = vmul.f32 %v796, %v836
      %v838 = vmul.f32 %v660, %v836
      %v839 = vmul.f32 %v801, %v836
      %v840 = vmul.f32 %v665, %v836
      %v841 = vmul.f32 %v806, %v836
      %v842 = vmul.f32 %v670, %v836
      %v843 = vmul.f32 %v811, %v836
      %v844 = vmul.f32 %v675, %v836
      %v845 = vmul.f32 %v816, %v836
      %v846 = vmul.f32 %v680, %v836
      %v847 = vmul.f32 %v821, %v836
      %v848 = vmul.f32 %v685, %v836
      %v849 = vmul.f32 %v826, %v836
      %v850 = vmul.f32 %v690, %v836
      %v851 = vmul.f32 %v831, %v836
      %v852 = vmul.f32 %v695, %v836
      %vm869 = vcmask 1043456
      %v870 = vrot.slane %v837, 4
      %v871 = vrot.slane %v838, 4
      %v872 = vsel %vm869, %v870, %v871
      %v873 = vrot.slane %v839, 4
      %v874 = vrot.slane %v840, 4
      %v875 = vsel %vm869, %v873, %v874
      %v876 = vrot.slane %v841, 4
      %v877 = vrot.slane %v842, 4
      %v878 = vsel %vm869, %v876, %v877
      %v879 = vrot.slane %v843, 4
      %v880 = vrot.slane %v844, 4
      %v881 = vsel %vm869, %v879, %v880
      %v882 = vrot.slane %v845, 4
      %v883 = vrot.slane %v846, 4
      %v884 = vsel %vm869, %v882, %v883
      %v885 = vrot.slane %v847, 4
      %v886 = vrot.slane %v848, 4
      %v887 = vsel %vm869, %v885, %v886
      %v888 = vrot.slane %v849, 4
      %v889 = vrot.slane %v850, 4
      %v890 = vsel %vm869, %v888, %v889
      %v891 = vrot.slane %v851, 4
      %v892 = vrot.slane %v852, 4
      %v893 = vsel %vm869, %v891, %v892
      %v902 = vadd.f32 %v766, %v872
      %v903 = vadd.f32 %v767, %v875
      %v904 = vadd.f32 %v768, %v878
      %v905 = vadd.f32 %v769, %v881
      %v906 = vadd.f32 %v770, %v884
      %v907 = vadd.f32 %v771, %v887
      %v908 = vadd.f32 %v772, %v890
      %v909 = vadd.f32 %v773, %v893
      %s910 = scalar_lea.vmem %s196, 8
      %v911 = vld [vmem:[%s910] sm:$0xf]
      %v912 = vld [vmem:[%s910 + $0x8] sm:$0xf]
      %v913 = vld [vmem:[%s910 + $0x10] sm:$0xf]
      %v914 = vld [vmem:[%s910 + $0x18] sm:$0xf]
      %v915 = vld [vmem:[%s910 + $0x20] sm:$0xf]
      %v916 = vld [vmem:[%s910 + $0x28] sm:$0xf]
      %v917 = vld [vmem:[%s910 + $0x30] sm:$0xf]
      %v918 = vld [vmem:[%s910 + $0x38] sm:$0xf]
      %s919 = scalar_lea.vmem %s201, 5
      %v920 = vld [vmem:[%s919] sm:$0x1]
      %v921 = vunpack.c.l.bf16 %v911
      %v922 = vunpack.c.l.bf16 %v912
      %v923 = vunpack.c.l.bf16 %v913
      %v924 = vunpack.c.l.bf16 %v914
      %v925 = vunpack.c.l.bf16 %v915
      %v926 = vunpack.c.l.bf16 %v916
      %v927 = vunpack.c.l.bf16 %v917
      %v928 = vunpack.c.l.bf16 %v918
      %v929 = vunpack.c.l.bf16 %v920
      %931 = vset.pattern.permute.xlu0 0
      %932 = vperm.xlu0 %931, %v921
      %v933 = vpop.permute.xlu0 %932
      %936 = vset.pattern.permute.xlu0 0
      %937 = vperm.xlu0 %936, %v922
      %v938 = vpop.permute.xlu0 %937
      %941 = vset.pattern.permute.xlu0 0
      %942 = vperm.xlu0 %941, %v923
      %v943 = vpop.permute.xlu0 %942
      %946 = vset.pattern.permute.xlu0 0
      %947 = vperm.xlu0 %946, %v924
      %v948 = vpop.permute.xlu0 %947
      %951 = vset.pattern.permute.xlu0 0
      %952 = vperm.xlu0 %951, %v925
      %v953 = vpop.permute.xlu0 %952
      %956 = vset.pattern.permute.xlu0 0
      %957 = vperm.xlu0 %956, %v926
      %v958 = vpop.permute.xlu0 %957
      %961 = vset.pattern.permute.xlu0 0
      %962 = vperm.xlu0 %961, %v927
      %v963 = vpop.permute.xlu0 %962
      %966 = vset.pattern.permute.xlu0 0
      %967 = vperm.xlu0 %966, %v928
      %v968 = vpop.permute.xlu0 %967
      %v970 = vlaneseq
      %v971 = vshrl.u32 %v970, 7
      %v972 = vsub.s32 0, %v971
      %v973 = vrot.slane %v929, %v972
      %v974 = vmul.f32 %v933, %v973
      %v975 = vmul.f32 %v938, %v973
      %v976 = vmul.f32 %v943, %v973
      %v977 = vmul.f32 %v948, %v973
      %v978 = vmul.f32 %v953, %v973
      %v979 = vmul.f32 %v958, %v973
      %v980 = vmul.f32 %v963, %v973
      %v981 = vmul.f32 %v968, %v973
      %v982 = vadd.f32 %v902, %v974
      %v983 = vadd.f32 %v903, %v975
      %v984 = vadd.f32 %v904, %v976
      %v985 = vadd.f32 %v905, %v977
      %v986 = vadd.f32 %v906, %v978
      %v987 = vadd.f32 %v907, %v979
      %v988 = vadd.f32 %v908, %v980
      %v989 = vadd.f32 %v909, %v981
      %v990 = vld [vmem:[%s910] sm:$0xf]
      %v991 = vld [vmem:[%s910 + $0x4] sm:$0x1]
      %v992 = vld [vmem:[%s910 + $0x8] sm:$0xf]
      %v993 = vld [vmem:[%s910 + $0xc] sm:$0x1]
      %v994 = vld [vmem:[%s910 + $0x10] sm:$0xf]
      %v995 = vld [vmem:[%s910 + $0x14] sm:$0x1]
      %v996 = vld [vmem:[%s910 + $0x18] sm:$0xf]
      %v997 = vld [vmem:[%s910 + $0x1c] sm:$0x1]
      %v998 = vld [vmem:[%s910 + $0x20] sm:$0xf]
      %v999 = vld [vmem:[%s910 + $0x24] sm:$0x1]
      %v1000 = vld [vmem:[%s910 + $0x28] sm:$0xf]
      %v1001 = vld [vmem:[%s910 + $0x2c] sm:$0x1]
      %v1002 = vld [vmem:[%s910 + $0x30] sm:$0xf]
      %v1003 = vld [vmem:[%s910 + $0x34] sm:$0x1]
      %v1004 = vld [vmem:[%s910 + $0x38] sm:$0xf]
      %v1005 = vld [vmem:[%s910 + $0x3c] sm:$0x1]
      %s1006 = scalar_lea.vmem %s201, 6
      %v1007 = vld [vmem:[%s1006] sm:$0x1]
      %v1008 = vunpack.c.l.bf16 %v990
      %v1009 = vunpack.c.l.bf16 %v991
      %v1010 = vunpack.c.l.bf16 %v992
      %v1011 = vunpack.c.l.bf16 %v993
      %v1012 = vunpack.c.l.bf16 %v994
      %v1013 = vunpack.c.l.bf16 %v995
      %v1014 = vunpack.c.l.bf16 %v996
      %v1015 = vunpack.c.l.bf16 %v997
      %v1016 = vunpack.c.l.bf16 %v998
      %v1017 = vunpack.c.l.bf16 %v999
      %v1018 = vunpack.c.l.bf16 %v1000
      %v1019 = vunpack.c.l.bf16 %v1001
      %v1020 = vunpack.c.l.bf16 %v1002
      %v1021 = vunpack.c.l.bf16 %v1003
      %v1022 = vunpack.c.l.bf16 %v1004
      %v1023 = vunpack.c.l.bf16 %v1005
      %v1024 = vunpack.c.l.bf16 %v1007
      %1026 = vset.pattern.permute.xlu0 0
      %1027 = vperm.xlu0 %1026, %v1008
      %v1028 = vpop.permute.xlu0 %1027
      %1031 = vset.pattern.permute.xlu0 0
      %1032 = vperm.xlu0 %1031, %v1009
      %v1033 = vpop.permute.xlu0 %1032
      %1036 = vset.pattern.permute.xlu0 0
      %1037 = vperm.xlu0 %1036, %v1010
      %v1038 = vpop.permute.xlu0 %1037
      %1041 = vset.pattern.permute.xlu0 0
      %1042 = vperm.xlu0 %1041, %v1011
      %v1043 = vpop.permute.xlu0 %1042
      %1046 = vset.pattern.permute.xlu0 0
      %1047 = vperm.xlu0 %1046, %v1012
      %v1048 = vpop.permute.xlu0 %1047
      %1051 = vset.pattern.permute.xlu0 0
      %1052 = vperm.xlu0 %1051, %v1013
      %v1053 = vpop.permute.xlu0 %1052
      %1056 = vset.pattern.permute.xlu0 0
      %1057 = vperm.xlu0 %1056, %v1014
      %v1058 = vpop.permute.xlu0 %1057
      %1061 = vset.pattern.permute.xlu0 0
      %1062 = vperm.xlu0 %1061, %v1015
      %v1063 = vpop.permute.xlu0 %1062
      %1066 = vset.pattern.permute.xlu0 0
      %1067 = vperm.xlu0 %1066, %v1016
      %v1068 = vpop.permute.xlu0 %1067
      %1071 = vset.pattern.permute.xlu0 0
      %1072 = vperm.xlu0 %1071, %v1017
      %v1073 = vpop.permute.xlu0 %1072
      %1076 = vset.pattern.permute.xlu0 0
      %1077 = vperm.xlu0 %1076, %v1018
      %v1078 = vpop.permute.xlu0 %1077
      %1081 = vset.pattern.permute.xlu0 0
      %1082 = vperm.xlu0 %1081, %v1019
      %v1083 = vpop.permute.xlu0 %1082
      %1086 = vset.pattern.permute.xlu0 0
      %1087 = vperm.xlu0 %1086, %v1020
      %v1088 = vpop.permute.xlu0 %1087
      %1091 = vset.pattern.permute.xlu0 0
      %1092 = vperm.xlu0 %1091, %v1021
      %v1093 = vpop.permute.xlu0 %1092
      %1096 = vset.pattern.permute.xlu0 0
      %1097 = vperm.xlu0 %1096, %v1022
      %v1098 = vpop.permute.xlu0 %1097
      %1101 = vset.pattern.permute.xlu0 0
      %1102 = vperm.xlu0 %1101, %v1023
      %v1103 = vpop.permute.xlu0 %1102
      %v1105 = vlaneseq
      %v1106 = vshrl.u32 %v1105, 7
      %v1107 = vsub.s32 0, %v1106
      %v1108 = vrot.slane %v1024, %v1107
      %v1109 = vmul.f32 %v1028, %v1108
      %v1110 = vmul.f32 %v1033, %v1108
      %v1111 = vmul.f32 %v1038, %v1108
      %v1112 = vmul.f32 %v1043, %v1108
      %v1113 = vmul.f32 %v1048, %v1108
      %v1114 = vmul.f32 %v1053, %v1108
      %v1115 = vmul.f32 %v1058, %v1108
      %v1116 = vmul.f32 %v1063, %v1108
      %v1117 = vmul.f32 %v1068, %v1108
      %v1118 = vmul.f32 %v1073, %v1108
      %v1119 = vmul.f32 %v1078, %v1108
      %v1120 = vmul.f32 %v1083, %v1108
      %v1121 = vmul.f32 %v1088, %v1108
      %v1122 = vmul.f32 %v1093, %v1108
      %v1123 = vmul.f32 %v1098, %v1108
      %v1124 = vmul.f32 %v1103, %v1108
      %v1141 = vrot.slane %v1109, 1
      %v1142 = vrot.slane %v1110, 1
      %v1143 = vsel %vm461, %v1141, %v1142
      %v1144 = vrot.slane %v1111, 1
      %v1145 = vrot.slane %v1112, 1
      %v1146 = vsel %vm461, %v1144, %v1145
      %v1147 = vrot.slane %v1113, 1
      %v1148 = vrot.slane %v1114, 1
      %v1149 = vsel %vm461, %v1147, %v1148
      %v1150 = vrot.slane %v1115, 1
      %v1151 = vrot.slane %v1116, 1
      %v1152 = vsel %vm461, %v1150, %v1151
      %v1153 = vrot.slane %v1117, 1
      %v1154 = vrot.slane %v1118, 1
      %v1155 = vsel %vm461, %v1153, %v1154
      %v1156 = vrot.slane %v1119, 1
      %v1157 = vrot.slane %v1120, 1
      %v1158 = vsel %vm461, %v1156, %v1157
      %v1159 = vrot.slane %v1121, 1
      %v1160 = vrot.slane %v1122, 1
      %v1161 = vsel %vm461, %v1159, %v1160
      %v1162 = vrot.slane %v1123, 1
      %v1163 = vrot.slane %v1124, 1
      %v1164 = vsel %vm461, %v1162, %v1163
      %v1173 = vadd.f32 %v982, %v1143
      %v1174 = vadd.f32 %v983, %v1146
      %v1175 = vadd.f32 %v984, %v1149
      %v1176 = vadd.f32 %v985, %v1152
      %v1177 = vadd.f32 %v986, %v1155
      %v1178 = vadd.f32 %v987, %v1158
      %v1179 = vadd.f32 %v988, %v1161
      %v1180 = vadd.f32 %v989, %v1164
      %v1181 = vld [vmem:[%s910] sm:$0xe]
      %v1182 = vld [vmem:[%s910 + $0x8] sm:$0xe]
      %v1183 = vld [vmem:[%s910 + $0x10] sm:$0xe]
      %v1184 = vld [vmem:[%s910 + $0x18] sm:$0xe]
      %v1185 = vld [vmem:[%s910 + $0x20] sm:$0xe]
      %v1186 = vld [vmem:[%s910 + $0x28] sm:$0xe]
      %v1187 = vld [vmem:[%s910 + $0x30] sm:$0xe]
      %v1188 = vld [vmem:[%s910 + $0x38] sm:$0xe]
      %s1189 = scalar_lea.vmem %s201, 7
      %v1190 = vld [vmem:[%s1189] sm:$0x1]
      %v1191 = vunpack.c.l.bf16 %v1181
      %v1192 = vunpack.c.l.bf16 %v1182
      %v1193 = vunpack.c.l.bf16 %v1183
      %v1194 = vunpack.c.l.bf16 %v1184
      %v1195 = vunpack.c.l.bf16 %v1185
      %v1196 = vunpack.c.l.bf16 %v1186
      %v1197 = vunpack.c.l.bf16 %v1187
      %v1198 = vunpack.c.l.bf16 %v1188
      %v1199 = vunpack.c.l.bf16 %v1190
      %1201 = vset.pattern.permute.xlu0 0
      %1202 = vperm.xlu0 %1201, %v1191
      %v1203 = vpop.permute.xlu0 %1202
      %1206 = vset.pattern.permute.xlu0 0
      %1207 = vperm.xlu0 %1206, %v1192
      %v1208 = vpop.permute.xlu0 %1207
      %1211 = vset.pattern.permute.xlu0 0
      %1212 = vperm.xlu0 %1211, %v1193
      %v1213 = vpop.permute.xlu0 %1212
      %1216 = vset.pattern.permute.xlu0 0
      %1217 = vperm.xlu0 %1216, %v1194
      %v1218 = vpop.permute.xlu0 %1217
      %1221 = vset.pattern.permute.xlu0 0
      %1222 = vperm.xlu0 %1221, %v1195
      %v1223 = vpop.permute.xlu0 %1222
      %1226 = vset.pattern.permute.xlu0 0
      %1227 = vperm.xlu0 %1226, %v1196
      %v1228 = vpop.permute.xlu0 %1227
      %1231 = vset.pattern.permute.xlu0 0
      %1232 = vperm.xlu0 %1231, %v1197
      %v1233 = vpop.permute.xlu0 %1232
      %1236 = vset.pattern.permute.xlu0 0
      %1237 = vperm.xlu0 %1236, %v1198
      %v1238 = vpop.permute.xlu0 %1237
      %v1240 = vlaneseq
      %v1241 = vshrl.u32 %v1240, 7
      %v1242 = vsub.s32 0, %v1241
      %v1243 = vrot.slane %v1199, %v1242
      %v1244 = vmul.f32 %v1203, %v1243
      %v1245 = vmul.f32 %v1033, %v1243
      %v1246 = vmul.f32 %v1208, %v1243
      %v1247 = vmul.f32 %v1043, %v1243
      %v1248 = vmul.f32 %v1213, %v1243
      %v1249 = vmul.f32 %v1053, %v1243
      %v1250 = vmul.f32 %v1218, %v1243
      %v1251 = vmul.f32 %v1063, %v1243
      %v1252 = vmul.f32 %v1223, %v1243
      %v1253 = vmul.f32 %v1073, %v1243
      %v1254 = vmul.f32 %v1228, %v1243
      %v1255 = vmul.f32 %v1083, %v1243
      %v1256 = vmul.f32 %v1233, %v1243
      %v1257 = vmul.f32 %v1093, %v1243
      %v1258 = vmul.f32 %v1238, %v1243
      %v1259 = vmul.f32 %v1103, %v1243
      %v1276 = vrot.slane %v1244, 2
      %v1277 = vrot.slane %v1245, 2
      %v1278 = vsel %vm597, %v1276, %v1277
      %v1279 = vrot.slane %v1246, 2
      %v1280 = vrot.slane %v1247, 2
      %v1281 = vsel %vm597, %v1279, %v1280
      %v1282 = vrot.slane %v1248, 2
      %v1283 = vrot.slane %v1249, 2
      %v1284 = vsel %vm597, %v1282, %v1283
      %v1285 = vrot.slane %v1250, 2
      %v1286 = vrot.slane %v1251, 2
      %v1287 = vsel %vm597, %v1285, %v1286
      %v1288 = vrot.slane %v1252, 2
      %v1289 = vrot.slane %v1253, 2
      %v1290 = vsel %vm597, %v1288, %v1289
      %v1291 = vrot.slane %v1254, 2
      %v1292 = vrot.slane %v1255, 2
      %v1293 = vsel %vm597, %v1291, %v1292
      %v1294 = vrot.slane %v1256, 2
      %v1295 = vrot.slane %v1257, 2
      %v1296 = vsel %vm597, %v1294, %v1295
      %v1297 = vrot.slane %v1258, 2
      %v1298 = vrot.slane %v1259, 2
      %v1299 = vsel %vm597, %v1297, %v1298
      %v1308 = vadd.f32 %v1173, %v1278
      %v1309 = vadd.f32 %v1174, %v1281
      %v1310 = vadd.f32 %v1175, %v1284
      %v1311 = vadd.f32 %v1176, %v1287
      %v1312 = vadd.f32 %v1177, %v1290
      %v1313 = vadd.f32 %v1178, %v1293
      %v1314 = vadd.f32 %v1179, %v1296
      %v1315 = vadd.f32 %v1180, %v1299
      %v1316 = vld [vmem:[%s910 + $0x4] sm:$0x3]
      %v1317 = vld [vmem:[%s910 + $0xc] sm:$0x3]
      %v1318 = vld [vmem:[%s910 + $0x14] sm:$0x3]
      %v1319 = vld [vmem:[%s910 + $0x1c] sm:$0x3]
      %v1320 = vld [vmem:[%s910 + $0x24] sm:$0x3]
      %v1321 = vld [vmem:[%s910 + $0x2c] sm:$0x3]
      %v1322 = vld [vmem:[%s910 + $0x34] sm:$0x3]
      %v1323 = vld [vmem:[%s910 + $0x3c] sm:$0x3]
      %s1324 = scalar_lea.vmem %s201, 8
      %v1325 = vld [vmem:[%s1324] sm:$0x1]
      %v1326 = vunpack.c.l.bf16 %v1316
      %v1327 = vunpack.c.l.bf16 %v1317
      %v1328 = vunpack.c.l.bf16 %v1318
      %v1329 = vunpack.c.l.bf16 %v1319
      %v1330 = vunpack.c.l.bf16 %v1320
      %v1331 = vunpack.c.l.bf16 %v1321
      %v1332 = vunpack.c.l.bf16 %v1322
      %v1333 = vunpack.c.l.bf16 %v1323
      %v1334 = vunpack.c.l.bf16 %v1325
      %1336 = vset.pattern.permute.xlu0 0
      %1337 = vperm.xlu0 %1336, %v1326
      %v1338 = vpop.permute.xlu0 %1337
      %1341 = vset.pattern.permute.xlu0 0
      %1342 = vperm.xlu0 %1341, %v1327
      %v1343 = vpop.permute.xlu0 %1342
      %1346 = vset.pattern.permute.xlu0 0
      %1347 = vperm.xlu0 %1346, %v1328
      %v1348 = vpop.permute.xlu0 %1347
      %1351 = vset.pattern.permute.xlu0 0
      %1352 = vperm.xlu0 %1351, %v1329
      %v1353 = vpop.permute.xlu0 %1352
      %1356 = vset.pattern.permute.xlu0 0
      %1357 = vperm.xlu0 %1356, %v1330
      %v1358 = vpop.permute.xlu0 %1357
      %1361 = vset.pattern.permute.xlu0 0
      %1362 = vperm.xlu0 %1361, %v1331
      %v1363 = vpop.permute.xlu0 %1362
      %1366 = vset.pattern.permute.xlu0 0
      %1367 = vperm.xlu0 %1366, %v1332
      %v1368 = vpop.permute.xlu0 %1367
      %1371 = vset.pattern.permute.xlu0 0
      %1372 = vperm.xlu0 %1371, %v1333
      %v1373 = vpop.permute.xlu0 %1372
      %v1375 = vlaneseq
      %v1376 = vshrl.u32 %v1375, 7
      %v1377 = vsub.s32 0, %v1376
      %v1378 = vrot.slane %v1334, %v1377
      %v1379 = vmul.f32 %v1203, %v1378
      %v1380 = vmul.f32 %v1338, %v1378
      %v1381 = vmul.f32 %v1208, %v1378
      %v1382 = vmul.f32 %v1343, %v1378
      %v1383 = vmul.f32 %v1213, %v1378
      %v1384 = vmul.f32 %v1348, %v1378
      %v1385 = vmul.f32 %v1218, %v1378
      %v1386 = vmul.f32 %v1353, %v1378
      %v1387 = vmul.f32 %v1223, %v1378
      %v1388 = vmul.f32 %v1358, %v1378
      %v1389 = vmul.f32 %v1228, %v1378
      %v1390 = vmul.f32 %v1363, %v1378
      %v1391 = vmul.f32 %v1233, %v1378
      %v1392 = vmul.f32 %v1368, %v1378
      %v1393 = vmul.f32 %v1238, %v1378
      %v1394 = vmul.f32 %v1373, %v1378
      %v1411 = vrot.slane %v1379, 3
      %v1412 = vrot.slane %v1380, 3
      %v1413 = vsel %vm733, %v1411, %v1412
      %v1414 = vrot.slane %v1381, 3
      %v1415 = vrot.slane %v1382, 3
      %v1416 = vsel %vm733, %v1414, %v1415
      %v1417 = vrot.slane %v1383, 3
      %v1418 = vrot.slane %v1384, 3
      %v1419 = vsel %vm733, %v1417, %v1418
      %v1420 = vrot.slane %v1385, 3
      %v1421 = vrot.slane %v1386, 3
      %v1422 = vsel %vm733, %v1420, %v1421
      %v1423 = vrot.slane %v1387, 3
      %v1424 = vrot.slane %v1388, 3
      %v1425 = vsel %vm733, %v1423, %v1424
      %v1426 = vrot.slane %v1389, 3
      %v1427 = vrot.slane %v1390, 3
      %v1428 = vsel %vm733, %v1426, %v1427
      %v1429 = vrot.slane %v1391, 3
      %v1430 = vrot.slane %v1392, 3
      %v1431 = vsel %vm733, %v1429, %v1430
      %v1432 = vrot.slane %v1393, 3
      %v1433 = vrot.slane %v1394, 3
      %v1434 = vsel %vm733, %v1432, %v1433
      %v1443 = vadd.f32 %v1308, %v1413
      %v1444 = vadd.f32 %v1309, %v1416
      %v1445 = vadd.f32 %v1310, %v1419
      %v1446 = vadd.f32 %v1311, %v1422
      %v1447 = vadd.f32 %v1312, %v1425
      %v1448 = vadd.f32 %v1313, %v1428
      %v1449 = vadd.f32 %v1314, %v1431
      %v1450 = vadd.f32 %v1315, %v1434
      %v1451 = vld [vmem:[%s910] sm:$0xc]
      %v1452 = vld [vmem:[%s910 + $0x8] sm:$0xc]
      %v1453 = vld [vmem:[%s910 + $0x10] sm:$0xc]
      %v1454 = vld [vmem:[%s910 + $0x18] sm:$0xc]
      %v1455 = vld [vmem:[%s910 + $0x20] sm:$0xc]
      %v1456 = vld [vmem:[%s910 + $0x28] sm:$0xc]
      %v1457 = vld [vmem:[%s910 + $0x30] sm:$0xc]
      %v1458 = vld [vmem:[%s910 + $0x38] sm:$0xc]
      %s1459 = scalar_lea.vmem %s201, 9
      %v1460 = vld [vmem:[%s1459] sm:$0x1]
      %v1461 = vunpack.c.l.bf16 %v1451
      %v1462 = vunpack.c.l.bf16 %v1452
      %v1463 = vunpack.c.l.bf16 %v1453
      %v1464 = vunpack.c.l.bf16 %v1454
      %v1465 = vunpack.c.l.bf16 %v1455
      %v1466 = vunpack.c.l.bf16 %v1456
      %v1467 = vunpack.c.l.bf16 %v1457
      %v1468 = vunpack.c.l.bf16 %v1458
      %v1469 = vunpack.c.l.bf16 %v1460
      %1471 = vset.pattern.permute.xlu0 0
      %1472 = vperm.xlu0 %1471, %v1461
      %v1473 = vpop.permute.xlu0 %1472
      %1476 = vset.pattern.permute.xlu0 0
      %1477 = vperm.xlu0 %1476, %v1462
      %v1478 = vpop.permute.xlu0 %1477
      %1481 = vset.pattern.permute.xlu0 0
      %1482 = vperm.xlu0 %1481, %v1463
      %v1483 = vpop.permute.xlu0 %1482
      %1486 = vset.pattern.permute.xlu0 0
      %1487 = vperm.xlu0 %1486, %v1464
      %v1488 = vpop.permute.xlu0 %1487
      %1491 = vset.pattern.permute.xlu0 0
      %1492 = vperm.xlu0 %1491, %v1465
      %v1493 = vpop.permute.xlu0 %1492
      %1496 = vset.pattern.permute.xlu0 0
      %1497 = vperm.xlu0 %1496, %v1466
      %v1498 = vpop.permute.xlu0 %1497
      %1501 = vset.pattern.permute.xlu0 0
      %1502 = vperm.xlu0 %1501, %v1467
      %v1503 = vpop.permute.xlu0 %1502
      %1506 = vset.pattern.permute.xlu0 0
      %1507 = vperm.xlu0 %1506, %v1468
      %v1508 = vpop.permute.xlu0 %1507
      %v1510 = vlaneseq
      %v1511 = vshrl.u32 %v1510, 7
      %v1512 = vsub.s32 0, %v1511
      %v1513 = vrot.slane %v1469, %v1512
      %v1514 = vmul.f32 %v1473, %v1513
      %v1515 = vmul.f32 %v1338, %v1513
      %v1516 = vmul.f32 %v1478, %v1513
      %v1517 = vmul.f32 %v1343, %v1513
      %v1518 = vmul.f32 %v1483, %v1513
      %v1519 = vmul.f32 %v1348, %v1513
      %v1520 = vmul.f32 %v1488, %v1513
      %v1521 = vmul.f32 %v1353, %v1513
      %v1522 = vmul.f32 %v1493, %v1513
      %v1523 = vmul.f32 %v1358, %v1513
      %v1524 = vmul.f32 %v1498, %v1513
      %v1525 = vmul.f32 %v1363, %v1513
      %v1526 = vmul.f32 %v1503, %v1513
      %v1527 = vmul.f32 %v1368, %v1513
      %v1528 = vmul.f32 %v1508, %v1513
      %v1529 = vmul.f32 %v1373, %v1513
      %v1546 = vrot.slane %v1514, 4
      %v1547 = vrot.slane %v1515, 4
      %v1548 = vsel %vm869, %v1546, %v1547
      %v1549 = vrot.slane %v1516, 4
      %v1550 = vrot.slane %v1517, 4
      %v1551 = vsel %vm869, %v1549, %v1550
      %v1552 = vrot.slane %v1518, 4
      %v1553 = vrot.slane %v1519, 4
      %v1554 = vsel %vm869, %v1552, %v1553
      %v1555 = vrot.slane %v1520, 4
      %v1556 = vrot.slane %v1521, 4
      %v1557 = vsel %vm869, %v1555, %v1556
      %v1558 = vrot.slane %v1522, 4
      %v1559 = vrot.slane %v1523, 4
      %v1560 = vsel %vm869, %v1558, %v1559
      %v1561 = vrot.slane %v1524, 4
      %v1562 = vrot.slane %v1525, 4
      %v1563 = vsel %vm869, %v1561, %v1562
      %v1564 = vrot.slane %v1526, 4
      %v1565 = vrot.slane %v1527, 4
      %v1566 = vsel %vm869, %v1564, %v1565
      %v1567 = vrot.slane %v1528, 4
      %v1568 = vrot.slane %v1529, 4
      %v1569 = vsel %vm869, %v1567, %v1568
      %v1578 = vadd.f32 %v1443, %v1548
      %v1579 = vadd.f32 %v1444, %v1551
      %v1580 = vadd.f32 %v1445, %v1554
      %v1581 = vadd.f32 %v1446, %v1557
      %v1582 = vadd.f32 %v1447, %v1560
      %v1583 = vadd.f32 %v1448, %v1563
      %v1584 = vadd.f32 %v1449, %v1566
      %v1585 = vadd.f32 %v1450, %v1569
      %s1586 = scalar_lea.vmem %s196, 16
      %v1587 = vld [vmem:[%s1586] sm:$0xf]
      %v1588 = vld [vmem:[%s1586 + $0x8] sm:$0xf]
      %v1589 = vld [vmem:[%s1586 + $0x10] sm:$0xf]
      %v1590 = vld [vmem:[%s1586 + $0x18] sm:$0xf]
      %v1591 = vld [vmem:[%s1586 + $0x20] sm:$0xf]
      %v1592 = vld [vmem:[%s1586 + $0x28] sm:$0xf]
      %v1593 = vld [vmem:[%s1586 + $0x30] sm:$0xf]
      %v1594 = vld [vmem:[%s1586 + $0x38] sm:$0xf]
      %s1595 = scalar_lea.vmem %s201, 10
      %v1596 = vld [vmem:[%s1595] sm:$0x1]
      %v1597 = vunpack.c.l.bf16 %v1587
      %v1598 = vunpack.c.l.bf16 %v1588
      %v1599 = vunpack.c.l.bf16 %v1589
      %v1600 = vunpack.c.l.bf16 %v1590
      %v1601 = vunpack.c.l.bf16 %v1591
      %v1602 = vunpack.c.l.bf16 %v1592
      %v1603 = vunpack.c.l.bf16 %v1593
      %v1604 = vunpack.c.l.bf16 %v1594
      %v1605 = vunpack.c.l.bf16 %v1596
      %1607 = vset.pattern.permute.xlu0 0
      %1608 = vperm.xlu0 %1607, %v1597
      %v1609 = vpop.permute.xlu0 %1608
      %1612 = vset.pattern.permute.xlu0 0
      %1613 = vperm.xlu0 %1612, %v1598
      %v1614 = vpop.permute.xlu0 %1613
      %1617 = vset.pattern.permute.xlu0 0
      %1618 = vperm.xlu0 %1617, %v1599
      %v1619 = vpop.permute.xlu0 %1618
      %1622 = vset.pattern.permute.xlu0 0
      %1623 = vperm.xlu0 %1622, %v1600
      %v1624 = vpop.permute.xlu0 %1623
      %1627 = vset.pattern.permute.xlu0 0
      %1628 = vperm.xlu0 %1627, %v1601
      %v1629 = vpop.permute.xlu0 %1628
      %1632 = vset.pattern.permute.xlu0 0
      %1633 = vperm.xlu0 %1632, %v1602
      %v1634 = vpop.permute.xlu0 %1633
      %1637 = vset.pattern.permute.xlu0 0
      %1638 = vperm.xlu0 %1637, %v1603
      %v1639 = vpop.permute.xlu0 %1638
      %1642 = vset.pattern.permute.xlu0 0
      %1643 = vperm.xlu0 %1642, %v1604
      %v1644 = vpop.permute.xlu0 %1643
      %v1646 = vlaneseq
      %v1647 = vshrl.u32 %v1646, 7
      %v1648 = vsub.s32 0, %v1647
      %v1649 = vrot.slane %v1605, %v1648
      %v1650 = vmul.f32 %v1609, %v1649
      %v1651 = vmul.f32 %v1614, %v1649
      %v1652 = vmul.f32 %v1619, %v1649
      %v1653 = vmul.f32 %v1624, %v1649
      %v1654 = vmul.f32 %v1629, %v1649
      %v1655 = vmul.f32 %v1634, %v1649
      %v1656 = vmul.f32 %v1639, %v1649
      %v1657 = vmul.f32 %v1644, %v1649
      %v1658 = vadd.f32 %v1578, %v1650
      %v1659 = vadd.f32 %v1579, %v1651
      %v1660 = vadd.f32 %v1580, %v1652
      %v1661 = vadd.f32 %v1581, %v1653
      %v1662 = vadd.f32 %v1582, %v1654
      %v1663 = vadd.f32 %v1583, %v1655
      %v1664 = vadd.f32 %v1584, %v1656
      %v1665 = vadd.f32 %v1585, %v1657
      %v1666 = vld [vmem:[%s1586] sm:$0xf]
      %v1667 = vld [vmem:[%s1586 + $0x4] sm:$0x1]
      %v1668 = vld [vmem:[%s1586 + $0x8] sm:$0xf]
      %v1669 = vld [vmem:[%s1586 + $0xc] sm:$0x1]
      %v1670 = vld [vmem:[%s1586 + $0x10] sm:$0xf]
      %v1671 = vld [vmem:[%s1586 + $0x14] sm:$0x1]
      %v1672 = vld [vmem:[%s1586 + $0x18] sm:$0xf]
      %v1673 = vld [vmem:[%s1586 + $0x1c] sm:$0x1]
      %v1674 = vld [vmem:[%s1586 + $0x20] sm:$0xf]
      %v1675 = vld [vmem:[%s1586 + $0x24] sm:$0x1]
      %v1676 = vld [vmem:[%s1586 + $0x28] sm:$0xf]
      %v1677 = vld [vmem:[%s1586 + $0x2c] sm:$0x1]
      %v1678 = vld [vmem:[%s1586 + $0x30] sm:$0xf]
      %v1679 = vld [vmem:[%s1586 + $0x34] sm:$0x1]
      %v1680 = vld [vmem:[%s1586 + $0x38] sm:$0xf]
      %v1681 = vld [vmem:[%s1586 + $0x3c] sm:$0x1]
      %s1682 = scalar_lea.vmem %s201, 11
      %v1683 = vld [vmem:[%s1682] sm:$0x1]
      %v1684 = vunpack.c.l.bf16 %v1666
      %v1685 = vunpack.c.l.bf16 %v1667
      %v1686 = vunpack.c.l.bf16 %v1668
      %v1687 = vunpack.c.l.bf16 %v1669
      %v1688 = vunpack.c.l.bf16 %v1670
      %v1689 = vunpack.c.l.bf16 %v1671
      %v1690 = vunpack.c.l.bf16 %v1672
      %v1691 = vunpack.c.l.bf16 %v1673
      %v1692 = vunpack.c.l.bf16 %v1674
      %v1693 = vunpack.c.l.bf16 %v1675
      %v1694 = vunpack.c.l.bf16 %v1676
      %v1695 = vunpack.c.l.bf16 %v1677
      %v1696 = vunpack.c.l.bf16 %v1678
      %v1697 = vunpack.c.l.bf16 %v1679
      %v1698 = vunpack.c.l.bf16 %v1680
      %v1699 = vunpack.c.l.bf16 %v1681
      %v1700 = vunpack.c.l.bf16 %v1683
      %1702 = vset.pattern.permute.xlu0 0
      %1703 = vperm.xlu0 %1702, %v1684
      %v1704 = vpop.permute.xlu0 %1703
      %1707 = vset.pattern.permute.xlu0 0
      %1708 = vperm.xlu0 %1707, %v1685
      %v1709 = vpop.permute.xlu0 %1708
      %1712 = vset.pattern.permute.xlu0 0
      %1713 = vperm.xlu0 %1712, %v1686
      %v1714 = vpop.permute.xlu0 %1713
      %1717 = vset.pattern.permute.xlu0 0
      %1718 = vperm.xlu0 %1717, %v1687
      %v1719 = vpop.permute.xlu0 %1718
      %1722 = vset.pattern.permute.xlu0 0
      %1723 = vperm.xlu0 %1722, %v1688
      %v1724 = vpop.permute.xlu0 %1723
      %1727 = vset.pattern.permute.xlu0 0
      %1728 = vperm.xlu0 %1727, %v1689
      %v1729 = vpop.permute.xlu0 %1728
      %1732 = vset.pattern.permute.xlu0 0
      %1733 = vperm.xlu0 %1732, %v1690
      %v1734 = vpop.permute.xlu0 %1733
      %1737 = vset.pattern.permute.xlu0 0
      %1738 = vperm.xlu0 %1737, %v1691
      %v1739 = vpop.permute.xlu0 %1738
      %1742 = vset.pattern.permute.xlu0 0
      %1743 = vperm.xlu0 %1742, %v1692
      %v1744 = vpop.permute.xlu0 %1743
      %1747 = vset.pattern.permute.xlu0 0
      %1748 = vperm.xlu0 %1747, %v1693
      %v1749 = vpop.permute.xlu0 %1748
      %1752 = vset.pattern.permute.xlu0 0
      %1753 = vperm.xlu0 %1752, %v1694
      %v1754 = vpop.permute.xlu0 %1753
      %1757 = vset.pattern.permute.xlu0 0
      %1758 = vperm.xlu0 %1757, %v1695
      %v1759 = vpop.permute.xlu0 %1758
      %1762 = vset.pattern.permute.xlu0 0
      %1763 = vperm.xlu0 %1762, %v1696
      %v1764 = vpop.permute.xlu0 %1763
      %1767 = vset.pattern.permute.xlu0 0
      %1768 = vperm.xlu0 %1767, %v1697
      %v1769 = vpop.permute.xlu0 %1768
      %1772 = vset.pattern.permute.xlu0 0
      %1773 = vperm.xlu0 %1772, %v1698
      %v1774 = vpop.permute.xlu0 %1773
      %1777 = vset.pattern.permute.xlu0 0
      %1778 = vperm.xlu0 %1777, %v1699
      %v1779 = vpop.permute.xlu0 %1778
      %v1781 = vlaneseq
      %v1782 = vshrl.u32 %v1781, 7
      %v1783 = vsub.s32 0, %v1782
      %v1784 = vrot.slane %v1700, %v1783
      %v1785 = vmul.f32 %v1704, %v1784
      %v1786 = vmul.f32 %v1709, %v1784
      %v1787 = vmul.f32 %v1714, %v1784
      %v1788 = vmul.f32 %v1719, %v1784
      %v1789 = vmul.f32 %v1724, %v1784
      %v1790 = vmul.f32 %v1729, %v1784
      %v1791 = vmul.f32 %v1734, %v1784
      %v1792 = vmul.f32 %v1739, %v1784
      %v1793 = vmul.f32 %v1744, %v1784
      %v1794 = vmul.f32 %v1749, %v1784
      %v1795 = vmul.f32 %v1754, %v1784
      %v1796 = vmul.f32 %v1759, %v1784
      %v1797 = vmul.f32 %v1764, %v1784
      %v1798 = vmul.f32 %v1769, %v1784
      %v1799 = vmul.f32 %v1774, %v1784
      %v1800 = vmul.f32 %v1779, %v1784
      %v1817 = vrot.slane %v1785, 1
      %v1818 = vrot.slane %v1786, 1
      %v1819 = vsel %vm461, %v1817, %v1818
      %v1820 = vrot.slane %v1787, 1
      %v1821 = vrot.slane %v1788, 1
      %v1822 = vsel %vm461, %v1820, %v1821
      %v1823 = vrot.slane %v1789, 1
      %v1824 = vrot.slane %v1790, 1
      %v1825 = vsel %vm461, %v1823, %v1824
      %v1826 = vrot.slane %v1791, 1
      %v1827 = vrot.slane %v1792, 1
      %v1828 = vsel %vm461, %v1826, %v1827
      %v1829 = vrot.slane %v1793, 1
      %v1830 = vrot.slane %v1794, 1
      %v1831 = vsel %vm461, %v1829, %v1830
      %v1832 = vrot.slane %v1795, 1
      %v1833 = vrot.slane %v1796, 1
      %v1834 = vsel %vm461, %v1832, %v1833
      %v1835 = vrot.slane %v1797, 1
      %v1836 = vrot.slane %v1798, 1
      %v1837 = vsel %vm461, %v1835, %v1836
      %v1838 = vrot.slane %v1799, 1
      %v1839 = vrot.slane %v1800, 1
      %v1840 = vsel %vm461, %v1838, %v1839
      %v1849 = vadd.f32 %v1658, %v1819
      %v1850 = vadd.f32 %v1659, %v1822
      %v1851 = vadd.f32 %v1660, %v1825
      %v1852 = vadd.f32 %v1661, %v1828
      %v1853 = vadd.f32 %v1662, %v1831
      %v1854 = vadd.f32 %v1663, %v1834
      %v1855 = vadd.f32 %v1664, %v1837
      %v1856 = vadd.f32 %v1665, %v1840
      %v1857 = vld [vmem:[%s1586] sm:$0xe]
      %v1858 = vld [vmem:[%s1586 + $0x8] sm:$0xe]
      %v1859 = vld [vmem:[%s1586 + $0x10] sm:$0xe]
      %v1860 = vld [vmem:[%s1586 + $0x18] sm:$0xe]
      %v1861 = vld [vmem:[%s1586 + $0x20] sm:$0xe]
      %v1862 = vld [vmem:[%s1586 + $0x28] sm:$0xe]
      %v1863 = vld [vmem:[%s1586 + $0x30] sm:$0xe]
      %v1864 = vld [vmem:[%s1586 + $0x38] sm:$0xe]
      %s1865 = scalar_lea.vmem %s201, 12
      %v1866 = vld [vmem:[%s1865] sm:$0x1]
      %v1867 = vunpack.c.l.bf16 %v1857
      %v1868 = vunpack.c.l.bf16 %v1858
      %v1869 = vunpack.c.l.bf16 %v1859
      %v1870 = vunpack.c.l.bf16 %v1860
      %v1871 = vunpack.c.l.bf16 %v1861
      %v1872 = vunpack.c.l.bf16 %v1862
      %v1873 = vunpack.c.l.bf16 %v1863
      %v1874 = vunpack.c.l.bf16 %v1864
      %v1875 = vunpack.c.l.bf16 %v1866
      %1877 = vset.pattern.permute.xlu0 0
      %1878 = vperm.xlu0 %1877, %v1867
      %v1879 = vpop.permute.xlu0 %1878
      %1882 = vset.pattern.permute.xlu0 0
      %1883 = vperm.xlu0 %1882, %v1868
      %v1884 = vpop.permute.xlu0 %1883
      %1887 = vset.pattern.permute.xlu0 0
      %1888 = vperm.xlu0 %1887, %v1869
      %v1889 = vpop.permute.xlu0 %1888
      %1892 = vset.pattern.permute.xlu0 0
      %1893 = vperm.xlu0 %1892, %v1870
      %v1894 = vpop.permute.xlu0 %1893
      %1897 = vset.pattern.permute.xlu0 0
      %1898 = vperm.xlu0 %1897, %v1871
      %v1899 = vpop.permute.xlu0 %1898
      %1902 = vset.pattern.permute.xlu0 0
      %1903 = vperm.xlu0 %1902, %v1872
      %v1904 = vpop.permute.xlu0 %1903
      %1907 = vset.pattern.permute.xlu0 0
      %1908 = vperm.xlu0 %1907, %v1873
      %v1909 = vpop.permute.xlu0 %1908
      %1912 = vset.pattern.permute.xlu0 0
      %1913 = vperm.xlu0 %1912, %v1874
      %v1914 = vpop.permute.xlu0 %1913
      %v1916 = vlaneseq
      %v1917 = vshrl.u32 %v1916, 7
      %v1918 = vsub.s32 0, %v1917
      %v1919 = vrot.slane %v1875, %v1918
      %v1920 = vmul.f32 %v1879, %v1919
      %v1921 = vmul.f32 %v1709, %v1919
      %v1922 = vmul.f32 %v1884, %v1919
      %v1923 = vmul.f32 %v1719, %v1919
      %v1924 = vmul.f32 %v1889, %v1919
      %v1925 = vmul.f32 %v1729, %v1919
      %v1926 = vmul.f32 %v1894, %v1919
      %v1927 = vmul.f32 %v1739, %v1919
      %v1928 = vmul.f32 %v1899, %v1919
      %v1929 = vmul.f32 %v1749, %v1919
      %v1930 = vmul.f32 %v1904, %v1919
      %v1931 = vmul.f32 %v1759, %v1919
      %v1932 = vmul.f32 %v1909, %v1919
      %v1933 = vmul.f32 %v1769, %v1919
      %v1934 = vmul.f32 %v1914, %v1919
      %v1935 = vmul.f32 %v1779, %v1919
      %v1952 = vrot.slane %v1920, 2
      %v1953 = vrot.slane %v1921, 2
      %v1954 = vsel %vm597, %v1952, %v1953
      %v1955 = vrot.slane %v1922, 2
      %v1956 = vrot.slane %v1923, 2
      %v1957 = vsel %vm597, %v1955, %v1956
      %v1958 = vrot.slane %v1924, 2
      %v1959 = vrot.slane %v1925, 2
      %v1960 = vsel %vm597, %v1958, %v1959
      %v1961 = vrot.slane %v1926, 2
      %v1962 = vrot.slane %v1927, 2
      %v1963 = vsel %vm597, %v1961, %v1962
      %v1964 = vrot.slane %v1928, 2
      %v1965 = vrot.slane %v1929, 2
      %v1966 = vsel %vm597, %v1964, %v1965
      %v1967 = vrot.slane %v1930, 2
      %v1968 = vrot.slane %v1931, 2
      %v1969 = vsel %vm597, %v1967, %v1968
      %v1970 = vrot.slane %v1932, 2
      %v1971 = vrot.slane %v1933, 2
      %v1972 = vsel %vm597, %v1970, %v1971
      %v1973 = vrot.slane %v1934, 2
      %v1974 = vrot.slane %v1935, 2
      %v1975 = vsel %vm597, %v1973, %v1974
      %v1984 = vadd.f32 %v1849, %v1954
      %v1985 = vadd.f32 %v1850, %v1957
      %v1986 = vadd.f32 %v1851, %v1960
      %v1987 = vadd.f32 %v1852, %v1963
      %v1988 = vadd.f32 %v1853, %v1966
      %v1989 = vadd.f32 %v1854, %v1969
      %v1990 = vadd.f32 %v1855, %v1972
      %v1991 = vadd.f32 %v1856, %v1975
      %v1992 = vld [vmem:[%s1586 + $0x4] sm:$0x3]
      %v1993 = vld [vmem:[%s1586 + $0xc] sm:$0x3]
      %v1994 = vld [vmem:[%s1586 + $0x14] sm:$0x3]
      %v1995 = vld [vmem:[%s1586 + $0x1c] sm:$0x3]
      %v1996 = vld [vmem:[%s1586 + $0x24] sm:$0x3]
      %v1997 = vld [vmem:[%s1586 + $0x2c] sm:$0x3]
      %v1998 = vld [vmem:[%s1586 + $0x34] sm:$0x3]
      %v1999 = vld [vmem:[%s1586 + $0x3c] sm:$0x3]
      %s2000 = scalar_lea.vmem %s201, 13
      %v2001 = vld [vmem:[%s2000] sm:$0x1]
      %v2002 = vunpack.c.l.bf16 %v1992
      %v2003 = vunpack.c.l.bf16 %v1993
      %v2004 = vunpack.c.l.bf16 %v1994
      %v2005 = vunpack.c.l.bf16 %v1995
      %v2006 = vunpack.c.l.bf16 %v1996
      %v2007 = vunpack.c.l.bf16 %v1997
      %v2008 = vunpack.c.l.bf16 %v1998
      %v2009 = vunpack.c.l.bf16 %v1999
      %v2010 = vunpack.c.l.bf16 %v2001
      %2012 = vset.pattern.permute.xlu0 0
      %2013 = vperm.xlu0 %2012, %v2002
      %v2014 = vpop.permute.xlu0 %2013
      %2017 = vset.pattern.permute.xlu0 0
      %2018 = vperm.xlu0 %2017, %v2003
      %v2019 = vpop.permute.xlu0 %2018
      %2022 = vset.pattern.permute.xlu0 0
      %2023 = vperm.xlu0 %2022, %v2004
      %v2024 = vpop.permute.xlu0 %2023
      %2027 = vset.pattern.permute.xlu0 0
      %2028 = vperm.xlu0 %2027, %v2005
      %v2029 = vpop.permute.xlu0 %2028
      %2032 = vset.pattern.permute.xlu0 0
      %2033 = vperm.xlu0 %2032, %v2006
      %v2034 = vpop.permute.xlu0 %2033
      %2037 = vset.pattern.permute.xlu0 0
      %2038 = vperm.xlu0 %2037, %v2007
      %v2039 = vpop.permute.xlu0 %2038
      %2042 = vset.pattern.permute.xlu0 0
      %2043 = vperm.xlu0 %2042, %v2008
      %v2044 = vpop.permute.xlu0 %2043
      %2047 = vset.pattern.permute.xlu0 0
      %2048 = vperm.xlu0 %2047, %v2009
      %v2049 = vpop.permute.xlu0 %2048
      %v2051 = vlaneseq
      %v2052 = vshrl.u32 %v2051, 7
      %v2053 = vsub.s32 0, %v2052
      %v2054 = vrot.slane %v2010, %v2053
      %v2055 = vmul.f32 %v1879, %v2054
      %v2056 = vmul.f32 %v2014, %v2054
      %v2057 = vmul.f32 %v1884, %v2054
      %v2058 = vmul.f32 %v2019, %v2054
      %v2059 = vmul.f32 %v1889, %v2054
      %v2060 = vmul.f32 %v2024, %v2054
      %v2061 = vmul.f32 %v1894, %v2054
      %v2062 = vmul.f32 %v2029, %v2054
      %v2063 = vmul.f32 %v1899, %v2054
      %v2064 = vmul.f32 %v2034, %v2054
      %v2065 = vmul.f32 %v1904, %v2054
      %v2066 = vmul.f32 %v2039, %v2054
      %v2067 = vmul.f32 %v1909, %v2054
      %v2068 = vmul.f32 %v2044, %v2054
      %v2069 = vmul.f32 %v1914, %v2054
      %v2070 = vmul.f32 %v2049, %v2054
      %v2087 = vrot.slane %v2055, 3
      %v2088 = vrot.slane %v2056, 3
      %v2089 = vsel %vm733, %v2087, %v2088
      %v2090 = vrot.slane %v2057, 3
      %v2091 = vrot.slane %v2058, 3
      %v2092 = vsel %vm733, %v2090, %v2091
      %v2093 = vrot.slane %v2059, 3
      %v2094 = vrot.slane %v2060, 3
      %v2095 = vsel %vm733, %v2093, %v2094
      %v2096 = vrot.slane %v2061, 3
      %v2097 = vrot.slane %v2062, 3
      %v2098 = vsel %vm733, %v2096, %v2097
      %v2099 = vrot.slane %v2063, 3
      %v2100 = vrot.slane %v2064, 3
      %v2101 = vsel %vm733, %v2099, %v2100
      %v2102 = vrot.slane %v2065, 3
      %v2103 = vrot.slane %v2066, 3
      %v2104 = vsel %vm733, %v2102, %v2103
      %v2105 = vrot.slane %v2067, 3
      %v2106 = vrot.slane %v2068, 3
      %v2107 = vsel %vm733, %v2105, %v2106
      %v2108 = vrot.slane %v2069, 3
      %v2109 = vrot.slane %v2070, 3
      %v2110 = vsel %vm733, %v2108, %v2109
      %v2119 = vadd.f32 %v1984, %v2089
      %v2120 = vadd.f32 %v1985, %v2092
      %v2121 = vadd.f32 %v1986, %v2095
      %v2122 = vadd.f32 %v1987, %v2098
      %v2123 = vadd.f32 %v1988, %v2101
      %v2124 = vadd.f32 %v1989, %v2104
      %v2125 = vadd.f32 %v1990, %v2107
      %v2126 = vadd.f32 %v1991, %v2110
      %v2127 = vld [vmem:[%s1586] sm:$0xc]
      %v2128 = vld [vmem:[%s1586 + $0x8] sm:$0xc]
      %v2129 = vld [vmem:[%s1586 + $0x10] sm:$0xc]
      %v2130 = vld [vmem:[%s1586 + $0x18] sm:$0xc]
      %v2131 = vld [vmem:[%s1586 + $0x20] sm:$0xc]
      %v2132 = vld [vmem:[%s1586 + $0x28] sm:$0xc]
      %v2133 = vld [vmem:[%s1586 + $0x30] sm:$0xc]
      %v2134 = vld [vmem:[%s1586 + $0x38] sm:$0xc]
      %s2135 = scalar_lea.vmem %s201, 14
      %v2136 = vld [vmem:[%s2135] sm:$0x1]
      %v2137 = vunpack.c.l.bf16 %v2127
      %v2138 = vunpack.c.l.bf16 %v2128
      %v2139 = vunpack.c.l.bf16 %v2129
      %v2140 = vunpack.c.l.bf16 %v2130
      %v2141 = vunpack.c.l.bf16 %v2131
      %v2142 = vunpack.c.l.bf16 %v2132
      %v2143 = vunpack.c.l.bf16 %v2133
      %v2144 = vunpack.c.l.bf16 %v2134
      %v2145 = vunpack.c.l.bf16 %v2136
      %2147 = vset.pattern.permute.xlu0 0
      %2148 = vperm.xlu0 %2147, %v2137
      %v2149 = vpop.permute.xlu0 %2148
      %2152 = vset.pattern.permute.xlu0 0
      %2153 = vperm.xlu0 %2152, %v2138
      %v2154 = vpop.permute.xlu0 %2153
      %2157 = vset.pattern.permute.xlu0 0
      %2158 = vperm.xlu0 %2157, %v2139
      %v2159 = vpop.permute.xlu0 %2158
      %2162 = vset.pattern.permute.xlu0 0
      %2163 = vperm.xlu0 %2162, %v2140
      %v2164 = vpop.permute.xlu0 %2163
      %2167 = vset.pattern.permute.xlu0 0
      %2168 = vperm.xlu0 %2167, %v2141
      %v2169 = vpop.permute.xlu0 %2168
      %2172 = vset.pattern.permute.xlu0 0
      %2173 = vperm.xlu0 %2172, %v2142
      %v2174 = vpop.permute.xlu0 %2173
      %2177 = vset.pattern.permute.xlu0 0
      %2178 = vperm.xlu0 %2177, %v2143
      %v2179 = vpop.permute.xlu0 %2178
      %2182 = vset.pattern.permute.xlu0 0
      %2183 = vperm.xlu0 %2182, %v2144
      %v2184 = vpop.permute.xlu0 %2183
      %v2186 = vlaneseq
      %v2187 = vshrl.u32 %v2186, 7
      %v2188 = vsub.s32 0, %v2187
      %v2189 = vrot.slane %v2145, %v2188
      %v2190 = vmul.f32 %v2149, %v2189
      %v2191 = vmul.f32 %v2014, %v2189
      %v2192 = vmul.f32 %v2154, %v2189
      %v2193 = vmul.f32 %v2019, %v2189
      %v2194 = vmul.f32 %v2159, %v2189
      %v2195 = vmul.f32 %v2024, %v2189
      %v2196 = vmul.f32 %v2164, %v2189
      %v2197 = vmul.f32 %v2029, %v2189
      %v2198 = vmul.f32 %v2169, %v2189
      %v2199 = vmul.f32 %v2034, %v2189
      %v2200 = vmul.f32 %v2174, %v2189
      %v2201 = vmul.f32 %v2039, %v2189
      %v2202 = vmul.f32 %v2179, %v2189
      %v2203 = vmul.f32 %v2044, %v2189
      %v2204 = vmul.f32 %v2184, %v2189
      %v2205 = vmul.f32 %v2049, %v2189
      %v2222 = vrot.slane %v2190, 4
      %v2223 = vrot.slane %v2191, 4
      %v2224 = vsel %vm869, %v2222, %v2223
      %v2225 = vrot.slane %v2192, 4
      %v2226 = vrot.slane %v2193, 4
      %v2227 = vsel %vm869, %v2225, %v2226
      %v2228 = vrot.slane %v2194, 4
      %v2229 = vrot.slane %v2195, 4
      %v2230 = vsel %vm869, %v2228, %v2229
      %v2231 = vrot.slane %v2196, 4
      %v2232 = vrot.slane %v2197, 4
      %v2233 = vsel %vm869, %v2231, %v2232
      %v2234 = vrot.slane %v2198, 4
      %v2235 = vrot.slane %v2199, 4
      %v2236 = vsel %vm869, %v2234, %v2235
      %v2237 = vrot.slane %v2200, 4
      %v2238 = vrot.slane %v2201, 4
      %v2239 = vsel %vm869, %v2237, %v2238
      %v2240 = vrot.slane %v2202, 4
      %v2241 = vrot.slane %v2203, 4
      %v2242 = vsel %vm869, %v2240, %v2241
      %v2243 = vrot.slane %v2204, 4
      %v2244 = vrot.slane %v2205, 4
      %v2245 = vsel %vm869, %v2243, %v2244
      %v2254 = vadd.f32 %v2119, %v2224
      %v2255 = vadd.f32 %v2120, %v2227
      %v2256 = vadd.f32 %v2121, %v2230
      %v2257 = vadd.f32 %v2122, %v2233
      %v2258 = vadd.f32 %v2123, %v2236
      %v2259 = vadd.f32 %v2124, %v2239
      %v2260 = vadd.f32 %v2125, %v2242
      %v2261 = vadd.f32 %v2126, %v2245
      %s2262 = scalar_lea.vmem %s196, 24
      %v2263 = vld [vmem:[%s2262] sm:$0xf]
      %v2264 = vld [vmem:[%s2262 + $0x8] sm:$0xf]
      %v2265 = vld [vmem:[%s2262 + $0x10] sm:$0xf]
      %v2266 = vld [vmem:[%s2262 + $0x18] sm:$0xf]
      %v2267 = vld [vmem:[%s2262 + $0x20] sm:$0xf]
      %v2268 = vld [vmem:[%s2262 + $0x28] sm:$0xf]
      %v2269 = vld [vmem:[%s2262 + $0x30] sm:$0xf]
      %v2270 = vld [vmem:[%s2262 + $0x38] sm:$0xf]
      %s2271 = scalar_lea.vmem %s201, 15
      %v2272 = vld [vmem:[%s2271] sm:$0x1]
      %v2273 = vunpack.c.l.bf16 %v2263
      %v2274 = vunpack.c.l.bf16 %v2264
      %v2275 = vunpack.c.l.bf16 %v2265
      %v2276 = vunpack.c.l.bf16 %v2266
      %v2277 = vunpack.c.l.bf16 %v2267
      %v2278 = vunpack.c.l.bf16 %v2268
      %v2279 = vunpack.c.l.bf16 %v2269
      %v2280 = vunpack.c.l.bf16 %v2270
      %v2281 = vunpack.c.l.bf16 %v2272
      %2283 = vset.pattern.permute.xlu0 0
      %2284 = vperm.xlu0 %2283, %v2273
      %v2285 = vpop.permute.xlu0 %2284
      %2288 = vset.pattern.permute.xlu0 0
      %2289 = vperm.xlu0 %2288, %v2274
      %v2290 = vpop.permute.xlu0 %2289
      %2293 = vset.pattern.permute.xlu0 0
      %2294 = vperm.xlu0 %2293, %v2275
      %v2295 = vpop.permute.xlu0 %2294
      %2298 = vset.pattern.permute.xlu0 0
      %2299 = vperm.xlu0 %2298, %v2276
      %v2300 = vpop.permute.xlu0 %2299
      %2303 = vset.pattern.permute.xlu0 0
      %2304 = vperm.xlu0 %2303, %v2277
      %v2305 = vpop.permute.xlu0 %2304
      %2308 = vset.pattern.permute.xlu0 0
      %2309 = vperm.xlu0 %2308, %v2278
      %v2310 = vpop.permute.xlu0 %2309
      %2313 = vset.pattern.permute.xlu0 0
      %2314 = vperm.xlu0 %2313, %v2279
      %v2315 = vpop.permute.xlu0 %2314
      %2318 = vset.pattern.permute.xlu0 0
      %2319 = vperm.xlu0 %2318, %v2280
      %v2320 = vpop.permute.xlu0 %2319
      %v2322 = vlaneseq
      %v2323 = vshrl.u32 %v2322, 7
      %v2324 = vsub.s32 0, %v2323
      %v2325 = vrot.slane %v2281, %v2324
      %v2326 = vmul.f32 %v2285, %v2325
      %v2327 = vmul.f32 %v2290, %v2325
      %v2328 = vmul.f32 %v2295, %v2325
      %v2329 = vmul.f32 %v2300, %v2325
      %v2330 = vmul.f32 %v2305, %v2325
      %v2331 = vmul.f32 %v2310, %v2325
      %v2332 = vmul.f32 %v2315, %v2325
      %v2333 = vmul.f32 %v2320, %v2325
      %v2334 = vadd.f32 %v2254, %v2326
      %v2335 = vadd.f32 %v2255, %v2327
      %v2336 = vadd.f32 %v2256, %v2328
      %v2337 = vadd.f32 %v2257, %v2329
      %v2338 = vadd.f32 %v2258, %v2330
      %v2339 = vadd.f32 %v2259, %v2331
      %v2340 = vadd.f32 %v2260, %v2332
      %v2341 = vadd.f32 %v2261, %v2333
      %v2342 = vld [vmem:[%s2262] sm:$0xf]
      %v2343 = vld [vmem:[%s2262 + $0x4] sm:$0x1]
      %v2344 = vld [vmem:[%s2262 + $0x8] sm:$0xf]
      %v2345 = vld [vmem:[%s2262 + $0xc] sm:$0x1]
      %v2346 = vld [vmem:[%s2262 + $0x10] sm:$0xf]
      %v2347 = vld [vmem:[%s2262 + $0x14] sm:$0x1]
      %v2348 = vld [vmem:[%s2262 + $0x18] sm:$0xf]
      %v2349 = vld [vmem:[%s2262 + $0x1c] sm:$0x1]
      %v2350 = vld [vmem:[%s2262 + $0x20] sm:$0xf]
      %v2351 = vld [vmem:[%s2262 + $0x24] sm:$0x1]
      %v2352 = vld [vmem:[%s2262 + $0x28] sm:$0xf]
      %v2353 = vld [vmem:[%s2262 + $0x2c] sm:$0x1]
      %v2354 = vld [vmem:[%s2262 + $0x30] sm:$0xf]
      %v2355 = vld [vmem:[%s2262 + $0x34] sm:$0x1]
      %v2356 = vld [vmem:[%s2262 + $0x38] sm:$0xf]
      %v2357 = vld [vmem:[%s2262 + $0x3c] sm:$0x1]
      %s2358 = scalar_lea.vmem %s201, 16
      %v2359 = vld [vmem:[%s2358] sm:$0x1]
      %v2360 = vunpack.c.l.bf16 %v2342
      %v2361 = vunpack.c.l.bf16 %v2343
      %v2362 = vunpack.c.l.bf16 %v2344
      %v2363 = vunpack.c.l.bf16 %v2345
      %v2364 = vunpack.c.l.bf16 %v2346
      %v2365 = vunpack.c.l.bf16 %v2347
      %v2366 = vunpack.c.l.bf16 %v2348
      %v2367 = vunpack.c.l.bf16 %v2349
      %v2368 = vunpack.c.l.bf16 %v2350
      %v2369 = vunpack.c.l.bf16 %v2351
      %v2370 = vunpack.c.l.bf16 %v2352
      %v2371 = vunpack.c.l.bf16 %v2353
      %v2372 = vunpack.c.l.bf16 %v2354
      %v2373 = vunpack.c.l.bf16 %v2355
      %v2374 = vunpack.c.l.bf16 %v2356
      %v2375 = vunpack.c.l.bf16 %v2357
      %v2376 = vunpack.c.l.bf16 %v2359
      %2378 = vset.pattern.permute.xlu0 0
      %2379 = vperm.xlu0 %2378, %v2360
      %v2380 = vpop.permute.xlu0 %2379
      %2383 = vset.pattern.permute.xlu0 0
      %2384 = vperm.xlu0 %2383, %v2361
      %v2385 = vpop.permute.xlu0 %2384
      %2388 = vset.pattern.permute.xlu0 0
      %2389 = vperm.xlu0 %2388, %v2362
      %v2390 = vpop.permute.xlu0 %2389
      %2393 = vset.pattern.permute.xlu0 0
      %2394 = vperm.xlu0 %2393, %v2363
      %v2395 = vpop.permute.xlu0 %2394
      %2398 = vset.pattern.permute.xlu0 0
      %2399 = vperm.xlu0 %2398, %v2364
      %v2400 = vpop.permute.xlu0 %2399
      %2403 = vset.pattern.permute.xlu0 0
      %2404 = vperm.xlu0 %2403, %v2365
      %v2405 = vpop.permute.xlu0 %2404
      %2408 = vset.pattern.permute.xlu0 0
      %2409 = vperm.xlu0 %2408, %v2366
      %v2410 = vpop.permute.xlu0 %2409
      %2413 = vset.pattern.permute.xlu0 0
      %2414 = vperm.xlu0 %2413, %v2367
      %v2415 = vpop.permute.xlu0 %2414
      %2418 = vset.pattern.permute.xlu0 0
      %2419 = vperm.xlu0 %2418, %v2368
      %v2420 = vpop.permute.xlu0 %2419
      %2423 = vset.pattern.permute.xlu0 0
      %2424 = vperm.xlu0 %2423, %v2369
      %v2425 = vpop.permute.xlu0 %2424
      %2428 = vset.pattern.permute.xlu0 0
      %2429 = vperm.xlu0 %2428, %v2370
      %v2430 = vpop.permute.xlu0 %2429
      %2433 = vset.pattern.permute.xlu0 0
      %2434 = vperm.xlu0 %2433, %v2371
      %v2435 = vpop.permute.xlu0 %2434
      %2438 = vset.pattern.permute.xlu0 0
      %2439 = vperm.xlu0 %2438, %v2372
      %v2440 = vpop.permute.xlu0 %2439
      %2443 = vset.pattern.permute.xlu0 0
      %2444 = vperm.xlu0 %2443, %v2373
      %v2445 = vpop.permute.xlu0 %2444
      %2448 = vset.pattern.permute.xlu0 0
      %2449 = vperm.xlu0 %2448, %v2374
      %v2450 = vpop.permute.xlu0 %2449
      %2453 = vset.pattern.permute.xlu0 0
      %2454 = vperm.xlu0 %2453, %v2375
      %v2455 = vpop.permute.xlu0 %2454
      %v2457 = vlaneseq
      %v2458 = vshrl.u32 %v2457, 7
      %v2459 = vsub.s32 0, %v2458
      %v2460 = vrot.slane %v2376, %v2459
      %v2461 = vmul.f32 %v2380, %v2460
      %v2462 = vmul.f32 %v2385, %v2460
      %v2463 = vmul.f32 %v2390, %v2460
      %v2464 = vmul.f32 %v2395, %v2460
      %v2465 = vmul.f32 %v2400, %v2460
      %v2466 = vmul.f32 %v2405, %v2460
      %v2467 = vmul.f32 %v2410, %v2460
      %v2468 = vmul.f32 %v2415, %v2460
      %v2469 = vmul.f32 %v2420, %v2460
      %v2470 = vmul.f32 %v2425, %v2460
      %v2471 = vmul.f32 %v2430, %v2460
      %v2472 = vmul.f32 %v2435, %v2460
      %v2473 = vmul.f32 %v2440, %v2460
      %v2474 = vmul.f32 %v2445, %v2460
      %v2475 = vmul.f32 %v2450, %v2460
      %v2476 = vmul.f32 %v2455, %v2460
      %v2493 = vrot.slane %v2461, 1
      %v2494 = vrot.slane %v2462, 1
      %v2495 = vsel %vm461, %v2493, %v2494
      %v2496 = vrot.slane %v2463, 1
      %v2497 = vrot.slane %v2464, 1
      %v2498 = vsel %vm461, %v2496, %v2497
      %v2499 = vrot.slane %v2465, 1
      %v2500 = vrot.slane %v2466, 1
      %v2501 = vsel %vm461, %v2499, %v2500
      %v2502 = vrot.slane %v2467, 1
      %v2503 = vrot.slane %v2468, 1
      %v2504 = vsel %vm461, %v2502, %v2503
      %v2505 = vrot.slane %v2469, 1
      %v2506 = vrot.slane %v2470, 1
      %v2507 = vsel %vm461, %v2505, %v2506
      %v2508 = vrot.slane %v2471, 1
      %v2509 = vrot.slane %v2472, 1
      %v2510 = vsel %vm461, %v2508, %v2509
      %v2511 = vrot.slane %v2473, 1
      %v2512 = vrot.slane %v2474, 1
      %v2513 = vsel %vm461, %v2511, %v2512
      %v2514 = vrot.slane %v2475, 1
      %v2515 = vrot.slane %v2476, 1
      %v2516 = vsel %vm461, %v2514, %v2515
      %v2525 = vadd.f32 %v2334, %v2495
      %v2526 = vadd.f32 %v2335, %v2498
      %v2527 = vadd.f32 %v2336, %v2501
      %v2528 = vadd.f32 %v2337, %v2504
      %v2529 = vadd.f32 %v2338, %v2507
      %v2530 = vadd.f32 %v2339, %v2510
      %v2531 = vadd.f32 %v2340, %v2513
      %v2532 = vadd.f32 %v2341, %v2516
      %v2533 = vld [vmem:[%s2262] sm:$0xe]
      %v2534 = vld [vmem:[%s2262 + $0x8] sm:$0xe]
      %v2535 = vld [vmem:[%s2262 + $0x10] sm:$0xe]
      %v2536 = vld [vmem:[%s2262 + $0x18] sm:$0xe]
      %v2537 = vld [vmem:[%s2262 + $0x20] sm:$0xe]
      %v2538 = vld [vmem:[%s2262 + $0x28] sm:$0xe]
      %v2539 = vld [vmem:[%s2262 + $0x30] sm:$0xe]
      %v2540 = vld [vmem:[%s2262 + $0x38] sm:$0xe]
      %s2541 = scalar_lea.vmem %s201, 17
      %v2542 = vld [vmem:[%s2541] sm:$0x1]
      %v2543 = vunpack.c.l.bf16 %v2533
      %v2544 = vunpack.c.l.bf16 %v2534
      %v2545 = vunpack.c.l.bf16 %v2535
      %v2546 = vunpack.c.l.bf16 %v2536
      %v2547 = vunpack.c.l.bf16 %v2537
      %v2548 = vunpack.c.l.bf16 %v2538
      %v2549 = vunpack.c.l.bf16 %v2539
      %v2550 = vunpack.c.l.bf16 %v2540
      %v2551 = vunpack.c.l.bf16 %v2542
      %2553 = vset.pattern.permute.xlu0 0
      %2554 = vperm.xlu0 %2553, %v2543
      %v2555 = vpop.permute.xlu0 %2554
      %2558 = vset.pattern.permute.xlu0 0
      %2559 = vperm.xlu0 %2558, %v2544
      %v2560 = vpop.permute.xlu0 %2559
      %2563 = vset.pattern.permute.xlu0 0
      %2564 = vperm.xlu0 %2563, %v2545
      %v2565 = vpop.permute.xlu0 %2564
      %2568 = vset.pattern.permute.xlu0 0
      %2569 = vperm.xlu0 %2568, %v2546
      %v2570 = vpop.permute.xlu0 %2569
      %2573 = vset.pattern.permute.xlu0 0
      %2574 = vperm.xlu0 %2573, %v2547
      %v2575 = vpop.permute.xlu0 %2574
      %2578 = vset.pattern.permute.xlu0 0
      %2579 = vperm.xlu0 %2578, %v2548
      %v2580 = vpop.permute.xlu0 %2579
      %2583 = vset.pattern.permute.xlu0 0
      %2584 = vperm.xlu0 %2583, %v2549
      %v2585 = vpop.permute.xlu0 %2584
      %2588 = vset.pattern.permute.xlu0 0
      %2589 = vperm.xlu0 %2588, %v2550
      %v2590 = vpop.permute.xlu0 %2589
      %v2592 = vlaneseq
      %v2593 = vshrl.u32 %v2592, 7
      %v2594 = vsub.s32 0, %v2593
      %v2595 = vrot.slane %v2551, %v2594
      %v2596 = vmul.f32 %v2555, %v2595
      %v2597 = vmul.f32 %v2385, %v2595
      %v2598 = vmul.f32 %v2560, %v2595
      %v2599 = vmul.f32 %v2395, %v2595
      %v2600 = vmul.f32 %v2565, %v2595
      %v2601 = vmul.f32 %v2405, %v2595
      %v2602 = vmul.f32 %v2570, %v2595
      %v2603 = vmul.f32 %v2415, %v2595
      %v2604 = vmul.f32 %v2575, %v2595
      %v2605 = vmul.f32 %v2425, %v2595
      %v2606 = vmul.f32 %v2580, %v2595
      %v2607 = vmul.f32 %v2435, %v2595
      %v2608 = vmul.f32 %v2585, %v2595
      %v2609 = vmul.f32 %v2445, %v2595
      %v2610 = vmul.f32 %v2590, %v2595
      %v2611 = vmul.f32 %v2455, %v2595
      %v2628 = vrot.slane %v2596, 2
      %v2629 = vrot.slane %v2597, 2
      %v2630 = vsel %vm597, %v2628, %v2629
      %v2631 = vrot.slane %v2598, 2
      %v2632 = vrot.slane %v2599, 2
      %v2633 = vsel %vm597, %v2631, %v2632
      %v2634 = vrot.slane %v2600, 2
      %v2635 = vrot.slane %v2601, 2
      %v2636 = vsel %vm597, %v2634, %v2635
      %v2637 = vrot.slane %v2602, 2
      %v2638 = vrot.slane %v2603, 2
      %v2639 = vsel %vm597, %v2637, %v2638
      %v2640 = vrot.slane %v2604, 2
      %v2641 = vrot.slane %v2605, 2
      %v2642 = vsel %vm597, %v2640, %v2641
      %v2643 = vrot.slane %v2606, 2
      %v2644 = vrot.slane %v2607, 2
      %v2645 = vsel %vm597, %v2643, %v2644
      %v2646 = vrot.slane %v2608, 2
      %v2647 = vrot.slane %v2609, 2
      %v2648 = vsel %vm597, %v2646, %v2647
      %v2649 = vrot.slane %v2610, 2
      %v2650 = vrot.slane %v2611, 2
      %v2651 = vsel %vm597, %v2649, %v2650
      %v2660 = vadd.f32 %v2525, %v2630
      %v2661 = vadd.f32 %v2526, %v2633
      %v2662 = vadd.f32 %v2527, %v2636
      %v2663 = vadd.f32 %v2528, %v2639
      %v2664 = vadd.f32 %v2529, %v2642
      %v2665 = vadd.f32 %v2530, %v2645
      %v2666 = vadd.f32 %v2531, %v2648
      %v2667 = vadd.f32 %v2532, %v2651
      %v2668 = vld [vmem:[%s2262 + $0x4] sm:$0x3]
      %v2669 = vld [vmem:[%s2262 + $0xc] sm:$0x3]
      %v2670 = vld [vmem:[%s2262 + $0x14] sm:$0x3]
      %v2671 = vld [vmem:[%s2262 + $0x1c] sm:$0x3]
      %v2672 = vld [vmem:[%s2262 + $0x24] sm:$0x3]
      %v2673 = vld [vmem:[%s2262 + $0x2c] sm:$0x3]
      %v2674 = vld [vmem:[%s2262 + $0x34] sm:$0x3]
      %v2675 = vld [vmem:[%s2262 + $0x3c] sm:$0x3]
      %s2676 = scalar_lea.vmem %s201, 18
      %v2677 = vld [vmem:[%s2676] sm:$0x1]
      %v2678 = vunpack.c.l.bf16 %v2668
      %v2679 = vunpack.c.l.bf16 %v2669
      %v2680 = vunpack.c.l.bf16 %v2670
      %v2681 = vunpack.c.l.bf16 %v2671
      %v2682 = vunpack.c.l.bf16 %v2672
      %v2683 = vunpack.c.l.bf16 %v2673
      %v2684 = vunpack.c.l.bf16 %v2674
      %v2685 = vunpack.c.l.bf16 %v2675
      %v2686 = vunpack.c.l.bf16 %v2677
      %2688 = vset.pattern.permute.xlu0 0
      %2689 = vperm.xlu0 %2688, %v2678
      %v2690 = vpop.permute.xlu0 %2689
      %2693 = vset.pattern.permute.xlu0 0
      %2694 = vperm.xlu0 %2693, %v2679
      %v2695 = vpop.permute.xlu0 %2694
      %2698 = vset.pattern.permute.xlu0 0
      %2699 = vperm.xlu0 %2698, %v2680
      %v2700 = vpop.permute.xlu0 %2699
      %2703 = vset.pattern.permute.xlu0 0
      %2704 = vperm.xlu0 %2703, %v2681
      %v2705 = vpop.permute.xlu0 %2704
      %2708 = vset.pattern.permute.xlu0 0
      %2709 = vperm.xlu0 %2708, %v2682
      %v2710 = vpop.permute.xlu0 %2709
      %2713 = vset.pattern.permute.xlu0 0
      %2714 = vperm.xlu0 %2713, %v2683
      %v2715 = vpop.permute.xlu0 %2714
      %2718 = vset.pattern.permute.xlu0 0
      %2719 = vperm.xlu0 %2718, %v2684
      %v2720 = vpop.permute.xlu0 %2719
      %2723 = vset.pattern.permute.xlu0 0
      %2724 = vperm.xlu0 %2723, %v2685
      %v2725 = vpop.permute.xlu0 %2724
      %v2727 = vlaneseq
      %v2728 = vshrl.u32 %v2727, 7
      %v2729 = vsub.s32 0, %v2728
      %v2730 = vrot.slane %v2686, %v2729
      %v2731 = vmul.f32 %v2555, %v2730
      %v2732 = vmul.f32 %v2690, %v2730
      %v2733 = vmul.f32 %v2560, %v2730
      %v2734 = vmul.f32 %v2695, %v2730
      %v2735 = vmul.f32 %v2565, %v2730
      %v2736 = vmul.f32 %v2700, %v2730
      %v2737 = vmul.f32 %v2570, %v2730
      %v2738 = vmul.f32 %v2705, %v2730
      %v2739 = vmul.f32 %v2575, %v2730
      %v2740 = vmul.f32 %v2710, %v2730
      %v2741 = vmul.f32 %v2580, %v2730
      %v2742 = vmul.f32 %v2715, %v2730
      %v2743 = vmul.f32 %v2585, %v2730
      %v2744 = vmul.f32 %v2720, %v2730
      %v2745 = vmul.f32 %v2590, %v2730
      %v2746 = vmul.f32 %v2725, %v2730
      %v2763 = vrot.slane %v2731, 3
      %v2764 = vrot.slane %v2732, 3
      %v2765 = vsel %vm733, %v2763, %v2764
      %v2766 = vrot.slane %v2733, 3
      %v2767 = vrot.slane %v2734, 3
      %v2768 = vsel %vm733, %v2766, %v2767
      %v2769 = vrot.slane %v2735, 3
      %v2770 = vrot.slane %v2736, 3
      %v2771 = vsel %vm733, %v2769, %v2770
      %v2772 = vrot.slane %v2737, 3
      %v2773 = vrot.slane %v2738, 3
      %v2774 = vsel %vm733, %v2772, %v2773
      %v2775 = vrot.slane %v2739, 3
      %v2776 = vrot.slane %v2740, 3
      %v2777 = vsel %vm733, %v2775, %v2776
      %v2778 = vrot.slane %v2741, 3
      %v2779 = vrot.slane %v2742, 3
      %v2780 = vsel %vm733, %v2778, %v2779
      %v2781 = vrot.slane %v2743, 3
      %v2782 = vrot.slane %v2744, 3
      %v2783 = vsel %vm733, %v2781, %v2782
      %v2784 = vrot.slane %v2745, 3
      %v2785 = vrot.slane %v2746, 3
      %v2786 = vsel %vm733, %v2784, %v2785
      %v2795 = vadd.f32 %v2660, %v2765
      %v2796 = vadd.f32 %v2661, %v2768
      %v2797 = vadd.f32 %v2662, %v2771
      %v2798 = vadd.f32 %v2663, %v2774
      %v2799 = vadd.f32 %v2664, %v2777
      %v2800 = vadd.f32 %v2665, %v2780
      %v2801 = vadd.f32 %v2666, %v2783
      %v2802 = vadd.f32 %v2667, %v2786
      %v2803 = vld [vmem:[%s2262] sm:$0xc]
      %v2804 = vld [vmem:[%s2262 + $0x8] sm:$0xc]
      %v2805 = vld [vmem:[%s2262 + $0x10] sm:$0xc]
      %v2806 = vld [vmem:[%s2262 + $0x18] sm:$0xc]
      %v2807 = vld [vmem:[%s2262 + $0x20] sm:$0xc]
      %v2808 = vld [vmem:[%s2262 + $0x28] sm:$0xc]
      %v2809 = vld [vmem:[%s2262 + $0x30] sm:$0xc]
      %v2810 = vld [vmem:[%s2262 + $0x38] sm:$0xc]
      %s2811 = scalar_lea.vmem %s201, 19
      %v2812 = vld [vmem:[%s2811] sm:$0x1]
      %v2813 = vunpack.c.l.bf16 %v2803
      %v2814 = vunpack.c.l.bf16 %v2804
      %v2815 = vunpack.c.l.bf16 %v2805
      %v2816 = vunpack.c.l.bf16 %v2806
      %v2817 = vunpack.c.l.bf16 %v2807
      %v2818 = vunpack.c.l.bf16 %v2808
      %v2819 = vunpack.c.l.bf16 %v2809
      %v2820 = vunpack.c.l.bf16 %v2810
      %v2821 = vunpack.c.l.bf16 %v2812
      %2823 = vset.pattern.permute.xlu0 0
      %2824 = vperm.xlu0 %2823, %v2813
      %v2825 = vpop.permute.xlu0 %2824
      %2828 = vset.pattern.permute.xlu0 0
      %2829 = vperm.xlu0 %2828, %v2814
      %v2830 = vpop.permute.xlu0 %2829
      %2833 = vset.pattern.permute.xlu0 0
      %2834 = vperm.xlu0 %2833, %v2815
      %v2835 = vpop.permute.xlu0 %2834
      %2838 = vset.pattern.permute.xlu0 0
      %2839 = vperm.xlu0 %2838, %v2816
      %v2840 = vpop.permute.xlu0 %2839
      %2843 = vset.pattern.permute.xlu0 0
      %2844 = vperm.xlu0 %2843, %v2817
      %v2845 = vpop.permute.xlu0 %2844
      %2848 = vset.pattern.permute.xlu0 0
      %2849 = vperm.xlu0 %2848, %v2818
      %v2850 = vpop.permute.xlu0 %2849
      %2853 = vset.pattern.permute.xlu0 0
      %2854 = vperm.xlu0 %2853, %v2819
      %v2855 = vpop.permute.xlu0 %2854
      %2858 = vset.pattern.permute.xlu0 0
      %2859 = vperm.xlu0 %2858, %v2820
      %v2860 = vpop.permute.xlu0 %2859
      %v2862 = vlaneseq
      %v2863 = vshrl.u32 %v2862, 7
      %v2864 = vsub.s32 0, %v2863
      %v2865 = vrot.slane %v2821, %v2864
      %v2866 = vmul.f32 %v2825, %v2865
      %v2867 = vmul.f32 %v2690, %v2865
      %v2868 = vmul.f32 %v2830, %v2865
      %v2869 = vmul.f32 %v2695, %v2865
      %v2870 = vmul.f32 %v2835, %v2865
      %v2871 = vmul.f32 %v2700, %v2865
      %v2872 = vmul.f32 %v2840, %v2865
      %v2873 = vmul.f32 %v2705, %v2865
      %v2874 = vmul.f32 %v2845, %v2865
      %v2875 = vmul.f32 %v2710, %v2865
      %v2876 = vmul.f32 %v2850, %v2865
      %v2877 = vmul.f32 %v2715, %v2865
      %v2878 = vmul.f32 %v2855, %v2865
      %v2879 = vmul.f32 %v2720, %v2865
      %v2880 = vmul.f32 %v2860, %v2865
      %v2881 = vmul.f32 %v2725, %v2865
      %v2898 = vrot.slane %v2866, 4
      %v2899 = vrot.slane %v2867, 4
      %v2900 = vsel %vm869, %v2898, %v2899
      %v2901 = vrot.slane %v2868, 4
      %v2902 = vrot.slane %v2869, 4
      %v2903 = vsel %vm869, %v2901, %v2902
      %v2904 = vrot.slane %v2870, 4
      %v2905 = vrot.slane %v2871, 4
      %v2906 = vsel %vm869, %v2904, %v2905
      %v2907 = vrot.slane %v2872, 4
      %v2908 = vrot.slane %v2873, 4
      %v2909 = vsel %vm869, %v2907, %v2908
      %v2910 = vrot.slane %v2874, 4
      %v2911 = vrot.slane %v2875, 4
      %v2912 = vsel %vm869, %v2910, %v2911
      %v2913 = vrot.slane %v2876, 4
      %v2914 = vrot.slane %v2877, 4
      %v2915 = vsel %vm869, %v2913, %v2914
      %v2916 = vrot.slane %v2878, 4
      %v2917 = vrot.slane %v2879, 4
      %v2918 = vsel %vm869, %v2916, %v2917
      %v2919 = vrot.slane %v2880, 4
      %v2920 = vrot.slane %v2881, 4
      %v2921 = vsel %vm869, %v2919, %v2920
      %v2930 = vadd.f32 %v2795, %v2900
      %v2931 = vadd.f32 %v2796, %v2903
      %v2932 = vadd.f32 %v2797, %v2906
      %v2933 = vadd.f32 %v2798, %v2909
      %v2934 = vadd.f32 %v2799, %v2912
      %v2935 = vadd.f32 %v2800, %v2915
      %v2936 = vadd.f32 %v2801, %v2918
      %v2937 = vadd.f32 %v2802, %v2921
      %s2938 = scalar_lea.vmem %s196, 32
      %v2939 = vld [vmem:[%s2938] sm:$0xf]
      %v2940 = vld [vmem:[%s2938 + $0x8] sm:$0xf]
      %v2941 = vld [vmem:[%s2938 + $0x10] sm:$0xf]
      %v2942 = vld [vmem:[%s2938 + $0x18] sm:$0xf]
      %v2943 = vld [vmem:[%s2938 + $0x20] sm:$0xf]
      %v2944 = vld [vmem:[%s2938 + $0x28] sm:$0xf]
      %v2945 = vld [vmem:[%s2938 + $0x30] sm:$0xf]
      %v2946 = vld [vmem:[%s2938 + $0x38] sm:$0xf]
      %s2947 = scalar_lea.vmem %s201, 20
      %v2948 = vld [vmem:[%s2947] sm:$0x1]
      %v2949 = vunpack.c.l.bf16 %v2939
      %v2950 = vunpack.c.l.bf16 %v2940
      %v2951 = vunpack.c.l.bf16 %v2941
      %v2952 = vunpack.c.l.bf16 %v2942
      %v2953 = vunpack.c.l.bf16 %v2943
      %v2954 = vunpack.c.l.bf16 %v2944
      %v2955 = vunpack.c.l.bf16 %v2945
      %v2956 = vunpack.c.l.bf16 %v2946
      %v2957 = vunpack.c.l.bf16 %v2948
      %2959 = vset.pattern.permute.xlu0 0
      %2960 = vperm.xlu0 %2959, %v2949
      %v2961 = vpop.permute.xlu0 %2960
      %2964 = vset.pattern.permute.xlu0 0
      %2965 = vperm.xlu0 %2964, %v2950
      %v2966 = vpop.permute.xlu0 %2965
      %2969 = vset.pattern.permute.xlu0 0
      %2970 = vperm.xlu0 %2969, %v2951
      %v2971 = vpop.permute.xlu0 %2970
      %2974 = vset.pattern.permute.xlu0 0
      %2975 = vperm.xlu0 %2974, %v2952
      %v2976 = vpop.permute.xlu0 %2975
      %2979 = vset.pattern.permute.xlu0 0
      %2980 = vperm.xlu0 %2979, %v2953
      %v2981 = vpop.permute.xlu0 %2980
      %2984 = vset.pattern.permute.xlu0 0
      %2985 = vperm.xlu0 %2984, %v2954
      %v2986 = vpop.permute.xlu0 %2985
      %2989 = vset.pattern.permute.xlu0 0
      %2990 = vperm.xlu0 %2989, %v2955
      %v2991 = vpop.permute.xlu0 %2990
      %2994 = vset.pattern.permute.xlu0 0
      %2995 = vperm.xlu0 %2994, %v2956
      %v2996 = vpop.permute.xlu0 %2995
      %v2998 = vlaneseq
      %v2999 = vshrl.u32 %v2998, 7
      %v3000 = vsub.s32 0, %v2999
      %v3001 = vrot.slane %v2957, %v3000
      %v3002 = vmul.f32 %v2961, %v3001
      %v3003 = vmul.f32 %v2966, %v3001
      %v3004 = vmul.f32 %v2971, %v3001
      %v3005 = vmul.f32 %v2976, %v3001
      %v3006 = vmul.f32 %v2981, %v3001
      %v3007 = vmul.f32 %v2986, %v3001
      %v3008 = vmul.f32 %v2991, %v3001
      %v3009 = vmul.f32 %v2996, %v3001
      %v3010 = vadd.f32 %v2930, %v3002
      %v3011 = vadd.f32 %v2931, %v3003
      %v3012 = vadd.f32 %v2932, %v3004
      %v3013 = vadd.f32 %v2933, %v3005
      %v3014 = vadd.f32 %v2934, %v3006
      %v3015 = vadd.f32 %v2935, %v3007
      %v3016 = vadd.f32 %v2936, %v3008
      %v3017 = vadd.f32 %v2937, %v3009
      %v3018 = vld [vmem:[%s2938] sm:$0xf]
      %v3019 = vld [vmem:[%s2938 + $0x4] sm:$0x1]
      %v3020 = vld [vmem:[%s2938 + $0x8] sm:$0xf]
      %v3021 = vld [vmem:[%s2938 + $0xc] sm:$0x1]
      %v3022 = vld [vmem:[%s2938 + $0x10] sm:$0xf]
      %v3023 = vld [vmem:[%s2938 + $0x14] sm:$0x1]
      %v3024 = vld [vmem:[%s2938 + $0x18] sm:$0xf]
      %v3025 = vld [vmem:[%s2938 + $0x1c] sm:$0x1]
      %v3026 = vld [vmem:[%s2938 + $0x20] sm:$0xf]
      %v3027 = vld [vmem:[%s2938 + $0x24] sm:$0x1]
      %v3028 = vld [vmem:[%s2938 + $0x28] sm:$0xf]
      %v3029 = vld [vmem:[%s2938 + $0x2c] sm:$0x1]
      %v3030 = vld [vmem:[%s2938 + $0x30] sm:$0xf]
      %v3031 = vld [vmem:[%s2938 + $0x34] sm:$0x1]
      %v3032 = vld [vmem:[%s2938 + $0x38] sm:$0xf]
      %v3033 = vld [vmem:[%s2938 + $0x3c] sm:$0x1]
      %s3034 = scalar_lea.vmem %s201, 21
      %v3035 = vld [vmem:[%s3034] sm:$0x1]
      %v3036 = vunpack.c.l.bf16 %v3018
      %v3037 = vunpack.c.l.bf16 %v3019
      %v3038 = vunpack.c.l.bf16 %v3020
      %v3039 = vunpack.c.l.bf16 %v3021
      %v3040 = vunpack.c.l.bf16 %v3022
      %v3041 = vunpack.c.l.bf16 %v3023
      %v3042 = vunpack.c.l.bf16 %v3024
      %v3043 = vunpack.c.l.bf16 %v3025
      %v3044 = vunpack.c.l.bf16 %v3026
      %v3045 = vunpack.c.l.bf16 %v3027
      %v3046 = vunpack.c.l.bf16 %v3028
      %v3047 = vunpack.c.l.bf16 %v3029
      %v3048 = vunpack.c.l.bf16 %v3030
      %v3049 = vunpack.c.l.bf16 %v3031
      %v3050 = vunpack.c.l.bf16 %v3032
      %v3051 = vunpack.c.l.bf16 %v3033
      %v3052 = vunpack.c.l.bf16 %v3035
      %3054 = vset.pattern.permute.xlu0 0
      %3055 = vperm.xlu0 %3054, %v3036
      %v3056 = vpop.permute.xlu0 %3055
      %3059 = vset.pattern.permute.xlu0 0
      %3060 = vperm.xlu0 %3059, %v3037
      %v3061 = vpop.permute.xlu0 %3060
      %3064 = vset.pattern.permute.xlu0 0
      %3065 = vperm.xlu0 %3064, %v3038
      %v3066 = vpop.permute.xlu0 %3065
      %3069 = vset.pattern.permute.xlu0 0
      %3070 = vperm.xlu0 %3069, %v3039
      %v3071 = vpop.permute.xlu0 %3070
      %3074 = vset.pattern.permute.xlu0 0
      %3075 = vperm.xlu0 %3074, %v3040
      %v3076 = vpop.permute.xlu0 %3075
      %3079 = vset.pattern.permute.xlu0 0
      %3080 = vperm.xlu0 %3079, %v3041
      %v3081 = vpop.permute.xlu0 %3080
      %3084 = vset.pattern.permute.xlu0 0
      %3085 = vperm.xlu0 %3084, %v3042
      %v3086 = vpop.permute.xlu0 %3085
      %3089 = vset.pattern.permute.xlu0 0
      %3090 = vperm.xlu0 %3089, %v3043
      %v3091 = vpop.permute.xlu0 %3090
      %3094 = vset.pattern.permute.xlu0 0
      %3095 = vperm.xlu0 %3094, %v3044
      %v3096 = vpop.permute.xlu0 %3095
      %3099 = vset.pattern.permute.xlu0 0
      %3100 = vperm.xlu0 %3099, %v3045
      %v3101 = vpop.permute.xlu0 %3100
      %3104 = vset.pattern.permute.xlu0 0
      %3105 = vperm.xlu0 %3104, %v3046
      %v3106 = vpop.permute.xlu0 %3105
      %3109 = vset.pattern.permute.xlu0 0
      %3110 = vperm.xlu0 %3109, %v3047
      %v3111 = vpop.permute.xlu0 %3110
      %3114 = vset.pattern.permute.xlu0 0
      %3115 = vperm.xlu0 %3114, %v3048
      %v3116 = vpop.permute.xlu0 %3115
      %3119 = vset.pattern.permute.xlu0 0
      %3120 = vperm.xlu0 %3119, %v3049
      %v3121 = vpop.permute.xlu0 %3120
      %3124 = vset.pattern.permute.xlu0 0
      %3125 = vperm.xlu0 %3124, %v3050
      %v3126 = vpop.permute.xlu0 %3125
      %3129 = vset.pattern.permute.xlu0 0
      %3130 = vperm.xlu0 %3129, %v3051
      %v3131 = vpop.permute.xlu0 %3130
      %v3133 = vlaneseq
      %v3134 = vshrl.u32 %v3133, 7
      %v3135 = vsub.s32 0, %v3134
      %v3136 = vrot.slane %v3052, %v3135
      %v3137 = vmul.f32 %v3056, %v3136
      %v3138 = vmul.f32 %v3061, %v3136
      %v3139 = vmul.f32 %v3066, %v3136
      %v3140 = vmul.f32 %v3071, %v3136
      %v3141 = vmul.f32 %v3076, %v3136
      %v3142 = vmul.f32 %v3081, %v3136
      %v3143 = vmul.f32 %v3086, %v3136
      %v3144 = vmul.f32 %v3091, %v3136
      %v3145 = vmul.f32 %v3096, %v3136
      %v3146 = vmul.f32 %v3101, %v3136
      %v3147 = vmul.f32 %v3106, %v3136
      %v3148 = vmul.f32 %v3111, %v3136
      %v3149 = vmul.f32 %v3116, %v3136
      %v3150 = vmul.f32 %v3121, %v3136
      %v3151 = vmul.f32 %v3126, %v3136
      %v3152 = vmul.f32 %v3131, %v3136
      %v3169 = vrot.slane %v3137, 1
      %v3170 = vrot.slane %v3138, 1
      %v3171 = vsel %vm461, %v3169, %v3170
      %v3172 = vrot.slane %v3139, 1
      %v3173 = vrot.slane %v3140, 1
      %v3174 = vsel %vm461, %v3172, %v3173
      %v3175 = vrot.slane %v3141, 1
      %v3176 = vrot.slane %v3142, 1
      %v3177 = vsel %vm461, %v3175, %v3176
      %v3178 = vrot.slane %v3143, 1
      %v3179 = vrot.slane %v3144, 1
      %v3180 = vsel %vm461, %v3178, %v3179
      %v3181 = vrot.slane %v3145, 1
      %v3182 = vrot.slane %v3146, 1
      %v3183 = vsel %vm461, %v3181, %v3182
      %v3184 = vrot.slane %v3147, 1
      %v3185 = vrot.slane %v3148, 1
      %v3186 = vsel %vm461, %v3184, %v3185
      %v3187 = vrot.slane %v3149, 1
      %v3188 = vrot.slane %v3150, 1
      %v3189 = vsel %vm461, %v3187, %v3188
      %v3190 = vrot.slane %v3151, 1
      %v3191 = vrot.slane %v3152, 1
      %v3192 = vsel %vm461, %v3190, %v3191
      %v3201 = vadd.f32 %v3010, %v3171
      %v3202 = vadd.f32 %v3011, %v3174
      %v3203 = vadd.f32 %v3012, %v3177
      %v3204 = vadd.f32 %v3013, %v3180
      %v3205 = vadd.f32 %v3014, %v3183
      %v3206 = vadd.f32 %v3015, %v3186
      %v3207 = vadd.f32 %v3016, %v3189
      %v3208 = vadd.f32 %v3017, %v3192
      %v3209 = vld [vmem:[%s2938] sm:$0xe]
      %v3210 = vld [vmem:[%s2938 + $0x8] sm:$0xe]
      %v3211 = vld [vmem:[%s2938 + $0x10] sm:$0xe]
      %v3212 = vld [vmem:[%s2938 + $0x18] sm:$0xe]
      %v3213 = vld [vmem:[%s2938 + $0x20] sm:$0xe]
      %v3214 = vld [vmem:[%s2938 + $0x28] sm:$0xe]
      %v3215 = vld [vmem:[%s2938 + $0x30] sm:$0xe]
      %v3216 = vld [vmem:[%s2938 + $0x38] sm:$0xe]
      %s3217 = scalar_lea.vmem %s201, 22
      %v3218 = vld [vmem:[%s3217] sm:$0x1]
      %v3219 = vunpack.c.l.bf16 %v3209
      %v3220 = vunpack.c.l.bf16 %v3210
      %v3221 = vunpack.c.l.bf16 %v3211
      %v3222 = vunpack.c.l.bf16 %v3212
      %v3223 = vunpack.c.l.bf16 %v3213
      %v3224 = vunpack.c.l.bf16 %v3214
      %v3225 = vunpack.c.l.bf16 %v3215
      %v3226 = vunpack.c.l.bf16 %v3216
      %v3227 = vunpack.c.l.bf16 %v3218
      %3229 = vset.pattern.permute.xlu0 0
      %3230 = vperm.xlu0 %3229, %v3219
      %v3231 = vpop.permute.xlu0 %3230
      %3234 = vset.pattern.permute.xlu0 0
      %3235 = vperm.xlu0 %3234, %v3220
      %v3236 = vpop.permute.xlu0 %3235
      %3239 = vset.pattern.permute.xlu0 0
      %3240 = vperm.xlu0 %3239, %v3221
      %v3241 = vpop.permute.xlu0 %3240
      %3244 = vset.pattern.permute.xlu0 0
      %3245 = vperm.xlu0 %3244, %v3222
      %v3246 = vpop.permute.xlu0 %3245
      %3249 = vset.pattern.permute.xlu0 0
      %3250 = vperm.xlu0 %3249, %v3223
      %v3251 = vpop.permute.xlu0 %3250
      %3254 = vset.pattern.permute.xlu0 0
      %3255 = vperm.xlu0 %3254, %v3224
      %v3256 = vpop.permute.xlu0 %3255
      %3259 = vset.pattern.permute.xlu0 0
      %3260 = vperm.xlu0 %3259, %v3225
      %v3261 = vpop.permute.xlu0 %3260
      %3264 = vset.pattern.permute.xlu0 0
      %3265 = vperm.xlu0 %3264, %v3226
      %v3266 = vpop.permute.xlu0 %3265
      %v3268 = vlaneseq
      %v3269 = vshrl.u32 %v3268, 7
      %v3270 = vsub.s32 0, %v3269
      %v3271 = vrot.slane %v3227, %v3270
      %v3272 = vmul.f32 %v3231, %v3271
      %v3273 = vmul.f32 %v3061, %v3271
      %v3274 = vmul.f32 %v3236, %v3271
      %v3275 = vmul.f32 %v3071, %v3271
      %v3276 = vmul.f32 %v3241, %v3271
      %v3277 = vmul.f32 %v3081, %v3271
      %v3278 = vmul.f32 %v3246, %v3271
      %v3279 = vmul.f32 %v3091, %v3271
      %v3280 = vmul.f32 %v3251, %v3271
      %v3281 = vmul.f32 %v3101, %v3271
      %v3282 = vmul.f32 %v3256, %v3271
      %v3283 = vmul.f32 %v3111, %v3271
      %v3284 = vmul.f32 %v3261, %v3271
      %v3285 = vmul.f32 %v3121, %v3271
      %v3286 = vmul.f32 %v3266, %v3271
      %v3287 = vmul.f32 %v3131, %v3271
      %v3304 = vrot.slane %v3272, 2
      %v3305 = vrot.slane %v3273, 2
      %v3306 = vsel %vm597, %v3304, %v3305
      %v3307 = vrot.slane %v3274, 2
      %v3308 = vrot.slane %v3275, 2
      %v3309 = vsel %vm597, %v3307, %v3308
      %v3310 = vrot.slane %v3276, 2
      %v3311 = vrot.slane %v3277, 2
      %v3312 = vsel %vm597, %v3310, %v3311
      %v3313 = vrot.slane %v3278, 2
      %v3314 = vrot.slane %v3279, 2
      %v3315 = vsel %vm597, %v3313, %v3314
      %v3316 = vrot.slane %v3280, 2
      %v3317 = vrot.slane %v3281, 2
      %v3318 = vsel %vm597, %v3316, %v3317
      %v3319 = vrot.slane %v3282, 2
      %v3320 = vrot.slane %v3283, 2
      %v3321 = vsel %vm597, %v3319, %v3320
      %v3322 = vrot.slane %v3284, 2
      %v3323 = vrot.slane %v3285, 2
      %v3324 = vsel %vm597, %v3322, %v3323
      %v3325 = vrot.slane %v3286, 2
      %v3326 = vrot.slane %v3287, 2
      %v3327 = vsel %vm597, %v3325, %v3326
      %v3336 = vadd.f32 %v3201, %v3306
      %v3337 = vadd.f32 %v3202, %v3309
      %v3338 = vadd.f32 %v3203, %v3312
      %v3339 = vadd.f32 %v3204, %v3315
      %v3340 = vadd.f32 %v3205, %v3318
      %v3341 = vadd.f32 %v3206, %v3321
      %v3342 = vadd.f32 %v3207, %v3324
      %v3343 = vadd.f32 %v3208, %v3327
      %v3344 = vld [vmem:[%s2938 + $0x4] sm:$0x3]
      %v3345 = vld [vmem:[%s2938 + $0xc] sm:$0x3]
      %v3346 = vld [vmem:[%s2938 + $0x14] sm:$0x3]
      %v3347 = vld [vmem:[%s2938 + $0x1c] sm:$0x3]
      %v3348 = vld [vmem:[%s2938 + $0x24] sm:$0x3]
      %v3349 = vld [vmem:[%s2938 + $0x2c] sm:$0x3]
      %v3350 = vld [vmem:[%s2938 + $0x34] sm:$0x3]
      %v3351 = vld [vmem:[%s2938 + $0x3c] sm:$0x3]
      %s3352 = scalar_lea.vmem %s201, 23
      %v3353 = vld [vmem:[%s3352] sm:$0x1]
      %v3354 = vunpack.c.l.bf16 %v3344
      %v3355 = vunpack.c.l.bf16 %v3345
      %v3356 = vunpack.c.l.bf16 %v3346
      %v3357 = vunpack.c.l.bf16 %v3347
      %v3358 = vunpack.c.l.bf16 %v3348
      %v3359 = vunpack.c.l.bf16 %v3349
      %v3360 = vunpack.c.l.bf16 %v3350
      %v3361 = vunpack.c.l.bf16 %v3351
      %v3362 = vunpack.c.l.bf16 %v3353
      %3364 = vset.pattern.permute.xlu0 0
      %3365 = vperm.xlu0 %3364, %v3354
      %v3366 = vpop.permute.xlu0 %3365
      %3369 = vset.pattern.permute.xlu0 0
      %3370 = vperm.xlu0 %3369, %v3355
      %v3371 = vpop.permute.xlu0 %3370
      %3374 = vset.pattern.permute.xlu0 0
      %3375 = vperm.xlu0 %3374, %v3356
      %v3376 = vpop.permute.xlu0 %3375
      %3379 = vset.pattern.permute.xlu0 0
      %3380 = vperm.xlu0 %3379, %v3357
      %v3381 = vpop.permute.xlu0 %3380
      %3384 = vset.pattern.permute.xlu0 0
      %3385 = vperm.xlu0 %3384, %v3358
      %v3386 = vpop.permute.xlu0 %3385
      %3389 = vset.pattern.permute.xlu0 0
      %3390 = vperm.xlu0 %3389, %v3359
      %v3391 = vpop.permute.xlu0 %3390
      %3394 = vset.pattern.permute.xlu0 0
      %3395 = vperm.xlu0 %3394, %v3360
      %v3396 = vpop.permute.xlu0 %3395
      %3399 = vset.pattern.permute.xlu0 0
      %3400 = vperm.xlu0 %3399, %v3361
      %v3401 = vpop.permute.xlu0 %3400
      %v3403 = vlaneseq
      %v3404 = vshrl.u32 %v3403, 7
      %v3405 = vsub.s32 0, %v3404
      %v3406 = vrot.slane %v3362, %v3405
      %v3407 = vmul.f32 %v3231, %v3406
      %v3408 = vmul.f32 %v3366, %v3406
      %v3409 = vmul.f32 %v3236, %v3406
      %v3410 = vmul.f32 %v3371, %v3406
      %v3411 = vmul.f32 %v3241, %v3406
      %v3412 = vmul.f32 %v3376, %v3406
      %v3413 = vmul.f32 %v3246, %v3406
      %v3414 = vmul.f32 %v3381, %v3406
      %v3415 = vmul.f32 %v3251, %v3406
      %v3416 = vmul.f32 %v3386, %v3406
      %v3417 = vmul.f32 %v3256, %v3406
      %v3418 = vmul.f32 %v3391, %v3406
      %v3419 = vmul.f32 %v3261, %v3406
      %v3420 = vmul.f32 %v3396, %v3406
      %v3421 = vmul.f32 %v3266, %v3406
      %v3422 = vmul.f32 %v3401, %v3406
      %v3439 = vrot.slane %v3407, 3
      %v3440 = vrot.slane %v3408, 3
      %v3441 = vsel %vm733, %v3439, %v3440
      %v3442 = vrot.slane %v3409, 3
      %v3443 = vrot.slane %v3410, 3
      %v3444 = vsel %vm733, %v3442, %v3443
      %v3445 = vrot.slane %v3411, 3
      %v3446 = vrot.slane %v3412, 3
      %v3447 = vsel %vm733, %v3445, %v3446
      %v3448 = vrot.slane %v3413, 3
      %v3449 = vrot.slane %v3414, 3
      %v3450 = vsel %vm733, %v3448, %v3449
      %v3451 = vrot.slane %v3415, 3
      %v3452 = vrot.slane %v3416, 3
      %v3453 = vsel %vm733, %v3451, %v3452
      %v3454 = vrot.slane %v3417, 3
      %v3455 = vrot.slane %v3418, 3
      %v3456 = vsel %vm733, %v3454, %v3455
      %v3457 = vrot.slane %v3419, 3
      %v3458 = vrot.slane %v3420, 3
      %v3459 = vsel %vm733, %v3457, %v3458
      %v3460 = vrot.slane %v3421, 3
      %v3461 = vrot.slane %v3422, 3
      %v3462 = vsel %vm733, %v3460, %v3461
      %v3471 = vadd.f32 %v3336, %v3441
      %v3472 = vadd.f32 %v3337, %v3444
      %v3473 = vadd.f32 %v3338, %v3447
      %v3474 = vadd.f32 %v3339, %v3450
      %v3475 = vadd.f32 %v3340, %v3453
      %v3476 = vadd.f32 %v3341, %v3456
      %v3477 = vadd.f32 %v3342, %v3459
      %v3478 = vadd.f32 %v3343, %v3462
      %v3479 = vld [vmem:[%s2938] sm:$0xc]
      %v3480 = vld [vmem:[%s2938 + $0x8] sm:$0xc]
      %v3481 = vld [vmem:[%s2938 + $0x10] sm:$0xc]
      %v3482 = vld [vmem:[%s2938 + $0x18] sm:$0xc]
      %v3483 = vld [vmem:[%s2938 + $0x20] sm:$0xc]
      %v3484 = vld [vmem:[%s2938 + $0x28] sm:$0xc]
      %v3485 = vld [vmem:[%s2938 + $0x30] sm:$0xc]
      %v3486 = vld [vmem:[%s2938 + $0x38] sm:$0xc]
      %s3487 = scalar_lea.vmem %s201, 24
      %v3488 = vld [vmem:[%s3487] sm:$0x1]
      %v3489 = vunpack.c.l.bf16 %v3479
      %v3490 = vunpack.c.l.bf16 %v3480
      %v3491 = vunpack.c.l.bf16 %v3481
      %v3492 = vunpack.c.l.bf16 %v3482
      %v3493 = vunpack.c.l.bf16 %v3483
      %v3494 = vunpack.c.l.bf16 %v3484
      %v3495 = vunpack.c.l.bf16 %v3485
      %v3496 = vunpack.c.l.bf16 %v3486
      %v3497 = vunpack.c.l.bf16 %v3488
      %3499 = vset.pattern.permute.xlu0 0
      %3500 = vperm.xlu0 %3499, %v3489
      %v3501 = vpop.permute.xlu0 %3500
      %3504 = vset.pattern.permute.xlu0 0
      %3505 = vperm.xlu0 %3504, %v3490
      %v3506 = vpop.permute.xlu0 %3505
      %3509 = vset.pattern.permute.xlu0 0
      %3510 = vperm.xlu0 %3509, %v3491
      %v3511 = vpop.permute.xlu0 %3510
      %3514 = vset.pattern.permute.xlu0 0
      %3515 = vperm.xlu0 %3514, %v3492
      %v3516 = vpop.permute.xlu0 %3515
      %3519 = vset.pattern.permute.xlu0 0
      %3520 = vperm.xlu0 %3519, %v3493
      %v3521 = vpop.permute.xlu0 %3520
      %3524 = vset.pattern.permute.xlu0 0
      %3525 = vperm.xlu0 %3524, %v3494
      %v3526 = vpop.permute.xlu0 %3525
      %3529 = vset.pattern.permute.xlu0 0
      %3530 = vperm.xlu0 %3529, %v3495
      %v3531 = vpop.permute.xlu0 %3530
      %3534 = vset.pattern.permute.xlu0 0
      %3535 = vperm.xlu0 %3534, %v3496
      %v3536 = vpop.permute.xlu0 %3535
      %v3538 = vlaneseq
      %v3539 = vshrl.u32 %v3538, 7
      %v3540 = vsub.s32 0, %v3539
      %v3541 = vrot.slane %v3497, %v3540
      %v3542 = vmul.f32 %v3501, %v3541
      %v3543 = vmul.f32 %v3366, %v3541
      %v3544 = vmul.f32 %v3506, %v3541
      %v3545 = vmul.f32 %v3371, %v3541
      %v3546 = vmul.f32 %v3511, %v3541
      %v3547 = vmul.f32 %v3376, %v3541
      %v3548 = vmul.f32 %v3516, %v3541
      %v3549 = vmul.f32 %v3381, %v3541
      %v3550 = vmul.f32 %v3521, %v3541
      %v3551 = vmul.f32 %v3386, %v3541
      %v3552 = vmul.f32 %v3526, %v3541
      %v3553 = vmul.f32 %v3391, %v3541
      %v3554 = vmul.f32 %v3531, %v3541
      %v3555 = vmul.f32 %v3396, %v3541
      %v3556 = vmul.f32 %v3536, %v3541
      %v3557 = vmul.f32 %v3401, %v3541
      %v3574 = vrot.slane %v3542, 4
      %v3575 = vrot.slane %v3543, 4
      %v3576 = vsel %vm869, %v3574, %v3575
      %v3577 = vrot.slane %v3544, 4
      %v3578 = vrot.slane %v3545, 4
      %v3579 = vsel %vm869, %v3577, %v3578
      %v3580 = vrot.slane %v3546, 4
      %v3581 = vrot.slane %v3547, 4
      %v3582 = vsel %vm869, %v3580, %v3581
      %v3583 = vrot.slane %v3548, 4
      %v3584 = vrot.slane %v3549, 4
      %v3585 = vsel %vm869, %v3583, %v3584
      %v3586 = vrot.slane %v3550, 4
      %v3587 = vrot.slane %v3551, 4
      %v3588 = vsel %vm869, %v3586, %v3587
      %v3589 = vrot.slane %v3552, 4
      %v3590 = vrot.slane %v3553, 4
      %v3591 = vsel %vm869, %v3589, %v3590
      %v3592 = vrot.slane %v3554, 4
      %v3593 = vrot.slane %v3555, 4
      %v3594 = vsel %vm869, %v3592, %v3593
      %v3595 = vrot.slane %v3556, 4
      %v3596 = vrot.slane %v3557, 4
      %v3597 = vsel %vm869, %v3595, %v3596
      %v3606 = vadd.f32 %v3471, %v3576
      %v3607 = vadd.f32 %v3472, %v3579
      %v3608 = vadd.f32 %v3473, %v3582
      %v3609 = vadd.f32 %v3474, %v3585
      %v3610 = vadd.f32 %v3475, %v3588
      %v3611 = vadd.f32 %v3476, %v3591
      %v3612 = vadd.f32 %v3477, %v3594
      %v3613 = vadd.f32 %v3478, %v3597
      %vm3614 = vcmask 261120
      %3615 = vst.msk [vmem:[#allocation2] sm:$0xff] %vm3614, %v3606
      %3616 = vst.msk [vmem:[#allocation2 + $0x8] sm:$0xff] %vm3614, %v3607
      %3617 = vst.msk [vmem:[#allocation2 + $0x10] sm:$0xff] %vm3614, %v3608
      %3618 = vst.msk [vmem:[#allocation2 + $0x18] sm:$0xff] %vm3614, %v3609
      %3619 = vst.msk [vmem:[#allocation2 + $0x20] sm:$0xff] %vm3614, %v3610
      %3620 = vst.msk [vmem:[#allocation2 + $0x28] sm:$0xff] %vm3614, %v3611
      %3621 = vst.msk [vmem:[#allocation2 + $0x30] sm:$0xff] %vm3614, %v3612
      %3622 = vst.msk [vmem:[#allocation2 + $0x38] sm:$0xff] %vm3614, %v3613
      %p3623 = scmp.eq.s32.totalorder %s20, 4
      // Predicated region
      $region33: #{model_forward.2} parent=27 // pred_check
        %p3624 = pneg %p3623
      $region34: #{model_forward.2} parent=27 // pred_check_branch
        %3626 = sbr.rel (%p3624) target = $region36
      $region35: #{model_forward.2} parent=27 // pred_region
        %v3627 = vld [vmem:[#allocation2] sm:$0xff]
        %v3628 = vld [vmem:[#allocation2 + $0x8] sm:$0xff]
        %v3629 = vld [vmem:[#allocation2 + $0x10] sm:$0xff]
        %v3630 = vld [vmem:[#allocation2 + $0x18] sm:$0xff]
        %v3631 = vld [vmem:[#allocation2 + $0x20] sm:$0xff]
        %v3632 = vld [vmem:[#allocation2 + $0x28] sm:$0xff]
        %v3633 = vld [vmem:[#allocation2 + $0x30] sm:$0xff]
        %v3634 = vld [vmem:[#allocation2 + $0x38] sm:$0xff]
        %v3635 = vpack.c.bf16 %v3627, %v3627
        %v3636 = vpack.c.bf16 %v3628, %v3628
        %v3637 = vpack.c.bf16 %v3629, %v3629
        %v3638 = vpack.c.bf16 %v3630, %v3630
        %v3639 = vpack.c.bf16 %v3631, %v3631
        %v3640 = vpack.c.bf16 %v3632, %v3632
        %v3641 = vpack.c.bf16 %v3633, %v3633
        %v3642 = vpack.c.bf16 %v3634, %v3634
        %vm3643 = vcmask 257024
        %3644 = vst.msk [vmem:[%s210] sm:$0xf] %vm3643, %v3635
        %3645 = vst.msk [vmem:[%s210 + $0x4] sm:$0xf] %vm3643, %v3636
        %3646 = vst.msk [vmem:[%s210 + $0x8] sm:$0xf] %vm3643, %v3637
        %3647 = vst.msk [vmem:[%s210 + $0xc] sm:$0xf] %vm3643, %v3638
        %3648 = vst.msk [vmem:[%s210 + $0x10] sm:$0xf] %vm3643, %v3639
        %3649 = vst.msk [vmem:[%s210 + $0x14] sm:$0xf] %vm3643, %v3640
        %3650 = vst.msk [vmem:[%s210 + $0x18] sm:$0xf] %vm3643, %v3641
        %3651 = vst.msk [vmem:[%s210 + $0x1c] sm:$0xf] %vm3643, %v3642
      $region36: #{model_forward.2} parent=27 // pred_fallthru
        _
      %p3652 = scmp.lt.s32.totalorder %s18, 1
      %s3653 = scalar_select %p3652, %s18, 1
      %p3654 = scmp.lt.s32.totalorder %s19, 7
      %s3655 = scalar_select %p3654, %s19, 7
      %s3656 = smul.addr %s3655, 8
      %s3657 = smul.addr %s3653, 64
      %s3658 = sadd.s32 %s3656, %s3657
      %s3659 = smul.addr %s3658, 4
      %s3660 = scalar_lea.vmem %s2, %s3659
      // Predicated region
      $region37: #{model_forward.2} parent=27 // pred_check
        %p3661 = pneg %p108
      $region38: #{model_forward.2} parent=27 // pred_check_branch
        %3663 = sbr.rel (%p3661) target = $region40
      $region39: #{model_forward.2} parent=27 // pred_region
        _
      $region40: #{model_forward.2} parent=27 // pred_fallthru
        _
    $region28: #{model_forward.2} parent=5 // pred_fallthru
      _
    %p3664 = scmp.le.s32.totalorder 2, %s8
    // Predicated region
    $region41: #{model_forward.2} parent=5 // pred_check
      %p3665 = pneg %p3664
    $region42: #{model_forward.2} parent=5 // pred_check_branch
      %3667 = sbr.rel (%p3665) target = $region44
    $region43: #{model_forward.2} parent=5 // pred_region
      %s3668 = ssub.s32 %s8, 2
      // Predicated region
      $region45: #{model_forward.2} parent=43 // pred_check
        %p3669 = pneg %p114
      $region46: #{model_forward.2} parent=43 // pred_check_branch
        %3671 = sbr.rel (%p3669) target = $region48
      $region47: #{model_forward.2} parent=43 // pred_region
        %p3672 = scmp.lt.s32.totalorder %s21, 1
        %s3673 = scalar_select %p3672, %s21, 1
        %p3674 = scmp.lt.s32.totalorder %s22, 7
        %s3675 = scalar_select %p3674, %s22, 7
        %s3676 = smul.addr %s3675, 8
        %s3677 = smul.addr %s3673, 64
        %s3678 = sadd.s32 %s3676, %s3677
        %s3679 = smul.addr %s3678, 4
        %s3680 = scalar_lea.vmem %s2, %s3679
      $region48: #{model_forward.2} parent=43 // pred_fallthru
        _
    $region44: #{model_forward.2} parent=5 // pred_fallthru
      _
  $region6: #{model_forward.2} parent=0 // loop_footer
    %s12 = sadd.s32 1, %s8
  $region7: #{model_forward.2} parent=0 // loop_footer_branch
    %7 = sbr.rel target = $region3
  $region8: #{model_forward.2} parent=0 // loop_exit
    _

// kernel: model_forward.3
$region0: #{model_forward.3}
  #allocation0 [shape = 'u32[]', space=smem, size = 0x4, offset = 0x4, fixed_abs, tag = 'smem constant byte address 0x4 - core index']
  #allocation1 [shape = 'u32[144,128]{1,0:T(1,128)}', space=vmem, size = 0x12000, scoped, tag = 'internal scratch']
  #allocation2 [shape = 'f32[6,6,64]{2,1,0:T(8,128)}', space=vmem, size = 0x6000, scoped, tag = 'scratch operand']
  %s0 = inlined_call_operand.vmem [shape: bf16[2,10,10,10,32], index: 0, kind: input, shape index: {}]
  %s1 = inlined_call_operand.vmem [shape: bf16[3,3,3,32,64], index: 1, kind: input, shape index: {}]
  %s2 = inlined_call_operand.vmem [shape: f32[1,1,64], index: 2, kind: input, shape index: {}]
  %s3 = inlined_call_operand.vmem [shape: f32[2,6,6,6,64], index: 3, kind: output, shape index: {}]
  %s4 = sld [smem:[#allocation0]]
  $region53: #{model_forward.3} parent=0
    _
  %s6 = ssub.s32 1, %s4
  %s7 = scalar_select 0, %s6, %s4
  loop: start=0, step=1, limit=38
  $region2: #{model_forward.3} parent=0 // loop_pre_header
    _
  $region3: #{model_forward.3} parent=0 // loop_header
    %s9 = sphi 0, %s13
    %p10 = scmp.ge.s32.totalorder %s9, 38
    %s16 = sphi 0, %s35
    %s17 = sphi 0, %s31
    %s18 = sphi 0, %s27
    %s19 = sphi 0, %s16
    %s20 = sphi 0, %s17
    %s21 = sphi 0, %s18
    %s22 = sphi 0, %s19
    %s23 = sphi 0, %s20
    %s24 = sphi 0, %s21
    %s44 = sphi 0, %s46
    %s47 = sphi 0, %s44
    %s48 = sphi 0, %s47
    %s64 = sphi 0, %s48
    %s70 = sphi 0, %s72
    %s73 = sphi 0, %s70
    %s74 = sphi 0, %s73
    %s90 = sphi 0, %s74
    %s94 = sphi 0, %s94
    %s96 = sphi 0, %s94
    %s97 = sphi 0, %s96
    %s111 = sphi 0, %s97
    %s119 = sphi 0, %s121
    %s122 = sphi 0, %s119
    %s123 = sphi 0, %s122
    %s139 = sphi 0, %s123
  $region4: #{model_forward.3} parent=0 // loop_header_branch
    %12 = sbr.rel (%p10) target = $region8
  $region5: #{model_forward.3} parent=0 // loop_body
    %s14 = ssub.s32 %s9, 1
    %s15 = ssub.s32 %s9, 2
    %s25 = sadd.s32 1, %s18
    %p26 = scmp.ge.s32.totalorder %s25, 3
    %s27 = scalar_select %p26, 0, %s25
    %s28 = sadd.s32 1, %s17
    %s29 = scalar_select %p26, %s28, %s17
    %p30 = scmp.ge.s32.totalorder %s29, 6
    %s31 = scalar_select %p30, 0, %s29
    %s32 = sadd.s32 1, %s16
    %s33 = scalar_select %p30, %s32, %s16
    %p34 = scmp.ge.s32.totalorder %s33, 2
    %s35 = scalar_select %p34, 0, %s33
    %s36 = smul.u32 %s18, 2
    %s37 = sadd.s32 %s17, %s36
    %s38 = smul.u32 %s27, 2
    %s39 = sadd.s32 %s31, %s38
    %s40 = ssub.s32 %s16, %s35
    %s41 = ssub.s32 %s37, %s39
    %s42 = sor.u32 %s40, %s41
    %p43 = scmp.eq.s32.totalorder %s42, 0
    %s45 = sadd.s32 %s44, 1
    %s46 = scalar_select %p43, %s44, %s45
    %p49 = pneg %p43
    %p50 = scmp.eq.s32.totalorder %s9, 35
    %p51 = por %p49, %p50
    %p52 = scmp.ne.s32.totalorder %s44, %s47
    %p53 = scmp.eq.s32.totalorder %s9, 0
    %p54 = por %p52, %p53
    %p55 = scmp.ne.s32.totalorder %s44, %s47
    %p56 = scmp.eq.s32.totalorder %s14, 35
    %p57 = por %p55, %p56
    %p58 = scmp.ne.s32.totalorder %s47, %s48
    %p59 = scmp.eq.s32.totalorder %s14, 0
    %p60 = por %p58, %p59
    %p61 = scmp.ne.s32.totalorder %s47, %s48
    %p62 = scmp.eq.s32.totalorder %s15, 35
    %p63 = por %p61, %p62
    %p65 = scmp.ne.s32.totalorder %s48, %s64
    %p66 = scmp.eq.s32.totalorder %s15, 0
    %p67 = por %p65, %p66
    %s68 = ssub.s32 %s18, %s27
    %p69 = scmp.eq.s32.totalorder %s68, 0
    %s71 = sadd.s32 %s70, 1
    %s72 = scalar_select %p69, %s70, %s71
    %p75 = pneg %p69
    %p76 = scmp.eq.s32.totalorder %s9, 35
    %p77 = por %p75, %p76
    %p78 = scmp.ne.s32.totalorder %s70, %s73
    %p79 = scmp.eq.s32.totalorder %s9, 0
    %p80 = por %p78, %p79
    %p81 = scmp.ne.s32.totalorder %s70, %s73
    %p82 = scmp.eq.s32.totalorder %s14, 35
    %p83 = por %p81, %p82
    %p84 = scmp.ne.s32.totalorder %s73, %s74
    %p85 = scmp.eq.s32.totalorder %s14, 0
    %p86 = por %p84, %p85
    %p87 = scmp.ne.s32.totalorder %s73, %s74
    %p88 = scmp.eq.s32.totalorder %s15, 35
    %p89 = por %p87, %p88
    %p91 = scmp.ne.s32.totalorder %s74, %s90
    %p92 = scmp.eq.s32.totalorder %s15, 0
    %p93 = por %p91, %p92
    %s95 = sadd.s32 %s94, 1
    %p98 = scmp.eq.s32.totalorder %s9, 35
    %p99 = scmp.ne.s32.totalorder %s94, %s96
    %p100 = scmp.eq.s32.totalorder %s9, 0
    %p101 = por %p99, %p100
    %p102 = scmp.ne.s32.totalorder %s94, %s96
    %p103 = scmp.eq.s32.totalorder %s14, 35
    %p104 = por %p102, %p103
    %p105 = scmp.ne.s32.totalorder %s96, %s97
    %p106 = scmp.eq.s32.totalorder %s14, 0
    %p107 = por %p105, %p106
    %p108 = scmp.ne.s32.totalorder %s96, %s97
    %p109 = scmp.eq.s32.totalorder %s15, 35
    %p110 = por %p108, %p109
    %p112 = scmp.ne.s32.totalorder %s97, %s111
    %p113 = scmp.eq.s32.totalorder %s15, 0
    %p114 = por %p112, %p113
    %s115 = ssub.s32 %s16, %s35
    %s116 = ssub.s32 %s17, %s31
    %s117 = sor.u32 %s115, %s116
    %p118 = scmp.eq.s32.totalorder %s117, 0
    %s120 = sadd.s32 %s119, 1
    %s121 = scalar_select %p118, %s119, %s120
    %p124 = pneg %p118
    %p125 = scmp.eq.s32.totalorder %s9, 35
    %p126 = por %p124, %p125
    %p127 = scmp.ne.s32.totalorder %s119, %s122
    %p128 = scmp.eq.s32.totalorder %s9, 0
    %p129 = por %p127, %p128
    %p130 = scmp.ne.s32.totalorder %s119, %s122
    %p131 = scmp.eq.s32.totalorder %s14, 35
    %p132 = por %p130, %p131
    %p133 = scmp.ne.s32.totalorder %s122, %s123
    %p134 = scmp.eq.s32.totalorder %s14, 0
    %p135 = por %p133, %p134
    %p136 = scmp.ne.s32.totalorder %s122, %s123
    %p137 = scmp.eq.s32.totalorder %s15, 35
    %p138 = por %p136, %p137
    %p140 = scmp.ne.s32.totalorder %s123, %s139
    %p141 = scmp.eq.s32.totalorder %s15, 0
    %p142 = por %p140, %p141
    %p143 = scmp.le.s32.totalorder 1, %s9
    %p144 = scmp.lt.s32.totalorder %s9, 37
    %p145 = pnand %p143, %p144
    %p146 = pneg %p145
    // Predicated region
    $region9: #{model_forward.3} parent=5 // pred_check
      _
    $region10: #{model_forward.3} parent=5 // pred_check_branch
      %148 = sbr.rel (%p145) target = $region12
    $region11: #{model_forward.3} parent=5 // pred_region
      %s149 = ssub.s32 %s9, 1
      // Predicated region
      $region13: #{model_forward.3} parent=11 // pred_check
        %p150 = pneg %p107
      $region14: #{model_forward.3} parent=11 // pred_check_branch
        %152 = sbr.rel (%p150) target = $region16
      $region15: #{model_forward.3} parent=11 // pred_region
        _
      $region16: #{model_forward.3} parent=11 // pred_fallthru
        _
    $region12: #{model_forward.3} parent=5 // pred_fallthru
      _
    %p153 = scmp.lt.s32.totalorder %s9, 36
    // Predicated region
    $region17: #{model_forward.3} parent=5 // pred_check
      %p154 = pneg %p153
    $region18: #{model_forward.3} parent=5 // pred_check_branch
      %156 = sbr.rel (%p154) target = $region20
    $region19: #{model_forward.3} parent=5 // pred_region
      // Predicated region
      $region21: #{model_forward.3} parent=19 // pred_check
        %p157 = pneg %p54
      $region22: #{model_forward.3} parent=19 // pred_check_branch
        %159 = sbr.rel (%p157) target = $region24
      $region23: #{model_forward.3} parent=19 // pred_region
        %s160 = smul.u32 %s18, 2
        %s161 = sadd.s32 %s17, %s160
        %p162 = scmp.lt.s32.totalorder %s16, 1
        %s163 = scalar_select %p162, %s16, 1
        %p164 = scmp.lt.s32.totalorder %s161, 9
        %s165 = scalar_select %p164, %s161, 9
        %s166 = smul.addr %s165, 20
        %s167 = smul.addr %s163, 200
        %s168 = sadd.s32 %s166, %s167
        %s169 = smul.addr %s168, 4
        %s170 = scalar_lea.vmem %s0, %s169
        %s171 = smul.u32 %s18, 2
        %s172 = sadd.s32 %s17, %s171
      $region24: #{model_forward.3} parent=19 // pred_fallthru
        _
      // Predicated region
      $region25: #{model_forward.3} parent=19 // pred_check
        %p173 = pneg %p80
      $region26: #{model_forward.3} parent=19 // pred_check_branch
        %175 = sbr.rel (%p173) target = $region28
      $region27: #{model_forward.3} parent=19 // pred_region
        %p176 = scmp.lt.s32.totalorder %s18, 2
        %s177 = scalar_select %p176, %s18, 2
        %s178 = smul.addr %s177, 36
        %s179 = smul.addr %s178, 4
        %s180 = scalar_lea.vmem %s1, %s179
      $region28: #{model_forward.3} parent=19 // pred_fallthru
        _
    $region20: #{model_forward.3} parent=5 // pred_fallthru
      _
    %p181 = scmp.le.s32.totalorder 1, %s9
    %p182 = scmp.lt.s32.totalorder %s9, 37
    %p183 = pnand %p181, %p182
    %p184 = pneg %p183
    // Predicated region
    $region29: #{model_forward.3} parent=5 // pred_check
      _
    $region30: #{model_forward.3} parent=5 // pred_check_branch
      %186 = sbr.rel (%p183) target = $region32
    $region31: #{model_forward.3} parent=5 // pred_region
      %s187 = ssub.s32 %s9, 1
      %s188 = smul.u32 %s21, 2
      %s189 = sadd.s32 %s20, %s188
      %p190 = scmp.lt.s32.totalorder %s19, 1
      %s191 = scalar_select %p190, %s19, 1
      %p192 = scmp.lt.s32.totalorder %s189, 9
      %s193 = scalar_select %p192, %s189, 9
      %s194 = smul.addr %s193, 20
      %s195 = smul.addr %s191, 200
      %s196 = sadd.s32 %s194, %s195
      %s197 = smul.addr %s196, 4
      %s198 = scalar_lea.vmem %s0, %s197
      %p199 = pneg %p60
      %p200 = pneg %p57
      %p201 = scmp.lt.s32.totalorder %s21, 2
      %s202 = scalar_select %p201, %s21, 2
      %s203 = smul.addr %s202, 36
      %s204 = smul.addr %s203, 4
      %s205 = scalar_lea.vmem %s1, %s204
      %p206 = pneg %p86
      %p207 = pneg %p83
      %p208 = pneg %p107
      %p209 = pneg %p104
      %p210 = pneg %p135
      %p211 = pneg %p132
      %p212 = scmp.lt.s32.totalorder %s19, 1
      %s213 = scalar_select %p212, %s19, 1
      %p214 = scmp.lt.s32.totalorder %s20, 5
      %s215 = scalar_select %p214, %s20, 5
      %s216 = smul.addr %s215, 6
      %s217 = smul.addr %s213, 36
      %s218 = sadd.s32 %s216, %s217
      %s219 = smul.addr %s218, 8
      %s220 = scalar_lea.vmem %s3, %s219
      %s221 = smul.u32 %s21, 2
      %s222 = sadd.s32 %s20, %s221
      %p223 = scmp.lt.s32.totalorder %s19, 1
      %s224 = scalar_select %p223, %s19, 1
      %p225 = scmp.lt.s32.totalorder %s222, 9
      %s226 = scalar_select %p225, %s222, 9
      %s227 = smul.addr %s226, 20
      %s228 = smul.addr %s224, 200
      %s229 = sadd.s32 %s227, %s228
      %s230 = smul.addr %s229, 4
      %s231 = scalar_lea.vmem %s0, %s230
      %s232 = smul.u32 %s21, 2
      %s233 = sadd.s32 %s20, %s232
      %p234 = scmp.lt.s32.totalorder %s21, 2
      %s235 = scalar_select %p234, %s21, 2
      %s236 = smul.addr %s235, 36
      %s237 = smul.addr %s236, 4
      %s238 = scalar_lea.vmem %s1, %s237
      %p239 = scmp.lt.s32.totalorder %s19, 1
      %s240 = scalar_select %p239, %s19, 1
      %p241 = scmp.lt.s32.totalorder %s20, 5
      %s242 = scalar_select %p241, %s20, 5
      %s243 = smul.addr %s242, 6
      %s244 = smul.addr %s240, 36
      %s245 = sadd.s32 %s243, %s244
      %s246 = smul.addr %s245, 8
      %s247 = scalar_lea.vmem %s3, %s246
      %p249 = scmp.eq.s32.totalorder %s21, 0
      // Predicated region
      $region33: #{model_forward.3} parent=31 // pred_check
        %p250 = pneg %p249
      $region34: #{model_forward.3} parent=31 // pred_check_branch
        %252 = sbr.rel (%p250) target = $region36
      $region35: #{model_forward.3} parent=31 // pred_region
        %vm253 = vcmask 521216
        %254 = vst.msk [vmem:[#allocation2] sm:$0x3f] %vm253, 0.0
        %255 = vst.msk [vmem:[#allocation2 + $0x8] sm:$0x3f] %vm253, 0.0
        %256 = vst.msk [vmem:[#allocation2 + $0x10] sm:$0x3f] %vm253, 0.0
        %257 = vst.msk [vmem:[#allocation2 + $0x18] sm:$0x3f] %vm253, 0.0
        %258 = vst.msk [vmem:[#allocation2 + $0x20] sm:$0x3f] %vm253, 0.0
        %259 = vst.msk [vmem:[#allocation2 + $0x28] sm:$0x3f] %vm253, 0.0
      $region36: #{model_forward.3} parent=31 // pred_fallthru
        _
      %v260 = vld [vmem:[#allocation2] sm:$0x3f]
      %v261 = vld [vmem:[#allocation2 + $0x8] sm:$0x3f]
      %v262 = vld [vmem:[#allocation2 + $0x10] sm:$0x3f]
      %v263 = vld [vmem:[#allocation2 + $0x18] sm:$0x3f]
      %v264 = vld [vmem:[#allocation2 + $0x20] sm:$0x3f]
      %v265 = vld [vmem:[#allocation2 + $0x28] sm:$0x3f]
      %v266 = vld [vmem:[%s231] sm:$0x7]
      %v267 = vld [vmem:[%s231 + $0x8] sm:$0x7]
      %v268 = vld [vmem:[%s231 + $0x10] sm:$0x7]
      %v269 = vld [vmem:[%s231 + $0x18] sm:$0x7]
      %v270 = vld [vmem:[%s231 + $0x20] sm:$0x7]
      %v271 = vld [vmem:[%s231 + $0x28] sm:$0x7]
      %v272 = vld [vmem:[%s238] sm:$0xf]
      %v273 = vld [vmem:[%s238 + $0x4] sm:$0xf]
      %v274 = vld [vmem:[%s238 + $0x8] sm:$0xf]
      %v275 = vld [vmem:[%s238 + $0xc] sm:$0xf]
      %v280 = vunpack.c.l.b16 %v272
      %v281 = vunpack.c.l.b16 %v273
      %v282 = vunpack.c.l.b16 %v274
      %v283 = vunpack.c.l.b16 %v275
      %v284 = vpack.c.b16 %v281, %v280
      %v285 = vpack.c.b16 %v283, %v282
      %vm288 = vcmask 261120
      %v290 = vsel %vm288, %v266, 0
      %292 = vmatprep.subr.bf16.mxu0 0
      %293 = vmatpush1.bf16.msra.mxu0 0
      %294 = vmatprep.subr.bf16.mxu0 0
      %295 = vmatpush1.bf16.msra.mxu0 0
      %296 = vmatprep.subr.bf16.mxu0 0
      %297 = vmatpush1.bf16.msra.mxu0 0
      %298 = vmatprep.subr.bf16.mxu0 0
      %299 = vmatpush1.bf16.msra.mxu0 0
      %300 = vmatprep.subr.bf16.mxu0 0
      %301 = vmatpush1.bf16.msra.mxu0 0
      %302 = vmatprep.subr.bf16.mxu0 0
      %303 = vmatpush1.bf16.msra.mxu0 0
      %304 = vmatprep.subr.bf16.mxu0 0
      %305 = vmatpush1.bf16.msra.mxu0 %v285
      %306 = vmatprep.subr.bf16.mxu0 0
      %307 = vmatpush1.bf16.msra.mxu0 %v284
      %308 = vmatprep.subr.bf16.mxu0 0
      %309 = vmatpush2.bf16.msra.mxu0 0
      %310 = vmatprep.subr.bf16.mxu0 0
      %311 = vmatpush2.bf16.msra.mxu0 0
      %312 = vmatprep.subr.bf16.mxu0 0
      %313 = vmatpush2.bf16.msra.mxu0 0
      %314 = vmatprep.subr.bf16.mxu0 0
      %315 = vmatpush2.bf16.msra.mxu0 0
      %316 = vmatprep.subr.bf16.mxu0 0
      %317 = vmatpush2.bf16.msra.mxu0 0
      %318 = vmatprep.subr.bf16.mxu0 0
      %319 = vmatpush2.bf16.msra.mxu0 0
      %320 = vmatprep.subr.bf16.mxu0 0
      %321 = vmatpush2.bf16.msra.mxu0 0
      %322 = vmatprep.subr.bf16.mxu0 0
      %323 = vmatpush2.bf16.msra.mxu0 0
      %324 = vmatprep.mubr.bf16.mxu0 0
      %325 = vmatmul.mubr.bf16.gmra.mxu0 %v290
      %v326 = vpop.f32.mrf.mxu0
      %v327 = vadd.f32 0.0, %v326
      %v328 = vpop.f32.mrf.mxu0
      %v329 = vpop.f32.mrf.mxu0
      %v330 = vpop.f32.mrf.mxu0
      %331 = vdwg.mxu0
      %v333 = vsel %vm288, %v267, 0
      %335 = vmatprep.subr.bf16.mxu0 0
      %336 = vmatpush1.bf16.msra.mxu0 0
      %337 = vmatprep.subr.bf16.mxu0 0
      %338 = vmatpush1.bf16.msra.mxu0 0
      %339 = vmatprep.subr.bf16.mxu0 0
      %340 = vmatpush1.bf16.msra.mxu0 0
      %341 = vmatprep.subr.bf16.mxu0 0
      %342 = vmatpush1.bf16.msra.mxu0 0
      %343 = vmatprep.subr.bf16.mxu0 0
      %344 = vmatpush1.bf16.msra.mxu0 0
      %345 = vmatprep.subr.bf16.mxu0 0
      %346 = vmatpush1.bf16.msra.mxu0 0
      %347 = vmatprep.subr.bf16.mxu0 0
      %348 = vmatpush1.bf16.msra.mxu0 %v285
      %349 = vmatprep.subr.bf16.mxu0 0
      %350 = vmatpush1.bf16.msra.mxu0 %v284
      %351 = vmatprep.subr.bf16.mxu0 0
      %352 = vmatpush2.bf16.msra.mxu0 0
      %353 = vmatprep.subr.bf16.mxu0 0
      %354 = vmatpush2.bf16.msra.mxu0 0
      %355 = vmatprep.subr.bf16.mxu0 0
      %356 = vmatpush2.bf16.msra.mxu0 0
      %357 = vmatprep.subr.bf16.mxu0 0
      %358 = vmatpush2.bf16.msra.mxu0 0
      %359 = vmatprep.subr.bf16.mxu0 0
      %360 = vmatpush2.bf16.msra.mxu0 0
      %361 = vmatprep.subr.bf16.mxu0 0
      %362 = vmatpush2.bf16.msra.mxu0 0
      %363 = vmatprep.subr.bf16.mxu0 0
      %364 = vmatpush2.bf16.msra.mxu0 0
      %365 = vmatprep.subr.bf16.mxu0 0
      %366 = vmatpush2.bf16.msra.mxu0 0
      %367 = vmatprep.mubr.bf16.mxu0 0
      %368 = vmatmul.mubr.bf16.gmra.mxu0 %v333
      %v369 = vpop.f32.mrf.mxu0
      %v370 = vadd.f32 0.0, %v369
      %v371 = vpop.f32.mrf.mxu0
      %v372 = vpop.f32.mrf.mxu0
      %v373 = vpop.f32.mrf.mxu0
      %374 = vdwg.mxu0
      %v376 = vsel %vm288, %v268, 0
      %378 = vmatprep.subr.bf16.mxu0 0
      %379 = vmatpush1.bf16.msra.mxu0 0
      %380 = vmatprep.subr.bf16.mxu0 0
      %381 = vmatpush1.bf16.msra.mxu0 0
      %382 = vmatprep.subr.bf16.mxu0 0
      %383 = vmatpush1.bf16.msra.mxu0 0
      %384 = vmatprep.subr.bf16.mxu0 0
      %385 = vmatpush1.bf16.msra.mxu0 0
      %386 = vmatprep.subr.bf16.mxu0 0
      %387 = vmatpush1.bf16.msra.mxu0 0
      %388 = vmatprep.subr.bf16.mxu0 0
      %389 = vmatpush1.bf16.msra.mxu0 0
      %390 = vmatprep.subr.bf16.mxu0 0
      %391 = vmatpush1.bf16.msra.mxu0 %v285
      %392 = vmatprep.subr.bf16.mxu0 0
      %393 = vmatpush1.bf16.msra.mxu0 %v284
      %394 = vmatprep.subr.bf16.mxu0 0
      %395 = vmatpush2.bf16.msra.mxu0 0
      %396 = vmatprep.subr.bf16.mxu0 0
      %397 = vmatpush2.bf16.msra.mxu0 0
      %398 = vmatprep.subr.bf16.mxu0 0
      %399 = vmatpush2.bf16.msra.mxu0 0
      %400 = vmatprep.subr.bf16.mxu0 0
      %401 = vmatpush2.bf16.msra.mxu0 0
      %402 = vmatprep.subr.bf16.mxu0 0
      %403 = vmatpush2.bf16.msra.mxu0 0
      %404 = vmatprep.subr.bf16.mxu0 0
      %405 = vmatpush2.bf16.msra.mxu0 0
      %406 = vmatprep.subr.bf16.mxu0 0
      %407 = vmatpush2.bf16.msra.mxu0 0
      %408 = vmatprep.subr.bf16.mxu0 0
      %409 = vmatpush2.bf16.msra.mxu0 0
      %410 = vmatprep.mubr.bf16.mxu0 0
      %411 = vmatmul.mubr.bf16.gmra.mxu0 %v376
      %v412 = vpop.f32.mrf.mxu0
      %v413 = vadd.f32 0.0, %v412
      %v414 = vpop.f32.mrf.mxu0
      %v415 = vpop.f32.mrf.mxu0
      %v416 = vpop.f32.mrf.mxu0
      %417 = vdwg.mxu0
      %v419 = vsel %vm288, %v269, 0
      %421 = vmatprep.subr.bf16.mxu0 0
      %422 = vmatpush1.bf16.msra.mxu0 0
      %423 = vmatprep.subr.bf16.mxu0 0
      %424 = vmatpush1.bf16.msra.mxu0 0
      %425 = vmatprep.subr.bf16.mxu0 0
      %426 = vmatpush1.bf16.msra.mxu0 0
      %427 = vmatprep.subr.bf16.mxu0 0
      %428 = vmatpush1.bf16.msra.mxu0 0
      %429 = vmatprep.subr.bf16.mxu0 0
      %430 = vmatpush1.bf16.msra.mxu0 0
      %431 = vmatprep.subr.bf16.mxu0 0
      %432 = vmatpush1.bf16.msra.mxu0 0
      %433 = vmatprep.subr.bf16.mxu0 0
      %434 = vmatpush1.bf16.msra.mxu0 %v285
      %435 = vmatprep.subr.bf16.mxu0 0
      %436 = vmatpush1.bf16.msra.mxu0 %v284
      %437 = vmatprep.subr.bf16.mxu0 0
      %438 = vmatpush2.bf16.msra.mxu0 0
      %439 = vmatprep.subr.bf16.mxu0 0
      %440 = vmatpush2.bf16.msra.mxu0 0
      %441 = vmatprep.subr.bf16.mxu0 0
      %442 = vmatpush2.bf16.msra.mxu0 0
      %443 = vmatprep.subr.bf16.mxu0 0
      %444 = vmatpush2.bf16.msra.mxu0 0
      %445 = vmatprep.subr.bf16.mxu0 0
      %446 = vmatpush2.bf16.msra.mxu0 0
      %447 = vmatprep.subr.bf16.mxu0 0
      %448 = vmatpush2.bf16.msra.mxu0 0
      %449 = vmatprep.subr.bf16.mxu0 0
      %450 = vmatpush2.bf16.msra.mxu0 0
      %451 = vmatprep.subr.bf16.mxu0 0
      %452 = vmatpush2.bf16.msra.mxu0 0
      %453 = vmatprep.mubr.bf16.mxu0 0
      %454 = vmatmul.mubr.bf16.gmra.mxu0 %v419
      %v455 = vpop.f32.mrf.mxu0
      %v456 = vadd.f32 0.0, %v455
      %v457 = vpop.f32.mrf.mxu0
      %v458 = vpop.f32.mrf.mxu0
      %v459 = vpop.f32.mrf.mxu0
      %460 = vdwg.mxu0
      %v462 = vsel %vm288, %v270, 0
      %464 = vmatprep.subr.bf16.mxu0 0
      %465 = vmatpush1.bf16.msra.mxu0 0
      %466 = vmatprep.subr.bf16.mxu0 0
      %467 = vmatpush1.bf16.msra.mxu0 0
      %468 = vmatprep.subr.bf16.mxu0 0
      %469 = vmatpush1.bf16.msra.mxu0 0
      %470 = vmatprep.subr.bf16.mxu0 0
      %471 = vmatpush1.bf16.msra.mxu0 0
      %472 = vmatprep.subr.bf16.mxu0 0
      %473 = vmatpush1.bf16.msra.mxu0 0
      %474 = vmatprep.subr.bf16.mxu0 0
      %475 = vmatpush1.bf16.msra.mxu0 0
      %476 = vmatprep.subr.bf16.mxu0 0
      %477 = vmatpush1.bf16.msra.mxu0 %v285
      %478 = vmatprep.subr.bf16.mxu0 0
      %479 = vmatpush1.bf16.msra.mxu0 %v284
      %480 = vmatprep.subr.bf16.mxu0 0
      %481 = vmatpush2.bf16.msra.mxu0 0
      %482 = vmatprep.subr.bf16.mxu0 0
      %483 = vmatpush2.bf16.msra.mxu0 0
      %484 = vmatprep.subr.bf16.mxu0 0
      %485 = vmatpush2.bf16.msra.mxu0 0
      %486 = vmatprep.subr.bf16.mxu0 0
      %487 = vmatpush2.bf16.msra.mxu0 0
      %488 = vmatprep.subr.bf16.mxu0 0
      %489 = vmatpush2.bf16.msra.mxu0 0
      %490 = vmatprep.subr.bf16.mxu0 0
      %491 = vmatpush2.bf16.msra.mxu0 0
      %492 = vmatprep.subr.bf16.mxu0 0
      %493 = vmatpush2.bf16.msra.mxu0 0
      %494 = vmatprep.subr.bf16.mxu0 0
      %495 = vmatpush2.bf16.msra.mxu0 0
      %496 = vmatprep.mubr.bf16.mxu0 0
      %497 = vmatmul.mubr.bf16.gmra.mxu0 %v462
      %v498 = vpop.f32.mrf.mxu0
      %v499 = vadd.f32 0.0, %v498
      %v500 = vpop.f32.mrf.mxu0
      %v501 = vpop.f32.mrf.mxu0
      %v502 = vpop.f32.mrf.mxu0
      %503 = vdwg.mxu0
      %v505 = vsel %vm288, %v271, 0
      %507 = vmatprep.subr.bf16.mxu0 0
      %508 = vmatpush1.bf16.msra.mxu0 0
      %509 = vmatprep.subr.bf16.mxu0 0
      %510 = vmatpush1.bf16.msra.mxu0 0
      %511 = vmatprep.subr.bf16.mxu0 0
      %512 = vmatpush1.bf16.msra.mxu0 0
      %513 = vmatprep.subr.bf16.mxu0 0
      %514 = vmatpush1.bf16.msra.mxu0 0
      %515 = vmatprep.subr.bf16.mxu0 0
      %516 = vmatpush1.bf16.msra.mxu0 0
      %517 = vmatprep.subr.bf16.mxu0 0
      %518 = vmatpush1.bf16.msra.mxu0 0
      %519 = vmatprep.subr.bf16.mxu0 0
      %520 = vmatpush1.bf16.msra.mxu0 %v285
      %521 = vmatprep.subr.bf16.mxu0 0
      %522 = vmatpush1.bf16.msra.mxu0 %v284
      %523 = vmatprep.subr.bf16.mxu0 0
      %524 = vmatpush2.bf16.msra.mxu0 0
      %525 = vmatprep.subr.bf16.mxu0 0
      %526 = vmatpush2.bf16.msra.mxu0 0
      %527 = vmatprep.subr.bf16.mxu0 0
      %528 = vmatpush2.bf16.msra.mxu0 0
      %529 = vmatprep.subr.bf16.mxu0 0
      %530 = vmatpush2.bf16.msra.mxu0 0
      %531 = vmatprep.subr.bf16.mxu0 0
      %532 = vmatpush2.bf16.msra.mxu0 0
      %533 = vmatprep.subr.bf16.mxu0 0
      %534 = vmatpush2.bf16.msra.mxu0 0
      %535 = vmatprep.subr.bf16.mxu0 0
      %536 = vmatpush2.bf16.msra.mxu0 0
      %537 = vmatprep.subr.bf16.mxu0 0
      %538 = vmatpush2.bf16.msra.mxu0 0
      %539 = vmatprep.mubr.bf16.mxu0 0
      %540 = vmatmul.mubr.bf16.gmra.mxu0 %v505
      %v541 = vpop.f32.mrf.mxu0
      %v542 = vadd.f32 0.0, %v541
      %v543 = vpop.f32.mrf.mxu0
      %v544 = vpop.f32.mrf.mxu0
      %v545 = vpop.f32.mrf.mxu0
      %546 = vdwg.mxu0
      %v547 = vadd.f32 %v260, %v327
      %v548 = vadd.f32 %v261, %v370
      %v549 = vadd.f32 %v262, %v413
      %v550 = vadd.f32 %v263, %v456
      %v551 = vadd.f32 %v264, %v499
      %v552 = vadd.f32 %v265, %v542
      %v553 = vld [vmem:[%s231] sm:$0xe]
      %v554 = vld [vmem:[%s231 + $0x8] sm:$0xe]
      %v555 = vld [vmem:[%s231 + $0x10] sm:$0xe]
      %v556 = vld [vmem:[%s231 + $0x18] sm:$0xe]
      %v557 = vld [vmem:[%s231 + $0x20] sm:$0xe]
      %v558 = vld [vmem:[%s231 + $0x28] sm:$0xe]
      %s559 = scalar_lea.vmem %s238, 16
      %v560 = vld [vmem:[%s559] sm:$0xf]
      %v561 = vld [vmem:[%s559 + $0x4] sm:$0xf]
      %v562 = vld [vmem:[%s559 + $0x8] sm:$0xf]
      %v563 = vld [vmem:[%s559 + $0xc] sm:$0xf]
      %v565 = vunpack.c.l.b16 %v553
      %v566 = vpack.c.b16 %v565, %v565
      %v567 = vrot.slane %v566, 1
      %v572 = vunpack.c.l.b16 %v560
      %v573 = vunpack.c.l.b16 %v561
      %v574 = vunpack.c.l.b16 %v562
      %v575 = vunpack.c.l.b16 %v563
      %v576 = vpack.c.b16 %v573, %v572
      %v577 = vpack.c.b16 %v575, %v574
      %v581 = vsel %vm288, %v567, 0
      %583 = vmatprep.subr.bf16.mxu0 0
      %584 = vmatpush1.bf16.msra.mxu0 0
      %585 = vmatprep.subr.bf16.mxu0 0
      %586 = vmatpush1.bf16.msra.mxu0 0
      %587 = vmatprep.subr.bf16.mxu0 0
      %588 = vmatpush1.bf16.msra.mxu0 0
      %589 = vmatprep.subr.bf16.mxu0 0
      %590 = vmatpush1.bf16.msra.mxu0 0
      %591 = vmatprep.subr.bf16.mxu0 0
      %592 = vmatpush1.bf16.msra.mxu0 0
      %593 = vmatprep.subr.bf16.mxu0 0
      %594 = vmatpush1.bf16.msra.mxu0 0
      %595 = vmatprep.subr.bf16.mxu0 0
      %596 = vmatpush1.bf16.msra.mxu0 %v577
      %597 = vmatprep.subr.bf16.mxu0 0
      %598 = vmatpush1.bf16.msra.mxu0 %v576
      %599 = vmatprep.subr.bf16.mxu0 0
      %600 = vmatpush2.bf16.msra.mxu0 0
      %601 = vmatprep.subr.bf16.mxu0 0
      %602 = vmatpush2.bf16.msra.mxu0 0
      %603 = vmatprep.subr.bf16.mxu0 0
      %604 = vmatpush2.bf16.msra.mxu0 0
      %605 = vmatprep.subr.bf16.mxu0 0
      %606 = vmatpush2.bf16.msra.mxu0 0
      %607 = vmatprep.subr.bf16.mxu0 0
      %608 = vmatpush2.bf16.msra.mxu0 0
      %609 = vmatprep.subr.bf16.mxu0 0
      %610 = vmatpush2.bf16.msra.mxu0 0
      %611 = vmatprep.subr.bf16.mxu0 0
      %612 = vmatpush2.bf16.msra.mxu0 0
      %613 = vmatprep.subr.bf16.mxu0 0
      %614 = vmatpush2.bf16.msra.mxu0 0
      %615 = vmatprep.mubr.bf16.mxu0 0
      %616 = vmatmul.mubr.bf16.gmra.mxu0 %v581
      %v617 = vpop.f32.mrf.mxu0
      %v618 = vadd.f32 0.0, %v617
      %v619 = vpop.f32.mrf.mxu0
      %v620 = vpop.f32.mrf.mxu0
      %v621 = vpop.f32.mrf.mxu0
      %622 = vdwg.mxu0
      %v624 = vunpack.c.l.b16 %v554
      %v625 = vpack.c.b16 %v624, %v624
      %v626 = vrot.slane %v625, 1
      %v628 = vsel %vm288, %v626, 0
      %630 = vmatprep.subr.bf16.mxu0 0
      %631 = vmatpush1.bf16.msra.mxu0 0
      %632 = vmatprep.subr.bf16.mxu0 0
      %633 = vmatpush1.bf16.msra.mxu0 0
      %634 = vmatprep.subr.bf16.mxu0 0
      %635 = vmatpush1.bf16.msra.mxu0 0
      %636 = vmatprep.subr.bf16.mxu0 0
      %637 = vmatpush1.bf16.msra.mxu0 0
      %638 = vmatprep.subr.bf16.mxu0 0
      %639 = vmatpush1.bf16.msra.mxu0 0
      %640 = vmatprep.subr.bf16.mxu0 0
      %641 = vmatpush1.bf16.msra.mxu0 0
      %642 = vmatprep.subr.bf16.mxu0 0
      %643 = vmatpush1.bf16.msra.mxu0 %v577
      %644 = vmatprep.subr.bf16.mxu0 0
      %645 = vmatpush1.bf16.msra.mxu0 %v576
      %646 = vmatprep.subr.bf16.mxu0 0
      %647 = vmatpush2.bf16.msra.mxu0 0
      %648 = vmatprep.subr.bf16.mxu0 0
      %649 = vmatpush2.bf16.msra.mxu0 0
      %650 = vmatprep.subr.bf16.mxu0 0
      %651 = vmatpush2.bf16.msra.mxu0 0
      %652 = vmatprep.subr.bf16.mxu0 0
      %653 = vmatpush2.bf16.msra.mxu0 0
      %654 = vmatprep.subr.bf16.mxu0 0
      %655 = vmatpush2.bf16.msra.mxu0 0
      %656 = vmatprep.subr.bf16.mxu0 0
      %657 = vmatpush2.bf16.msra.mxu0 0
      %658 = vmatprep.subr.bf16.mxu0 0
      %659 = vmatpush2.bf16.msra.mxu0 0
      %660 = vmatprep.subr.bf16.mxu0 0
      %661 = vmatpush2.bf16.msra.mxu0 0
      %662 = vmatprep.mubr.bf16.mxu0 0
      %663 = vmatmul.mubr.bf16.gmra.mxu0 %v628
      %v664 = vpop.f32.mrf.mxu0
      %v665 = vadd.f32 0.0, %v664
      %v666 = vpop.f32.mrf.mxu0
      %v667 = vpop.f32.mrf.mxu0
      %v668 = vpop.f32.mrf.mxu0
      %669 = vdwg.mxu0
      %v671 = vunpack.c.l.b16 %v555
      %v672 = vpack.c.b16 %v671, %v671
      %v673 = vrot.slane %v672, 1
      %v675 = vsel %vm288, %v673, 0
      %677 = vmatprep.subr.bf16.mxu0 0
      %678 = vmatpush1.bf16.msra.mxu0 0
      %679 = vmatprep.subr.bf16.mxu0 0
      %680 = vmatpush1.bf16.msra.mxu0 0
      %681 = vmatprep.subr.bf16.mxu0 0
      %682 = vmatpush1.bf16.msra.mxu0 0
      %683 = vmatprep.subr.bf16.mxu0 0
      %684 = vmatpush1.bf16.msra.mxu0 0
      %685 = vmatprep.subr.bf16.mxu0 0
      %686 = vmatpush1.bf16.msra.mxu0 0
      %687 = vmatprep.subr.bf16.mxu0 0
      %688 = vmatpush1.bf16.msra.mxu0 0
      %689 = vmatprep.subr.bf16.mxu0 0
      %690 = vmatpush1.bf16.msra.mxu0 %v577
      %691 = vmatprep.subr.bf16.mxu0 0
      %692 = vmatpush1.bf16.msra.mxu0 %v576
      %693 = vmatprep.subr.bf16.mxu0 0
      %694 = vmatpush2.bf16.msra.mxu0 0
      %695 = vmatprep.subr.bf16.mxu0 0
      %696 = vmatpush2.bf16.msra.mxu0 0
      %697 = vmatprep.subr.bf16.mxu0 0
      %698 = vmatpush2.bf16.msra.mxu0 0
      %699 = vmatprep.subr.bf16.mxu0 0
      %700 = vmatpush2.bf16.msra.mxu0 0
      %701 = vmatprep.subr.bf16.mxu0 0
      %702 = vmatpush2.bf16.msra.mxu0 0
      %703 = vmatprep.subr.bf16.mxu0 0
      %704 = vmatpush2.bf16.msra.mxu0 0
      %705 = vmatprep.subr.bf16.mxu0 0
      %706 = vmatpush2.bf16.msra.mxu0 0
      %707 = vmatprep.subr.bf16.mxu0 0
      %708 = vmatpush2.bf16.msra.mxu0 0
      %709 = vmatprep.mubr.bf16.mxu0 0
      %710 = vmatmul.mubr.bf16.gmra.mxu0 %v675
      %v711 = vpop.f32.mrf.mxu0
      %v712 = vadd.f32 0.0, %v711
      %v713 = vpop.f32.mrf.mxu0
      %v714 = vpop.f32.mrf.mxu0
      %v715 = vpop.f32.mrf.mxu0
      %716 = vdwg.mxu0
      %v718 = vunpack.c.l.b16 %v556
      %v719 = vpack.c.b16 %v718, %v718
      %v720 = vrot.slane %v719, 1
      %v722 = vsel %vm288, %v720, 0
      %724 = vmatprep.subr.bf16.mxu0 0
      %725 = vmatpush1.bf16.msra.mxu0 0
      %726 = vmatprep.subr.bf16.mxu0 0
      %727 = vmatpush1.bf16.msra.mxu0 0
      %728 = vmatprep.subr.bf16.mxu0 0
      %729 = vmatpush1.bf16.msra.mxu0 0
      %730 = vmatprep.subr.bf16.mxu0 0
      %731 = vmatpush1.bf16.msra.mxu0 0
      %732 = vmatprep.subr.bf16.mxu0 0
      %733 = vmatpush1.bf16.msra.mxu0 0
      %734 = vmatprep.subr.bf16.mxu0 0
      %735 = vmatpush1.bf16.msra.mxu0 0
      %736 = vmatprep.subr.bf16.mxu0 0
      %737 = vmatpush1.bf16.msra.mxu0 %v577
      %738 = vmatprep.subr.bf16.mxu0 0
      %739 = vmatpush1.bf16.msra.mxu0 %v576
      %740 = vmatprep.subr.bf16.mxu0 0
      %741 = vmatpush2.bf16.msra.mxu0 0
      %742 = vmatprep.subr.bf16.mxu0 0
      %743 = vmatpush2.bf16.msra.mxu0 0
      %744 = vmatprep.subr.bf16.mxu0 0
      %745 = vmatpush2.bf16.msra.mxu0 0
      %746 = vmatprep.subr.bf16.mxu0 0
      %747 = vmatpush2.bf16.msra.mxu0 0
      %748 = vmatprep.subr.bf16.mxu0 0
      %749 = vmatpush2.bf16.msra.mxu0 0
      %750 = vmatprep.subr.bf16.mxu0 0
      %751 = vmatpush2.bf16.msra.mxu0 0
      %752 = vmatprep.subr.bf16.mxu0 0
      %753 = vmatpush2.bf16.msra.mxu0 0
      %754 = vmatprep.subr.bf16.mxu0 0
      %755 = vmatpush2.bf16.msra.mxu0 0
      %756 = vmatprep.mubr.bf16.mxu0 0
      %757 = vmatmul.mubr.bf16.gmra.mxu0 %v722
      %v758 = vpop.f32.mrf.mxu0
      %v759 = vadd.f32 0.0, %v758
      %v760 = vpop.f32.mrf.mxu0
      %v761 = vpop.f32.mrf.mxu0
      %v762 = vpop.f32.mrf.mxu0
      %763 = vdwg.mxu0
      %v765 = vunpack.c.l.b16 %v557
      %v766 = vpack.c.b16 %v765, %v765
      %v767 = vrot.slane %v766, 1
      %v769 = vsel %vm288, %v767, 0
      %771 = vmatprep.subr.bf16.mxu0 0
      %772 = vmatpush1.bf16.msra.mxu0 0
      %773 = vmatprep.subr.bf16.mxu0 0
      %774 = vmatpush1.bf16.msra.mxu0 0
      %775 = vmatprep.subr.bf16.mxu0 0
      %776 = vmatpush1.bf16.msra.mxu0 0
      %777 = vmatprep.subr.bf16.mxu0 0
      %778 = vmatpush1.bf16.msra.mxu0 0
      %779 = vmatprep.subr.bf16.mxu0 0
      %780 = vmatpush1.bf16.msra.mxu0 0
      %781 = vmatprep.subr.bf16.mxu0 0
      %782 = vmatpush1.bf16.msra.mxu0 0
      %783 = vmatprep.subr.bf16.mxu0 0
      %784 = vmatpush1.bf16.msra.mxu0 %v577
      %785 = vmatprep.subr.bf16.mxu0 0
      %786 = vmatpush1.bf16.msra.mxu0 %v576
      %787 = vmatprep.subr.bf16.mxu0 0
      %788 = vmatpush2.bf16.msra.mxu0 0
      %789 = vmatprep.subr.bf16.mxu0 0
      %790 = vmatpush2.bf16.msra.mxu0 0
      %791 = vmatprep.subr.bf16.mxu0 0
      %792 = vmatpush2.bf16.msra.mxu0 0
      %793 = vmatprep.subr.bf16.mxu0 0
      %794 = vmatpush2.bf16.msra.mxu0 0
      %795 = vmatprep.subr.bf16.mxu0 0
      %796 = vmatpush2.bf16.msra.mxu0 0
      %797 = vmatprep.subr.bf16.mxu0 0
      %798 = vmatpush2.bf16.msra.mxu0 0
      %799 = vmatprep.subr.bf16.mxu0 0
      %800 = vmatpush2.bf16.msra.mxu0 0
      %801 = vmatprep.subr.bf16.mxu0 0
      %802 = vmatpush2.bf16.msra.mxu0 0
      %803 = vmatprep.mubr.bf16.mxu0 0
      %804 = vmatmul.mubr.bf16.gmra.mxu0 %v769
      %v805 = vpop.f32.mrf.mxu0
      %v806 = vadd.f32 0.0, %v805
      %v807 = vpop.f32.mrf.mxu0
      %v808 = vpop.f32.mrf.mxu0
      %v809 = vpop.f32.mrf.mxu0
      %810 = vdwg.mxu0
      %v812 = vunpack.c.l.b16 %v558
      %v813 = vpack.c.b16 %v812, %v812
      %v814 = vrot.slane %v813, 1
      %v816 = vsel %vm288, %v814, 0
      %818 = vmatprep.subr.bf16.mxu0 0
      %819 = vmatpush1.bf16.msra.mxu0 0
      %820 = vmatprep.subr.bf16.mxu0 0
      %821 = vmatpush1.bf16.msra.mxu0 0
      %822 = vmatprep.subr.bf16.mxu0 0
      %823 = vmatpush1.bf16.msra.mxu0 0
      %824 = vmatprep.subr.bf16.mxu0 0
      %825 = vmatpush1.bf16.msra.mxu0 0
      %826 = vmatprep.subr.bf16.mxu0 0
      %827 = vmatpush1.bf16.msra.mxu0 0
      %828 = vmatprep.subr.bf16.mxu0 0
      %829 = vmatpush1.bf16.msra.mxu0 0
      %830 = vmatprep.subr.bf16.mxu0 0
      %831 = vmatpush1.bf16.msra.mxu0 %v577
      %832 = vmatprep.subr.bf16.mxu0 0
      %833 = vmatpush1.bf16.msra.mxu0 %v576
      %834 = vmatprep.subr.bf16.mxu0 0
      %835 = vmatpush2.bf16.msra.mxu0 0
      %836 = vmatprep.subr.bf16.mxu0 0
      %837 = vmatpush2.bf16.msra.mxu0 0
      %838 = vmatprep.subr.bf16.mxu0 0
      %839 = vmatpush2.bf16.msra.mxu0 0
      %840 = vmatprep.subr.bf16.mxu0 0
      %841 = vmatpush2.bf16.msra.mxu0 0
      %842 = vmatprep.subr.bf16.mxu0 0
      %843 = vmatpush2.bf16.msra.mxu0 0
      %844 = vmatprep.subr.bf16.mxu0 0
      %845 = vmatpush2.bf16.msra.mxu0 0
      %846 = vmatprep.subr.bf16.mxu0 0
      %847 = vmatpush2.bf16.msra.mxu0 0
      %848 = vmatprep.subr.bf16.mxu0 0
      %849 = vmatpush2.bf16.msra.mxu0 0
      %850 = vmatprep.mubr.bf16.mxu0 0
      %851 = vmatmul.mubr.bf16.gmra.mxu0 %v816
      %v852 = vpop.f32.mrf.mxu0
      %v853 = vadd.f32 0.0, %v852
      %v854 = vpop.f32.mrf.mxu0
      %v855 = vpop.f32.mrf.mxu0
      %v856 = vpop.f32.mrf.mxu0
      %857 = vdwg.mxu0
      %v858 = vadd.f32 %v547, %v618
      %v859 = vadd.f32 %v548, %v665
      %v860 = vadd.f32 %v549, %v712
      %v861 = vadd.f32 %v550, %v759
      %v862 = vadd.f32 %v551, %v806
      %v863 = vadd.f32 %v552, %v853
      %v864 = vld [vmem:[%s231] sm:$0xc]
      %v865 = vld [vmem:[%s231 + $0x4] sm:$0x1]
      %v866 = vld [vmem:[%s231 + $0x8] sm:$0xc]
      %v867 = vld [vmem:[%s231 + $0xc] sm:$0x1]
      %v868 = vld [vmem:[%s231 + $0x10] sm:$0xc]
      %v869 = vld [vmem:[%s231 + $0x14] sm:$0x1]
      %v870 = vld [vmem:[%s231 + $0x18] sm:$0xc]
      %v871 = vld [vmem:[%s231 + $0x1c] sm:$0x1]
      %v872 = vld [vmem:[%s231 + $0x20] sm:$0xc]
      %v873 = vld [vmem:[%s231 + $0x24] sm:$0x1]
      %v874 = vld [vmem:[%s231 + $0x28] sm:$0xc]
      %v875 = vld [vmem:[%s231 + $0x2c] sm:$0x1]
      %s876 = scalar_lea.vmem %s238, 32
      %v877 = vld [vmem:[%s876] sm:$0xf]
      %v878 = vld [vmem:[%s876 + $0x4] sm:$0xf]
      %v879 = vld [vmem:[%s876 + $0x8] sm:$0xf]
      %v880 = vld [vmem:[%s876 + $0xc] sm:$0xf]
      %v883 = vunpack.c.l.b16 %v864
      %v884 = vunpack.c.l.b16 %v865
      %v885 = vpack.c.b16 %v884, %v883
      %v886 = vrot.slane %v885, 2
      %v891 = vunpack.c.l.b16 %v877
      %v892 = vunpack.c.l.b16 %v878
      %v893 = vunpack.c.l.b16 %v879
      %v894 = vunpack.c.l.b16 %v880
      %v895 = vpack.c.b16 %v892, %v891
      %v896 = vpack.c.b16 %v894, %v893
      %v900 = vsel %vm288, %v886, 0
      %902 = vmatprep.subr.bf16.mxu0 0
      %903 = vmatpush1.bf16.msra.mxu0 0
      %904 = vmatprep.subr.bf16.mxu0 0
      %905 = vmatpush1.bf16.msra.mxu0 0
      %906 = vmatprep.subr.bf16.mxu0 0
      %907 = vmatpush1.bf16.msra.mxu0 0
      %908 = vmatprep.subr.bf16.mxu0 0
      %909 = vmatpush1.bf16.msra.mxu0 0
      %910 = vmatprep.subr.bf16.mxu0 0
      %911 = vmatpush1.bf16.msra.mxu0 0
      %912 = vmatprep.subr.bf16.mxu0 0
      %913 = vmatpush1.bf16.msra.mxu0 0
      %914 = vmatprep.subr.bf16.mxu0 0
      %915 = vmatpush1.bf16.msra.mxu0 %v896
      %916 = vmatprep.subr.bf16.mxu0 0
      %917 = vmatpush1.bf16.msra.mxu0 %v895
      %918 = vmatprep.subr.bf16.mxu0 0
      %919 = vmatpush2.bf16.msra.mxu0 0
      %920 = vmatprep.subr.bf16.mxu0 0
      %921 = vmatpush2.bf16.msra.mxu0 0
      %922 = vmatprep.subr.bf16.mxu0 0
      %923 = vmatpush2.bf16.msra.mxu0 0
      %924 = vmatprep.subr.bf16.mxu0 0
      %925 = vmatpush2.bf16.msra.mxu0 0
      %926 = vmatprep.subr.bf16.mxu0 0
      %927 = vmatpush2.bf16.msra.mxu0 0
      %928 = vmatprep.subr.bf16.mxu0 0
      %929 = vmatpush2.bf16.msra.mxu0 0
      %930 = vmatprep.subr.bf16.mxu0 0
      %931 = vmatpush2.bf16.msra.mxu0 0
      %932 = vmatprep.subr.bf16.mxu0 0
      %933 = vmatpush2.bf16.msra.mxu0 0
      %934 = vmatprep.mubr.bf16.mxu0 0
      %935 = vmatmul.mubr.bf16.gmra.mxu0 %v900
      %v936 = vpop.f32.mrf.mxu0
      %v937 = vadd.f32 0.0, %v936
      %v938 = vpop.f32.mrf.mxu0
      %v939 = vpop.f32.mrf.mxu0
      %v940 = vpop.f32.mrf.mxu0
      %941 = vdwg.mxu0
      %v944 = vunpack.c.l.b16 %v866
      %v945 = vunpack.c.l.b16 %v867
      %v946 = vpack.c.b16 %v945, %v944
      %v947 = vrot.slane %v946, 2
      %v949 = vsel %vm288, %v947, 0
      %951 = vmatprep.subr.bf16.mxu0 0
      %952 = vmatpush1.bf16.msra.mxu0 0
      %953 = vmatprep.subr.bf16.mxu0 0
      %954 = vmatpush1.bf16.msra.mxu0 0
      %955 = vmatprep.subr.bf16.mxu0 0
      %956 = vmatpush1.bf16.msra.mxu0 0
      %957 = vmatprep.subr.bf16.mxu0 0
      %958 = vmatpush1.bf16.msra.mxu0 0
      %959 = vmatprep.subr.bf16.mxu0 0
      %960 = vmatpush1.bf16.msra.mxu0 0
      %961 = vmatprep.subr.bf16.mxu0 0
      %962 = vmatpush1.bf16.msra.mxu0 0
      %963 = vmatprep.subr.bf16.mxu0 0
      %964 = vmatpush1.bf16.msra.mxu0 %v896
      %965 = vmatprep.subr.bf16.mxu0 0
      %966 = vmatpush1.bf16.msra.mxu0 %v895
      %967 = vmatprep.subr.bf16.mxu0 0
      %968 = vmatpush2.bf16.msra.mxu0 0
      %969 = vmatprep.subr.bf16.mxu0 0
      %970 = vmatpush2.bf16.msra.mxu0 0
      %971 = vmatprep.subr.bf16.mxu0 0
      %972 = vmatpush2.bf16.msra.mxu0 0
      %973 = vmatprep.subr.bf16.mxu0 0
      %974 = vmatpush2.bf16.msra.mxu0 0
      %975 = vmatprep.subr.bf16.mxu0 0
      %976 = vmatpush2.bf16.msra.mxu0 0
      %977 = vmatprep.subr.bf16.mxu0 0
      %978 = vmatpush2.bf16.msra.mxu0 0
      %979 = vmatprep.subr.bf16.mxu0 0
      %980 = vmatpush2.bf16.msra.mxu0 0
      %981 = vmatprep.subr.bf16.mxu0 0
      %982 = vmatpush2.bf16.msra.mxu0 0
      %983 = vmatprep.mubr.bf16.mxu0 0
      %984 = vmatmul.mubr.bf16.gmra.mxu0 %v949
      %v985 = vpop.f32.mrf.mxu0
      %v986 = vadd.f32 0.0, %v985
      %v987 = vpop.f32.mrf.mxu0
      %v988 = vpop.f32.mrf.mxu0
      %v989 = vpop.f32.mrf.mxu0
      %990 = vdwg.mxu0
      %v993 = vunpack.c.l.b16 %v868
      %v994 = vunpack.c.l.b16 %v869
      %v995 = vpack.c.b16 %v994, %v993
      %v996 = vrot.slane %v995, 2
      %v998 = vsel %vm288, %v996, 0
      %1000 = vmatprep.subr.bf16.mxu0 0
      %1001 = vmatpush1.bf16.msra.mxu0 0
      %1002 = vmatprep.subr.bf16.mxu0 0
      %1003 = vmatpush1.bf16.msra.mxu0 0
      %1004 = vmatprep.subr.bf16.mxu0 0
      %1005 = vmatpush1.bf16.msra.mxu0 0
      %1006 = vmatprep.subr.bf16.mxu0 0
      %1007 = vmatpush1.bf16.msra.mxu0 0
      %1008 = vmatprep.subr.bf16.mxu0 0
      %1009 = vmatpush1.bf16.msra.mxu0 0
      %1010 = vmatprep.subr.bf16.mxu0 0
      %1011 = vmatpush1.bf16.msra.mxu0 0
      %1012 = vmatprep.subr.bf16.mxu0 0
      %1013 = vmatpush1.bf16.msra.mxu0 %v896
      %1014 = vmatprep.subr.bf16.mxu0 0
      %1015 = vmatpush1.bf16.msra.mxu0 %v895
      %1016 = vmatprep.subr.bf16.mxu0 0
      %1017 = vmatpush2.bf16.msra.mxu0 0
      %1018 = vmatprep.subr.bf16.mxu0 0
      %1019 = vmatpush2.bf16.msra.mxu0 0
      %1020 = vmatprep.subr.bf16.mxu0 0
      %1021 = vmatpush2.bf16.msra.mxu0 0
      %1022 = vmatprep.subr.bf16.mxu0 0
      %1023 = vmatpush2.bf16.msra.mxu0 0
      %1024 = vmatprep.subr.bf16.mxu0 0
      %1025 = vmatpush2.bf16.msra.mxu0 0
      %1026 = vmatprep.subr.bf16.mxu0 0
      %1027 = vmatpush2.bf16.msra.mxu0 0
      %1028 = vmatprep.subr.bf16.mxu0 0
      %1029 = vmatpush2.bf16.msra.mxu0 0
      %1030 = vmatprep.subr.bf16.mxu0 0
      %1031 = vmatpush2.bf16.msra.mxu0 0
      %1032 = vmatprep.mubr.bf16.mxu0 0
      %1033 = vmatmul.mubr.bf16.gmra.mxu0 %v998
      %v1034 = vpop.f32.mrf.mxu0
      %v1035 = vadd.f32 0.0, %v1034
      %v1036 = vpop.f32.mrf.mxu0
      %v1037 = vpop.f32.mrf.mxu0
      %v1038 = vpop.f32.mrf.mxu0
      %1039 = vdwg.mxu0
      %v1042 = vunpack.c.l.b16 %v870
      %v1043 = vunpack.c.l.b16 %v871
      %v1044 = vpack.c.b16 %v1043, %v1042
      %v1045 = vrot.slane %v1044, 2
      %v1047 = vsel %vm288, %v1045, 0
      %1049 = vmatprep.subr.bf16.mxu0 0
      %1050 = vmatpush1.bf16.msra.mxu0 0
      %1051 = vmatprep.subr.bf16.mxu0 0
      %1052 = vmatpush1.bf16.msra.mxu0 0
      %1053 = vmatprep.subr.bf16.mxu0 0
      %1054 = vmatpush1.bf16.msra.mxu0 0
      %1055 = vmatprep.subr.bf16.mxu0 0
      %1056 = vmatpush1.bf16.msra.mxu0 0
      %1057 = vmatprep.subr.bf16.mxu0 0
      %1058 = vmatpush1.bf16.msra.mxu0 0
      %1059 = vmatprep.subr.bf16.mxu0 0
      %1060 = vmatpush1.bf16.msra.mxu0 0
      %1061 = vmatprep.subr.bf16.mxu0 0
      %1062 = vmatpush1.bf16.msra.mxu0 %v896
      %1063 = vmatprep.subr.bf16.mxu0 0
      %1064 = vmatpush1.bf16.msra.mxu0 %v895
      %1065 = vmatprep.subr.bf16.mxu0 0
      %1066 = vmatpush2.bf16.msra.mxu0 0
      %1067 = vmatprep.subr.bf16.mxu0 0
      %1068 = vmatpush2.bf16.msra.mxu0 0
      %1069 = vmatprep.subr.bf16.mxu0 0
      %1070 = vmatpush2.bf16.msra.mxu0 0
      %1071 = vmatprep.subr.bf16.mxu0 0
      %1072 = vmatpush2.bf16.msra.mxu0 0
      %1073 = vmatprep.subr.bf16.mxu0 0
      %1074 = vmatpush2.bf16.msra.mxu0 0
      %1075 = vmatprep.subr.bf16.mxu0 0
      %1076 = vmatpush2.bf16.msra.mxu0 0
      %1077 = vmatprep.subr.bf16.mxu0 0
      %1078 = vmatpush2.bf16.msra.mxu0 0
      %1079 = vmatprep.subr.bf16.mxu0 0
      %1080 = vmatpush2.bf16.msra.mxu0 0
      %1081 = vmatprep.mubr.bf16.mxu0 0
      %1082 = vmatmul.mubr.bf16.gmra.mxu0 %v1047
      %v1083 = vpop.f32.mrf.mxu0
      %v1084 = vadd.f32 0.0, %v1083
      %v1085 = vpop.f32.mrf.mxu0
      %v1086 = vpop.f32.mrf.mxu0
      %v1087 = vpop.f32.mrf.mxu0
      %1088 = vdwg.mxu0
      %v1091 = vunpack.c.l.b16 %v872
      %v1092 = vunpack.c.l.b16 %v873
      %v1093 = vpack.c.b16 %v1092, %v1091
      %v1094 = vrot.slane %v1093, 2
      %v1096 = vsel %vm288, %v1094, 0
      %1098 = vmatprep.subr.bf16.mxu0 0
      %1099 = vmatpush1.bf16.msra.mxu0 0
      %1100 = vmatprep.subr.bf16.mxu0 0
      %1101 = vmatpush1.bf16.msra.mxu0 0
      %1102 = vmatprep.subr.bf16.mxu0 0
      %1103 = vmatpush1.bf16.msra.mxu0 0
      %1104 = vmatprep.subr.bf16.mxu0 0
      %1105 = vmatpush1.bf16.msra.mxu0 0
      %1106 = vmatprep.subr.bf16.mxu0 0
      %1107 = vmatpush1.bf16.msra.mxu0 0
      %1108 = vmatprep.subr.bf16.mxu0 0
      %1109 = vmatpush1.bf16.msra.mxu0 0
      %1110 = vmatprep.subr.bf16.mxu0 0
      %1111 = vmatpush1.bf16.msra.mxu0 %v896
      %1112 = vmatprep.subr.bf16.mxu0 0
      %1113 = vmatpush1.bf16.msra.mxu0 %v895
      %1114 = vmatprep.subr.bf16.mxu0 0
      %1115 = vmatpush2.bf16.msra.mxu0 0
      %1116 = vmatprep.subr.bf16.mxu0 0
      %1117 = vmatpush2.bf16.msra.mxu0 0
      %1118 = vmatprep.subr.bf16.mxu0 0
      %1119 = vmatpush2.bf16.msra.mxu0 0
      %1120 = vmatprep.subr.bf16.mxu0 0
      %1121 = vmatpush2.bf16.msra.mxu0 0
      %1122 = vmatprep.subr.bf16.mxu0 0
      %1123 = vmatpush2.bf16.msra.mxu0 0
      %1124 = vmatprep.subr.bf16.mxu0 0
      %1125 = vmatpush2.bf16.msra.mxu0 0
      %1126 = vmatprep.subr.bf16.mxu0 0
      %1127 = vmatpush2.bf16.msra.mxu0 0
      %1128 = vmatprep.subr.bf16.mxu0 0
      %1129 = vmatpush2.bf16.msra.mxu0 0
      %1130 = vmatprep.mubr.bf16.mxu0 0
      %1131 = vmatmul.mubr.bf16.gmra.mxu0 %v1096
      %v1132 = vpop.f32.mrf.mxu0
      %v1133 = vadd.f32 0.0, %v1132
      %v1134 = vpop.f32.mrf.mxu0
      %v1135 = vpop.f32.mrf.mxu0
      %v1136 = vpop.f32.mrf.mxu0
      %1137 = vdwg.mxu0
      %v1140 = vunpack.c.l.b16 %v874
      %v1141 = vunpack.c.l.b16 %v875
      %v1142 = vpack.c.b16 %v1141, %v1140
      %v1143 = vrot.slane %v1142, 2
      %v1145 = vsel %vm288, %v1143, 0
      %1147 = vmatprep.subr.bf16.mxu0 0
      %1148 = vmatpush1.bf16.msra.mxu0 0
      %1149 = vmatprep.subr.bf16.mxu0 0
      %1150 = vmatpush1.bf16.msra.mxu0 0
      %1151 = vmatprep.subr.bf16.mxu0 0
      %1152 = vmatpush1.bf16.msra.mxu0 0
      %1153 = vmatprep.subr.bf16.mxu0 0
      %1154 = vmatpush1.bf16.msra.mxu0 0
      %1155 = vmatprep.subr.bf16.mxu0 0
      %1156 = vmatpush1.bf16.msra.mxu0 0
      %1157 = vmatprep.subr.bf16.mxu0 0
      %1158 = vmatpush1.bf16.msra.mxu0 0
      %1159 = vmatprep.subr.bf16.mxu0 0
      %1160 = vmatpush1.bf16.msra.mxu0 %v896
      %1161 = vmatprep.subr.bf16.mxu0 0
      %1162 = vmatpush1.bf16.msra.mxu0 %v895
      %1163 = vmatprep.subr.bf16.mxu0 0
      %1164 = vmatpush2.bf16.msra.mxu0 0
      %1165 = vmatprep.subr.bf16.mxu0 0
      %1166 = vmatpush2.bf16.msra.mxu0 0
      %1167 = vmatprep.subr.bf16.mxu0 0
      %1168 = vmatpush2.bf16.msra.mxu0 0
      %1169 = vmatprep.subr.bf16.mxu0 0
      %1170 = vmatpush2.bf16.msra.mxu0 0
      %1171 = vmatprep.subr.bf16.mxu0 0
      %1172 = vmatpush2.bf16.msra.mxu0 0
      %1173 = vmatprep.subr.bf16.mxu0 0
      %1174 = vmatpush2.bf16.msra.mxu0 0
      %1175 = vmatprep.subr.bf16.mxu0 0
      %1176 = vmatpush2.bf16.msra.mxu0 0
      %1177 = vmatprep.subr.bf16.mxu0 0
      %1178 = vmatpush2.bf16.msra.mxu0 0
      %1179 = vmatprep.mubr.bf16.mxu0 0
      %1180 = vmatmul.mubr.bf16.gmra.mxu0 %v1145
      %v1181 = vpop.f32.mrf.mxu0
      %v1182 = vadd.f32 0.0, %v1181
      %v1183 = vpop.f32.mrf.mxu0
      %v1184 = vpop.f32.mrf.mxu0
      %v1185 = vpop.f32.mrf.mxu0
      %1186 = vdwg.mxu0
      %v1187 = vadd.f32 %v858, %v937
      %v1188 = vadd.f32 %v859, %v986
      %v1189 = vadd.f32 %v860, %v1035
      %v1190 = vadd.f32 %v861, %v1084
      %v1191 = vadd.f32 %v862, %v1133
      %v1192 = vadd.f32 %v863, %v1182
      %s1193 = scalar_lea.vmem %s231, 16
      %v1194 = vld [vmem:[%s1193] sm:$0x7]
      %v1195 = vld [vmem:[%s1193 + $0x8] sm:$0x7]
      %v1196 = vld [vmem:[%s1193 + $0x10] sm:$0x7]
      %v1197 = vld [vmem:[%s1193 + $0x18] sm:$0x7]
      %v1198 = vld [vmem:[%s1193 + $0x20] sm:$0x7]
      %v1199 = vld [vmem:[%s1193 + $0x28] sm:$0x7]
      %s1200 = scalar_lea.vmem %s238, 48
      %v1201 = vld [vmem:[%s1200] sm:$0xf]
      %v1202 = vld [vmem:[%s1200 + $0x4] sm:$0xf]
      %v1203 = vld [vmem:[%s1200 + $0x8] sm:$0xf]
      %v1204 = vld [vmem:[%s1200 + $0xc] sm:$0xf]
      %v1209 = vunpack.c.l.b16 %v1201
      %v1210 = vunpack.c.l.b16 %v1202
      %v1211 = vunpack.c.l.b16 %v1203
      %v1212 = vunpack.c.l.b16 %v1204
      %v1213 = vpack.c.b16 %v1210, %v1209
      %v1214 = vpack.c.b16 %v1212, %v1211
      %v1218 = vsel %vm288, %v1194, 0
      %1220 = vmatprep.subr.bf16.mxu0 0
      %1221 = vmatpush1.bf16.msra.mxu0 0
      %1222 = vmatprep.subr.bf16.mxu0 0
      %1223 = vmatpush1.bf16.msra.mxu0 0
      %1224 = vmatprep.subr.bf16.mxu0 0
      %1225 = vmatpush1.bf16.msra.mxu0 0
      %1226 = vmatprep.subr.bf16.mxu0 0
      %1227 = vmatpush1.bf16.msra.mxu0 0
      %1228 = vmatprep.subr.bf16.mxu0 0
      %1229 = vmatpush1.bf16.msra.mxu0 0
      %1230 = vmatprep.subr.bf16.mxu0 0
      %1231 = vmatpush1.bf16.msra.mxu0 0
      %1232 = vmatprep.subr.bf16.mxu0 0
      %1233 = vmatpush1.bf16.msra.mxu0 %v1214
      %1234 = vmatprep.subr.bf16.mxu0 0
      %1235 = vmatpush1.bf16.msra.mxu0 %v1213
      %1236 = vmatprep.subr.bf16.mxu0 0
      %1237 = vmatpush2.bf16.msra.mxu0 0
      %1238 = vmatprep.subr.bf16.mxu0 0
      %1239 = vmatpush2.bf16.msra.mxu0 0
      %1240 = vmatprep.subr.bf16.mxu0 0
      %1241 = vmatpush2.bf16.msra.mxu0 0
      %1242 = vmatprep.subr.bf16.mxu0 0
      %1243 = vmatpush2.bf16.msra.mxu0 0
      %1244 = vmatprep.subr.bf16.mxu0 0
      %1245 = vmatpush2.bf16.msra.mxu0 0
      %1246 = vmatprep.subr.bf16.mxu0 0
      %1247 = vmatpush2.bf16.msra.mxu0 0
      %1248 = vmatprep.subr.bf16.mxu0 0
      %1249 = vmatpush2.bf16.msra.mxu0 0
      %1250 = vmatprep.subr.bf16.mxu0 0
      %1251 = vmatpush2.bf16.msra.mxu0 0
      %1252 = vmatprep.mubr.bf16.mxu0 0
      %1253 = vmatmul.mubr.bf16.gmra.mxu0 %v1218
      %v1254 = vpop.f32.mrf.mxu0
      %v1255 = vadd.f32 0.0, %v1254
      %v1256 = vpop.f32.mrf.mxu0
      %v1257 = vpop.f32.mrf.mxu0
      %v1258 = vpop.f32.mrf.mxu0
      %1259 = vdwg.mxu0
      %v1261 = vsel %vm288, %v1195, 0
      %1263 = vmatprep.subr.bf16.mxu0 0
      %1264 = vmatpush1.bf16.msra.mxu0 0
      %1265 = vmatprep.subr.bf16.mxu0 0
      %1266 = vmatpush1.bf16.msra.mxu0 0
      %1267 = vmatprep.subr.bf16.mxu0 0
      %1268 = vmatpush1.bf16.msra.mxu0 0
      %1269 = vmatprep.subr.bf16.mxu0 0
      %1270 = vmatpush1.bf16.msra.mxu0 0
      %1271 = vmatprep.subr.bf16.mxu0 0
      %1272 = vmatpush1.bf16.msra.mxu0 0
      %1273 = vmatprep.subr.bf16.mxu0 0
      %1274 = vmatpush1.bf16.msra.mxu0 0
      %1275 = vmatprep.subr.bf16.mxu0 0
      %1276 = vmatpush1.bf16.msra.mxu0 %v1214
      %1277 = vmatprep.subr.bf16.mxu0 0
      %1278 = vmatpush1.bf16.msra.mxu0 %v1213
      %1279 = vmatprep.subr.bf16.mxu0 0
      %1280 = vmatpush2.bf16.msra.mxu0 0
      %1281 = vmatprep.subr.bf16.mxu0 0
      %1282 = vmatpush2.bf16.msra.mxu0 0
      %1283 = vmatprep.subr.bf16.mxu0 0
      %1284 = vmatpush2.bf16.msra.mxu0 0
      %1285 = vmatprep.subr.bf16.mxu0 0
      %1286 = vmatpush2.bf16.msra.mxu0 0
      %1287 = vmatprep.subr.bf16.mxu0 0
      %1288 = vmatpush2.bf16.msra.mxu0 0
      %1289 = vmatprep.subr.bf16.mxu0 0
      %1290 = vmatpush2.bf16.msra.mxu0 0
      %1291 = vmatprep.subr.bf16.mxu0 0
      %1292 = vmatpush2.bf16.msra.mxu0 0
      %1293 = vmatprep.subr.bf16.mxu0 0
      %1294 = vmatpush2.bf16.msra.mxu0 0
      %1295 = vmatprep.mubr.bf16.mxu0 0
      %1296 = vmatmul.mubr.bf16.gmra.mxu0 %v1261
      %v1297 = vpop.f32.mrf.mxu0
      %v1298 = vadd.f32 0.0, %v1297
      %v1299 = vpop.f32.mrf.mxu0
      %v1300 = vpop.f32.mrf.mxu0
      %v1301 = vpop.f32.mrf.mxu0
      %1302 = vdwg.mxu0
      %v1304 = vsel %vm288, %v1196, 0
      %1306 = vmatprep.subr.bf16.mxu0 0
      %1307 = vmatpush1.bf16.msra.mxu0 0
      %1308 = vmatprep.subr.bf16.mxu0 0
      %1309 = vmatpush1.bf16.msra.mxu0 0
      %1310 = vmatprep.subr.bf16.mxu0 0
      %1311 = vmatpush1.bf16.msra.mxu0 0
      %1312 = vmatprep.subr.bf16.mxu0 0
      %1313 = vmatpush1.bf16.msra.mxu0 0
      %1314 = vmatprep.subr.bf16.mxu0 0
      %1315 = vmatpush1.bf16.msra.mxu0 0
      %1316 = vmatprep.subr.bf16.mxu0 0
      %1317 = vmatpush1.bf16.msra.mxu0 0
      %1318 = vmatprep.subr.bf16.mxu0 0
      %1319 = vmatpush1.bf16.msra.mxu0 %v1214
      %1320 = vmatprep.subr.bf16.mxu0 0
      %1321 = vmatpush1.bf16.msra.mxu0 %v1213
      %1322 = vmatprep.subr.bf16.mxu0 0
      %1323 = vmatpush2.bf16.msra.mxu0 0
      %1324 = vmatprep.subr.bf16.mxu0 0
      %1325 = vmatpush2.bf16.msra.mxu0 0
      %1326 = vmatprep.subr.bf16.mxu0 0
      %1327 = vmatpush2.bf16.msra.mxu0 0
      %1328 = vmatprep.subr.bf16.mxu0 0
      %1329 = vmatpush2.bf16.msra.mxu0 0
      %1330 = vmatprep.subr.bf16.mxu0 0
      %1331 = vmatpush2.bf16.msra.mxu0 0
      %1332 = vmatprep.subr.bf16.mxu0 0
      %1333 = vmatpush2.bf16.msra.mxu0 0
      %1334 = vmatprep.subr.bf16.mxu0 0
      %1335 = vmatpush2.bf16.msra.mxu0 0
      %1336 = vmatprep.subr.bf16.mxu0 0
      %1337 = vmatpush2.bf16.msra.mxu0 0
      %1338 = vmatprep.mubr.bf16.mxu0 0
      %1339 = vmatmul.mubr.bf16.gmra.mxu0 %v1304
      %v1340 = vpop.f32.mrf.mxu0
      %v1341 = vadd.f32 0.0, %v1340
      %v1342 = vpop.f32.mrf.mxu0
      %v1343 = vpop.f32.mrf.mxu0
      %v1344 = vpop.f32.mrf.mxu0
      %1345 = vdwg.mxu0
      %v1347 = vsel %vm288, %v1197, 0
      %1349 = vmatprep.subr.bf16.mxu0 0
      %1350 = vmatpush1.bf16.msra.mxu0 0
      %1351 = vmatprep.subr.bf16.mxu0 0
      %1352 = vmatpush1.bf16.msra.mxu0 0
      %1353 = vmatprep.subr.bf16.mxu0 0
      %1354 = vmatpush1.bf16.msra.mxu0 0
      %1355 = vmatprep.subr.bf16.mxu0 0
      %1356 = vmatpush1.bf16.msra.mxu0 0
      %1357 = vmatprep.subr.bf16.mxu0 0
      %1358 = vmatpush1.bf16.msra.mxu0 0
      %1359 = vmatprep.subr.bf16.mxu0 0
      %1360 = vmatpush1.bf16.msra.mxu0 0
      %1361 = vmatprep.subr.bf16.mxu0 0
      %1362 = vmatpush1.bf16.msra.mxu0 %v1214
      %1363 = vmatprep.subr.bf16.mxu0 0
      %1364 = vmatpush1.bf16.msra.mxu0 %v1213
      %1365 = vmatprep.subr.bf16.mxu0 0
      %1366 = vmatpush2.bf16.msra.mxu0 0
      %1367 = vmatprep.subr.bf16.mxu0 0
      %1368 = vmatpush2.bf16.msra.mxu0 0
      %1369 = vmatprep.subr.bf16.mxu0 0
      %1370 = vmatpush2.bf16.msra.mxu0 0
      %1371 = vmatprep.subr.bf16.mxu0 0
      %1372 = vmatpush2.bf16.msra.mxu0 0
      %1373 = vmatprep.subr.bf16.mxu0 0
      %1374 = vmatpush2.bf16.msra.mxu0 0
      %1375 = vmatprep.subr.bf16.mxu0 0
      %1376 = vmatpush2.bf16.msra.mxu0 0
      %1377 = vmatprep.subr.bf16.mxu0 0
      %1378 = vmatpush2.bf16.msra.mxu0 0
      %1379 = vmatprep.subr.bf16.mxu0 0
      %1380 = vmatpush2.bf16.msra.mxu0 0
      %1381 = vmatprep.mubr.bf16.mxu0 0
      %1382 = vmatmul.mubr.bf16.gmra.mxu0 %v1347
      %v1383 = vpop.f32.mrf.mxu0
      %v1384 = vadd.f32 0.0, %v1383
      %v1385 = vpop.f32.mrf.mxu0
      %v1386 = vpop.f32.mrf.mxu0
      %v1387 = vpop.f32.mrf.mxu0
      %1388 = vdwg.mxu0
      %v1390 = vsel %vm288, %v1198, 0
      %1392 = vmatprep.subr.bf16.mxu0 0
      %1393 = vmatpush1.bf16.msra.mxu0 0
      %1394 = vmatprep.subr.bf16.mxu0 0
      %1395 = vmatpush1.bf16.msra.mxu0 0
      %1396 = vmatprep.subr.bf16.mxu0 0
      %1397 = vmatpush1.bf16.msra.mxu0 0
      %1398 = vmatprep.subr.bf16.mxu0 0
      %1399 = vmatpush1.bf16.msra.mxu0 0
      %1400 = vmatprep.subr.bf16.mxu0 0
      %1401 = vmatpush1.bf16.msra.mxu0 0
      %1402 = vmatprep.subr.bf16.mxu0 0
      %1403 = vmatpush1.bf16.msra.mxu0 0
      %1404 = vmatprep.subr.bf16.mxu0 0
      %1405 = vmatpush1.bf16.msra.mxu0 %v1214
      %1406 = vmatprep.subr.bf16.mxu0 0
      %1407 = vmatpush1.bf16.msra.mxu0 %v1213
      %1408 = vmatprep.subr.bf16.mxu0 0
      %1409 = vmatpush2.bf16.msra.mxu0 0
      %1410 = vmatprep.subr.bf16.mxu0 0
      %1411 = vmatpush2.bf16.msra.mxu0 0
      %1412 = vmatprep.subr.bf16.mxu0 0
      %1413 = vmatpush2.bf16.msra.mxu0 0
      %1414 = vmatprep.subr.bf16.mxu0 0
      %1415 = vmatpush2.bf16.msra.mxu0 0
      %1416 = vmatprep.subr.bf16.mxu0 0
      %1417 = vmatpush2.bf16.msra.mxu0 0
      %1418 = vmatprep.subr.bf16.mxu0 0
      %1419 = vmatpush2.bf16.msra.mxu0 0
      %1420 = vmatprep.subr.bf16.mxu0 0
      %1421 = vmatpush2.bf16.msra.mxu0 0
      %1422 = vmatprep.subr.bf16.mxu0 0
      %1423 = vmatpush2.bf16.msra.mxu0 0
      %1424 = vmatprep.mubr.bf16.mxu0 0
      %1425 = vmatmul.mubr.bf16.gmra.mxu0 %v1390
      %v1426 = vpop.f32.mrf.mxu0
      %v1427 = vadd.f32 0.0, %v1426
      %v1428 = vpop.f32.mrf.mxu0
      %v1429 = vpop.f32.mrf.mxu0
      %v1430 = vpop.f32.mrf.mxu0
      %1431 = vdwg.mxu0
      %v1433 = vsel %vm288, %v1199, 0
      %1435 = vmatprep.subr.bf16.mxu0 0
      %1436 = vmatpush1.bf16.msra.mxu0 0
      %1437 = vmatprep.subr.bf16.mxu0 0
      %1438 = vmatpush1.bf16.msra.mxu0 0
      %1439 = vmatprep.subr.bf16.mxu0 0
      %1440 = vmatpush1.bf16.msra.mxu0 0
      %1441 = vmatprep.subr.bf16.mxu0 0
      %1442 = vmatpush1.bf16.msra.mxu0 0
      %1443 = vmatprep.subr.bf16.mxu0 0
      %1444 = vmatpush1.bf16.msra.mxu0 0
      %1445 = vmatprep.subr.bf16.mxu0 0
      %1446 = vmatpush1.bf16.msra.mxu0 0
      %1447 = vmatprep.subr.bf16.mxu0 0
      %1448 = vmatpush1.bf16.msra.mxu0 %v1214
      %1449 = vmatprep.subr.bf16.mxu0 0
      %1450 = vmatpush1.bf16.msra.mxu0 %v1213
      %1451 = vmatprep.subr.bf16.mxu0 0
      %1452 = vmatpush2.bf16.msra.mxu0 0
      %1453 = vmatprep.subr.bf16.mxu0 0
      %1454 = vmatpush2.bf16.msra.mxu0 0
      %1455 = vmatprep.subr.bf16.mxu0 0
      %1456 = vmatpush2.bf16.msra.mxu0 0
      %1457 = vmatprep.subr.bf16.mxu0 0
      %1458 = vmatpush2.bf16.msra.mxu0 0
      %1459 = vmatprep.subr.bf16.mxu0 0
      %1460 = vmatpush2.bf16.msra.mxu0 0
      %1461 = vmatprep.subr.bf16.mxu0 0
      %1462 = vmatpush2.bf16.msra.mxu0 0
      %1463 = vmatprep.subr.bf16.mxu0 0
      %1464 = vmatpush2.bf16.msra.mxu0 0
      %1465 = vmatprep.subr.bf16.mxu0 0
      %1466 = vmatpush2.bf16.msra.mxu0 0
      %1467 = vmatprep.mubr.bf16.mxu0 0
      %1468 = vmatmul.mubr.bf16.gmra.mxu0 %v1433
      %v1469 = vpop.f32.mrf.mxu0
      %v1470 = vadd.f32 0.0, %v1469
      %v1471 = vpop.f32.mrf.mxu0
      %v1472 = vpop.f32.mrf.mxu0
      %v1473 = vpop.f32.mrf.mxu0
      %1474 = vdwg.mxu0
      %v1475 = vadd.f32 %v1187, %v1255
      %v1476 = vadd.f32 %v1188, %v1298
      %v1477 = vadd.f32 %v1189, %v1341
      %v1478 = vadd.f32 %v1190, %v1384
      %v1479 = vadd.f32 %v1191, %v1427
      %v1480 = vadd.f32 %v1192, %v1470
      %v1481 = vld [vmem:[%s1193] sm:$0xe]
      %v1482 = vld [vmem:[%s1193 + $0x8] sm:$0xe]
      %v1483 = vld [vmem:[%s1193 + $0x10] sm:$0xe]
      %v1484 = vld [vmem:[%s1193 + $0x18] sm:$0xe]
      %v1485 = vld [vmem:[%s1193 + $0x20] sm:$0xe]
      %v1486 = vld [vmem:[%s1193 + $0x28] sm:$0xe]
      %s1487 = scalar_lea.vmem %s238, 64
      %v1488 = vld [vmem:[%s1487] sm:$0xf]
      %v1489 = vld [vmem:[%s1487 + $0x4] sm:$0xf]
      %v1490 = vld [vmem:[%s1487 + $0x8] sm:$0xf]
      %v1491 = vld [vmem:[%s1487 + $0xc] sm:$0xf]
      %v1493 = vunpack.c.l.b16 %v1481
      %v1494 = vpack.c.b16 %v1493, %v1493
      %v1495 = vrot.slane %v1494, 1
      %v1500 = vunpack.c.l.b16 %v1488
      %v1501 = vunpack.c.l.b16 %v1489
      %v1502 = vunpack.c.l.b16 %v1490
      %v1503 = vunpack.c.l.b16 %v1491
      %v1504 = vpack.c.b16 %v1501, %v1500
      %v1505 = vpack.c.b16 %v1503, %v1502
      %v1509 = vsel %vm288, %v1495, 0
      %1511 = vmatprep.subr.bf16.mxu0 0
      %1512 = vmatpush1.bf16.msra.mxu0 0
      %1513 = vmatprep.subr.bf16.mxu0 0
      %1514 = vmatpush1.bf16.msra.mxu0 0
      %1515 = vmatprep.subr.bf16.mxu0 0
      %1516 = vmatpush1.bf16.msra.mxu0 0
      %1517 = vmatprep.subr.bf16.mxu0 0
      %1518 = vmatpush1.bf16.msra.mxu0 0
      %1519 = vmatprep.subr.bf16.mxu0 0
      %1520 = vmatpush1.bf16.msra.mxu0 0
      %1521 = vmatprep.subr.bf16.mxu0 0
      %1522 = vmatpush1.bf16.msra.mxu0 0
      %1523 = vmatprep.subr.bf16.mxu0 0
      %1524 = vmatpush1.bf16.msra.mxu0 %v1505
      %1525 = vmatprep.subr.bf16.mxu0 0
      %1526 = vmatpush1.bf16.msra.mxu0 %v1504
      %1527 = vmatprep.subr.bf16.mxu0 0
      %1528 = vmatpush2.bf16.msra.mxu0 0
      %1529 = vmatprep.subr.bf16.mxu0 0
      %1530 = vmatpush2.bf16.msra.mxu0 0
      %1531 = vmatprep.subr.bf16.mxu0 0
      %1532 = vmatpush2.bf16.msra.mxu0 0
      %1533 = vmatprep.subr.bf16.mxu0 0
      %1534 = vmatpush2.bf16.msra.mxu0 0
      %1535 = vmatprep.subr.bf16.mxu0 0
      %1536 = vmatpush2.bf16.msra.mxu0 0
      %1537 = vmatprep.subr.bf16.mxu0 0
      %1538 = vmatpush2.bf16.msra.mxu0 0
      %1539 = vmatprep.subr.bf16.mxu0 0
      %1540 = vmatpush2.bf16.msra.mxu0 0
      %1541 = vmatprep.subr.bf16.mxu0 0
      %1542 = vmatpush2.bf16.msra.mxu0 0
      %1543 = vmatprep.mubr.bf16.mxu0 0
      %1544 = vmatmul.mubr.bf16.gmra.mxu0 %v1509
      %v1545 = vpop.f32.mrf.mxu0
      %v1546 = vadd.f32 0.0, %v1545
      %v1547 = vpop.f32.mrf.mxu0
      %v1548 = vpop.f32.mrf.mxu0
      %v1549 = vpop.f32.mrf.mxu0
      %1550 = vdwg.mxu0
      %v1552 = vunpack.c.l.b16 %v1482
      %v1553 = vpack.c.b16 %v1552, %v1552
      %v1554 = vrot.slane %v1553, 1
      %v1556 = vsel %vm288, %v1554, 0
      %1558 = vmatprep.subr.bf16.mxu0 0
      %1559 = vmatpush1.bf16.msra.mxu0 0
      %1560 = vmatprep.subr.bf16.mxu0 0
      %1561 = vmatpush1.bf16.msra.mxu0 0
      %1562 = vmatprep.subr.bf16.mxu0 0
      %1563 = vmatpush1.bf16.msra.mxu0 0
      %1564 = vmatprep.subr.bf16.mxu0 0
      %1565 = vmatpush1.bf16.msra.mxu0 0
      %1566 = vmatprep.subr.bf16.mxu0 0
      %1567 = vmatpush1.bf16.msra.mxu0 0
      %1568 = vmatprep.subr.bf16.mxu0 0
      %1569 = vmatpush1.bf16.msra.mxu0 0
      %1570 = vmatprep.subr.bf16.mxu0 0
      %1571 = vmatpush1.bf16.msra.mxu0 %v1505
      %1572 = vmatprep.subr.bf16.mxu0 0
      %1573 = vmatpush1.bf16.msra.mxu0 %v1504
      %1574 = vmatprep.subr.bf16.mxu0 0
      %1575 = vmatpush2.bf16.msra.mxu0 0
      %1576 = vmatprep.subr.bf16.mxu0 0
      %1577 = vmatpush2.bf16.msra.mxu0 0
      %1578 = vmatprep.subr.bf16.mxu0 0
      %1579 = vmatpush2.bf16.msra.mxu0 0
      %1580 = vmatprep.subr.bf16.mxu0 0
      %1581 = vmatpush2.bf16.msra.mxu0 0
      %1582 = vmatprep.subr.bf16.mxu0 0
      %1583 = vmatpush2.bf16.msra.mxu0 0
      %1584 = vmatprep.subr.bf16.mxu0 0
      %1585 = vmatpush2.bf16.msra.mxu0 0
      %1586 = vmatprep.subr.bf16.mxu0 0
      %1587 = vmatpush2.bf16.msra.mxu0 0
      %1588 = vmatprep.subr.bf16.mxu0 0
      %1589 = vmatpush2.bf16.msra.mxu0 0
      %1590 = vmatprep.mubr.bf16.mxu0 0
      %1591 = vmatmul.mubr.bf16.gmra.mxu0 %v1556
      %v1592 = vpop.f32.mrf.mxu0
      %v1593 = vadd.f32 0.0, %v1592
      %v1594 = vpop.f32.mrf.mxu0
      %v1595 = vpop.f32.mrf.mxu0
      %v1596 = vpop.f32.mrf.mxu0
      %1597 = vdwg.mxu0
      %v1599 = vunpack.c.l.b16 %v1483
      %v1600 = vpack.c.b16 %v1599, %v1599
      %v1601 = vrot.slane %v1600, 1
      %v1603 = vsel %vm288, %v1601, 0
      %1605 = vmatprep.subr.bf16.mxu0 0
      %1606 = vmatpush1.bf16.msra.mxu0 0
      %1607 = vmatprep.subr.bf16.mxu0 0
      %1608 = vmatpush1.bf16.msra.mxu0 0
      %1609 = vmatprep.subr.bf16.mxu0 0
      %1610 = vmatpush1.bf16.msra.mxu0 0
      %1611 = vmatprep.subr.bf16.mxu0 0
      %1612 = vmatpush1.bf16.msra.mxu0 0
      %1613 = vmatprep.subr.bf16.mxu0 0
      %1614 = vmatpush1.bf16.msra.mxu0 0
      %1615 = vmatprep.subr.bf16.mxu0 0
      %1616 = vmatpush1.bf16.msra.mxu0 0
      %1617 = vmatprep.subr.bf16.mxu0 0
      %1618 = vmatpush1.bf16.msra.mxu0 %v1505
      %1619 = vmatprep.subr.bf16.mxu0 0
      %1620 = vmatpush1.bf16.msra.mxu0 %v1504
      %1621 = vmatprep.subr.bf16.mxu0 0
      %1622 = vmatpush2.bf16.msra.mxu0 0
      %1623 = vmatprep.subr.bf16.mxu0 0
      %1624 = vmatpush2.bf16.msra.mxu0 0
      %1625 = vmatprep.subr.bf16.mxu0 0
      %1626 = vmatpush2.bf16.msra.mxu0 0
      %1627 = vmatprep.subr.bf16.mxu0 0
      %1628 = vmatpush2.bf16.msra.mxu0 0
      %1629 = vmatprep.subr.bf16.mxu0 0
      %1630 = vmatpush2.bf16.msra.mxu0 0
      %1631 = vmatprep.subr.bf16.mxu0 0
      %1632 = vmatpush2.bf16.msra.mxu0 0
      %1633 = vmatprep.subr.bf16.mxu0 0
      %1634 = vmatpush2.bf16.msra.mxu0 0
      %1635 = vmatprep.subr.bf16.mxu0 0
      %1636 = vmatpush2.bf16.msra.mxu0 0
      %1637 = vmatprep.mubr.bf16.mxu0 0
      %1638 = vmatmul.mubr.bf16.gmra.mxu0 %v1603
      %v1639 = vpop.f32.mrf.mxu0
      %v1640 = vadd.f32 0.0, %v1639
      %v1641 = vpop.f32.mrf.mxu0
      %v1642 = vpop.f32.mrf.mxu0
      %v1643 = vpop.f32.mrf.mxu0
      %1644 = vdwg.mxu0
      %v1646 = vunpack.c.l.b16 %v1484
      %v1647 = vpack.c.b16 %v1646, %v1646
      %v1648 = vrot.slane %v1647, 1
      %v1650 = vsel %vm288, %v1648, 0
      %1652 = vmatprep.subr.bf16.mxu0 0
      %1653 = vmatpush1.bf16.msra.mxu0 0
      %1654 = vmatprep.subr.bf16.mxu0 0
      %1655 = vmatpush1.bf16.msra.mxu0 0
      %1656 = vmatprep.subr.bf16.mxu0 0
      %1657 = vmatpush1.bf16.msra.mxu0 0
      %1658 = vmatprep.subr.bf16.mxu0 0
      %1659 = vmatpush1.bf16.msra.mxu0 0
      %1660 = vmatprep.subr.bf16.mxu0 0
      %1661 = vmatpush1.bf16.msra.mxu0 0
      %1662 = vmatprep.subr.bf16.mxu0 0
      %1663 = vmatpush1.bf16.msra.mxu0 0
      %1664 = vmatprep.subr.bf16.mxu0 0
      %1665 = vmatpush1.bf16.msra.mxu0 %v1505
      %1666 = vmatprep.subr.bf16.mxu0 0
      %1667 = vmatpush1.bf16.msra.mxu0 %v1504
      %1668 = vmatprep.subr.bf16.mxu0 0
      %1669 = vmatpush2.bf16.msra.mxu0 0
      %1670 = vmatprep.subr.bf16.mxu0 0
      %1671 = vmatpush2.bf16.msra.mxu0 0
      %1672 = vmatprep.subr.bf16.mxu0 0
      %1673 = vmatpush2.bf16.msra.mxu0 0
      %1674 = vmatprep.subr.bf16.mxu0 0
      %1675 = vmatpush2.bf16.msra.mxu0 0
      %1676 = vmatprep.subr.bf16.mxu0 0
      %1677 = vmatpush2.bf16.msra.mxu0 0
      %1678 = vmatprep.subr.bf16.mxu0 0
      %1679 = vmatpush2.bf16.msra.mxu0 0
      %1680 = vmatprep.subr.bf16.mxu0 0
      %1681 = vmatpush2.bf16.msra.mxu0 0
      %1682 = vmatprep.subr.bf16.mxu0 0
      %1683 = vmatpush2.bf16.msra.mxu0 0
      %1684 = vmatprep.mubr.bf16.mxu0 0
      %1685 = vmatmul.mubr.bf16.gmra.mxu0 %v1650
      %v1686 = vpop.f32.mrf.mxu0
      %v1687 = vadd.f32 0.0, %v1686
      %v1688 = vpop.f32.mrf.mxu0
      %v1689 = vpop.f32.mrf.mxu0
      %v1690 = vpop.f32.mrf.mxu0
      %1691 = vdwg.mxu0
      %v1693 = vunpack.c.l.b16 %v1485
      %v1694 = vpack.c.b16 %v1693, %v1693
      %v1695 = vrot.slane %v1694, 1
      %v1697 = vsel %vm288, %v1695, 0
      %1699 = vmatprep.subr.bf16.mxu0 0
      %1700 = vmatpush1.bf16.msra.mxu0 0
      %1701 = vmatprep.subr.bf16.mxu0 0
      %1702 = vmatpush1.bf16.msra.mxu0 0
      %1703 = vmatprep.subr.bf16.mxu0 0
      %1704 = vmatpush1.bf16.msra.mxu0 0
      %1705 = vmatprep.subr.bf16.mxu0 0
      %1706 = vmatpush1.bf16.msra.mxu0 0
      %1707 = vmatprep.subr.bf16.mxu0 0
      %1708 = vmatpush1.bf16.msra.mxu0 0
      %1709 = vmatprep.subr.bf16.mxu0 0
      %1710 = vmatpush1.bf16.msra.mxu0 0
      %1711 = vmatprep.subr.bf16.mxu0 0
      %1712 = vmatpush1.bf16.msra.mxu0 %v1505
      %1713 = vmatprep.subr.bf16.mxu0 0
      %1714 = vmatpush1.bf16.msra.mxu0 %v1504
      %1715 = vmatprep.subr.bf16.mxu0 0
      %1716 = vmatpush2.bf16.msra.mxu0 0
      %1717 = vmatprep.subr.bf16.mxu0 0
      %1718 = vmatpush2.bf16.msra.mxu0 0
      %1719 = vmatprep.subr.bf16.mxu0 0
      %1720 = vmatpush2.bf16.msra.mxu0 0
      %1721 = vmatprep.subr.bf16.mxu0 0
      %1722 = vmatpush2.bf16.msra.mxu0 0
      %1723 = vmatprep.subr.bf16.mxu0 0
      %1724 = vmatpush2.bf16.msra.mxu0 0
      %1725 = vmatprep.subr.bf16.mxu0 0
      %1726 = vmatpush2.bf16.msra.mxu0 0
      %1727 = vmatprep.subr.bf16.mxu0 0
      %1728 = vmatpush2.bf16.msra.mxu0 0
      %1729 = vmatprep.subr.bf16.mxu0 0
      %1730 = vmatpush2.bf16.msra.mxu0 0
      %1731 = vmatprep.mubr.bf16.mxu0 0
      %1732 = vmatmul.mubr.bf16.gmra.mxu0 %v1697
      %v1733 = vpop.f32.mrf.mxu0
      %v1734 = vadd.f32 0.0, %v1733
      %v1735 = vpop.f32.mrf.mxu0
      %v1736 = vpop.f32.mrf.mxu0
      %v1737 = vpop.f32.mrf.mxu0
      %1738 = vdwg.mxu0
      %v1740 = vunpack.c.l.b16 %v1486
      %v1741 = vpack.c.b16 %v1740, %v1740
      %v1742 = vrot.slane %v1741, 1
      %v1744 = vsel %vm288, %v1742, 0
      %1746 = vmatprep.subr.bf16.mxu0 0
      %1747 = vmatpush1.bf16.msra.mxu0 0
      %1748 = vmatprep.subr.bf16.mxu0 0
      %1749 = vmatpush1.bf16.msra.mxu0 0
      %1750 = vmatprep.subr.bf16.mxu0 0
      %1751 = vmatpush1.bf16.msra.mxu0 0
      %1752 = vmatprep.subr.bf16.mxu0 0
      %1753 = vmatpush1.bf16.msra.mxu0 0
      %1754 = vmatprep.subr.bf16.mxu0 0
      %1755 = vmatpush1.bf16.msra.mxu0 0
      %1756 = vmatprep.subr.bf16.mxu0 0
      %1757 = vmatpush1.bf16.msra.mxu0 0
      %1758 = vmatprep.subr.bf16.mxu0 0
      %1759 = vmatpush1.bf16.msra.mxu0 %v1505
      %1760 = vmatprep.subr.bf16.mxu0 0
      %1761 = vmatpush1.bf16.msra.mxu0 %v1504
      %1762 = vmatprep.subr.bf16.mxu0 0
      %1763 = vmatpush2.bf16.msra.mxu0 0
      %1764 = vmatprep.subr.bf16.mxu0 0
      %1765 = vmatpush2.bf16.msra.mxu0 0
      %1766 = vmatprep.subr.bf16.mxu0 0
      %1767 = vmatpush2.bf16.msra.mxu0 0
      %1768 = vmatprep.subr.bf16.mxu0 0
      %1769 = vmatpush2.bf16.msra.mxu0 0
      %1770 = vmatprep.subr.bf16.mxu0 0
      %1771 = vmatpush2.bf16.msra.mxu0 0
      %1772 = vmatprep.subr.bf16.mxu0 0
      %1773 = vmatpush2.bf16.msra.mxu0 0
      %1774 = vmatprep.subr.bf16.mxu0 0
      %1775 = vmatpush2.bf16.msra.mxu0 0
      %1776 = vmatprep.subr.bf16.mxu0 0
      %1777 = vmatpush2.bf16.msra.mxu0 0
      %1778 = vmatprep.mubr.bf16.mxu0 0
      %1779 = vmatmul.mubr.bf16.gmra.mxu0 %v1744
      %v1780 = vpop.f32.mrf.mxu0
      %v1781 = vadd.f32 0.0, %v1780
      %v1782 = vpop.f32.mrf.mxu0
      %v1783 = vpop.f32.mrf.mxu0
      %v1784 = vpop.f32.mrf.mxu0
      %1785 = vdwg.mxu0
      %v1786 = vadd.f32 %v1475, %v1546
      %v1787 = vadd.f32 %v1476, %v1593
      %v1788 = vadd.f32 %v1477, %v1640
      %v1789 = vadd.f32 %v1478, %v1687
      %v1790 = vadd.f32 %v1479, %v1734
      %v1791 = vadd.f32 %v1480, %v1781
      %v1792 = vld [vmem:[%s1193] sm:$0xc]
      %v1793 = vld [vmem:[%s1193 + $0x4] sm:$0x1]
      %v1794 = vld [vmem:[%s1193 + $0x8] sm:$0xc]
      %v1795 = vld [vmem:[%s1193 + $0xc] sm:$0x1]
      %v1796 = vld [vmem:[%s1193 + $0x10] sm:$0xc]
      %v1797 = vld [vmem:[%s1193 + $0x14] sm:$0x1]
      %v1798 = vld [vmem:[%s1193 + $0x18] sm:$0xc]
      %v1799 = vld [vmem:[%s1193 + $0x1c] sm:$0x1]
      %v1800 = vld [vmem:[%s1193 + $0x20] sm:$0xc]
      %v1801 = vld [vmem:[%s1193 + $0x24] sm:$0x1]
      %v1802 = vld [vmem:[%s1193 + $0x28] sm:$0xc]
      %v1803 = vld [vmem:[%s1193 + $0x2c] sm:$0x1]
      %s1804 = scalar_lea.vmem %s238, 80
      %v1805 = vld [vmem:[%s1804] sm:$0xf]
      %v1806 = vld [vmem:[%s1804 + $0x4] sm:$0xf]
      %v1807 = vld [vmem:[%s1804 + $0x8] sm:$0xf]
      %v1808 = vld [vmem:[%s1804 + $0xc] sm:$0xf]
      %v1811 = vunpack.c.l.b16 %v1792
      %v1812 = vunpack.c.l.b16 %v1793
      %v1813 = vpack.c.b16 %v1812, %v1811
      %v1814 = vrot.slane %v1813, 2
      %v1819 = vunpack.c.l.b16 %v1805
      %v1820 = vunpack.c.l.b16 %v1806
      %v1821 = vunpack.c.l.b16 %v1807
      %v1822 = vunpack.c.l.b16 %v1808
      %v1823 = vpack.c.b16 %v1820, %v1819
      %v1824 = vpack.c.b16 %v1822, %v1821
      %v1828 = vsel %vm288, %v1814, 0
      %1830 = vmatprep.subr.bf16.mxu0 0
      %1831 = vmatpush1.bf16.msra.mxu0 0
      %1832 = vmatprep.subr.bf16.mxu0 0
      %1833 = vmatpush1.bf16.msra.mxu0 0
      %1834 = vmatprep.subr.bf16.mxu0 0
      %1835 = vmatpush1.bf16.msra.mxu0 0
      %1836 = vmatprep.subr.bf16.mxu0 0
      %1837 = vmatpush1.bf16.msra.mxu0 0
      %1838 = vmatprep.subr.bf16.mxu0 0
      %1839 = vmatpush1.bf16.msra.mxu0 0
      %1840 = vmatprep.subr.bf16.mxu0 0
      %1841 = vmatpush1.bf16.msra.mxu0 0
      %1842 = vmatprep.subr.bf16.mxu0 0
      %1843 = vmatpush1.bf16.msra.mxu0 %v1824
      %1844 = vmatprep.subr.bf16.mxu0 0
      %1845 = vmatpush1.bf16.msra.mxu0 %v1823
      %1846 = vmatprep.subr.bf16.mxu0 0
      %1847 = vmatpush2.bf16.msra.mxu0 0
      %1848 = vmatprep.subr.bf16.mxu0 0
      %1849 = vmatpush2.bf16.msra.mxu0 0
      %1850 = vmatprep.subr.bf16.mxu0 0
      %1851 = vmatpush2.bf16.msra.mxu0 0
      %1852 = vmatprep.subr.bf16.mxu0 0
      %1853 = vmatpush2.bf16.msra.mxu0 0
      %1854 = vmatprep.subr.bf16.mxu0 0
      %1855 = vmatpush2.bf16.msra.mxu0 0
      %1856 = vmatprep.subr.bf16.mxu0 0
      %1857 = vmatpush2.bf16.msra.mxu0 0
      %1858 = vmatprep.subr.bf16.mxu0 0
      %1859 = vmatpush2.bf16.msra.mxu0 0
      %1860 = vmatprep.subr.bf16.mxu0 0
      %1861 = vmatpush2.bf16.msra.mxu0 0
      %1862 = vmatprep.mubr.bf16.mxu0 0
      %1863 = vmatmul.mubr.bf16.gmra.mxu0 %v1828
      %v1864 = vpop.f32.mrf.mxu0
      %v1865 = vadd.f32 0.0, %v1864
      %v1866 = vpop.f32.mrf.mxu0
      %v1867 = vpop.f32.mrf.mxu0
      %v1868 = vpop.f32.mrf.mxu0
      %1869 = vdwg.mxu0
      %v1872 = vunpack.c.l.b16 %v1794
      %v1873 = vunpack.c.l.b16 %v1795
      %v1874 = vpack.c.b16 %v1873, %v1872
      %v1875 = vrot.slane %v1874, 2
      %v1877 = vsel %vm288, %v1875, 0
      %1879 = vmatprep.subr.bf16.mxu0 0
      %1880 = vmatpush1.bf16.msra.mxu0 0
      %1881 = vmatprep.subr.bf16.mxu0 0
      %1882 = vmatpush1.bf16.msra.mxu0 0
      %1883 = vmatprep.subr.bf16.mxu0 0
      %1884 = vmatpush1.bf16.msra.mxu0 0
      %1885 = vmatprep.subr.bf16.mxu0 0
      %1886 = vmatpush1.bf16.msra.mxu0 0
      %1887 = vmatprep.subr.bf16.mxu0 0
      %1888 = vmatpush1.bf16.msra.mxu0 0
      %1889 = vmatprep.subr.bf16.mxu0 0
      %1890 = vmatpush1.bf16.msra.mxu0 0
      %1891 = vmatprep.subr.bf16.mxu0 0
      %1892 = vmatpush1.bf16.msra.mxu0 %v1824
      %1893 = vmatprep.subr.bf16.mxu0 0
      %1894 = vmatpush1.bf16.msra.mxu0 %v1823
      %1895 = vmatprep.subr.bf16.mxu0 0
      %1896 = vmatpush2.bf16.msra.mxu0 0
      %1897 = vmatprep.subr.bf16.mxu0 0
      %1898 = vmatpush2.bf16.msra.mxu0 0
      %1899 = vmatprep.subr.bf16.mxu0 0
      %1900 = vmatpush2.bf16.msra.mxu0 0
      %1901 = vmatprep.subr.bf16.mxu0 0
      %1902 = vmatpush2.bf16.msra.mxu0 0
      %1903 = vmatprep.subr.bf16.mxu0 0
      %1904 = vmatpush2.bf16.msra.mxu0 0
      %1905 = vmatprep.subr.bf16.mxu0 0
      %1906 = vmatpush2.bf16.msra.mxu0 0
      %1907 = vmatprep.subr.bf16.mxu0 0
      %1908 = vmatpush2.bf16.msra.mxu0 0
      %1909 = vmatprep.subr.bf16.mxu0 0
      %1910 = vmatpush2.bf16.msra.mxu0 0
      %1911 = vmatprep.mubr.bf16.mxu0 0
      %1912 = vmatmul.mubr.bf16.gmra.mxu0 %v1877
      %v1913 = vpop.f32.mrf.mxu0
      %v1914 = vadd.f32 0.0, %v1913
      %v1915 = vpop.f32.mrf.mxu0
      %v1916 = vpop.f32.mrf.mxu0
      %v1917 = vpop.f32.mrf.mxu0
      %1918 = vdwg.mxu0
      %v1921 = vunpack.c.l.b16 %v1796
      %v1922 = vunpack.c.l.b16 %v1797
      %v1923 = vpack.c.b16 %v1922, %v1921
      %v1924 = vrot.slane %v1923, 2
      %v1926 = vsel %vm288, %v1924, 0
      %1928 = vmatprep.subr.bf16.mxu0 0
      %1929 = vmatpush1.bf16.msra.mxu0 0
      %1930 = vmatprep.subr.bf16.mxu0 0
      %1931 = vmatpush1.bf16.msra.mxu0 0
      %1932 = vmatprep.subr.bf16.mxu0 0
      %1933 = vmatpush1.bf16.msra.mxu0 0
      %1934 = vmatprep.subr.bf16.mxu0 0
      %1935 = vmatpush1.bf16.msra.mxu0 0
      %1936 = vmatprep.subr.bf16.mxu0 0
      %1937 = vmatpush1.bf16.msra.mxu0 0
      %1938 = vmatprep.subr.bf16.mxu0 0
      %1939 = vmatpush1.bf16.msra.mxu0 0
      %1940 = vmatprep.subr.bf16.mxu0 0
      %1941 = vmatpush1.bf16.msra.mxu0 %v1824
      %1942 = vmatprep.subr.bf16.mxu0 0
      %1943 = vmatpush1.bf16.msra.mxu0 %v1823
      %1944 = vmatprep.subr.bf16.mxu0 0
      %1945 = vmatpush2.bf16.msra.mxu0 0
      %1946 = vmatprep.subr.bf16.mxu0 0
      %1947 = vmatpush2.bf16.msra.mxu0 0
      %1948 = vmatprep.subr.bf16.mxu0 0
      %1949 = vmatpush2.bf16.msra.mxu0 0
      %1950 = vmatprep.subr.bf16.mxu0 0
      %1951 = vmatpush2.bf16.msra.mxu0 0
      %1952 = vmatprep.subr.bf16.mxu0 0
      %1953 = vmatpush2.bf16.msra.mxu0 0
      %1954 = vmatprep.subr.bf16.mxu0 0
      %1955 = vmatpush2.bf16.msra.mxu0 0
      %1956 = vmatprep.subr.bf16.mxu0 0
      %1957 = vmatpush2.bf16.msra.mxu0 0
      %1958 = vmatprep.subr.bf16.mxu0 0
      %1959 = vmatpush2.bf16.msra.mxu0 0
      %1960 = vmatprep.mubr.bf16.mxu0 0
      %1961 = vmatmul.mubr.bf16.gmra.mxu0 %v1926
      %v1962 = vpop.f32.mrf.mxu0
      %v1963 = vadd.f32 0.0, %v1962
      %v1964 = vpop.f32.mrf.mxu0
      %v1965 = vpop.f32.mrf.mxu0
      %v1966 = vpop.f32.mrf.mxu0
      %1967 = vdwg.mxu0
      %v1970 = vunpack.c.l.b16 %v1798
      %v1971 = vunpack.c.l.b16 %v1799
      %v1972 = vpack.c.b16 %v1971, %v1970
      %v1973 = vrot.slane %v1972, 2
      %v1975 = vsel %vm288, %v1973, 0
      %1977 = vmatprep.subr.bf16.mxu0 0
      %1978 = vmatpush1.bf16.msra.mxu0 0
      %1979 = vmatprep.subr.bf16.mxu0 0
      %1980 = vmatpush1.bf16.msra.mxu0 0
      %1981 = vmatprep.subr.bf16.mxu0 0
      %1982 = vmatpush1.bf16.msra.mxu0 0
      %1983 = vmatprep.subr.bf16.mxu0 0
      %1984 = vmatpush1.bf16.msra.mxu0 0
      %1985 = vmatprep.subr.bf16.mxu0 0
      %1986 = vmatpush1.bf16.msra.mxu0 0
      %1987 = vmatprep.subr.bf16.mxu0 0
      %1988 = vmatpush1.bf16.msra.mxu0 0
      %1989 = vmatprep.subr.bf16.mxu0 0
      %1990 = vmatpush1.bf16.msra.mxu0 %v1824
      %1991 = vmatprep.subr.bf16.mxu0 0
      %1992 = vmatpush1.bf16.msra.mxu0 %v1823
      %1993 = vmatprep.subr.bf16.mxu0 0
      %1994 = vmatpush2.bf16.msra.mxu0 0
      %1995 = vmatprep.subr.bf16.mxu0 0
      %1996 = vmatpush2.bf16.msra.mxu0 0
      %1997 = vmatprep.subr.bf16.mxu0 0
      %1998 = vmatpush2.bf16.msra.mxu0 0
      %1999 = vmatprep.subr.bf16.mxu0 0
      %2000 = vmatpush2.bf16.msra.mxu0 0
      %2001 = vmatprep.subr.bf16.mxu0 0
      %2002 = vmatpush2.bf16.msra.mxu0 0
      %2003 = vmatprep.subr.bf16.mxu0 0
      %2004 = vmatpush2.bf16.msra.mxu0 0
      %2005 = vmatprep.subr.bf16.mxu0 0
      %2006 = vmatpush2.bf16.msra.mxu0 0
      %2007 = vmatprep.subr.bf16.mxu0 0
      %2008 = vmatpush2.bf16.msra.mxu0 0
      %2009 = vmatprep.mubr.bf16.mxu0 0
      %2010 = vmatmul.mubr.bf16.gmra.mxu0 %v1975
      %v2011 = vpop.f32.mrf.mxu0
      %v2012 = vadd.f32 0.0, %v2011
      %v2013 = vpop.f32.mrf.mxu0
      %v2014 = vpop.f32.mrf.mxu0
      %v2015 = vpop.f32.mrf.mxu0
      %2016 = vdwg.mxu0
      %v2019 = vunpack.c.l.b16 %v1800
      %v2020 = vunpack.c.l.b16 %v1801
      %v2021 = vpack.c.b16 %v2020, %v2019
      %v2022 = vrot.slane %v2021, 2
      %v2024 = vsel %vm288, %v2022, 0
      %2026 = vmatprep.subr.bf16.mxu0 0
      %2027 = vmatpush1.bf16.msra.mxu0 0
      %2028 = vmatprep.subr.bf16.mxu0 0
      %2029 = vmatpush1.bf16.msra.mxu0 0
      %2030 = vmatprep.subr.bf16.mxu0 0
      %2031 = vmatpush1.bf16.msra.mxu0 0
      %2032 = vmatprep.subr.bf16.mxu0 0
      %2033 = vmatpush1.bf16.msra.mxu0 0
      %2034 = vmatprep.subr.bf16.mxu0 0
      %2035 = vmatpush1.bf16.msra.mxu0 0
      %2036 = vmatprep.subr.bf16.mxu0 0
      %2037 = vmatpush1.bf16.msra.mxu0 0
      %2038 = vmatprep.subr.bf16.mxu0 0
      %2039 = vmatpush1.bf16.msra.mxu0 %v1824
      %2040 = vmatprep.subr.bf16.mxu0 0
      %2041 = vmatpush1.bf16.msra.mxu0 %v1823
      %2042 = vmatprep.subr.bf16.mxu0 0
      %2043 = vmatpush2.bf16.msra.mxu0 0
      %2044 = vmatprep.subr.bf16.mxu0 0
      %2045 = vmatpush2.bf16.msra.mxu0 0
      %2046 = vmatprep.subr.bf16.mxu0 0
      %2047 = vmatpush2.bf16.msra.mxu0 0
      %2048 = vmatprep.subr.bf16.mxu0 0
      %2049 = vmatpush2.bf16.msra.mxu0 0
      %2050 = vmatprep.subr.bf16.mxu0 0
      %2051 = vmatpush2.bf16.msra.mxu0 0
      %2052 = vmatprep.subr.bf16.mxu0 0
      %2053 = vmatpush2.bf16.msra.mxu0 0
      %2054 = vmatprep.subr.bf16.mxu0 0
      %2055 = vmatpush2.bf16.msra.mxu0 0
      %2056 = vmatprep.subr.bf16.mxu0 0
      %2057 = vmatpush2.bf16.msra.mxu0 0
      %2058 = vmatprep.mubr.bf16.mxu0 0
      %2059 = vmatmul.mubr.bf16.gmra.mxu0 %v2024
      %v2060 = vpop.f32.mrf.mxu0
      %v2061 = vadd.f32 0.0, %v2060
      %v2062 = vpop.f32.mrf.mxu0
      %v2063 = vpop.f32.mrf.mxu0
      %v2064 = vpop.f32.mrf.mxu0
      %2065 = vdwg.mxu0
      %v2068 = vunpack.c.l.b16 %v1802
      %v2069 = vunpack.c.l.b16 %v1803
      %v2070 = vpack.c.b16 %v2069, %v2068
      %v2071 = vrot.slane %v2070, 2
      %v2073 = vsel %vm288, %v2071, 0
      %2075 = vmatprep.subr.bf16.mxu0 0
      %2076 = vmatpush1.bf16.msra.mxu0 0
      %2077 = vmatprep.subr.bf16.mxu0 0
      %2078 = vmatpush1.bf16.msra.mxu0 0
      %2079 = vmatprep.subr.bf16.mxu0 0
      %2080 = vmatpush1.bf16.msra.mxu0 0
      %2081 = vmatprep.subr.bf16.mxu0 0
      %2082 = vmatpush1.bf16.msra.mxu0 0
      %2083 = vmatprep.subr.bf16.mxu0 0
      %2084 = vmatpush1.bf16.msra.mxu0 0
      %2085 = vmatprep.subr.bf16.mxu0 0
      %2086 = vmatpush1.bf16.msra.mxu0 0
      %2087 = vmatprep.subr.bf16.mxu0 0
      %2088 = vmatpush1.bf16.msra.mxu0 %v1824
      %2089 = vmatprep.subr.bf16.mxu0 0
      %2090 = vmatpush1.bf16.msra.mxu0 %v1823
      %2091 = vmatprep.subr.bf16.mxu0 0
      %2092 = vmatpush2.bf16.msra.mxu0 0
      %2093 = vmatprep.subr.bf16.mxu0 0
      %2094 = vmatpush2.bf16.msra.mxu0 0
      %2095 = vmatprep.subr.bf16.mxu0 0
      %2096 = vmatpush2.bf16.msra.mxu0 0
      %2097 = vmatprep.subr.bf16.mxu0 0
      %2098 = vmatpush2.bf16.msra.mxu0 0
      %2099 = vmatprep.subr.bf16.mxu0 0
      %2100 = vmatpush2.bf16.msra.mxu0 0
      %2101 = vmatprep.subr.bf16.mxu0 0
      %2102 = vmatpush2.bf16.msra.mxu0 0
      %2103 = vmatprep.subr.bf16.mxu0 0
      %2104 = vmatpush2.bf16.msra.mxu0 0
      %2105 = vmatprep.subr.bf16.mxu0 0
      %2106 = vmatpush2.bf16.msra.mxu0 0
      %2107 = vmatprep.mubr.bf16.mxu0 0
      %2108 = vmatmul.mubr.bf16.gmra.mxu0 %v2073
      %v2109 = vpop.f32.mrf.mxu0
      %v2110 = vadd.f32 0.0, %v2109
      %v2111 = vpop.f32.mrf.mxu0
      %v2112 = vpop.f32.mrf.mxu0
      %v2113 = vpop.f32.mrf.mxu0
      %2114 = vdwg.mxu0
      %v2115 = vadd.f32 %v1786, %v1865
      %v2116 = vadd.f32 %v1787, %v1914
      %v2117 = vadd.f32 %v1788, %v1963
      %v2118 = vadd.f32 %v1789, %v2012
      %v2119 = vadd.f32 %v1790, %v2061
      %v2120 = vadd.f32 %v1791, %v2110
      %s2121 = scalar_lea.vmem %s231, 32
      %v2122 = vld [vmem:[%s2121] sm:$0x7]
      %v2123 = vld [vmem:[%s2121 + $0x8] sm:$0x7]
      %v2124 = vld [vmem:[%s2121 + $0x10] sm:$0x7]
      %v2125 = vld [vmem:[%s2121 + $0x18] sm:$0x7]
      %v2126 = vld [vmem:[%s2121 + $0x20] sm:$0x7]
      %v2127 = vld [vmem:[%s2121 + $0x28] sm:$0x7]
      %s2128 = scalar_lea.vmem %s238, 96
      %v2129 = vld [vmem:[%s2128] sm:$0xf]
      %v2130 = vld [vmem:[%s2128 + $0x4] sm:$0xf]
      %v2131 = vld [vmem:[%s2128 + $0x8] sm:$0xf]
      %v2132 = vld [vmem:[%s2128 + $0xc] sm:$0xf]
      %v2137 = vunpack.c.l.b16 %v2129
      %v2138 = vunpack.c.l.b16 %v2130
      %v2139 = vunpack.c.l.b16 %v2131
      %v2140 = vunpack.c.l.b16 %v2132
      %v2141 = vpack.c.b16 %v2138, %v2137
      %v2142 = vpack.c.b16 %v2140, %v2139
      %v2146 = vsel %vm288, %v2122, 0
      %2148 = vmatprep.subr.bf16.mxu0 0
      %2149 = vmatpush1.bf16.msra.mxu0 0
      %2150 = vmatprep.subr.bf16.mxu0 0
      %2151 = vmatpush1.bf16.msra.mxu0 0
      %2152 = vmatprep.subr.bf16.mxu0 0
      %2153 = vmatpush1.bf16.msra.mxu0 0
      %2154 = vmatprep.subr.bf16.mxu0 0
      %2155 = vmatpush1.bf16.msra.mxu0 0
      %2156 = vmatprep.subr.bf16.mxu0 0
      %2157 = vmatpush1.bf16.msra.mxu0 0
      %2158 = vmatprep.subr.bf16.mxu0 0
      %2159 = vmatpush1.bf16.msra.mxu0 0
      %2160 = vmatprep.subr.bf16.mxu0 0
      %2161 = vmatpush1.bf16.msra.mxu0 %v2142
      %2162 = vmatprep.subr.bf16.mxu0 0
      %2163 = vmatpush1.bf16.msra.mxu0 %v2141
      %2164 = vmatprep.subr.bf16.mxu0 0
      %2165 = vmatpush2.bf16.msra.mxu0 0
      %2166 = vmatprep.subr.bf16.mxu0 0
      %2167 = vmatpush2.bf16.msra.mxu0 0
      %2168 = vmatprep.subr.bf16.mxu0 0
      %2169 = vmatpush2.bf16.msra.mxu0 0
      %2170 = vmatprep.subr.bf16.mxu0 0
      %2171 = vmatpush2.bf16.msra.mxu0 0
      %2172 = vmatprep.subr.bf16.mxu0 0
      %2173 = vmatpush2.bf16.msra.mxu0 0
      %2174 = vmatprep.subr.bf16.mxu0 0
      %2175 = vmatpush2.bf16.msra.mxu0 0
      %2176 = vmatprep.subr.bf16.mxu0 0
      %2177 = vmatpush2.bf16.msra.mxu0 0
      %2178 = vmatprep.subr.bf16.mxu0 0
      %2179 = vmatpush2.bf16.msra.mxu0 0
      %2180 = vmatprep.mubr.bf16.mxu0 0
      %2181 = vmatmul.mubr.bf16.gmra.mxu0 %v2146
      %v2182 = vpop.f32.mrf.mxu0
      %v2183 = vadd.f32 0.0, %v2182
      %v2184 = vpop.f32.mrf.mxu0
      %v2185 = vpop.f32.mrf.mxu0
      %v2186 = vpop.f32.mrf.mxu0
      %2187 = vdwg.mxu0
      %v2189 = vsel %vm288, %v2123, 0
      %2191 = vmatprep.subr.bf16.mxu0 0
      %2192 = vmatpush1.bf16.msra.mxu0 0
      %2193 = vmatprep.subr.bf16.mxu0 0
      %2194 = vmatpush1.bf16.msra.mxu0 0
      %2195 = vmatprep.subr.bf16.mxu0 0
      %2196 = vmatpush1.bf16.msra.mxu0 0
      %2197 = vmatprep.subr.bf16.mxu0 0
      %2198 = vmatpush1.bf16.msra.mxu0 0
      %2199 = vmatprep.subr.bf16.mxu0 0
      %2200 = vmatpush1.bf16.msra.mxu0 0
      %2201 = vmatprep.subr.bf16.mxu0 0
      %2202 = vmatpush1.bf16.msra.mxu0 0
      %2203 = vmatprep.subr.bf16.mxu0 0
      %2204 = vmatpush1.bf16.msra.mxu0 %v2142
      %2205 = vmatprep.subr.bf16.mxu0 0
      %2206 = vmatpush1.bf16.msra.mxu0 %v2141
      %2207 = vmatprep.subr.bf16.mxu0 0
      %2208 = vmatpush2.bf16.msra.mxu0 0
      %2209 = vmatprep.subr.bf16.mxu0 0
      %2210 = vmatpush2.bf16.msra.mxu0 0
      %2211 = vmatprep.subr.bf16.mxu0 0
      %2212 = vmatpush2.bf16.msra.mxu0 0
      %2213 = vmatprep.subr.bf16.mxu0 0
      %2214 = vmatpush2.bf16.msra.mxu0 0
      %2215 = vmatprep.subr.bf16.mxu0 0
      %2216 = vmatpush2.bf16.msra.mxu0 0
      %2217 = vmatprep.subr.bf16.mxu0 0
      %2218 = vmatpush2.bf16.msra.mxu0 0
      %2219 = vmatprep.subr.bf16.mxu0 0
      %2220 = vmatpush2.bf16.msra.mxu0 0
      %2221 = vmatprep.subr.bf16.mxu0 0
      %2222 = vmatpush2.bf16.msra.mxu0 0
      %2223 = vmatprep.mubr.bf16.mxu0 0
      %2224 = vmatmul.mubr.bf16.gmra.mxu0 %v2189
      %v2225 = vpop.f32.mrf.mxu0
      %v2226 = vadd.f32 0.0, %v2225
      %v2227 = vpop.f32.mrf.mxu0
      %v2228 = vpop.f32.mrf.mxu0
      %v2229 = vpop.f32.mrf.mxu0
      %2230 = vdwg.mxu0
      %v2232 = vsel %vm288, %v2124, 0
      %2234 = vmatprep.subr.bf16.mxu0 0
      %2235 = vmatpush1.bf16.msra.mxu0 0
      %2236 = vmatprep.subr.bf16.mxu0 0
      %2237 = vmatpush1.bf16.msra.mxu0 0
      %2238 = vmatprep.subr.bf16.mxu0 0
      %2239 = vmatpush1.bf16.msra.mxu0 0
      %2240 = vmatprep.subr.bf16.mxu0 0
      %2241 = vmatpush1.bf16.msra.mxu0 0
      %2242 = vmatprep.subr.bf16.mxu0 0
      %2243 = vmatpush1.bf16.msra.mxu0 0
      %2244 = vmatprep.subr.bf16.mxu0 0
      %2245 = vmatpush1.bf16.msra.mxu0 0
      %2246 = vmatprep.subr.bf16.mxu0 0
      %2247 = vmatpush1.bf16.msra.mxu0 %v2142
      %2248 = vmatprep.subr.bf16.mxu0 0
      %2249 = vmatpush1.bf16.msra.mxu0 %v2141
      %2250 = vmatprep.subr.bf16.mxu0 0
      %2251 = vmatpush2.bf16.msra.mxu0 0
      %2252 = vmatprep.subr.bf16.mxu0 0
      %2253 = vmatpush2.bf16.msra.mxu0 0
      %2254 = vmatprep.subr.bf16.mxu0 0
      %2255 = vmatpush2.bf16.msra.mxu0 0
      %2256 = vmatprep.subr.bf16.mxu0 0
      %2257 = vmatpush2.bf16.msra.mxu0 0
      %2258 = vmatprep.subr.bf16.mxu0 0
      %2259 = vmatpush2.bf16.msra.mxu0 0
      %2260 = vmatprep.subr.bf16.mxu0 0
      %2261 = vmatpush2.bf16.msra.mxu0 0
      %2262 = vmatprep.subr.bf16.mxu0 0
      %2263 = vmatpush2.bf16.msra.mxu0 0
      %2264 = vmatprep.subr.bf16.mxu0 0
      %2265 = vmatpush2.bf16.msra.mxu0 0
      %2266 = vmatprep.mubr.bf16.mxu0 0
      %2267 = vmatmul.mubr.bf16.gmra.mxu0 %v2232
      %v2268 = vpop.f32.mrf.mxu0
      %v2269 = vadd.f32 0.0, %v2268
      %v2270 = vpop.f32.mrf.mxu0
      %v2271 = vpop.f32.mrf.mxu0
      %v2272 = vpop.f32.mrf.mxu0
      %2273 = vdwg.mxu0
      %v2275 = vsel %vm288, %v2125, 0
      %2277 = vmatprep.subr.bf16.mxu0 0
      %2278 = vmatpush1.bf16.msra.mxu0 0
      %2279 = vmatprep.subr.bf16.mxu0 0
      %2280 = vmatpush1.bf16.msra.mxu0 0
      %2281 = vmatprep.subr.bf16.mxu0 0
      %2282 = vmatpush1.bf16.msra.mxu0 0
      %2283 = vmatprep.subr.bf16.mxu0 0
      %2284 = vmatpush1.bf16.msra.mxu0 0
      %2285 = vmatprep.subr.bf16.mxu0 0
      %2286 = vmatpush1.bf16.msra.mxu0 0
      %2287 = vmatprep.subr.bf16.mxu0 0
      %2288 = vmatpush1.bf16.msra.mxu0 0
      %2289 = vmatprep.subr.bf16.mxu0 0
      %2290 = vmatpush1.bf16.msra.mxu0 %v2142
      %2291 = vmatprep.subr.bf16.mxu0 0
      %2292 = vmatpush1.bf16.msra.mxu0 %v2141
      %2293 = vmatprep.subr.bf16.mxu0 0
      %2294 = vmatpush2.bf16.msra.mxu0 0
      %2295 = vmatprep.subr.bf16.mxu0 0
      %2296 = vmatpush2.bf16.msra.mxu0 0
      %2297 = vmatprep.subr.bf16.mxu0 0
      %2298 = vmatpush2.bf16.msra.mxu0 0
      %2299 = vmatprep.subr.bf16.mxu0 0
      %2300 = vmatpush2.bf16.msra.mxu0 0
      %2301 = vmatprep.subr.bf16.mxu0 0
      %2302 = vmatpush2.bf16.msra.mxu0 0
      %2303 = vmatprep.subr.bf16.mxu0 0
      %2304 = vmatpush2.bf16.msra.mxu0 0
      %2305 = vmatprep.subr.bf16.mxu0 0
      %2306 = vmatpush2.bf16.msra.mxu0 0
      %2307 = vmatprep.subr.bf16.mxu0 0
      %2308 = vmatpush2.bf16.msra.mxu0 0
      %2309 = vmatprep.mubr.bf16.mxu0 0
      %2310 = vmatmul.mubr.bf16.gmra.mxu0 %v2275
      %v2311 = vpop.f32.mrf.mxu0
      %v2312 = vadd.f32 0.0, %v2311
      %v2313 = vpop.f32.mrf.mxu0
      %v2314 = vpop.f32.mrf.mxu0
      %v2315 = vpop.f32.mrf.mxu0
      %2316 = vdwg.mxu0
      %v2318 = vsel %vm288, %v2126, 0
      %2320 = vmatprep.subr.bf16.mxu0 0
      %2321 = vmatpush1.bf16.msra.mxu0 0
      %2322 = vmatprep.subr.bf16.mxu0 0
      %2323 = vmatpush1.bf16.msra.mxu0 0
      %2324 = vmatprep.subr.bf16.mxu0 0
      %2325 = vmatpush1.bf16.msra.mxu0 0
      %2326 = vmatprep.subr.bf16.mxu0 0
      %2327 = vmatpush1.bf16.msra.mxu0 0
      %2328 = vmatprep.subr.bf16.mxu0 0
      %2329 = vmatpush1.bf16.msra.mxu0 0
      %2330 = vmatprep.subr.bf16.mxu0 0
      %2331 = vmatpush1.bf16.msra.mxu0 0
      %2332 = vmatprep.subr.bf16.mxu0 0
      %2333 = vmatpush1.bf16.msra.mxu0 %v2142
      %2334 = vmatprep.subr.bf16.mxu0 0
      %2335 = vmatpush1.bf16.msra.mxu0 %v2141
      %2336 = vmatprep.subr.bf16.mxu0 0
      %2337 = vmatpush2.bf16.msra.mxu0 0
      %2338 = vmatprep.subr.bf16.mxu0 0
      %2339 = vmatpush2.bf16.msra.mxu0 0
      %2340 = vmatprep.subr.bf16.mxu0 0
      %2341 = vmatpush2.bf16.msra.mxu0 0
      %2342 = vmatprep.subr.bf16.mxu0 0
      %2343 = vmatpush2.bf16.msra.mxu0 0
      %2344 = vmatprep.subr.bf16.mxu0 0
      %2345 = vmatpush2.bf16.msra.mxu0 0
      %2346 = vmatprep.subr.bf16.mxu0 0
      %2347 = vmatpush2.bf16.msra.mxu0 0
      %2348 = vmatprep.subr.bf16.mxu0 0
      %2349 = vmatpush2.bf16.msra.mxu0 0
      %2350 = vmatprep.subr.bf16.mxu0 0
      %2351 = vmatpush2.bf16.msra.mxu0 0
      %2352 = vmatprep.mubr.bf16.mxu0 0
      %2353 = vmatmul.mubr.bf16.gmra.mxu0 %v2318
      %v2354 = vpop.f32.mrf.mxu0
      %v2355 = vadd.f32 0.0, %v2354
      %v2356 = vpop.f32.mrf.mxu0
      %v2357 = vpop.f32.mrf.mxu0
      %v2358 = vpop.f32.mrf.mxu0
      %2359 = vdwg.mxu0
      %v2361 = vsel %vm288, %v2127, 0
      %2363 = vmatprep.subr.bf16.mxu0 0
      %2364 = vmatpush1.bf16.msra.mxu0 0
      %2365 = vmatprep.subr.bf16.mxu0 0
      %2366 = vmatpush1.bf16.msra.mxu0 0
      %2367 = vmatprep.subr.bf16.mxu0 0
      %2368 = vmatpush1.bf16.msra.mxu0 0
      %2369 = vmatprep.subr.bf16.mxu0 0
      %2370 = vmatpush1.bf16.msra.mxu0 0
      %2371 = vmatprep.subr.bf16.mxu0 0
      %2372 = vmatpush1.bf16.msra.mxu0 0
      %2373 = vmatprep.subr.bf16.mxu0 0
      %2374 = vmatpush1.bf16.msra.mxu0 0
      %2375 = vmatprep.subr.bf16.mxu0 0
      %2376 = vmatpush1.bf16.msra.mxu0 %v2142
      %2377 = vmatprep.subr.bf16.mxu0 0
      %2378 = vmatpush1.bf16.msra.mxu0 %v2141
      %2379 = vmatprep.subr.bf16.mxu0 0
      %2380 = vmatpush2.bf16.msra.mxu0 0
      %2381 = vmatprep.subr.bf16.mxu0 0
      %2382 = vmatpush2.bf16.msra.mxu0 0
      %2383 = vmatprep.subr.bf16.mxu0 0
      %2384 = vmatpush2.bf16.msra.mxu0 0
      %2385 = vmatprep.subr.bf16.mxu0 0
      %2386 = vmatpush2.bf16.msra.mxu0 0
      %2387 = vmatprep.subr.bf16.mxu0 0
      %2388 = vmatpush2.bf16.msra.mxu0 0
      %2389 = vmatprep.subr.bf16.mxu0 0
      %2390 = vmatpush2.bf16.msra.mxu0 0
      %2391 = vmatprep.subr.bf16.mxu0 0
      %2392 = vmatpush2.bf16.msra.mxu0 0
      %2393 = vmatprep.subr.bf16.mxu0 0
      %2394 = vmatpush2.bf16.msra.mxu0 0
      %2395 = vmatprep.mubr.bf16.mxu0 0
      %2396 = vmatmul.mubr.bf16.gmra.mxu0 %v2361
      %v2397 = vpop.f32.mrf.mxu0
      %v2398 = vadd.f32 0.0, %v2397
      %v2399 = vpop.f32.mrf.mxu0
      %v2400 = vpop.f32.mrf.mxu0
      %v2401 = vpop.f32.mrf.mxu0
      %2402 = vdwg.mxu0
      %v2403 = vadd.f32 %v2115, %v2183
      %v2404 = vadd.f32 %v2116, %v2226
      %v2405 = vadd.f32 %v2117, %v2269
      %v2406 = vadd.f32 %v2118, %v2312
      %v2407 = vadd.f32 %v2119, %v2355
      %v2408 = vadd.f32 %v2120, %v2398
      %v2409 = vld [vmem:[%s2121] sm:$0xe]
      %v2410 = vld [vmem:[%s2121 + $0x8] sm:$0xe]
      %v2411 = vld [vmem:[%s2121 + $0x10] sm:$0xe]
      %v2412 = vld [vmem:[%s2121 + $0x18] sm:$0xe]
      %v2413 = vld [vmem:[%s2121 + $0x20] sm:$0xe]
      %v2414 = vld [vmem:[%s2121 + $0x28] sm:$0xe]
      %s2415 = scalar_lea.vmem %s238, 112
      %v2416 = vld [vmem:[%s2415] sm:$0xf]
      %v2417 = vld [vmem:[%s2415 + $0x4] sm:$0xf]
      %v2418 = vld [vmem:[%s2415 + $0x8] sm:$0xf]
      %v2419 = vld [vmem:[%s2415 + $0xc] sm:$0xf]
      %v2421 = vunpack.c.l.b16 %v2409
      %v2422 = vpack.c.b16 %v2421, %v2421
      %v2423 = vrot.slane %v2422, 1
      %v2428 = vunpack.c.l.b16 %v2416
      %v2429 = vunpack.c.l.b16 %v2417
      %v2430 = vunpack.c.l.b16 %v2418
      %v2431 = vunpack.c.l.b16 %v2419
      %v2432 = vpack.c.b16 %v2429, %v2428
      %v2433 = vpack.c.b16 %v2431, %v2430
      %v2437 = vsel %vm288, %v2423, 0
      %2439 = vmatprep.subr.bf16.mxu0 0
      %2440 = vmatpush1.bf16.msra.mxu0 0
      %2441 = vmatprep.subr.bf16.mxu0 0
      %2442 = vmatpush1.bf16.msra.mxu0 0
      %2443 = vmatprep.subr.bf16.mxu0 0
      %2444 = vmatpush1.bf16.msra.mxu0 0
      %2445 = vmatprep.subr.bf16.mxu0 0
      %2446 = vmatpush1.bf16.msra.mxu0 0
      %2447 = vmatprep.subr.bf16.mxu0 0
      %2448 = vmatpush1.bf16.msra.mxu0 0
      %2449 = vmatprep.subr.bf16.mxu0 0
      %2450 = vmatpush1.bf16.msra.mxu0 0
      %2451 = vmatprep.subr.bf16.mxu0 0
      %2452 = vmatpush1.bf16.msra.mxu0 %v2433
      %2453 = vmatprep.subr.bf16.mxu0 0
      %2454 = vmatpush1.bf16.msra.mxu0 %v2432
      %2455 = vmatprep.subr.bf16.mxu0 0
      %2456 = vmatpush2.bf16.msra.mxu0 0
      %2457 = vmatprep.subr.bf16.mxu0 0
      %2458 = vmatpush2.bf16.msra.mxu0 0
      %2459 = vmatprep.subr.bf16.mxu0 0
      %2460 = vmatpush2.bf16.msra.mxu0 0
      %2461 = vmatprep.subr.bf16.mxu0 0
      %2462 = vmatpush2.bf16.msra.mxu0 0
      %2463 = vmatprep.subr.bf16.mxu0 0
      %2464 = vmatpush2.bf16.msra.mxu0 0
      %2465 = vmatprep.subr.bf16.mxu0 0
      %2466 = vmatpush2.bf16.msra.mxu0 0
      %2467 = vmatprep.subr.bf16.mxu0 0
      %2468 = vmatpush2.bf16.msra.mxu0 0
      %2469 = vmatprep.subr.bf16.mxu0 0
      %2470 = vmatpush2.bf16.msra.mxu0 0
      %2471 = vmatprep.mubr.bf16.mxu0 0
      %2472 = vmatmul.mubr.bf16.gmra.mxu0 %v2437
      %v2473 = vpop.f32.mrf.mxu0
      %v2474 = vadd.f32 0.0, %v2473
      %v2475 = vpop.f32.mrf.mxu0
      %v2476 = vpop.f32.mrf.mxu0
      %v2477 = vpop.f32.mrf.mxu0
      %2478 = vdwg.mxu0
      %v2480 = vunpack.c.l.b16 %v2410
      %v2481 = vpack.c.b16 %v2480, %v2480
      %v2482 = vrot.slane %v2481, 1
      %v2484 = vsel %vm288, %v2482, 0
      %2486 = vmatprep.subr.bf16.mxu0 0
      %2487 = vmatpush1.bf16.msra.mxu0 0
      %2488 = vmatprep.subr.bf16.mxu0 0
      %2489 = vmatpush1.bf16.msra.mxu0 0
      %2490 = vmatprep.subr.bf16.mxu0 0
      %2491 = vmatpush1.bf16.msra.mxu0 0
      %2492 = vmatprep.subr.bf16.mxu0 0
      %2493 = vmatpush1.bf16.msra.mxu0 0
      %2494 = vmatprep.subr.bf16.mxu0 0
      %2495 = vmatpush1.bf16.msra.mxu0 0
      %2496 = vmatprep.subr.bf16.mxu0 0
      %2497 = vmatpush1.bf16.msra.mxu0 0
      %2498 = vmatprep.subr.bf16.mxu0 0
      %2499 = vmatpush1.bf16.msra.mxu0 %v2433
      %2500 = vmatprep.subr.bf16.mxu0 0
      %2501 = vmatpush1.bf16.msra.mxu0 %v2432
      %2502 = vmatprep.subr.bf16.mxu0 0
      %2503 = vmatpush2.bf16.msra.mxu0 0
      %2504 = vmatprep.subr.bf16.mxu0 0
      %2505 = vmatpush2.bf16.msra.mxu0 0
      %2506 = vmatprep.subr.bf16.mxu0 0
      %2507 = vmatpush2.bf16.msra.mxu0 0
      %2508 = vmatprep.subr.bf16.mxu0 0
      %2509 = vmatpush2.bf16.msra.mxu0 0
      %2510 = vmatprep.subr.bf16.mxu0 0
      %2511 = vmatpush2.bf16.msra.mxu0 0
      %2512 = vmatprep.subr.bf16.mxu0 0
      %2513 = vmatpush2.bf16.msra.mxu0 0
      %2514 = vmatprep.subr.bf16.mxu0 0
      %2515 = vmatpush2.bf16.msra.mxu0 0
      %2516 = vmatprep.subr.bf16.mxu0 0
      %2517 = vmatpush2.bf16.msra.mxu0 0
      %2518 = vmatprep.mubr.bf16.mxu0 0
      %2519 = vmatmul.mubr.bf16.gmra.mxu0 %v2484
      %v2520 = vpop.f32.mrf.mxu0
      %v2521 = vadd.f32 0.0, %v2520
      %v2522 = vpop.f32.mrf.mxu0
      %v2523 = vpop.f32.mrf.mxu0
      %v2524 = vpop.f32.mrf.mxu0
      %2525 = vdwg.mxu0
      %v2527 = vunpack.c.l.b16 %v2411
      %v2528 = vpack.c.b16 %v2527, %v2527
      %v2529 = vrot.slane %v2528, 1
      %v2531 = vsel %vm288, %v2529, 0
      %2533 = vmatprep.subr.bf16.mxu0 0
      %2534 = vmatpush1.bf16.msra.mxu0 0
      %2535 = vmatprep.subr.bf16.mxu0 0
      %2536 = vmatpush1.bf16.msra.mxu0 0
      %2537 = vmatprep.subr.bf16.mxu0 0
      %2538 = vmatpush1.bf16.msra.mxu0 0
      %2539 = vmatprep.subr.bf16.mxu0 0
      %2540 = vmatpush1.bf16.msra.mxu0 0
      %2541 = vmatprep.subr.bf16.mxu0 0
      %2542 = vmatpush1.bf16.msra.mxu0 0
      %2543 = vmatprep.subr.bf16.mxu0 0
      %2544 = vmatpush1.bf16.msra.mxu0 0
      %2545 = vmatprep.subr.bf16.mxu0 0
      %2546 = vmatpush1.bf16.msra.mxu0 %v2433
      %2547 = vmatprep.subr.bf16.mxu0 0
      %2548 = vmatpush1.bf16.msra.mxu0 %v2432
      %2549 = vmatprep.subr.bf16.mxu0 0
      %2550 = vmatpush2.bf16.msra.mxu0 0
      %2551 = vmatprep.subr.bf16.mxu0 0
      %2552 = vmatpush2.bf16.msra.mxu0 0
      %2553 = vmatprep.subr.bf16.mxu0 0
      %2554 = vmatpush2.bf16.msra.mxu0 0
      %2555 = vmatprep.subr.bf16.mxu0 0
      %2556 = vmatpush2.bf16.msra.mxu0 0
      %2557 = vmatprep.subr.bf16.mxu0 0
      %2558 = vmatpush2.bf16.msra.mxu0 0
      %2559 = vmatprep.subr.bf16.mxu0 0
      %2560 = vmatpush2.bf16.msra.mxu0 0
      %2561 = vmatprep.subr.bf16.mxu0 0
      %2562 = vmatpush2.bf16.msra.mxu0 0
      %2563 = vmatprep.subr.bf16.mxu0 0
      %2564 = vmatpush2.bf16.msra.mxu0 0
      %2565 = vmatprep.mubr.bf16.mxu0 0
      %2566 = vmatmul.mubr.bf16.gmra.mxu0 %v2531
      %v2567 = vpop.f32.mrf.mxu0
      %v2568 = vadd.f32 0.0, %v2567
      %v2569 = vpop.f32.mrf.mxu0
      %v2570 = vpop.f32.mrf.mxu0
      %v2571 = vpop.f32.mrf.mxu0
      %2572 = vdwg.mxu0
      %v2574 = vunpack.c.l.b16 %v2412
      %v2575 = vpack.c.b16 %v2574, %v2574
      %v2576 = vrot.slane %v2575, 1
      %v2578 = vsel %vm288, %v2576, 0
      %2580 = vmatprep.subr.bf16.mxu0 0
      %2581 = vmatpush1.bf16.msra.mxu0 0
      %2582 = vmatprep.subr.bf16.mxu0 0
      %2583 = vmatpush1.bf16.msra.mxu0 0
      %2584 = vmatprep.subr.bf16.mxu0 0
      %2585 = vmatpush1.bf16.msra.mxu0 0
      %2586 = vmatprep.subr.bf16.mxu0 0
      %2587 = vmatpush1.bf16.msra.mxu0 0
      %2588 = vmatprep.subr.bf16.mxu0 0
      %2589 = vmatpush1.bf16.msra.mxu0 0
      %2590 = vmatprep.subr.bf16.mxu0 0
      %2591 = vmatpush1.bf16.msra.mxu0 0
      %2592 = vmatprep.subr.bf16.mxu0 0
      %2593 = vmatpush1.bf16.msra.mxu0 %v2433
      %2594 = vmatprep.subr.bf16.mxu0 0
      %2595 = vmatpush1.bf16.msra.mxu0 %v2432
      %2596 = vmatprep.subr.bf16.mxu0 0
      %2597 = vmatpush2.bf16.msra.mxu0 0
      %2598 = vmatprep.subr.bf16.mxu0 0
      %2599 = vmatpush2.bf16.msra.mxu0 0
      %2600 = vmatprep.subr.bf16.mxu0 0
      %2601 = vmatpush2.bf16.msra.mxu0 0
      %2602 = vmatprep.subr.bf16.mxu0 0
      %2603 = vmatpush2.bf16.msra.mxu0 0
      %2604 = vmatprep.subr.bf16.mxu0 0
      %2605 = vmatpush2.bf16.msra.mxu0 0
      %2606 = vmatprep.subr.bf16.mxu0 0
      %2607 = vmatpush2.bf16.msra.mxu0 0
      %2608 = vmatprep.subr.bf16.mxu0 0
      %2609 = vmatpush2.bf16.msra.mxu0 0
      %2610 = vmatprep.subr.bf16.mxu0 0
      %2611 = vmatpush2.bf16.msra.mxu0 0
      %2612 = vmatprep.mubr.bf16.mxu0 0
      %2613 = vmatmul.mubr.bf16.gmra.mxu0 %v2578
      %v2614 = vpop.f32.mrf.mxu0
      %v2615 = vadd.f32 0.0, %v2614
      %v2616 = vpop.f32.mrf.mxu0
      %v2617 = vpop.f32.mrf.mxu0
      %v2618 = vpop.f32.mrf.mxu0
      %2619 = vdwg.mxu0
      %v2621 = vunpack.c.l.b16 %v2413
      %v2622 = vpack.c.b16 %v2621, %v2621
      %v2623 = vrot.slane %v2622, 1
      %v2625 = vsel %vm288, %v2623, 0
      %2627 = vmatprep.subr.bf16.mxu0 0
      %2628 = vmatpush1.bf16.msra.mxu0 0
      %2629 = vmatprep.subr.bf16.mxu0 0
      %2630 = vmatpush1.bf16.msra.mxu0 0
      %2631 = vmatprep.subr.bf16.mxu0 0
      %2632 = vmatpush1.bf16.msra.mxu0 0
      %2633 = vmatprep.subr.bf16.mxu0 0
      %2634 = vmatpush1.bf16.msra.mxu0 0
      %2635 = vmatprep.subr.bf16.mxu0 0
      %2636 = vmatpush1.bf16.msra.mxu0 0
      %2637 = vmatprep.subr.bf16.mxu0 0
      %2638 = vmatpush1.bf16.msra.mxu0 0
      %2639 = vmatprep.subr.bf16.mxu0 0
      %2640 = vmatpush1.bf16.msra.mxu0 %v2433
      %2641 = vmatprep.subr.bf16.mxu0 0
      %2642 = vmatpush1.bf16.msra.mxu0 %v2432
      %2643 = vmatprep.subr.bf16.mxu0 0
      %2644 = vmatpush2.bf16.msra.mxu0 0
      %2645 = vmatprep.subr.bf16.mxu0 0
      %2646 = vmatpush2.bf16.msra.mxu0 0
      %2647 = vmatprep.subr.bf16.mxu0 0
      %2648 = vmatpush2.bf16.msra.mxu0 0
      %2649 = vmatprep.subr.bf16.mxu0 0
      %2650 = vmatpush2.bf16.msra.mxu0 0
      %2651 = vmatprep.subr.bf16.mxu0 0
      %2652 = vmatpush2.bf16.msra.mxu0 0
      %2653 = vmatprep.subr.bf16.mxu0 0
      %2654 = vmatpush2.bf16.msra.mxu0 0
      %2655 = vmatprep.subr.bf16.mxu0 0
      %2656 = vmatpush2.bf16.msra.mxu0 0
      %2657 = vmatprep.subr.bf16.mxu0 0
      %2658 = vmatpush2.bf16.msra.mxu0 0
      %2659 = vmatprep.mubr.bf16.mxu0 0
      %2660 = vmatmul.mubr.bf16.gmra.mxu0 %v2625
      %v2661 = vpop.f32.mrf.mxu0
      %v2662 = vadd.f32 0.0, %v2661
      %v2663 = vpop.f32.mrf.mxu0
      %v2664 = vpop.f32.mrf.mxu0
      %v2665 = vpop.f32.mrf.mxu0
      %2666 = vdwg.mxu0
      %v2668 = vunpack.c.l.b16 %v2414
      %v2669 = vpack.c.b16 %v2668, %v2668
      %v2670 = vrot.slane %v2669, 1
      %v2672 = vsel %vm288, %v2670, 0
      %2674 = vmatprep.subr.bf16.mxu0 0
      %2675 = vmatpush1.bf16.msra.mxu0 0
      %2676 = vmatprep.subr.bf16.mxu0 0
      %2677 = vmatpush1.bf16.msra.mxu0 0
      %2678 = vmatprep.subr.bf16.mxu0 0
      %2679 = vmatpush1.bf16.msra.mxu0 0
      %2680 = vmatprep.subr.bf16.mxu0 0
      %2681 = vmatpush1.bf16.msra.mxu0 0
      %2682 = vmatprep.subr.bf16.mxu0 0
      %2683 = vmatpush1.bf16.msra.mxu0 0
      %2684 = vmatprep.subr.bf16.mxu0 0
      %2685 = vmatpush1.bf16.msra.mxu0 0
      %2686 = vmatprep.subr.bf16.mxu0 0
      %2687 = vmatpush1.bf16.msra.mxu0 %v2433
      %2688 = vmatprep.subr.bf16.mxu0 0
      %2689 = vmatpush1.bf16.msra.mxu0 %v2432
      %2690 = vmatprep.subr.bf16.mxu0 0
      %2691 = vmatpush2.bf16.msra.mxu0 0
      %2692 = vmatprep.subr.bf16.mxu0 0
      %2693 = vmatpush2.bf16.msra.mxu0 0
      %2694 = vmatprep.subr.bf16.mxu0 0
      %2695 = vmatpush2.bf16.msra.mxu0 0
      %2696 = vmatprep.subr.bf16.mxu0 0
      %2697 = vmatpush2.bf16.msra.mxu0 0
      %2698 = vmatprep.subr.bf16.mxu0 0
      %2699 = vmatpush2.bf16.msra.mxu0 0
      %2700 = vmatprep.subr.bf16.mxu0 0
      %2701 = vmatpush2.bf16.msra.mxu0 0
      %2702 = vmatprep.subr.bf16.mxu0 0
      %2703 = vmatpush2.bf16.msra.mxu0 0
      %2704 = vmatprep.subr.bf16.mxu0 0
      %2705 = vmatpush2.bf16.msra.mxu0 0
      %2706 = vmatprep.mubr.bf16.mxu0 0
      %2707 = vmatmul.mubr.bf16.gmra.mxu0 %v2672
      %v2708 = vpop.f32.mrf.mxu0
      %v2709 = vadd.f32 0.0, %v2708
      %v2710 = vpop.f32.mrf.mxu0
      %v2711 = vpop.f32.mrf.mxu0
      %v2712 = vpop.f32.mrf.mxu0
      %2713 = vdwg.mxu0
      %v2714 = vadd.f32 %v2403, %v2474
      %v2715 = vadd.f32 %v2404, %v2521
      %v2716 = vadd.f32 %v2405, %v2568
      %v2717 = vadd.f32 %v2406, %v2615
      %v2718 = vadd.f32 %v2407, %v2662
      %v2719 = vadd.f32 %v2408, %v2709
      %v2720 = vld [vmem:[%s2121] sm:$0xc]
      %v2721 = vld [vmem:[%s2121 + $0x4] sm:$0x1]
      %v2722 = vld [vmem:[%s2121 + $0x8] sm:$0xc]
      %v2723 = vld [vmem:[%s2121 + $0xc] sm:$0x1]
      %v2724 = vld [vmem:[%s2121 + $0x10] sm:$0xc]
      %v2725 = vld [vmem:[%s2121 + $0x14] sm:$0x1]
      %v2726 = vld [vmem:[%s2121 + $0x18] sm:$0xc]
      %v2727 = vld [vmem:[%s2121 + $0x1c] sm:$0x1]
      %v2728 = vld [vmem:[%s2121 + $0x20] sm:$0xc]
      %v2729 = vld [vmem:[%s2121 + $0x24] sm:$0x1]
      %v2730 = vld [vmem:[%s2121 + $0x28] sm:$0xc]
      %v2731 = vld [vmem:[%s2121 + $0x2c] sm:$0x1]
      %s2732 = scalar_lea.vmem %s238, 128
      %v2733 = vld [vmem:[%s2732] sm:$0xf]
      %v2734 = vld [vmem:[%s2732 + $0x4] sm:$0xf]
      %v2735 = vld [vmem:[%s2732 + $0x8] sm:$0xf]
      %v2736 = vld [vmem:[%s2732 + $0xc] sm:$0xf]
      %v2739 = vunpack.c.l.b16 %v2720
      %v2740 = vunpack.c.l.b16 %v2721
      %v2741 = vpack.c.b16 %v2740, %v2739
      %v2742 = vrot.slane %v2741, 2
      %v2747 = vunpack.c.l.b16 %v2733
      %v2748 = vunpack.c.l.b16 %v2734
      %v2749 = vunpack.c.l.b16 %v2735
      %v2750 = vunpack.c.l.b16 %v2736
      %v2751 = vpack.c.b16 %v2748, %v2747
      %v2752 = vpack.c.b16 %v2750, %v2749
      %v2756 = vsel %vm288, %v2742, 0
      %2758 = vmatprep.subr.bf16.mxu0 0
      %2759 = vmatpush1.bf16.msra.mxu0 0
      %2760 = vmatprep.subr.bf16.mxu0 0
      %2761 = vmatpush1.bf16.msra.mxu0 0
      %2762 = vmatprep.subr.bf16.mxu0 0
      %2763 = vmatpush1.bf16.msra.mxu0 0
      %2764 = vmatprep.subr.bf16.mxu0 0
      %2765 = vmatpush1.bf16.msra.mxu0 0
      %2766 = vmatprep.subr.bf16.mxu0 0
      %2767 = vmatpush1.bf16.msra.mxu0 0
      %2768 = vmatprep.subr.bf16.mxu0 0
      %2769 = vmatpush1.bf16.msra.mxu0 0
      %2770 = vmatprep.subr.bf16.mxu0 0
      %2771 = vmatpush1.bf16.msra.mxu0 %v2752
      %2772 = vmatprep.subr.bf16.mxu0 0
      %2773 = vmatpush1.bf16.msra.mxu0 %v2751
      %2774 = vmatprep.subr.bf16.mxu0 0
      %2775 = vmatpush2.bf16.msra.mxu0 0
      %2776 = vmatprep.subr.bf16.mxu0 0
      %2777 = vmatpush2.bf16.msra.mxu0 0
      %2778 = vmatprep.subr.bf16.mxu0 0
      %2779 = vmatpush2.bf16.msra.mxu0 0
      %2780 = vmatprep.subr.bf16.mxu0 0
      %2781 = vmatpush2.bf16.msra.mxu0 0
      %2782 = vmatprep.subr.bf16.mxu0 0
      %2783 = vmatpush2.bf16.msra.mxu0 0
      %2784 = vmatprep.subr.bf16.mxu0 0
      %2785 = vmatpush2.bf16.msra.mxu0 0
      %2786 = vmatprep.subr.bf16.mxu0 0
      %2787 = vmatpush2.bf16.msra.mxu0 0
      %2788 = vmatprep.subr.bf16.mxu0 0
      %2789 = vmatpush2.bf16.msra.mxu0 0
      %2790 = vmatprep.mubr.bf16.mxu0 0
      %2791 = vmatmul.mubr.bf16.gmra.mxu0 %v2756
      %v2792 = vpop.f32.mrf.mxu0
      %v2793 = vadd.f32 0.0, %v2792
      %v2794 = vpop.f32.mrf.mxu0
      %v2795 = vpop.f32.mrf.mxu0
      %v2796 = vpop.f32.mrf.mxu0
      %2797 = vdwg.mxu0
      %v2800 = vunpack.c.l.b16 %v2722
      %v2801 = vunpack.c.l.b16 %v2723
      %v2802 = vpack.c.b16 %v2801, %v2800
      %v2803 = vrot.slane %v2802, 2
      %v2805 = vsel %vm288, %v2803, 0
      %2807 = vmatprep.subr.bf16.mxu0 0
      %2808 = vmatpush1.bf16.msra.mxu0 0
      %2809 = vmatprep.subr.bf16.mxu0 0
      %2810 = vmatpush1.bf16.msra.mxu0 0
      %2811 = vmatprep.subr.bf16.mxu0 0
      %2812 = vmatpush1.bf16.msra.mxu0 0
      %2813 = vmatprep.subr.bf16.mxu0 0
      %2814 = vmatpush1.bf16.msra.mxu0 0
      %2815 = vmatprep.subr.bf16.mxu0 0
      %2816 = vmatpush1.bf16.msra.mxu0 0
      %2817 = vmatprep.subr.bf16.mxu0 0
      %2818 = vmatpush1.bf16.msra.mxu0 0
      %2819 = vmatprep.subr.bf16.mxu0 0
      %2820 = vmatpush1.bf16.msra.mxu0 %v2752
      %2821 = vmatprep.subr.bf16.mxu0 0
      %2822 = vmatpush1.bf16.msra.mxu0 %v2751
      %2823 = vmatprep.subr.bf16.mxu0 0
      %2824 = vmatpush2.bf16.msra.mxu0 0
      %2825 = vmatprep.subr.bf16.mxu0 0
      %2826 = vmatpush2.bf16.msra.mxu0 0
      %2827 = vmatprep.subr.bf16.mxu0 0
      %2828 = vmatpush2.bf16.msra.mxu0 0
      %2829 = vmatprep.subr.bf16.mxu0 0
      %2830 = vmatpush2.bf16.msra.mxu0 0
      %2831 = vmatprep.subr.bf16.mxu0 0
      %2832 = vmatpush2.bf16.msra.mxu0 0
      %2833 = vmatprep.subr.bf16.mxu0 0
      %2834 = vmatpush2.bf16.msra.mxu0 0
      %2835 = vmatprep.subr.bf16.mxu0 0
      %2836 = vmatpush2.bf16.msra.mxu0 0
      %2837 = vmatprep.subr.bf16.mxu0 0
      %2838 = vmatpush2.bf16.msra.mxu0 0
      %2839 = vmatprep.mubr.bf16.mxu0 0
      %2840 = vmatmul.mubr.bf16.gmra.mxu0 %v2805
      %v2841 = vpop.f32.mrf.mxu0
      %v2842 = vadd.f32 0.0, %v2841
      %v2843 = vpop.f32.mrf.mxu0
      %v2844 = vpop.f32.mrf.mxu0
      %v2845 = vpop.f32.mrf.mxu0
      %2846 = vdwg.mxu0
      %v2849 = vunpack.c.l.b16 %v2724
      %v2850 = vunpack.c.l.b16 %v2725
      %v2851 = vpack.c.b16 %v2850, %v2849
      %v2852 = vrot.slane %v2851, 2
      %v2854 = vsel %vm288, %v2852, 0
      %2856 = vmatprep.subr.bf16.mxu0 0
      %2857 = vmatpush1.bf16.msra.mxu0 0
      %2858 = vmatprep.subr.bf16.mxu0 0
      %2859 = vmatpush1.bf16.msra.mxu0 0
      %2860 = vmatprep.subr.bf16.mxu0 0
      %2861 = vmatpush1.bf16.msra.mxu0 0
      %2862 = vmatprep.subr.bf16.mxu0 0
      %2863 = vmatpush1.bf16.msra.mxu0 0
      %2864 = vmatprep.subr.bf16.mxu0 0
      %2865 = vmatpush1.bf16.msra.mxu0 0
      %2866 = vmatprep.subr.bf16.mxu0 0
      %2867 = vmatpush1.bf16.msra.mxu0 0
      %2868 = vmatprep.subr.bf16.mxu0 0
      %2869 = vmatpush1.bf16.msra.mxu0 %v2752
      %2870 = vmatprep.subr.bf16.mxu0 0
      %2871 = vmatpush1.bf16.msra.mxu0 %v2751
      %2872 = vmatprep.subr.bf16.mxu0 0
      %2873 = vmatpush2.bf16.msra.mxu0 0
      %2874 = vmatprep.subr.bf16.mxu0 0
      %2875 = vmatpush2.bf16.msra.mxu0 0
      %2876 = vmatprep.subr.bf16.mxu0 0
      %2877 = vmatpush2.bf16.msra.mxu0 0
      %2878 = vmatprep.subr.bf16.mxu0 0
      %2879 = vmatpush2.bf16.msra.mxu0 0
      %2880 = vmatprep.subr.bf16.mxu0 0
      %2881 = vmatpush2.bf16.msra.mxu0 0
      %2882 = vmatprep.subr.bf16.mxu0 0
      %2883 = vmatpush2.bf16.msra.mxu0 0
      %2884 = vmatprep.subr.bf16.mxu0 0
      %2885 = vmatpush2.bf16.msra.mxu0 0
      %2886 = vmatprep.subr.bf16.mxu0 0
      %2887 = vmatpush2.bf16.msra.mxu0 0
      %2888 = vmatprep.mubr.bf16.mxu0 0
      %2889 = vmatmul.mubr.bf16.gmra.mxu0 %v2854
      %v2890 = vpop.f32.mrf.mxu0
      %v2891 = vadd.f32 0.0, %v2890
      %v2892 = vpop.f32.mrf.mxu0
      %v2893 = vpop.f32.mrf.mxu0
      %v2894 = vpop.f32.mrf.mxu0
      %2895 = vdwg.mxu0
      %v2898 = vunpack.c.l.b16 %v2726
      %v2899 = vunpack.c.l.b16 %v2727
      %v2900 = vpack.c.b16 %v2899, %v2898
      %v2901 = vrot.slane %v2900, 2
      %v2903 = vsel %vm288, %v2901, 0
      %2905 = vmatprep.subr.bf16.mxu0 0
      %2906 = vmatpush1.bf16.msra.mxu0 0
      %2907 = vmatprep.subr.bf16.mxu0 0
      %2908 = vmatpush1.bf16.msra.mxu0 0
      %2909 = vmatprep.subr.bf16.mxu0 0
      %2910 = vmatpush1.bf16.msra.mxu0 0
      %2911 = vmatprep.subr.bf16.mxu0 0
      %2912 = vmatpush1.bf16.msra.mxu0 0
      %2913 = vmatprep.subr.bf16.mxu0 0
      %2914 = vmatpush1.bf16.msra.mxu0 0
      %2915 = vmatprep.subr.bf16.mxu0 0
      %2916 = vmatpush1.bf16.msra.mxu0 0
      %2917 = vmatprep.subr.bf16.mxu0 0
      %2918 = vmatpush1.bf16.msra.mxu0 %v2752
      %2919 = vmatprep.subr.bf16.mxu0 0
      %2920 = vmatpush1.bf16.msra.mxu0 %v2751
      %2921 = vmatprep.subr.bf16.mxu0 0
      %2922 = vmatpush2.bf16.msra.mxu0 0
      %2923 = vmatprep.subr.bf16.mxu0 0
      %2924 = vmatpush2.bf16.msra.mxu0 0
      %2925 = vmatprep.subr.bf16.mxu0 0
      %2926 = vmatpush2.bf16.msra.mxu0 0
      %2927 = vmatprep.subr.bf16.mxu0 0
      %2928 = vmatpush2.bf16.msra.mxu0 0
      %2929 = vmatprep.subr.bf16.mxu0 0
      %2930 = vmatpush2.bf16.msra.mxu0 0
      %2931 = vmatprep.subr.bf16.mxu0 0
      %2932 = vmatpush2.bf16.msra.mxu0 0
      %2933 = vmatprep.subr.bf16.mxu0 0
      %2934 = vmatpush2.bf16.msra.mxu0 0
      %2935 = vmatprep.subr.bf16.mxu0 0
      %2936 = vmatpush2.bf16.msra.mxu0 0
      %2937 = vmatprep.mubr.bf16.mxu0 0
      %2938 = vmatmul.mubr.bf16.gmra.mxu0 %v2903
      %v2939 = vpop.f32.mrf.mxu0
      %v2940 = vadd.f32 0.0, %v2939
      %v2941 = vpop.f32.mrf.mxu0
      %v2942 = vpop.f32.mrf.mxu0
      %v2943 = vpop.f32.mrf.mxu0
      %2944 = vdwg.mxu0
      %v2947 = vunpack.c.l.b16 %v2728
      %v2948 = vunpack.c.l.b16 %v2729
      %v2949 = vpack.c.b16 %v2948, %v2947
      %v2950 = vrot.slane %v2949, 2
      %v2952 = vsel %vm288, %v2950, 0
      %2954 = vmatprep.subr.bf16.mxu0 0
      %2955 = vmatpush1.bf16.msra.mxu0 0
      %2956 = vmatprep.subr.bf16.mxu0 0
      %2957 = vmatpush1.bf16.msra.mxu0 0
      %2958 = vmatprep.subr.bf16.mxu0 0
      %2959 = vmatpush1.bf16.msra.mxu0 0
      %2960 = vmatprep.subr.bf16.mxu0 0
      %2961 = vmatpush1.bf16.msra.mxu0 0
      %2962 = vmatprep.subr.bf16.mxu0 0
      %2963 = vmatpush1.bf16.msra.mxu0 0
      %2964 = vmatprep.subr.bf16.mxu0 0
      %2965 = vmatpush1.bf16.msra.mxu0 0
      %2966 = vmatprep.subr.bf16.mxu0 0
      %2967 = vmatpush1.bf16.msra.mxu0 %v2752
      %2968 = vmatprep.subr.bf16.mxu0 0
      %2969 = vmatpush1.bf16.msra.mxu0 %v2751
      %2970 = vmatprep.subr.bf16.mxu0 0
      %2971 = vmatpush2.bf16.msra.mxu0 0
      %2972 = vmatprep.subr.bf16.mxu0 0
      %2973 = vmatpush2.bf16.msra.mxu0 0
      %2974 = vmatprep.subr.bf16.mxu0 0
      %2975 = vmatpush2.bf16.msra.mxu0 0
      %2976 = vmatprep.subr.bf16.mxu0 0
      %2977 = vmatpush2.bf16.msra.mxu0 0
      %2978 = vmatprep.subr.bf16.mxu0 0
      %2979 = vmatpush2.bf16.msra.mxu0 0
      %2980 = vmatprep.subr.bf16.mxu0 0
      %2981 = vmatpush2.bf16.msra.mxu0 0
      %2982 = vmatprep.subr.bf16.mxu0 0
      %2983 = vmatpush2.bf16.msra.mxu0 0
      %2984 = vmatprep.subr.bf16.mxu0 0
      %2985 = vmatpush2.bf16.msra.mxu0 0
      %2986 = vmatprep.mubr.bf16.mxu0 0
      %2987 = vmatmul.mubr.bf16.gmra.mxu0 %v2952
      %v2988 = vpop.f32.mrf.mxu0
      %v2989 = vadd.f32 0.0, %v2988
      %v2990 = vpop.f32.mrf.mxu0
      %v2991 = vpop.f32.mrf.mxu0
      %v2992 = vpop.f32.mrf.mxu0
      %2993 = vdwg.mxu0
      %v2996 = vunpack.c.l.b16 %v2730
      %v2997 = vunpack.c.l.b16 %v2731
      %v2998 = vpack.c.b16 %v2997, %v2996
      %v2999 = vrot.slane %v2998, 2
      %v3001 = vsel %vm288, %v2999, 0
      %3003 = vmatprep.subr.bf16.mxu0 0
      %3004 = vmatpush1.bf16.msra.mxu0 0
      %3005 = vmatprep.subr.bf16.mxu0 0
      %3006 = vmatpush1.bf16.msra.mxu0 0
      %3007 = vmatprep.subr.bf16.mxu0 0
      %3008 = vmatpush1.bf16.msra.mxu0 0
      %3009 = vmatprep.subr.bf16.mxu0 0
      %3010 = vmatpush1.bf16.msra.mxu0 0
      %3011 = vmatprep.subr.bf16.mxu0 0
      %3012 = vmatpush1.bf16.msra.mxu0 0
      %3013 = vmatprep.subr.bf16.mxu0 0
      %3014 = vmatpush1.bf16.msra.mxu0 0
      %3015 = vmatprep.subr.bf16.mxu0 0
      %3016 = vmatpush1.bf16.msra.mxu0 %v2752
      %3017 = vmatprep.subr.bf16.mxu0 0
      %3018 = vmatpush1.bf16.msra.mxu0 %v2751
      %3019 = vmatprep.subr.bf16.mxu0 0
      %3020 = vmatpush2.bf16.msra.mxu0 0
      %3021 = vmatprep.subr.bf16.mxu0 0
      %3022 = vmatpush2.bf16.msra.mxu0 0
      %3023 = vmatprep.subr.bf16.mxu0 0
      %3024 = vmatpush2.bf16.msra.mxu0 0
      %3025 = vmatprep.subr.bf16.mxu0 0
      %3026 = vmatpush2.bf16.msra.mxu0 0
      %3027 = vmatprep.subr.bf16.mxu0 0
      %3028 = vmatpush2.bf16.msra.mxu0 0
      %3029 = vmatprep.subr.bf16.mxu0 0
      %3030 = vmatpush2.bf16.msra.mxu0 0
      %3031 = vmatprep.subr.bf16.mxu0 0
      %3032 = vmatpush2.bf16.msra.mxu0 0
      %3033 = vmatprep.subr.bf16.mxu0 0
      %3034 = vmatpush2.bf16.msra.mxu0 0
      %3035 = vmatprep.mubr.bf16.mxu0 0
      %3036 = vmatmul.mubr.bf16.gmra.mxu0 %v3001
      %v3037 = vpop.f32.mrf.mxu0
      %v3038 = vadd.f32 0.0, %v3037
      %v3039 = vpop.f32.mrf.mxu0
      %v3040 = vpop.f32.mrf.mxu0
      %v3041 = vpop.f32.mrf.mxu0
      %3042 = vdwg.mxu0
      %v3043 = vadd.f32 %v2714, %v2793
      %v3044 = vadd.f32 %v2715, %v2842
      %v3045 = vadd.f32 %v2716, %v2891
      %v3046 = vadd.f32 %v2717, %v2940
      %v3047 = vadd.f32 %v2718, %v2989
      %v3048 = vadd.f32 %v2719, %v3038
      %vm3049 = vcmask 521216
      %3050 = vst.msk [vmem:[#allocation2] sm:$0x3f] %vm3049, %v3043
      %3051 = vst.msk [vmem:[#allocation2 + $0x8] sm:$0x3f] %vm3049, %v3044
      %3052 = vst.msk [vmem:[#allocation2 + $0x10] sm:$0x3f] %vm3049, %v3045
      %3053 = vst.msk [vmem:[#allocation2 + $0x18] sm:$0x3f] %vm3049, %v3046
      %3054 = vst.msk [vmem:[#allocation2 + $0x20] sm:$0x3f] %vm3049, %v3047
      %3055 = vst.msk [vmem:[#allocation2 + $0x28] sm:$0x3f] %vm3049, %v3048
      %p3056 = scmp.eq.s32.totalorder %s21, 2
      // Predicated region
      $region37: #{model_forward.3} parent=31 // pred_check
        %p3057 = pneg %p3056
      $region38: #{model_forward.3} parent=31 // pred_check_branch
        %3059 = sbr.rel (%p3057) target = $region40
      $region39: #{model_forward.3} parent=31 // pred_region
        %v3060 = vld [vmem:[#allocation2] sm:$0x3f]
        %v3061 = vld [vmem:[#allocation2 + $0x8] sm:$0x3f]
        %v3062 = vld [vmem:[#allocation2 + $0x10] sm:$0x3f]
        %v3063 = vld [vmem:[#allocation2 + $0x18] sm:$0x3f]
        %v3064 = vld [vmem:[#allocation2 + $0x20] sm:$0x3f]
        %v3065 = vld [vmem:[#allocation2 + $0x28] sm:$0x3f]
        %v3066 = vld [vmem:[%s2] sm:$0x1]
        %v3068 = vlaneseq
        %v3069 = vshrl.u32 %v3068, 7
        %v3070 = vsub.s32 0, %v3069
        %v3071 = vrot.slane %v3066, %v3070
        %v3073 = vadd.f32 %v3060, %v3071
        %v3074 = vadd.f32 %v3061, %v3071
        %v3075 = vadd.f32 %v3062, %v3071
        %v3076 = vadd.f32 %v3063, %v3071
        %v3077 = vadd.f32 %v3064, %v3071
        %v3078 = vadd.f32 %v3065, %v3071
        %v3079 = vmul.f32 %v3073, 0.5
        %v3080 = vmul.f32 %v3074, 0.5
        %v3081 = vmul.f32 %v3075, 0.5
        %v3082 = vmul.f32 %v3076, 0.5
        %v3083 = vmul.f32 %v3077, 0.5
        %v3084 = vmul.f32 %v3078, 0.5
        %v3085 = vmul.f32 %v3073, %v3073
        %v3086 = vmul.f32 %v3074, %v3074
        %v3087 = vmul.f32 %v3075, %v3075
        %v3088 = vmul.f32 %v3076, %v3076
        %v3089 = vmul.f32 %v3077, %v3077
        %v3090 = vmul.f32 %v3078, %v3078
        %v3091 = vmul.f32 %v3085, %v3073
        %v3092 = vmul.f32 %v3086, %v3074
        %v3093 = vmul.f32 %v3087, %v3075
        %v3094 = vmul.f32 %v3088, %v3076
        %v3095 = vmul.f32 %v3089, %v3077
        %v3096 = vmul.f32 %v3090, %v3078
        %v3097 = vmul.f32 %v3091, 0.044715
        %v3098 = vmul.f32 %v3092, 0.044715
        %v3099 = vmul.f32 %v3093, 0.044715
        %v3100 = vmul.f32 %v3094, 0.044715
        %v3101 = vmul.f32 %v3095, 0.044715
        %v3102 = vmul.f32 %v3096, 0.044715
        %v3103 = vadd.f32 %v3073, %v3097
        %v3104 = vadd.f32 %v3074, %v3098
        %v3105 = vadd.f32 %v3075, %v3099
        %v3106 = vadd.f32 %v3076, %v3100
        %v3107 = vadd.f32 %v3077, %v3101
        %v3108 = vadd.f32 %v3078, %v3102
        %v3109 = vmul.f32 %v3103, 0.7978846
        %v3110 = vmul.f32 %v3104, 0.7978846
        %v3111 = vmul.f32 %v3105, 0.7978846
        %v3112 = vmul.f32 %v3106, 0.7978846
        %v3113 = vmul.f32 %v3107, 0.7978846
        %v3114 = vmul.f32 %v3108, 0.7978846
        %v3115 = vtanh.pop %v3109
        %v3116 = vtanh.pop %v3110
        %v3117 = vtanh.pop %v3111
        %v3118 = vtanh.pop %v3112
        %v3119 = vtanh.pop %v3113
        %v3120 = vtanh.pop %v3114
        %v3121 = vadd.f32 %v3115, 1.0
        %v3122 = vadd.f32 %v3116, 1.0
        %v3123 = vadd.f32 %v3117, 1.0
        %v3124 = vadd.f32 %v3118, 1.0
        %v3125 = vadd.f32 %v3119, 1.0
        %v3126 = vadd.f32 %v3120, 1.0
        %v3127 = vmul.f32 %v3079, %v3121
        %v3128 = vmul.f32 %v3080, %v3122
        %v3129 = vmul.f32 %v3081, %v3123
        %v3130 = vmul.f32 %v3082, %v3124
        %v3131 = vmul.f32 %v3083, %v3125
        %v3132 = vmul.f32 %v3084, %v3126
        %3133 = vst.msk [vmem:[%s247] sm:$0x3f] %vm3049, %v3127
        %3134 = vst.msk [vmem:[%s247 + $0x8] sm:$0x3f] %vm3049, %v3128
        %3135 = vst.msk [vmem:[%s247 + $0x10] sm:$0x3f] %vm3049, %v3129
        %3136 = vst.msk [vmem:[%s247 + $0x18] sm:$0x3f] %vm3049, %v3130
        %3137 = vst.msk [vmem:[%s247 + $0x20] sm:$0x3f] %vm3049, %v3131
        %3138 = vst.msk [vmem:[%s247 + $0x28] sm:$0x3f] %vm3049, %v3132
      $region40: #{model_forward.3} parent=31 // pred_fallthru
        _
      %p3139 = scmp.lt.s32.totalorder %s19, 1
      %s3140 = scalar_select %p3139, %s19, 1
      %p3141 = scmp.lt.s32.totalorder %s20, 5
      %s3142 = scalar_select %p3141, %s20, 5
      %s3143 = smul.addr %s3142, 6
      %s3144 = smul.addr %s3140, 36
      %s3145 = sadd.s32 %s3143, %s3144
      %s3146 = smul.addr %s3145, 8
      %s3147 = scalar_lea.vmem %s3, %s3146
      // Predicated region
      $region41: #{model_forward.3} parent=31 // pred_check
        %p3148 = pneg %p132
      $region42: #{model_forward.3} parent=31 // pred_check_branch
        %3150 = sbr.rel (%p3148) target = $region44
      $region43: #{model_forward.3} parent=31 // pred_region
        _
      $region44: #{model_forward.3} parent=31 // pred_fallthru
        _
    $region32: #{model_forward.3} parent=5 // pred_fallthru
      _
    %p3151 = scmp.le.s32.totalorder 2, %s9
    // Predicated region
    $region45: #{model_forward.3} parent=5 // pred_check
      %p3152 = pneg %p3151
    $region46: #{model_forward.3} parent=5 // pred_check_branch
      %3154 = sbr.rel (%p3152) target = $region48
    $region47: #{model_forward.3} parent=5 // pred_region
      %s3155 = ssub.s32 %s9, 2
      // Predicated region
      $region49: #{model_forward.3} parent=47 // pred_check
        %p3156 = pneg %p138
      $region50: #{model_forward.3} parent=47 // pred_check_branch
        %3158 = sbr.rel (%p3156) target = $region52
      $region51: #{model_forward.3} parent=47 // pred_region
        %p3159 = scmp.lt.s32.totalorder %s22, 1
        %s3160 = scalar_select %p3159, %s22, 1
        %p3161 = scmp.lt.s32.totalorder %s23, 5
        %s3162 = scalar_select %p3161, %s23, 5
        %s3163 = smul.addr %s3162, 6
        %s3164 = smul.addr %s3160, 36
        %s3165 = sadd.s32 %s3163, %s3164
        %s3166 = smul.addr %s3165, 8
        %s3167 = scalar_lea.vmem %s3, %s3166
      $region52: #{model_forward.3} parent=47 // pred_fallthru
        _
    $region48: #{model_forward.3} parent=5 // pred_fallthru
      _
  $region6: #{model_forward.3} parent=0 // loop_footer
    %s13 = sadd.s32 1, %s9
  $region7: #{model_forward.3} parent=0 // loop_footer_branch
    %8 = sbr.rel target = $region3
  $region8: #{model_forward.3} parent=0 // loop_exit
    _

</llo_original>
